<compile_context>
chip_gen: v6e
topology: v6e:2x2x1
jax: 0.10.0
libtpu: 0.0.40
codegen_flags: <defaults>
</compile_context>

<pallas_src>
import functools

import jax
import jax.numpy as jnp
from jax import lax
from jax.experimental import pallas as pl
from jax.experimental.pallas import tpu as pltpu

LANE = 128
F32 = jnp.float32
BF16 = jnp.bfloat16


# ---------------------------------------------------------------------------
# Kernels (one per "global sync" point required by the graph propagation).
# ---------------------------------------------------------------------------
def _stage1_kernel(a_ref, x_ref, w1_ref, w2_ref, y2_ref):
    """conv1 (+relu) on a row tile, then row-local projection for conv2."""
    ax = jnp.dot(a_ref[...], x_ref[...], preferred_element_type=F32)
    h1 = jnp.maximum(
        jnp.dot(ax.astype(BF16), w1_ref[...], preferred_element_type=F32), 0.0)
    y2_ref[...] = jnp.dot(h1.astype(BF16), w2_ref[...],
                          preferred_element_type=F32).astype(y2_ref.dtype)


def _stage2_kernel(a_ref, y2_ref, wph_ref, wg_ref, h2_ref, ph_ref, g_ref):
    """conv2 propagation (+relu) and NLGCN phi/g projections (need full N)."""
    h2 = jnp.maximum(
        jnp.dot(a_ref[...], y2_ref[...], preferred_element_type=F32), 0.0)
    h2b = h2.astype(BF16)
    h2_ref[...] = h2b
    ph_ref[...] = jnp.dot(h2b, wph_ref[...],
                          preferred_element_type=F32).astype(BF16)
    g_ref[...] = jnp.dot(h2b, wg_ref[...],
                         preferred_element_type=F32).astype(BF16)


def _stage3_kernel(h2_ref, ph_ref, g_ref, wth_ref, wo_ref, dw_ref, db_ref,
                   w3_ref, hnl_ref, y3_ref, *, scale):
    """Non-local attention + residual, 6x (dense+relu), projection for conv3.

    theta is projected here from the resident h2 row tile (only the row block
    is needed), so it never round-trips through HBM.
    """
    h2b = h2_ref[...]                                           # [tn, C] bf16
    th = jnp.dot(h2b, wth_ref[...], preferred_element_type=F32)  # [tn, C]
    # scores = theta @ phi.T  — contract dim 1 of both, no transpose.
    scores = lax.dot_general(th.astype(BF16), ph_ref[...],
                             (((1,), (1,)), ((), ())),
                             preferred_element_type=F32) * scale
    m = jnp.max(scores, axis=-1, keepdims=True)
    p = jnp.exp(scores - m)
    attn = p * pl.reciprocal(jnp.sum(p, axis=-1, keepdims=True), approx=True)
    nl = jnp.dot(attn.astype(BF16), g_ref[...], preferred_element_type=F32)
    nl = jnp.dot(nl.astype(BF16), wo_ref[...], preferred_element_type=F32)
    h = h2b.astype(F32) + nl
    hnl_ref[...] = h.astype(hnl_ref.dtype)

    dw = dw_ref[...]          # [6, C, C] bf16, loaded once (hoisted)
    db = db_ref[...]          # [6, C]    f32,  loaded once (hoisted)
    for i in range(6):
        h = jnp.dot(h.astype(BF16), dw[i], preferred_element_type=F32) + db[i]
        h = jnp.maximum(h, 0.0)
    y3_ref[...] = jnp.dot(h.astype(BF16), w3_ref[...],
                          preferred_element_type=F32).astype(y3_ref.dtype)


def _stage4_kernel(a_ref, y3_ref, w4_ref, y4_ref):
    """conv3 propagation (+relu), then row-local projection for conv4."""
    att1 = jnp.maximum(
        jnp.dot(a_ref[...], y3_ref[...], preferred_element_type=F32), 0.0)
    y4_ref[...] = jnp.dot(att1.astype(BF16), w4_ref[...],
                          preferred_element_type=F32).astype(y4_ref.dtype)


def _stage5_kernel(a_ref, y4_ref, hrow_ref, hfull_ref, att_ref, adj_ref,
                   *, nout):
    """Streamed adjacency reconstruction + conv4 propagation + softmax."""
    # adj row tile = sigmoid(H_rows @ H_full.T), contract dim 1 of both.
    logits = lax.dot_general(hrow_ref[...], hfull_ref[...],
                             (((1,), (1,)), ((), ())),
                             preferred_element_type=F32)
    adj_ref[...] = pl.reciprocal(1.0 + jnp.exp(-logits), approx=True)

    # conv4 propagation then masked softmax over the real feature columns.
    z = jnp.dot(a_ref[...], y4_ref[...], preferred_element_type=F32)
    col = lax.broadcasted_iota(jnp.int32, z.shape, 1)
    mask = col < nout
    zm = jnp.where(mask, z, -jnp.inf)
    m = jnp.max(zm, axis=-1, keepdims=True)
    e = jnp.where(mask, jnp.exp(zm - m), 0.0)
    att_ref[...] = e * pl.reciprocal(jnp.sum(e, axis=-1, keepdims=True),
                                     approx=True)


# ---------------------------------------------------------------------------
# Wrapper.
# ---------------------------------------------------------------------------
def _pad2(x, rows, cols):
    return jnp.pad(x, ((0, rows - x.shape[0]), (0, cols - x.shape[1])))


def _pick_tile(n):
    for t in (512, 256, 128):
        if n % t == 0 and n // t >= 2:
            return t
    return n  # single tile fallback (always correct)


@jax.jit
def densenet6_forward(A_hat, X, params):
    N = X.shape[0]
    nout = params["w4"].shape[1]
    nhid2 = params["w2"].shape[1]
    C = LANE
    tn = _pick_tile(N)
    grid = (N // tn,)
    cp = pltpu.CompilerParams(dimension_semantics=("parallel",))

    # --- pad channel dims to lane width, cast matmul operands to bf16 ------
    a_bf = A_hat.astype(BF16)
    x_p = _pad2(X, N, C).astype(BF16)
    w1 = _pad2(params["w1"], C, C).astype(BF16)
    w2 = _pad2(params["w2"], C, C).astype(BF16)
    wth = _pad2(params["nl_theta"], C, C).astype(BF16)
    wph = _pad2(params["nl_phi"], C, C).astype(BF16)
    wg = _pad2(params["nl_g"], C, C).astype(BF16)
    wo = _pad2(params["nl_wo"], C, C).astype(BF16)
    dw = jnp.pad(params["dense_w"],
                 ((0, 0), (0, C - nhid2), (0, C - nhid2))).astype(BF16)
    db = jnp.pad(params["dense_b"], ((0, 0), (0, C - nhid2))).astype(F32)
    w3 = _pad2(params["w3"], C, C).astype(BF16)
    w4 = _pad2(params["w4"], C, C).astype(BF16)

    # --- BlockSpecs ---------------------------------------------------------
    a_spec = pl.BlockSpec((tn, N), lambda i: (i, 0))       # A row tile
    row_c = pl.BlockSpec((tn, C), lambda i: (i, 0))        # [tn, 128] row tile
    full_c = pl.BlockSpec((N, C), lambda i: (0, 0))        # full [N, 128]
    ww = pl.BlockSpec((C, C), lambda i: (0, 0))            # full weight
    dw_spec = pl.BlockSpec((6, C, C), lambda i: (0, 0, 0))
    db_spec = pl.BlockSpec((6, C), lambda i: (0, 0))
    adj_spec = pl.BlockSpec((tn, N), lambda i: (i, 0))

    fl_prop = 2 * N * N * C
    fl_proj = 2 * N * C * C
    by_a = N * N * 2
    by_c = N * C * 2

    # Stage 1: conv1 + projection for conv2.
    y2 = pl.pallas_call(
        _stage1_kernel, grid=grid,
        in_specs=[a_spec, full_c, ww, ww],
        out_specs=row_c,
        out_shape=jax.ShapeDtypeStruct((N, C), BF16),
        compiler_params=cp,
        cost_estimate=pl.CostEstimate(flops=fl_prop + 2 * fl_proj,
                                      transcendentals=0,
                                      bytes_accessed=by_a + 3 * by_c),
    )(a_bf, x_p, w1, w2)

    # Stage 2: conv2 propagation + NLGCN phi/g projections.
    h2, ph, g = pl.pallas_call(
        _stage2_kernel, grid=grid,
        in_specs=[a_spec, full_c, ww, ww],
        out_specs=(row_c, row_c, row_c),
        out_shape=tuple(jax.ShapeDtypeStruct((N, C), BF16) for _ in range(3)),
        compiler_params=cp,
        cost_estimate=pl.CostEstimate(flops=fl_prop + 2 * fl_proj,
                                      transcendentals=0,
                                      bytes_accessed=by_a + 4 * by_c),
    )(a_bf, y2, wph, wg)

    # Stage 3: non-local attention + residual + dense stack + conv3 projection.
    scale = 1.0 / float(nhid2) ** 0.5
    hnl, y3 = pl.pallas_call(
        functools.partial(_stage3_kernel, scale=scale), grid=grid,
        in_specs=[row_c, full_c, full_c, ww, ww, dw_spec, db_spec, ww],
        out_specs=(row_c, row_c),
        out_shape=(jax.ShapeDtypeStruct((N, C), BF16),
                   jax.ShapeDtypeStruct((N, C), BF16)),
        compiler_params=cp,
        cost_estimate=pl.CostEstimate(flops=2 * fl_prop + 10 * fl_proj,
                                      transcendentals=N * N,
                                      bytes_accessed=5 * by_c),
    )(h2, ph, g, wth, wo, dw, db, w3)

    # Stage 4: conv3 propagation + conv4 projection.
    y4 = pl.pallas_call(
        _stage4_kernel, grid=grid,
        in_specs=[a_spec, full_c, ww],
        out_specs=row_c,
        out_shape=jax.ShapeDtypeStruct((N, C), BF16),
        compiler_params=cp,
        cost_estimate=pl.CostEstimate(flops=fl_prop + fl_proj,
                                      transcendentals=0,
                                      bytes_accessed=by_a + 2 * by_c),
    )(a_bf, y3, w4)

    # Stage 5: streamed sigmoid(H @ H.T) + conv4 propagation + softmax.
    att_p, adj = pl.pallas_call(
        functools.partial(_stage5_kernel, nout=nout), grid=grid,
        in_specs=[a_spec, full_c, row_c, full_c],
        out_specs=(row_c, adj_spec),
        out_shape=(jax.ShapeDtypeStruct((N, C), F32),
                   jax.ShapeDtypeStruct((N, N), F32)),
        compiler_params=cp,
        cost_estimate=pl.CostEstimate(flops=2 * fl_prop,
                                      transcendentals=N * N + N * C,
                                      bytes_accessed=by_a + 2 * by_c
                                      + N * N * 4 + N * C * 4),
    )(a_bf, y4, hnl, hnl)

    return att_p[:, :nout], adj


# ---------------------------------------------------------------------------
# JAX glue (parameter init / adjacency normalization) — outside the kernels.
# ---------------------------------------------------------------------------
def normalize_adjacency(A):
    """A_hat = D^-1/2 (A + I) D^-1/2 — standard GCN normalization."""
    N = A.shape[0]
    A_self = A + jnp.eye(N, dtype=A.dtype)
    d = jnp.sum(A_self, axis=1)
    d_inv_sqrt = 1.0 / jnp.sqrt(d)
    return A_self * d_inv_sqrt[:, None] * d_inv_sqrt[None, :]


def init_params(key, nfeat, nhid1, nhid2, nhid3, nout):
    ks = jax.random.split(key, 16)

    def w(k, shape, fan_in):
        return (jax.random.normal(k, shape, F32) /
                jnp.sqrt(jnp.float32(fan_in)))

    return {
        "w1": w(ks[0], (nfeat, nhid1), nfeat),
        "w2": w(ks[1], (nhid1, nhid2), nhid1),
        "nl_theta": w(ks[2], (nhid2, nhid2), nhid2),
        "nl_phi": w(ks[3], (nhid2, nhid2), nhid2),
        "nl_g": w(ks[4], (nhid2, nhid2), nhid2),
        "nl_wo": w(ks[5], (nhid2, nhid2), nhid2),
        "dense_w": w(ks[6], (6, nhid2, nhid2), nhid2),
        "dense_b": 0.01 * jax.random.normal(ks[7], (6, nhid2), F32),
        "w3": w(ks[8], (nhid2, nhid3), nhid2),
        "w4": w(ks[9], (nhid3, nout), nhid3),
    }


if __name__ == "__main__":
    # Small, module-consistent shapes (N chosen so the grid has 2 row tiles).
    N = 256
    nfeat, nhid1, nhid2, nhid3, nout = 8, 32, 32, 16, 8

    key = jax.random.PRNGKey(0)
    k_adj, k_x, k_p = jax.random.split(key, 3)

    raw = jax.random.uniform(k_adj, (N, N))
    A = (raw + raw.T > 1.0).astype(F32)
    A = A * (1.0 - jnp.eye(N, dtype=F32))
    A_hat = normalize_adjacency(A)

    X = jax.random.normal(k_x, (N, nfeat), F32)
    params = init_params(k_p, nfeat, nhid1, nhid2, nhid3, nout)

    att, adj = densenet6_forward(A_hat, X, params)
    jax.block_until_ready((att, adj))

    assert att.shape == (N, nout) and adj.shape == (N, N)
    assert bool(jnp.all(jnp.isfinite(att))) and bool(jnp.all(jnp.isfinite(adj)))
    # softmax rows sum to ~1 (approx reciprocal has ~1e-4 relative error)
    assert bool(jnp.all(jnp.abs(jnp.sum(att, axis=1) - 1.0) < 1e-2))
    print("KERNEL_OK")
</pallas_src>

<mosaic_0001>
module attributes {stable_mosaic.version = 11 : i64} {
  func.func @_stage1_kernel(%arg0: i32, %arg1: memref<128x256xbf16, #tpu.memory_space<vmem>>, %arg2: memref<256x128xbf16, #tpu.memory_space<vmem>>, %arg3: memref<128x128xbf16, #tpu.memory_space<vmem>>, %arg4: memref<128x128xbf16, #tpu.memory_space<vmem>>, %arg5: memref<128x128xbf16, #tpu.memory_space<vmem>>) attributes {dimension_semantics = [#tpu.dimension_semantics<parallel>], iteration_bounds = array<i64: 2>, scalar_prefetch = 0 : i64, scratch_operands = 0 : i64, tpu.core_type = #tpu.core_type<tc>, window_params = [{transform_indices = @transform_0, window_bounds = array<i64: 128, 256>}, {pipeline_mode = #tpu.pipeline_mode<synchronous>, transform_indices = @transform_1, window_bounds = array<i64: 256, 128>}, {pipeline_mode = #tpu.pipeline_mode<synchronous>, transform_indices = @transform_2, window_bounds = array<i64: 128, 128>}, {pipeline_mode = #tpu.pipeline_mode<synchronous>, transform_indices = @transform_3, window_bounds = array<i64: 128, 128>}, {transform_indices = @transform_4, window_bounds = array<i64: 128, 128>}]} {
    %c0 = arith.constant 0 : index
    %c0_0 = arith.constant 0 : index
    %0 = vector.load %arg1[%c0, %c0_0] : memref<128x256xbf16, #tpu.memory_space<vmem>>, vector<128x256xbf16>
    %c0_1 = arith.constant 0 : index
    %c0_2 = arith.constant 0 : index
    %1 = vector.load %arg2[%c0_1, %c0_2] : memref<256x128xbf16, #tpu.memory_space<vmem>>, vector<256x128xbf16>
    %cst = arith.constant dense<0.000000e+00> : vector<128x128xf32>
    %2 = tpu.matmul %0, %1, %cst {dimension_numbers = #tpu.dot_dimension_numbers<[1], [0], [0], [1], [0, 0, 1, 1], [], []>} : vector<128x256xbf16>, vector<256x128xbf16>, vector<128x128xf32> -> vector<128x128xf32>
    %3 = arith.truncf %2 : vector<128x128xf32> to vector<128x128xbf16>
    %c0_3 = arith.constant 0 : index
    %c0_4 = arith.constant 0 : index
    %4 = vector.load %arg3[%c0_3, %c0_4] : memref<128x128xbf16, #tpu.memory_space<vmem>>, vector<128x128xbf16>
    %cst_5 = arith.constant dense<0.000000e+00> : vector<128x128xf32>
    %5 = tpu.matmul %3, %4, %cst_5 {dimension_numbers = #tpu.dot_dimension_numbers<[1], [0], [0], [1], [0, 0, 1, 1], [], []>} : vector<128x128xbf16>, vector<128x128xbf16>, vector<128x128xf32> -> vector<128x128xf32>
    %cst_6 = arith.constant 0.000000e+00 : f32
    %6 = vector.broadcast %cst_6 : f32 to vector<128x128xf32>
    %7 = arith.maximumf %5, %6 : vector<128x128xf32>
    %8 = arith.truncf %7 : vector<128x128xf32> to vector<128x128xbf16>
    %c0_7 = arith.constant 0 : index
    %c0_8 = arith.constant 0 : index
    %9 = vector.load %arg4[%c0_7, %c0_8] : memref<128x128xbf16, #tpu.memory_space<vmem>>, vector<128x128xbf16>
    %cst_9 = arith.constant dense<0.000000e+00> : vector<128x128xf32>
    %10 = tpu.matmul %8, %9, %cst_9 {dimension_numbers = #tpu.dot_dimension_numbers<[1], [0], [0], [1], [0, 0, 1, 1], [], []>} : vector<128x128xbf16>, vector<128x128xbf16>, vector<128x128xf32> -> vector<128x128xf32>
    %11 = arith.truncf %10 : vector<128x128xf32> to vector<128x128xbf16>
    %c0_10 = arith.constant 0 : index
    %c0_11 = arith.constant 0 : index
    %12 = vector.load %arg5[%c0_10, %c0_11] : memref<128x128xbf16, #tpu.memory_space<vmem>>, vector<128x128xbf16>
    tpu.vector_store %arg5[%c0_10, %c0_11], %11 {strides = array<i32>} : memref<128x128xbf16, #tpu.memory_space<vmem>>, vector<128x128xbf16>,
    return
  }
  func.func @transform_0(%arg0: i32) -> (i32, i32) {
    %c0_i32 = arith.constant 0 : i32
    %c0_i32_0 = arith.constant 0 : i32
    return %arg0, %c0_i32 : i32, i32
  }
  func.func @transform_1(%arg0: i32) -> (i32, i32) {
    %c0_i32 = arith.constant 0 : i32
    %c0_i32_0 = arith.constant 0 : i32
    %c0_i32_1 = arith.constant 0 : i32
    return %c0_i32, %c0_i32_0 : i32, i32
  }
  func.func @transform_2(%arg0: i32) -> (i32, i32) {
    %c0_i32 = arith.constant 0 : i32
    %c0_i32_0 = arith.constant 0 : i32
    %c0_i32_1 = arith.constant 0 : i32
    return %c0_i32, %c0_i32_0 : i32, i32
  }
  func.func @transform_3(%arg0: i32) -> (i32, i32) {
    %c0_i32 = arith.constant 0 : i32
    %c0_i32_0 = arith.constant 0 : i32
    %c0_i32_1 = arith.constant 0 : i32
    return %c0_i32, %c0_i32_0 : i32, i32
  }
  func.func @transform_4(%arg0: i32) -> (i32, i32) {
    %c0_i32 = arith.constant 0 : i32
    %c0_i32_0 = arith.constant 0 : i32
    return %arg0, %c0_i32 : i32, i32
  }
}

module attributes {stable_mosaic.version = 11 : i64} {
  func.func @_stage2_kernel(%arg0: i32, %arg1: memref<128x256xbf16, #tpu.memory_space<vmem>>, %arg2: memref<256x128xbf16, #tpu.memory_space<vmem>>, %arg3: memref<128x128xbf16, #tpu.memory_space<vmem>>, %arg4: memref<128x128xbf16, #tpu.memory_space<vmem>>, %arg5: memref<128x128xbf16, #tpu.memory_space<vmem>>, %arg6: memref<128x128xbf16, #tpu.memory_space<vmem>>, %arg7: memref<128x128xbf16, #tpu.memory_space<vmem>>) attributes {dimension_semantics = [#tpu.dimension_semantics<parallel>], iteration_bounds = array<i64: 2>, scalar_prefetch = 0 : i64, scratch_operands = 0 : i64, tpu.core_type = #tpu.core_type<tc>, window_params = [{transform_indices = @transform_0, window_bounds = array<i64: 128, 256>}, {pipeline_mode = #tpu.pipeline_mode<synchronous>, transform_indices = @transform_1, window_bounds = array<i64: 256, 128>}, {pipeline_mode = #tpu.pipeline_mode<synchronous>, transform_indices = @transform_2, window_bounds = array<i64: 128, 128>}, {pipeline_mode = #tpu.pipeline_mode<synchronous>, transform_indices = @transform_3, window_bounds = array<i64: 128, 128>}, {transform_indices = @transform_4, window_bounds = array<i64: 128, 128>}, {transform_indices = @transform_5, window_bounds = array<i64: 128, 128>}, {transform_indices = @transform_6, window_bounds = array<i64: 128, 128>}]} {
    %c0 = arith.constant 0 : index
    %c0_0 = arith.constant 0 : index
    %0 = vector.load %arg1[%c0, %c0_0] : memref<128x256xbf16, #tpu.memory_space<vmem>>, vector<128x256xbf16>
    %c0_1 = arith.constant 0 : index
    %c0_2 = arith.constant 0 : index
    %1 = vector.load %arg2[%c0_1, %c0_2] : memref<256x128xbf16, #tpu.memory_space<vmem>>, vector<256x128xbf16>
    %cst = arith.constant dense<0.000000e+00> : vector<128x128xf32>
    %2 = tpu.matmul %0, %1, %cst {dimension_numbers = #tpu.dot_dimension_numbers<[1], [0], [0], [1], [0, 0, 1, 1], [], []>} : vector<128x256xbf16>, vector<256x128xbf16>, vector<128x128xf32> -> vector<128x128xf32>
    %cst_3 = arith.constant 0.000000e+00 : f32
    %3 = vector.broadcast %cst_3 : f32 to vector<128x128xf32>
    %4 = arith.maximumf %2, %3 : vector<128x128xf32>
    %5 = arith.truncf %4 : vector<128x128xf32> to vector<128x128xbf16>
    %c0_4 = arith.constant 0 : index
    %c0_5 = arith.constant 0 : index
    %6 = vector.load %arg5[%c0_4, %c0_5] : memref<128x128xbf16, #tpu.memory_space<vmem>>, vector<128x128xbf16>
    tpu.vector_store %arg5[%c0_4, %c0_5], %5 {strides = array<i32>} : memref<128x128xbf16, #tpu.memory_space<vmem>>, vector<128x128xbf16>,
    %c0_6 = arith.constant 0 : index
    %c0_7 = arith.constant 0 : index
    %7 = vector.load %arg3[%c0_6, %c0_7] : memref<128x128xbf16, #tpu.memory_space<vmem>>, vector<128x128xbf16>
    %cst_8 = arith.constant dense<0.000000e+00> : vector<128x128xf32>
    %8 = tpu.matmul %5, %7, %cst_8 {dimension_numbers = #tpu.dot_dimension_numbers<[1], [0], [0], [1], [0, 0, 1, 1], [], []>} : vector<128x128xbf16>, vector<128x128xbf16>, vector<128x128xf32> -> vector<128x128xf32>
    %9 = arith.truncf %8 : vector<128x128xf32> to vector<128x128xbf16>
    %c0_9 = arith.constant 0 : index
    %c0_10 = arith.constant 0 : index
    %10 = vector.load %arg6[%c0_9, %c0_10] : memref<128x128xbf16, #tpu.memory_space<vmem>>, vector<128x128xbf16>
    tpu.vector_store %arg6[%c0_9, %c0_10], %9 {strides = array<i32>} : memref<128x128xbf16, #tpu.memory_space<vmem>>, vector<128x128xbf16>,
    %c0_11 = arith.constant 0 : index
    %c0_12 = arith.constant 0 : index
    %11 = vector.load %arg4[%c0_11, %c0_12] : memref<128x128xbf16, #tpu.memory_space<vmem>>, vector<128x128xbf16>
    %cst_13 = arith.constant dense<0.000000e+00> : vector<128x128xf32>
    %12 = tpu.matmul %5, %11, %cst_13 {dimension_numbers = #tpu.dot_dimension_numbers<[1], [0], [0], [1], [0, 0, 1, 1], [], []>} : vector<128x128xbf16>, vector<128x128xbf16>, vector<128x128xf32> -> vector<128x128xf32>
    %13 = arith.truncf %12 : vector<128x128xf32> to vector<128x128xbf16>
    %c0_14 = arith.constant 0 : index
    %c0_15 = arith.constant 0 : index
    %14 = vector.load %arg7[%c0_14, %c0_15] : memref<128x128xbf16, #tpu.memory_space<vmem>>, vector<128x128xbf16>
    tpu.vector_store %arg7[%c0_14, %c0_15], %13 {strides = array<i32>} : memref<128x128xbf16, #tpu.memory_space<vmem>>, vector<128x128xbf16>,
    return
  }
  func.func @transform_0(%arg0: i32) -> (i32, i32) {
    %c0_i32 = arith.constant 0 : i32
    %c0_i32_0 = arith.constant 0 : i32
    return %arg0, %c0_i32 : i32, i32
  }
  func.func @transform_1(%arg0: i32) -> (i32, i32) {
    %c0_i32 = arith.constant 0 : i32
    %c0_i32_0 = arith.constant 0 : i32
    %c0_i32_1 = arith.constant 0 : i32
    return %c0_i32, %c0_i32_0 : i32, i32
  }
  func.func @transform_2(%arg0: i32) -> (i32, i32) {
    %c0_i32 = arith.constant 0 : i32
    %c0_i32_0 = arith.constant 0 : i32
    %c0_i32_1 = arith.constant 0 : i32
    return %c0_i32, %c0_i32_0 : i32, i32
  }
  func.func @transform_3(%arg0: i32) -> (i32, i32) {
    %c0_i32 = arith.constant 0 : i32
    %c0_i32_0 = arith.constant 0 : i32
    %c0_i32_1 = arith.constant 0 : i32
    return %c0_i32, %c0_i32_0 : i32, i32
  }
  func.func @transform_4(%arg0: i32) -> (i32, i32) {
    %c0_i32 = arith.constant 0 : i32
    %c0_i32_0 = arith.constant 0 : i32
    return %arg0, %c0_i32 : i32, i32
  }
  func.func @transform_5(%arg0: i32) -> (i32, i32) {
    %c0_i32 = arith.constant 0 : i32
    %c0_i32_0 = arith.constant 0 : i32
    return %arg0, %c0_i32 : i32, i32
  }
  func.func @transform_6(%arg0: i32) -> (i32, i32) {
    %c0_i32 = arith.constant 0 : i32
    %c0_i32_0 = arith.constant 0 : i32
    return %arg0, %c0_i32 : i32, i32
  }
}

module attributes {stable_mosaic.version = 11 : i64} {
  func.func @_stage3_kernel(%arg0: i32, %arg1: memref<128x128xbf16, #tpu.memory_space<vmem>>, %arg2: memref<256x128xbf16, #tpu.memory_space<vmem>>, %arg3: memref<256x128xbf16, #tpu.memory_space<vmem>>, %arg4: memref<128x128xbf16, #tpu.memory_space<vmem>>, %arg5: memref<128x128xbf16, #tpu.memory_space<vmem>>, %arg6: memref<6x128x128xbf16, #tpu.memory_space<vmem>>, %arg7: memref<6x128xf32, #tpu.memory_space<vmem>>, %arg8: memref<128x128xbf16, #tpu.memory_space<vmem>>, %arg9: memref<128x128xbf16, #tpu.memory_space<vmem>>, %arg10: memref<128x128xbf16, #tpu.memory_space<vmem>>) attributes {dimension_semantics = [#tpu.dimension_semantics<parallel>], iteration_bounds = array<i64: 2>, scalar_prefetch = 0 : i64, scratch_operands = 0 : i64, tpu.core_type = #tpu.core_type<tc>, window_params = [{transform_indices = @transform_0, window_bounds = array<i64: 128, 128>}, {pipeline_mode = #tpu.pipeline_mode<synchronous>, transform_indices = @transform_1, window_bounds = array<i64: 256, 128>}, {pipeline_mode = #tpu.pipeline_mode<synchronous>, transform_indices = @transform_2, window_bounds = array<i64: 256, 128>}, {pipeline_mode = #tpu.pipeline_mode<synchronous>, transform_indices = @transform_3, window_bounds = array<i64: 128, 128>}, {pipeline_mode = #tpu.pipeline_mode<synchronous>, transform_indices = @transform_4, window_bounds = array<i64: 128, 128>}, {pipeline_mode = #tpu.pipeline_mode<synchronous>, transform_indices = @transform_5, window_bounds = array<i64: 6, 128, 128>}, {pipeline_mode = #tpu.pipeline_mode<synchronous>, transform_indices = @transform_6, window_bounds = array<i64: 6, 128>}, {pipeline_mode = #tpu.pipeline_mode<synchronous>, transform_indices = @transform_7, window_bounds = array<i64: 128, 128>}, {transform_indices = @transform_8, window_bounds = array<i64: 128, 128>}, {transform_indices = @transform_9, window_bounds = array<i64: 128, 128>}]} {
    %c0 = arith.constant 0 : index
    %c0_0 = arith.constant 0 : index
    %0 = vector.load %arg1[%c0, %c0_0] : memref<128x128xbf16, #tpu.memory_space<vmem>>, vector<128x128xbf16>
    %c0_1 = arith.constant 0 : index
    %c0_2 = arith.constant 0 : index
    %1 = vector.load %arg4[%c0_1, %c0_2] : memref<128x128xbf16, #tpu.memory_space<vmem>>, vector<128x128xbf16>
    %cst = arith.constant dense<0.000000e+00> : vector<128x128xf32>
    %2 = tpu.matmul %0, %1, %cst {dimension_numbers = #tpu.dot_dimension_numbers<[1], [0], [0], [1], [0, 0, 1, 1], [], []>} : vector<128x128xbf16>, vector<128x128xbf16>, vector<128x128xf32> -> vector<128x128xf32>
    %3 = arith.truncf %2 : vector<128x128xf32> to vector<128x128xbf16>
    %c0_3 = arith.constant 0 : index
    %c0_4 = arith.constant 0 : index
    %4 = vector.load %arg2[%c0_3, %c0_4] : memref<256x128xbf16, #tpu.memory_space<vmem>>, vector<256x128xbf16>
    %cst_5 = arith.constant dense<0.000000e+00> : vector<128x256xf32>
    %5 = tpu.matmul %3, %4, %cst_5 {dimension_numbers = #tpu.dot_dimension_numbers<[1], [1], [0], [0], [0, 0, 1, 0], [], []>} : vector<128x128xbf16>, vector<256x128xbf16>, vector<128x256xf32> -> vector<128x256xf32>
    %cst_6 = arith.constant 0.176776692 : f32
    %6 = vector.broadcast %cst_6 : f32 to vector<128x256xf32>
    %7 = arith.mulf %5, %6 : vector<128x256xf32>
    %cst_7 = arith.constant dense<0xFF800000> : vector<128xf32>
    %8 = vector.multi_reduction <maximumf>, %7, %cst_7 [1] : vector<128x256xf32> to vector<128xf32>
    %9 = vector.shape_cast %8 : vector<128xf32> to vector<128x1xf32>
    %10 = vector.broadcast %9 : vector<128x1xf32> to vector<128x256xf32>
    %11 = arith.subf %7, %10 : vector<128x256xf32>
    %12 = math.exp %11 : vector<128x256xf32>
    %cst_8 = arith.constant dense<0.000000e+00> : vector<128xf32>
    %13 = vector.multi_reduction <add>, %12, %cst_8 [1] : vector<128x256xf32> to vector<128xf32>
    %14 = vector.shape_cast %13 : vector<128xf32> to vector<128x1xf32>
    %15 = tpu.reciprocal %14 {approx = true} : vector<128x1xf32> -> vector<128x1xf32>
    %16 = vector.broadcast %15 : vector<128x1xf32> to vector<128x256xf32>
    %17 = arith.mulf %12, %16 : vector<128x256xf32>
    %18 = arith.truncf %17 : vector<128x256xf32> to vector<128x256xbf16>
    %c0_9 = arith.constant 0 : index
    %c0_10 = arith.constant 0 : index
    %19 = vector.load %arg3[%c0_9, %c0_10] : memref<256x128xbf16, #tpu.memory_space<vmem>>, vector<256x128xbf16>
    %cst_11 = arith.constant dense<0.000000e+00> : vector<128x128xf32>
    %20 = tpu.matmul %18, %19, %cst_11 {dimension_numbers = #tpu.dot_dimension_numbers<[1], [0], [0], [1], [0, 0, 1, 1], [], []>} : vector<128x256xbf16>, vector<256x128xbf16>, vector<128x128xf32> -> vector<128x128xf32>
    %21 = arith.truncf %20 : vector<128x128xf32> to vector<128x128xbf16>
    %c0_12 = arith.constant 0 : index
    %c0_13 = arith.constant 0 : index
    %22 = vector.load %arg5[%c0_12, %c0_13] : memref<128x128xbf16, #tpu.memory_space<vmem>>, vector<128x128xbf16>
    %cst_14 = arith.constant dense<0.000000e+00> : vector<128x128xf32>
    %23 = tpu.matmul %21, %22, %cst_14 {dimension_numbers = #tpu.dot_dimension_numbers<[1], [0], [0], [1], [0, 0, 1, 1], [], []>} : vector<128x128xbf16>, vector<128x128xbf16>, vector<128x128xf32> -> vector<128x128xf32>
    %24 = arith.extf %0 : vector<128x128xbf16> to vector<128x128xf32>
    %25 = arith.addf %24, %23 : vector<128x128xf32>
    %26 = arith.truncf %25 : vector<128x128xf32> to vector<128x128xbf16>
    %c0_15 = arith.constant 0 : index
    %c0_16 = arith.constant 0 : index
    %27 = vector.load %arg9[%c0_15, %c0_16] : memref<128x128xbf16, #tpu.memory_space<vmem>>, vector<128x128xbf16>
    tpu.vector_store %arg9[%c0_15, %c0_16], %26 {strides = array<i32>} : memref<128x128xbf16, #tpu.memory_space<vmem>>, vector<128x128xbf16>,
    %c0_17 = arith.constant 0 : index
    %c0_18 = arith.constant 0 : index
    %c0_19 = arith.constant 0 : index
    %28 = vector.load %arg6[%c0_17, %c0_18, %c0_19] : memref<6x128x128xbf16, #tpu.memory_space<vmem>>, vector<6x128x128xbf16>
    %c0_20 = arith.constant 0 : index
    %c0_21 = arith.constant 0 : index
    %29 = vector.load %arg7[%c0_20, %c0_21] : memref<6x128xf32, #tpu.memory_space<vmem>>, vector<6x128xf32>
    %30 = arith.truncf %25 : vector<128x128xf32> to vector<128x128xbf16>
    %31 = vector.extract_strided_slice %28 {offsets = [0, 0, 0], sizes = [1, 128, 128], strides = [1, 1, 1]} : vector<6x128x128xbf16> to vector<1x128x128xbf16>
    %32 = vector.shape_cast %31 : vector<1x128x128xbf16> to vector<128x128xbf16>
    %cst_22 = arith.constant dense<0.000000e+00> : vector<128x128xf32>
    %33 = tpu.matmul %30, %32, %cst_22 {dimension_numbers = #tpu.dot_dimension_numbers<[1], [0], [0], [1], [0, 0, 1, 1], [], []>} : vector<128x128xbf16>, vector<128x128xbf16>, vector<128x128xf32> -> vector<128x128xf32>
    %34 = vector.extract_strided_slice %29 {offsets = [0, 0], sizes = [1, 128], strides = [1, 1]} : vector<6x128xf32> to vector<1x128xf32>
    %35 = vector.shape_cast %34 : vector<1x128xf32> to vector<128xf32>
    %36 = vector.shape_cast %35 : vector<128xf32> to vector<1x128xf32>
    %37 = vector.broadcast %36 : vector<1x128xf32> to vector<128x128xf32>
    %38 = arith.addf %33, %37 : vector<128x128xf32>
    %cst_23 = arith.constant 0.000000e+00 : f32
    %39 = vector.broadcast %cst_23 : f32 to vector<128x128xf32>
    %40 = arith.maximumf %38, %39 : vector<128x128xf32>
    %41 = arith.truncf %40 : vector<128x128xf32> to vector<128x128xbf16>
    %42 = vector.extract_strided_slice %28 {offsets = [1, 0, 0], sizes = [1, 128, 128], strides = [1, 1, 1]} : vector<6x128x128xbf16> to vector<1x128x128xbf16>
    %43 = vector.shape_cast %42 : vector<1x128x128xbf16> to vector<128x128xbf16>
    %cst_24 = arith.constant dense<0.000000e+00> : vector<128x128xf32>
    %44 = tpu.matmul %41, %43, %cst_24 {dimension_numbers = #tpu.dot_dimension_numbers<[1], [0], [0], [1], [0, 0, 1, 1], [], []>} : vector<128x128xbf16>, vector<128x128xbf16>, vector<128x128xf32> -> vector<128x128xf32>
    %45 = vector.extract_strided_slice %29 {offsets = [1, 0], sizes = [1, 128], strides = [1, 1]} : vector<6x128xf32> to vector<1x128xf32>
    %46 = vector.shape_cast %45 : vector<1x128xf32> to vector<128xf32>
    %47 = vector.shape_cast %46 : vector<128xf32> to vector<1x128xf32>
    %48 = vector.broadcast %47 : vector<1x128xf32> to vector<128x128xf32>
    %49 = arith.addf %44, %48 : vector<128x128xf32>
    %cst_25 = arith.constant 0.000000e+00 : f32
    %50 = vector.broadcast %cst_25 : f32 to vector<128x128xf32>
    %51 = arith.maximumf %49, %50 : vector<128x128xf32>
    %52 = arith.truncf %51 : vector<128x128xf32> to vector<128x128xbf16>
    %53 = vector.extract_strided_slice %28 {offsets = [2, 0, 0], sizes = [1, 128, 128], strides = [1, 1, 1]} : vector<6x128x128xbf16> to vector<1x128x128xbf16>
    %54 = vector.shape_cast %53 : vector<1x128x128xbf16> to vector<128x128xbf16>
    %cst_26 = arith.constant dense<0.000000e+00> : vector<128x128xf32>
    %55 = tpu.matmul %52, %54, %cst_26 {dimension_numbers = #tpu.dot_dimension_numbers<[1], [0], [0], [1], [0, 0, 1, 1], [], []>} : vector<128x128xbf16>, vector<128x128xbf16>, vector<128x128xf32> -> vector<128x128xf32>
    %56 = vector.extract_strided_slice %29 {offsets = [2, 0], sizes = [1, 128], strides = [1, 1]} : vector<6x128xf32> to vector<1x128xf32>
    %57 = vector.shape_cast %56 : vector<1x128xf32> to vector<128xf32>
    %58 = vector.shape_cast %57 : vector<128xf32> to vector<1x128xf32>
    %59 = vector.broadcast %58 : vector<1x128xf32> to vector<128x128xf32>
    %60 = arith.addf %55, %59 : vector<128x128xf32>
    %cst_27 = arith.constant 0.000000e+00 : f32
    %61 = vector.broadcast %cst_27 : f32 to vector<128x128xf32>
    %62 = arith.maximumf %60, %61 : vector<128x128xf32>
    %63 = arith.truncf %62 : vector<128x128xf32> to vector<128x128xbf16>
    %64 = vector.extract_strided_slice %28 {offsets = [3, 0, 0], sizes = [1, 128, 128], strides = [1, 1, 1]} : vector<6x128x128xbf16> to vector<1x128x128xbf16>
    %65 = vector.shape_cast %64 : vector<1x128x128xbf16> to vector<128x128xbf16>
    %cst_28 = arith.constant dense<0.000000e+00> : vector<128x128xf32>
    %66 = tpu.matmul %63, %65, %cst_28 {dimension_numbers = #tpu.dot_dimension_numbers<[1], [0], [0], [1], [0, 0, 1, 1], [], []>} : vector<128x128xbf16>, vector<128x128xbf16>, vector<128x128xf32> -> vector<128x128xf32>
    %67 = vector.extract_strided_slice %29 {offsets = [3, 0], sizes = [1, 128], strides = [1, 1]} : vector<6x128xf32> to vector<1x128xf32>
    %68 = vector.shape_cast %67 : vector<1x128xf32> to vector<128xf32>
    %69 = vector.shape_cast %68 : vector<128xf32> to vector<1x128xf32>
    %70 = vector.broadcast %69 : vector<1x128xf32> to vector<128x128xf32>
    %71 = arith.addf %66, %70 : vector<128x128xf32>
    %cst_29 = arith.constant 0.000000e+00 : f32
    %72 = vector.broadcast %cst_29 : f32 to vector<128x128xf32>
    %73 = arith.maximumf %71, %72 : vector<128x128xf32>
    %74 = arith.truncf %73 : vector<128x128xf32> to vector<128x128xbf16>
    %75 = vector.extract_strided_slice %28 {offsets = [4, 0, 0], sizes = [1, 128, 128], strides = [1, 1, 1]} : vector<6x128x128xbf16> to vector<1x128x128xbf16>
    %76 = vector.shape_cast %75 : vector<1x128x128xbf16> to vector<128x128xbf16>
    %cst_30 = arith.constant dense<0.000000e+00> : vector<128x128xf32>
    %77 = tpu.matmul %74, %76, %cst_30 {dimension_numbers = #tpu.dot_dimension_numbers<[1], [0], [0], [1], [0, 0, 1, 1], [], []>} : vector<128x128xbf16>, vector<128x128xbf16>, vector<128x128xf32> -> vector<128x128xf32>
    %78 = vector.extract_strided_slice %29 {offsets = [4, 0], sizes = [1, 128], strides = [1, 1]} : vector<6x128xf32> to vector<1x128xf32>
    %79 = vector.shape_cast %78 : vector<1x128xf32> to vector<128xf32>
    %80 = vector.shape_cast %79 : vector<128xf32> to vector<1x128xf32>
    %81 = vector.broadcast %80 : vector<1x128xf32> to vector<128x128xf32>
    %82 = arith.addf %77, %81 : vector<128x128xf32>
    %cst_31 = arith.constant 0.000000e+00 : f32
    %83 = vector.broadcast %cst_31 : f32 to vector<128x128xf32>
    %84 = arith.maximumf %82, %83 : vector<128x128xf32>
    %85 = arith.truncf %84 : vector<128x128xf32> to vector<128x128xbf16>
    %86 = vector.extract_strided_slice %28 {offsets = [5, 0, 0], sizes = [1, 128, 128], strides = [1, 1, 1]} : vector<6x128x128xbf16> to vector<1x128x128xbf16>
    %87 = vector.shape_cast %86 : vector<1x128x128xbf16> to vector<128x128xbf16>
    %cst_32 = arith.constant dense<0.000000e+00> : vector<128x128xf32>
    %88 = tpu.matmul %85, %87, %cst_32 {dimension_numbers = #tpu.dot_dimension_numbers<[1], [0], [0], [1], [0, 0, 1, 1], [], []>} : vector<128x128xbf16>, vector<128x128xbf16>, vector<128x128xf32> -> vector<128x128xf32>
    %89 = vector.extract_strided_slice %29 {offsets = [5, 0], sizes = [1, 128], strides = [1, 1]} : vector<6x128xf32> to vector<1x128xf32>
    %90 = vector.shape_cast %89 : vector<1x128xf32> to vector<128xf32>
    %91 = vector.shape_cast %90 : vector<128xf32> to vector<1x128xf32>
    %92 = vector.broadcast %91 : vector<1x128xf32> to vector<128x128xf32>
    %93 = arith.addf %88, %92 : vector<128x128xf32>
    %cst_33 = arith.constant 0.000000e+00 : f32
    %94 = vector.broadcast %cst_33 : f32 to vector<128x128xf32>
    %95 = arith.maximumf %93, %94 : vector<128x128xf32>
    %96 = arith.truncf %95 : vector<128x128xf32> to vector<128x128xbf16>
    %c0_34 = arith.constant 0 : index
    %c0_35 = arith.constant 0 : index
    %97 = vector.load %arg8[%c0_34, %c0_35] : memref<128x128xbf16, #tpu.memory_space<vmem>>, vector<128x128xbf16>
    %cst_36 = arith.constant dense<0.000000e+00> : vector<128x128xf32>
    %98 = tpu.matmul %96, %97, %cst_36 {dimension_numbers = #tpu.dot_dimension_numbers<[1], [0], [0], [1], [0, 0, 1, 1], [], []>} : vector<128x128xbf16>, vector<128x128xbf16>, vector<128x128xf32> -> vector<128x128xf32>
    %99 = arith.truncf %98 : vector<128x128xf32> to vector<128x128xbf16>
    %c0_37 = arith.constant 0 : index
    %c0_38 = arith.constant 0 : index
    %100 = vector.load %arg10[%c0_37, %c0_38] : memref<128x128xbf16, #tpu.memory_space<vmem>>, vector<128x128xbf16>
    tpu.vector_store %arg10[%c0_37, %c0_38], %99 {strides = array<i32>} : memref<128x128xbf16, #tpu.memory_space<vmem>>, vector<128x128xbf16>,
    return
  }
  func.func @transform_0(%arg0: i32) -> (i32, i32) {
    %c0_i32 = arith.constant 0 : i32
    %c0_i32_0 = arith.constant 0 : i32
    return %arg0, %c0_i32 : i32, i32
  }
  func.func @transform_1(%arg0: i32) -> (i32, i32) {
    %c0_i32 = arith.constant 0 : i32
    %c0_i32_0 = arith.constant 0 : i32
    %c0_i32_1 = arith.constant 0 : i32
    return %c0_i32, %c0_i32_0 : i32, i32
  }
  func.func @transform_2(%arg0: i32) -> (i32, i32) {
    %c0_i32 = arith.constant 0 : i32
    %c0_i32_0 = arith.constant 0 : i32
    %c0_i32_1 = arith.constant 0 : i32
    return %c0_i32, %c0_i32_0 : i32, i32
  }
  func.func @transform_3(%arg0: i32) -> (i32, i32) {
    %c0_i32 = arith.constant 0 : i32
    %c0_i32_0 = arith.constant 0 : i32
    %c0_i32_1 = arith.constant 0 : i32
    return %c0_i32, %c0_i32_0 : i32, i32
  }
  func.func @transform_4(%arg0: i32) -> (i32, i32) {
    %c0_i32 = arith.constant 0 : i32
    %c0_i32_0 = arith.constant 0 : i32
    %c0_i32_1 = arith.constant 0 : i32
    return %c0_i32, %c0_i32_0 : i32, i32
  }
  func.func @transform_5(%arg0: i32) -> (i32, i32, i32) {
    %c0_i32 = arith.constant 0 : i32
    %c0_i32_0 = arith.constant 0 : i32
    %c0_i32_1 = arith.constant 0 : i32
    %c0_i32_2 = arith.constant 0 : i32
    return %c0_i32, %c0_i32_0, %c0_i32_1 : i32, i32, i32
  }
  func.func @transform_6(%arg0: i32) -> (i32, i32) {
    %c0_i32 = arith.constant 0 : i32
    %c0_i32_0 = arith.constant 0 : i32
    %c0_i32_1 = arith.constant 0 : i32
    return %c0_i32, %c0_i32_0 : i32, i32
  }
  func.func @transform_7(%arg0: i32) -> (i32, i32) {
    %c0_i32 = arith.constant 0 : i32
    %c0_i32_0 = arith.constant 0 : i32
    %c0_i32_1 = arith.constant 0 : i32
    return %c0_i32, %c0_i32_0 : i32, i32
  }
  func.func @transform_8(%arg0: i32) -> (i32, i32) {
    %c0_i32 = arith.constant 0 : i32
    %c0_i32_0 = arith.constant 0 : i32
    return %arg0, %c0_i32 : i32, i32
  }
  func.func @transform_9(%arg0: i32) -> (i32, i32) {
    %c0_i32 = arith.constant 0 : i32
    %c0_i32_0 = arith.constant 0 : i32
    return %arg0, %c0_i32 : i32, i32
  }
}

module attributes {stable_mosaic.version = 11 : i64} {
  func.func @_stage4_kernel(%arg0: i32, %arg1: memref<128x256xbf16, #tpu.memory_space<vmem>>, %arg2: memref<256x128xbf16, #tpu.memory_space<vmem>>, %arg3: memref<128x128xbf16, #tpu.memory_space<vmem>>, %arg4: memref<128x128xbf16, #tpu.memory_space<vmem>>) attributes {dimension_semantics = [#tpu.dimension_semantics<parallel>], iteration_bounds = array<i64: 2>, scalar_prefetch = 0 : i64, scratch_operands = 0 : i64, tpu.core_type = #tpu.core_type<tc>, window_params = [{transform_indices = @transform_0, window_bounds = array<i64: 128, 256>}, {pipeline_mode = #tpu.pipeline_mode<synchronous>, transform_indices = @transform_1, window_bounds = array<i64: 256, 128>}, {pipeline_mode = #tpu.pipeline_mode<synchronous>, transform_indices = @transform_2, window_bounds = array<i64: 128, 128>}, {transform_indices = @transform_3, window_bounds = array<i64: 128, 128>}]} {
    %c0 = arith.constant 0 : index
    %c0_0 = arith.constant 0 : index
    %0 = vector.load %arg1[%c0, %c0_0] : memref<128x256xbf16, #tpu.memory_space<vmem>>, vector<128x256xbf16>
    %c0_1 = arith.constant 0 : index
    %c0_2 = arith.constant 0 : index
    %1 = vector.load %arg2[%c0_1, %c0_2] : memref<256x128xbf16, #tpu.memory_space<vmem>>, vector<256x128xbf16>
    %cst = arith.constant dense<0.000000e+00> : vector<128x128xf32>
    %2 = tpu.matmul %0, %1, %cst {dimension_numbers = #tpu.dot_dimension_numbers<[1], [0], [0], [1], [0, 0, 1, 1], [], []>} : vector<128x256xbf16>, vector<256x128xbf16>, vector<128x128xf32> -> vector<128x128xf32>
    %cst_3 = arith.constant 0.000000e+00 : f32
    %3 = vector.broadcast %cst_3 : f32 to vector<128x128xf32>
    %4 = arith.maximumf %2, %3 : vector<128x128xf32>
    %5 = arith.truncf %4 : vector<128x128xf32> to vector<128x128xbf16>
    %c0_4 = arith.constant 0 : index
    %c0_5 = arith.constant 0 : index
    %6 = vector.load %arg3[%c0_4, %c0_5] : memref<128x128xbf16, #tpu.memory_space<vmem>>, vector<128x128xbf16>
    %cst_6 = arith.constant dense<0.000000e+00> : vector<128x128xf32>
    %7 = tpu.matmul %5, %6, %cst_6 {dimension_numbers = #tpu.dot_dimension_numbers<[1], [0], [0], [1], [0, 0, 1, 1], [], []>} : vector<128x128xbf16>, vector<128x128xbf16>, vector<128x128xf32> -> vector<128x128xf32>
    %8 = arith.truncf %7 : vector<128x128xf32> to vector<128x128xbf16>
    %c0_7 = arith.constant 0 : index
    %c0_8 = arith.constant 0 : index
    %9 = vector.load %arg4[%c0_7, %c0_8] : memref<128x128xbf16, #tpu.memory_space<vmem>>, vector<128x128xbf16>
    tpu.vector_store %arg4[%c0_7, %c0_8], %8 {strides = array<i32>} : memref<128x128xbf16, #tpu.memory_space<vmem>>, vector<128x128xbf16>,
    return
  }
  func.func @transform_0(%arg0: i32) -> (i32, i32) {
    %c0_i32 = arith.constant 0 : i32
    %c0_i32_0 = arith.constant 0 : i32
    return %arg0, %c0_i32 : i32, i32
  }
  func.func @transform_1(%arg0: i32) -> (i32, i32) {
    %c0_i32 = arith.constant 0 : i32
    %c0_i32_0 = arith.constant 0 : i32
    %c0_i32_1 = arith.constant 0 : i32
    return %c0_i32, %c0_i32_0 : i32, i32
  }
  func.func @transform_2(%arg0: i32) -> (i32, i32) {
    %c0_i32 = arith.constant 0 : i32
    %c0_i32_0 = arith.constant 0 : i32
    %c0_i32_1 = arith.constant 0 : i32
    return %c0_i32, %c0_i32_0 : i32, i32
  }
  func.func @transform_3(%arg0: i32) -> (i32, i32) {
    %c0_i32 = arith.constant 0 : i32
    %c0_i32_0 = arith.constant 0 : i32
    return %arg0, %c0_i32 : i32, i32
  }
}

module attributes {stable_mosaic.version = 11 : i64} {
  func.func @_stage5_kernel(%arg0: i32, %arg1: memref<128x256xbf16, #tpu.memory_space<vmem>>, %arg2: memref<256x128xbf16, #tpu.memory_space<vmem>>, %arg3: memref<128x128xbf16, #tpu.memory_space<vmem>>, %arg4: memref<256x128xbf16, #tpu.memory_space<vmem>>, %arg5: memref<128x128xf32, #tpu.memory_space<vmem>>, %arg6: memref<128x256xf32, #tpu.memory_space<vmem>>) attributes {dimension_semantics = [#tpu.dimension_semantics<parallel>], iteration_bounds = array<i64: 2>, scalar_prefetch = 0 : i64, scratch_operands = 0 : i64, tpu.core_type = #tpu.core_type<tc>, window_params = [{transform_indices = @transform_0, window_bounds = array<i64: 128, 256>}, {pipeline_mode = #tpu.pipeline_mode<synchronous>, transform_indices = @transform_1, window_bounds = array<i64: 256, 128>}, {transform_indices = @transform_2, window_bounds = array<i64: 128, 128>}, {pipeline_mode = #tpu.pipeline_mode<synchronous>, transform_indices = @transform_3, window_bounds = array<i64: 256, 128>}, {transform_indices = @transform_4, window_bounds = array<i64: 128, 128>}, {transform_indices = @transform_5, window_bounds = array<i64: 128, 256>}]} {
    %c0 = arith.constant 0 : index
    %c0_0 = arith.constant 0 : index
    %0 = vector.load %arg3[%c0, %c0_0] : memref<128x128xbf16, #tpu.memory_space<vmem>>, vector<128x128xbf16>
    %c0_1 = arith.constant 0 : index
    %c0_2 = arith.constant 0 : index
    %1 = vector.load %arg4[%c0_1, %c0_2] : memref<256x128xbf16, #tpu.memory_space<vmem>>, vector<256x128xbf16>
    %cst = arith.constant dense<0.000000e+00> : vector<128x256xf32>
    %2 = tpu.matmul %0, %1, %cst {dimension_numbers = #tpu.dot_dimension_numbers<[1], [1], [0], [0], [0, 0, 1, 0], [], []>} : vector<128x128xbf16>, vector<256x128xbf16>, vector<128x256xf32> -> vector<128x256xf32>
    %cst_3 = arith.constant 0.000000e+00 : f32
    %3 = vector.broadcast %cst_3 : f32 to vector<128x256xf32>
    %4 = arith.subf %3, %2 : vector<128x256xf32>
    %5 = math.exp %4 : vector<128x256xf32>
    %cst_4 = arith.constant 1.000000e+00 : f32
    %6 = vector.broadcast %cst_4 : f32 to vector<128x256xf32>
    %7 = arith.addf %6, %5 : vector<128x256xf32>
    %8 = tpu.reciprocal %7 {approx = true} : vector<128x256xf32> -> vector<128x256xf32>
    %c0_5 = arith.constant 0 : index
    %c0_6 = arith.constant 0 : index
    %9 = vector.load %arg6[%c0_5, %c0_6] : memref<128x256xf32, #tpu.memory_space<vmem>>, vector<128x256xf32>
    tpu.vector_store %arg6[%c0_5, %c0_6], %8 {strides = array<i32>} : memref<128x256xf32, #tpu.memory_space<vmem>>, vector<128x256xf32>,
    %c0_7 = arith.constant 0 : index
    %c0_8 = arith.constant 0 : index
    %10 = vector.load %arg1[%c0_7, %c0_8] : memref<128x256xbf16, #tpu.memory_space<vmem>>, vector<128x256xbf16>
    %c0_9 = arith.constant 0 : index
    %c0_10 = arith.constant 0 : index
    %11 = vector.load %arg2[%c0_9, %c0_10] : memref<256x128xbf16, #tpu.memory_space<vmem>>, vector<256x128xbf16>
    %cst_11 = arith.constant dense<0.000000e+00> : vector<128x128xf32>
    %12 = tpu.matmul %10, %11, %cst_11 {dimension_numbers = #tpu.dot_dimension_numbers<[1], [0], [0], [1], [0, 0, 1, 1], [], []>} : vector<128x256xbf16>, vector<256x128xbf16>, vector<128x128xf32> -> vector<128x128xf32>
    %13 = tpu.iota {dimensions = array<i32: 1>} : vector<128x128xi32>
    %c8_i32 = arith.constant 8 : i32
    %14 = vector.broadcast %c8_i32 : i32 to vector<128x128xi32>
    %15 = arith.cmpi slt, %13, %14 : vector<128x128xi32>
    %cst_12 = arith.constant 0xFF800000 : f32
    %16 = vector.broadcast %cst_12 : f32 to vector<128x128xf32>
    %17 = arith.select %15, %12, %16 : vector<128x128xi1>, vector<128x128xf32>
    %cst_13 = arith.constant dense<0xFF800000> : vector<128xf32>
    %18 = vector.multi_reduction <maximumf>, %17, %cst_13 [1] : vector<128x128xf32> to vector<128xf32>
    %19 = vector.shape_cast %18 : vector<128xf32> to vector<128x1xf32>
    %20 = vector.broadcast %19 : vector<128x1xf32> to vector<128x128xf32>
    %21 = arith.subf %17, %20 : vector<128x128xf32>
    %22 = math.exp %21 : vector<128x128xf32>
    %cst_14 = arith.constant 0.000000e+00 : f32
    %23 = vector.broadcast %cst_14 : f32 to vector<128x128xf32>
    %24 = arith.select %15, %22, %23 : vector<128x128xi1>, vector<128x128xf32>
    %cst_15 = arith.constant dense<0.000000e+00> : vector<128xf32>
    %25 = vector.multi_reduction <add>, %24, %cst_15 [1] : vector<128x128xf32> to vector<128xf32>
    %26 = vector.shape_cast %25 : vector<128xf32> to vector<128x1xf32>
    %27 = tpu.reciprocal %26 {approx = true} : vector<128x1xf32> -> vector<128x1xf32>
    %28 = vector.broadcast %27 : vector<128x1xf32> to vector<128x128xf32>
    %29 = arith.mulf %24, %28 : vector<128x128xf32>
    %c0_16 = arith.constant 0 : index
    %c0_17 = arith.constant 0 : index
    %30 = vector.load %arg5[%c0_16, %c0_17] : memref<128x128xf32, #tpu.memory_space<vmem>>, vector<128x128xf32>
    tpu.vector_store %arg5[%c0_16, %c0_17], %29 {strides = array<i32>} : memref<128x128xf32, #tpu.memory_space<vmem>>, vector<128x128xf32>,
    return
  }
  func.func @transform_0(%arg0: i32) -> (i32, i32) {
    %c0_i32 = arith.constant 0 : i32
    %c0_i32_0 = arith.constant 0 : i32
    return %arg0, %c0_i32 : i32, i32
  }
  func.func @transform_1(%arg0: i32) -> (i32, i32) {
    %c0_i32 = arith.constant 0 : i32
    %c0_i32_0 = arith.constant 0 : i32
    %c0_i32_1 = arith.constant 0 : i32
    return %c0_i32, %c0_i32_0 : i32, i32
  }
  func.func @transform_2(%arg0: i32) -> (i32, i32) {
    %c0_i32 = arith.constant 0 : i32
    %c0_i32_0 = arith.constant 0 : i32
    return %arg0, %c0_i32 : i32, i32
  }
  func.func @transform_3(%arg0: i32) -> (i32, i32) {
    %c0_i32 = arith.constant 0 : i32
    %c0_i32_0 = arith.constant 0 : i32
    %c0_i32_1 = arith.constant 0 : i32
    return %c0_i32, %c0_i32_0 : i32, i32
  }
  func.func @transform_4(%arg0: i32) -> (i32, i32) {
    %c0_i32 = arith.constant 0 : i32
    %c0_i32_0 = arith.constant 0 : i32
    return %arg0, %c0_i32 : i32, i32
  }
  func.func @transform_5(%arg0: i32) -> (i32, i32) {
    %c0_i32 = arith.constant 0 : i32
    %c0_i32_0 = arith.constant 0 : i32
    return %arg0, %c0_i32 : i32, i32
  }
}

</mosaic_0001>

<llo_original>
// kernel: densenet6_forward.8
$region0: #{densenet6_forward.8}
  #allocation0 [shape = 'u32[]', space=smem, size = 0x4, offset = 0x4, fixed_abs, tag = 'smem constant byte address 0x4 - core index']
  #allocation1 [shape = 'u32[144,128]{1,0:T(1,128)}', space=vmem, size = 0x12000, scoped, tag = 'internal scratch']
  %s0 = inlined_call_operand.vmem [shape: bf16[256,256], index: 0, kind: input, shape index: {}]
  %s1 = inlined_call_operand.vmem [shape: bf16[256,128], index: 1, kind: input, shape index: {}]
  %s2 = inlined_call_operand.vmem [shape: bf16[128,128], index: 2, kind: input, shape index: {}]
  %s3 = inlined_call_operand.vmem [shape: bf16[256,128], index: 3, kind: output, shape index: {}]
  %s4 = sld [smem:[#allocation0]]
  $region45: #{densenet6_forward.8} parent=0
    _
  %s6 = ssub.s32 1, %s4
  %s7 = scalar_select 0, %s6, %s4
  loop: start=0, step=1, limit=4
  $region2: #{densenet6_forward.8} parent=0 // loop_pre_header
    _
  $region3: #{densenet6_forward.8} parent=0 // loop_header
    %s9 = sphi 0, %s13
    %p10 = scmp.ge.s32.totalorder %s9, 4
    %s19 = sphi 0, %s21
    %s22 = sphi 0, %s19
    %s23 = sphi 0, %s22
    %s39 = sphi 0, %s23
    %s43 = sphi 0, %s43
    %s45 = sphi 0, %s43
    %s46 = sphi 0, %s45
    %s60 = sphi 0, %s46
    %s64 = sphi 0, %s64
    %s66 = sphi 0, %s64
    %s67 = sphi 0, %s66
    %s81 = sphi 0, %s67
    %s87 = sphi 0, %s89
    %s90 = sphi 0, %s87
    %s91 = sphi 0, %s90
    %s107 = sphi 0, %s91
  $region4: #{densenet6_forward.8} parent=0 // loop_header_branch
    %12 = sbr.rel (%p10) target = $region8
  $region5: #{densenet6_forward.8} parent=0 // loop_body
    %s14 = ssub.s32 %s9, 1
    %s15 = ssub.s32 %s9, 2
    %s16 = sadd.s32 %s9, 1
    %s17 = ssub.s32 %s9, %s16
    %p18 = scmp.eq.s32.totalorder %s17, 0
    %s20 = sadd.s32 %s19, 1
    %s21 = scalar_select %p18, %s19, %s20
    %p24 = pneg %p18
    %p25 = scmp.eq.s32.totalorder %s9, 1
    %p26 = por %p24, %p25
    %p27 = scmp.ne.s32.totalorder %s19, %s22
    %p28 = scmp.eq.s32.totalorder %s9, 0
    %p29 = por %p27, %p28
    %p30 = scmp.ne.s32.totalorder %s19, %s22
    %p31 = scmp.eq.s32.totalorder %s14, 1
    %p32 = por %p30, %p31
    %p33 = scmp.ne.s32.totalorder %s22, %s23
    %p34 = scmp.eq.s32.totalorder %s14, 0
    %p35 = por %p33, %p34
    %p36 = scmp.ne.s32.totalorder %s22, %s23
    %p37 = scmp.eq.s32.totalorder %s15, 1
    %p38 = por %p36, %p37
    %p40 = scmp.ne.s32.totalorder %s23, %s39
    %p41 = scmp.eq.s32.totalorder %s15, 0
    %p42 = por %p40, %p41
    %s44 = sadd.s32 %s43, 1
    %p47 = scmp.eq.s32.totalorder %s9, 1
    %p48 = scmp.ne.s32.totalorder %s43, %s45
    %p49 = scmp.eq.s32.totalorder %s9, 0
    %p50 = por %p48, %p49
    %p51 = scmp.ne.s32.totalorder %s43, %s45
    %p52 = scmp.eq.s32.totalorder %s14, 1
    %p53 = por %p51, %p52
    %p54 = scmp.ne.s32.totalorder %s45, %s46
    %p55 = scmp.eq.s32.totalorder %s14, 0
    %p56 = por %p54, %p55
    %p57 = scmp.ne.s32.totalorder %s45, %s46
    %p58 = scmp.eq.s32.totalorder %s15, 1
    %p59 = por %p57, %p58
    %p61 = scmp.ne.s32.totalorder %s46, %s60
    %p62 = scmp.eq.s32.totalorder %s15, 0
    %p63 = por %p61, %p62
    %s65 = sadd.s32 %s64, 1
    %p68 = scmp.eq.s32.totalorder %s9, 1
    %p69 = scmp.ne.s32.totalorder %s64, %s66
    %p70 = scmp.eq.s32.totalorder %s9, 0
    %p71 = por %p69, %p70
    %p72 = scmp.ne.s32.totalorder %s64, %s66
    %p73 = scmp.eq.s32.totalorder %s14, 1
    %p74 = por %p72, %p73
    %p75 = scmp.ne.s32.totalorder %s66, %s67
    %p76 = scmp.eq.s32.totalorder %s14, 0
    %p77 = por %p75, %p76
    %p78 = scmp.ne.s32.totalorder %s66, %s67
    %p79 = scmp.eq.s32.totalorder %s15, 1
    %p80 = por %p78, %p79
    %p82 = scmp.ne.s32.totalorder %s67, %s81
    %p83 = scmp.eq.s32.totalorder %s15, 0
    %p84 = por %p82, %p83
    %s85 = ssub.s32 %s9, %s16
    %p86 = scmp.eq.s32.totalorder %s85, 0
    %s88 = sadd.s32 %s87, 1
    %s89 = scalar_select %p86, %s87, %s88
    %p92 = pneg %p86
    %p93 = scmp.eq.s32.totalorder %s9, 1
    %p94 = por %p92, %p93
    %p95 = scmp.ne.s32.totalorder %s87, %s90
    %p96 = scmp.eq.s32.totalorder %s9, 0
    %p97 = por %p95, %p96
    %p98 = scmp.ne.s32.totalorder %s87, %s90
    %p99 = scmp.eq.s32.totalorder %s14, 1
    %p100 = por %p98, %p99
    %p101 = scmp.ne.s32.totalorder %s90, %s91
    %p102 = scmp.eq.s32.totalorder %s14, 0
    %p103 = por %p101, %p102
    %p104 = scmp.ne.s32.totalorder %s90, %s91
    %p105 = scmp.eq.s32.totalorder %s15, 1
    %p106 = por %p104, %p105
    %p108 = scmp.ne.s32.totalorder %s91, %s107
    %p109 = scmp.eq.s32.totalorder %s15, 0
    %p110 = por %p108, %p109
    %p111 = scmp.le.s32.totalorder 1, %s9
    %p112 = scmp.lt.s32.totalorder %s9, 3
    %p113 = pnand %p111, %p112
    %p114 = pneg %p113
    // Predicated region
    $region9: #{densenet6_forward.8} parent=5 // pred_check
      _
    $region10: #{densenet6_forward.8} parent=5 // pred_check_branch
      %116 = sbr.rel (%p113) target = $region12
    $region11: #{densenet6_forward.8} parent=5 // pred_region
      %s117 = ssub.s32 %s9, 1
      // Predicated region
      $region13: #{densenet6_forward.8} parent=11 // pred_check
        %p118 = pneg %p56
      $region14: #{densenet6_forward.8} parent=11 // pred_check_branch
        %120 = sbr.rel (%p118) target = $region16
      $region15: #{densenet6_forward.8} parent=11 // pred_region
        _
      $region16: #{densenet6_forward.8} parent=11 // pred_fallthru
        _
      // Predicated region
      $region17: #{densenet6_forward.8} parent=11 // pred_check
        %p121 = pneg %p77
      $region18: #{densenet6_forward.8} parent=11 // pred_check_branch
        %123 = sbr.rel (%p121) target = $region20
      $region19: #{densenet6_forward.8} parent=11 // pred_region
        _
      $region20: #{densenet6_forward.8} parent=11 // pred_fallthru
        _
    $region12: #{densenet6_forward.8} parent=5 // pred_fallthru
      _
    %p124 = scmp.lt.s32.totalorder %s9, 2
    // Predicated region
    $region21: #{densenet6_forward.8} parent=5 // pred_check
      %p125 = pneg %p124
    $region22: #{densenet6_forward.8} parent=5 // pred_check_branch
      %127 = sbr.rel (%p125) target = $region24
    $region23: #{densenet6_forward.8} parent=5 // pred_region
      // Predicated region
      $region25: #{densenet6_forward.8} parent=23 // pred_check
        %p128 = pneg %p29
      $region26: #{densenet6_forward.8} parent=23 // pred_check_branch
        %130 = sbr.rel (%p128) target = $region28
      $region27: #{densenet6_forward.8} parent=23 // pred_region
        %s131 = smul.u32 16, %s9
        %p132 = scmp.lt.s32.totalorder %s131, 31
        %s133 = scalar_select %p132, %s131, 31
        %s134 = smul.addr %s133, 2
        %s135 = smul.addr %s134, 4
        %s136 = scalar_lea.vmem %s0, %s135
        %s137 = smul.u32 16, %s9
      $region28: #{densenet6_forward.8} parent=23 // pred_fallthru
        _
    $region24: #{densenet6_forward.8} parent=5 // pred_fallthru
      _
    %p138 = scmp.le.s32.totalorder 1, %s9
    %p139 = scmp.lt.s32.totalorder %s9, 3
    %p140 = pnand %p138, %p139
    %p141 = pneg %p140
    // Predicated region
    $region29: #{densenet6_forward.8} parent=5 // pred_check
      _
    $region30: #{densenet6_forward.8} parent=5 // pred_check_branch
      %143 = sbr.rel (%p140) target = $region32
    $region31: #{densenet6_forward.8} parent=5 // pred_region
      %s144 = ssub.s32 %s9, 1
      %s145 = smul.u32 16, %s14
      %p146 = scmp.lt.s32.totalorder %s145, 31
      %s147 = scalar_select %p146, %s145, 31
      %s148 = smul.addr %s147, 2
      %s149 = smul.addr %s148, 4
      %s150 = scalar_lea.vmem %s0, %s149
      %p151 = pneg %p35
      %p152 = pneg %p32
      %p153 = pneg %p56
      %p154 = pneg %p53
      %p155 = pneg %p77
      %p156 = pneg %p74
      %p157 = pneg %p103
      %p158 = pneg %p100
      %s159 = smul.u32 16, %s14
      %p160 = scmp.lt.s32.totalorder %s159, 31
      %s161 = scalar_select %p160, %s159, 31
      %s162 = smul.addr %s161, 4
      %s163 = scalar_lea.vmem %s3, %s162
      %s164 = smul.u32 16, %s14
      %p165 = scmp.lt.s32.totalorder %s164, 31
      %s166 = scalar_select %p165, %s164, 31
      %s167 = smul.addr %s166, 2
      %s168 = smul.addr %s167, 4
      %s169 = scalar_lea.vmem %s0, %s168
      %s170 = smul.u32 16, %s14
      %s171 = smul.u32 16, %s14
      %p172 = scmp.lt.s32.totalorder %s171, 31
      %s173 = scalar_select %p172, %s171, 31
      %s174 = smul.addr %s173, 4
      %s175 = scalar_lea.vmem %s3, %s174
      %s176 = smul.u32 16, %s14
      %v178 = vld [vmem:[%s169] sm:$0xff]
      %v179 = vld [vmem:[%s169 + $0x8] sm:$0xff]
      %v180 = vld [vmem:[%s169 + $0x10] sm:$0xff]
      %v181 = vld [vmem:[%s169 + $0x18] sm:$0xff]
      %v182 = vld [vmem:[%s169 + $0x20] sm:$0xff]
      %v183 = vld [vmem:[%s169 + $0x28] sm:$0xff]
      %v184 = vld [vmem:[%s169 + $0x30] sm:$0xff]
      %v185 = vld [vmem:[%s169 + $0x38] sm:$0xff]
      %v186 = vld [vmem:[%s169 + $0x40] sm:$0xff]
      %v187 = vld [vmem:[%s169 + $0x48] sm:$0xff]
      %v188 = vld [vmem:[%s169 + $0x50] sm:$0xff]
      %v189 = vld [vmem:[%s169 + $0x58] sm:$0xff]
      %v190 = vld [vmem:[%s169 + $0x60] sm:$0xff]
      %v191 = vld [vmem:[%s169 + $0x68] sm:$0xff]
      %v192 = vld [vmem:[%s169 + $0x70] sm:$0xff]
      %v193 = vld [vmem:[%s169 + $0x78] sm:$0xff]
      %v194 = vld [vmem:[%s1] sm:$0xf]
      %v195 = vld [vmem:[%s1 + $0x4] sm:$0xf]
      %v196 = vld [vmem:[%s1 + $0x8] sm:$0xf]
      %v197 = vld [vmem:[%s1 + $0xc] sm:$0xf]
      %v198 = vld [vmem:[%s1 + $0x10] sm:$0xf]
      %v199 = vld [vmem:[%s1 + $0x14] sm:$0xf]
      %v200 = vld [vmem:[%s1 + $0x18] sm:$0xf]
      %v201 = vld [vmem:[%s1 + $0x1c] sm:$0xf]
      %v202 = vld [vmem:[%s1 + $0x20] sm:$0xf]
      %v203 = vld [vmem:[%s1 + $0x24] sm:$0xf]
      %v204 = vld [vmem:[%s1 + $0x28] sm:$0xf]
      %v205 = vld [vmem:[%s1 + $0x2c] sm:$0xf]
      %v206 = vld [vmem:[%s1 + $0x30] sm:$0xf]
      %v207 = vld [vmem:[%s1 + $0x34] sm:$0xf]
      %v208 = vld [vmem:[%s1 + $0x38] sm:$0xf]
      %v209 = vld [vmem:[%s1 + $0x3c] sm:$0xf]
      %v210 = vld [vmem:[%s1 + $0x40] sm:$0xf]
      %v211 = vld [vmem:[%s1 + $0x44] sm:$0xf]
      %v212 = vld [vmem:[%s1 + $0x48] sm:$0xf]
      %v213 = vld [vmem:[%s1 + $0x4c] sm:$0xf]
      %v214 = vld [vmem:[%s1 + $0x50] sm:$0xf]
      %v215 = vld [vmem:[%s1 + $0x54] sm:$0xf]
      %v216 = vld [vmem:[%s1 + $0x58] sm:$0xf]
      %v217 = vld [vmem:[%s1 + $0x5c] sm:$0xf]
      %v218 = vld [vmem:[%s1 + $0x60] sm:$0xf]
      %v219 = vld [vmem:[%s1 + $0x64] sm:$0xf]
      %v220 = vld [vmem:[%s1 + $0x68] sm:$0xf]
      %v221 = vld [vmem:[%s1 + $0x6c] sm:$0xf]
      %v222 = vld [vmem:[%s1 + $0x70] sm:$0xf]
      %v223 = vld [vmem:[%s1 + $0x74] sm:$0xf]
      %v224 = vld [vmem:[%s1 + $0x78] sm:$0xf]
      %v225 = vld [vmem:[%s1 + $0x7c] sm:$0xf]
      %v242 = vunpack.c.l.b16 %v178
      %v243 = vunpack.c.h.b16 %v178
      %v244 = vunpack.c.l.b16 %v179
      %v245 = vunpack.c.h.b16 %v179
      %v246 = vunpack.c.l.b16 %v180
      %v247 = vunpack.c.h.b16 %v180
      %v248 = vunpack.c.l.b16 %v181
      %v249 = vunpack.c.h.b16 %v181
      %v250 = vunpack.c.l.b16 %v182
      %v251 = vunpack.c.h.b16 %v182
      %v252 = vunpack.c.l.b16 %v183
      %v253 = vunpack.c.h.b16 %v183
      %v254 = vunpack.c.l.b16 %v184
      %v255 = vunpack.c.h.b16 %v184
      %v256 = vunpack.c.l.b16 %v185
      %v257 = vunpack.c.h.b16 %v185
      %v258 = vunpack.c.l.b16 %v186
      %v259 = vunpack.c.h.b16 %v186
      %v260 = vunpack.c.l.b16 %v187
      %v261 = vunpack.c.h.b16 %v187
      %v262 = vunpack.c.l.b16 %v188
      %v263 = vunpack.c.h.b16 %v188
      %v264 = vunpack.c.l.b16 %v189
      %v265 = vunpack.c.h.b16 %v189
      %v266 = vunpack.c.l.b16 %v190
      %v267 = vunpack.c.h.b16 %v190
      %v268 = vunpack.c.l.b16 %v191
      %v269 = vunpack.c.h.b16 %v191
      %v270 = vunpack.c.l.b16 %v192
      %v271 = vunpack.c.h.b16 %v192
      %v272 = vunpack.c.l.b16 %v193
      %v273 = vunpack.c.h.b16 %v193
      %v274 = vpack.c.b16 %v244, %v242
      %v275 = vpack.c.b16 %v245, %v243
      %v276 = vpack.c.b16 %v248, %v246
      %v277 = vpack.c.b16 %v249, %v247
      %v278 = vpack.c.b16 %v252, %v250
      %v279 = vpack.c.b16 %v253, %v251
      %v280 = vpack.c.b16 %v256, %v254
      %v281 = vpack.c.b16 %v257, %v255
      %v282 = vpack.c.b16 %v260, %v258
      %v283 = vpack.c.b16 %v261, %v259
      %v284 = vpack.c.b16 %v264, %v262
      %v285 = vpack.c.b16 %v265, %v263
      %v286 = vpack.c.b16 %v268, %v266
      %v287 = vpack.c.b16 %v269, %v267
      %v288 = vpack.c.b16 %v272, %v270
      %v289 = vpack.c.b16 %v273, %v271
      %v338 = vunpack.c.l.b16 %v194
      %v339 = vunpack.c.l.b16 %v195
      %v340 = vunpack.c.l.b16 %v196
      %v341 = vunpack.c.l.b16 %v197
      %v342 = vunpack.c.l.b16 %v198
      %v343 = vunpack.c.l.b16 %v199
      %v344 = vunpack.c.l.b16 %v200
      %v345 = vunpack.c.l.b16 %v201
      %v346 = vunpack.c.l.b16 %v202
      %v347 = vunpack.c.l.b16 %v203
      %v348 = vunpack.c.l.b16 %v204
      %v349 = vunpack.c.l.b16 %v205
      %v350 = vunpack.c.l.b16 %v206
      %v351 = vunpack.c.l.b16 %v207
      %v352 = vunpack.c.l.b16 %v208
      %v353 = vunpack.c.l.b16 %v209
      %v354 = vunpack.c.l.b16 %v210
      %v355 = vunpack.c.l.b16 %v211
      %v356 = vunpack.c.l.b16 %v212
      %v357 = vunpack.c.l.b16 %v213
      %v358 = vunpack.c.l.b16 %v214
      %v359 = vunpack.c.l.b16 %v215
      %v360 = vunpack.c.l.b16 %v216
      %v361 = vunpack.c.l.b16 %v217
      %v362 = vunpack.c.l.b16 %v218
      %v363 = vunpack.c.l.b16 %v219
      %v364 = vunpack.c.l.b16 %v220
      %v365 = vunpack.c.l.b16 %v221
      %v366 = vunpack.c.l.b16 %v222
      %v367 = vunpack.c.l.b16 %v223
      %v368 = vunpack.c.l.b16 %v224
      %v369 = vunpack.c.l.b16 %v225
      %v370 = vpack.c.b16 %v339, %v338
      %v371 = vpack.c.b16 %v341, %v340
      %v372 = vpack.c.b16 %v343, %v342
      %v373 = vpack.c.b16 %v345, %v344
      %v374 = vpack.c.b16 %v347, %v346
      %v375 = vpack.c.b16 %v349, %v348
      %v376 = vpack.c.b16 %v351, %v350
      %v377 = vpack.c.b16 %v353, %v352
      %v378 = vpack.c.b16 %v355, %v354
      %v379 = vpack.c.b16 %v357, %v356
      %v380 = vpack.c.b16 %v359, %v358
      %v381 = vpack.c.b16 %v361, %v360
      %v382 = vpack.c.b16 %v363, %v362
      %v383 = vpack.c.b16 %v365, %v364
      %v384 = vpack.c.b16 %v367, %v366
      %v385 = vpack.c.b16 %v369, %v368
      %402 = vmatprep.subr.bf16.mxu0 0
      %403 = vmatpush1.bf16.msra.mxu0 %v377
      %404 = vmatprep.subr.bf16.mxu0 0
      %405 = vmatpush1.bf16.msra.mxu0 %v376
      %406 = vmatprep.subr.bf16.mxu0 0
      %407 = vmatpush1.bf16.msra.mxu0 %v375
      %408 = vmatprep.subr.bf16.mxu0 0
      %409 = vmatpush1.bf16.msra.mxu0 %v374
      %410 = vmatprep.subr.bf16.mxu0 0
      %411 = vmatpush1.bf16.msra.mxu0 %v373
      %412 = vmatprep.subr.bf16.mxu0 0
      %413 = vmatpush1.bf16.msra.mxu0 %v372
      %414 = vmatprep.subr.bf16.mxu0 0
      %415 = vmatpush1.bf16.msra.mxu0 %v371
      %416 = vmatprep.subr.bf16.mxu0 0
      %417 = vmatpush1.bf16.msra.mxu0 %v370
      %418 = vmatprep.subr.bf16.mxu0 0
      %419 = vmatpush2.bf16.msra.mxu0 %v385
      %420 = vmatprep.subr.bf16.mxu0 0
      %421 = vmatpush2.bf16.msra.mxu0 %v384
      %422 = vmatprep.subr.bf16.mxu0 0
      %423 = vmatpush2.bf16.msra.mxu0 %v383
      %424 = vmatprep.subr.bf16.mxu0 0
      %425 = vmatpush2.bf16.msra.mxu0 %v382
      %426 = vmatprep.subr.bf16.mxu0 0
      %427 = vmatpush2.bf16.msra.mxu0 %v381
      %428 = vmatprep.subr.bf16.mxu0 0
      %429 = vmatpush2.bf16.msra.mxu0 %v380
      %430 = vmatprep.subr.bf16.mxu0 0
      %431 = vmatpush2.bf16.msra.mxu0 %v379
      %432 = vmatprep.subr.bf16.mxu0 0
      %433 = vmatpush2.bf16.msra.mxu0 %v378
      %434 = vmatprep.mubr.bf16.mxu0 %v275
      %435 = vmatmul.mubr.bf16.gmra.mxu0 %v274
      %v436 = vpop.f32.mrf.mxu0
      %v437 = vadd.f32 0.0, %v436
      %v438 = vpop.f32.mrf.mxu0
      %v439 = vpop.f32.mrf.mxu0
      %v440 = vadd.f32 0.0, %v439
      %v441 = vpop.f32.mrf.mxu0
      %442 = vmatprep.mubr.bf16.mxu0 %v277
      %443 = vmatmul.mubr.bf16.gmra.mxu0 %v276
      %v444 = vpop.f32.mrf.mxu0
      %v445 = vadd.f32 0.0, %v444
      %v446 = vpop.f32.mrf.mxu0
      %v447 = vpop.f32.mrf.mxu0
      %v448 = vadd.f32 0.0, %v447
      %v449 = vpop.f32.mrf.mxu0
      %450 = vmatprep.mubr.bf16.mxu0 %v279
      %451 = vmatmul.mubr.bf16.gmra.mxu0 %v278
      %v452 = vpop.f32.mrf.mxu0
      %v453 = vadd.f32 0.0, %v452
      %v454 = vpop.f32.mrf.mxu0
      %v455 = vpop.f32.mrf.mxu0
      %v456 = vadd.f32 0.0, %v455
      %v457 = vpop.f32.mrf.mxu0
      %458 = vmatprep.mubr.bf16.mxu0 %v281
      %459 = vmatmul.mubr.bf16.gmra.mxu0 %v280
      %v460 = vpop.f32.mrf.mxu0
      %v461 = vadd.f32 0.0, %v460
      %v462 = vpop.f32.mrf.mxu0
      %v463 = vpop.f32.mrf.mxu0
      %v464 = vadd.f32 0.0, %v463
      %v465 = vpop.f32.mrf.mxu0
      %466 = vmatprep.mubr.bf16.mxu0 %v283
      %467 = vmatmul.mubr.bf16.gmra.mxu0 %v282
      %v468 = vpop.f32.mrf.mxu0
      %v469 = vadd.f32 0.0, %v468
      %v470 = vpop.f32.mrf.mxu0
      %v471 = vpop.f32.mrf.mxu0
      %v472 = vadd.f32 0.0, %v471
      %v473 = vpop.f32.mrf.mxu0
      %474 = vmatprep.mubr.bf16.mxu0 %v285
      %475 = vmatmul.mubr.bf16.gmra.mxu0 %v284
      %v476 = vpop.f32.mrf.mxu0
      %v477 = vadd.f32 0.0, %v476
      %v478 = vpop.f32.mrf.mxu0
      %v479 = vpop.f32.mrf.mxu0
      %v480 = vadd.f32 0.0, %v479
      %v481 = vpop.f32.mrf.mxu0
      %482 = vmatprep.mubr.bf16.mxu0 %v287
      %483 = vmatmul.mubr.bf16.gmra.mxu0 %v286
      %v484 = vpop.f32.mrf.mxu0
      %v485 = vadd.f32 0.0, %v484
      %v486 = vpop.f32.mrf.mxu0
      %v487 = vpop.f32.mrf.mxu0
      %v488 = vadd.f32 0.0, %v487
      %v489 = vpop.f32.mrf.mxu0
      %490 = vmatprep.mubr.bf16.mxu0 %v289
      %491 = vmatmul.mubr.bf16.gmra.mxu0 %v288
      %v492 = vpop.f32.mrf.mxu0
      %v493 = vadd.f32 0.0, %v492
      %v494 = vpop.f32.mrf.mxu0
      %v495 = vpop.f32.mrf.mxu0
      %v496 = vadd.f32 0.0, %v495
      %v497 = vpop.f32.mrf.mxu0
      %498 = vdwg.mxu0
      %v499 = vmax.f32 %v437, 0.0
      %v500 = vmax.f32 %v440, 0.0
      %v501 = vmax.f32 %v445, 0.0
      %v502 = vmax.f32 %v448, 0.0
      %v503 = vmax.f32 %v453, 0.0
      %v504 = vmax.f32 %v456, 0.0
      %v505 = vmax.f32 %v461, 0.0
      %v506 = vmax.f32 %v464, 0.0
      %v507 = vmax.f32 %v469, 0.0
      %v508 = vmax.f32 %v472, 0.0
      %v509 = vmax.f32 %v477, 0.0
      %v510 = vmax.f32 %v480, 0.0
      %v511 = vmax.f32 %v485, 0.0
      %v512 = vmax.f32 %v488, 0.0
      %v513 = vmax.f32 %v493, 0.0
      %v514 = vmax.f32 %v496, 0.0
      %v515 = vpack.c.bf16 %v500, %v499
      %v516 = vpack.c.bf16 %v502, %v501
      %v517 = vpack.c.bf16 %v504, %v503
      %v518 = vpack.c.bf16 %v506, %v505
      %v519 = vpack.c.bf16 %v508, %v507
      %v520 = vpack.c.bf16 %v510, %v509
      %v521 = vpack.c.bf16 %v512, %v511
      %v522 = vpack.c.bf16 %v514, %v513
      %v523 = vld [vmem:[%s2] sm:$0xf]
      %v524 = vld [vmem:[%s2 + $0x4] sm:$0xf]
      %v525 = vld [vmem:[%s2 + $0x8] sm:$0xf]
      %v526 = vld [vmem:[%s2 + $0xc] sm:$0xf]
      %v527 = vld [vmem:[%s2 + $0x10] sm:$0xf]
      %v528 = vld [vmem:[%s2 + $0x14] sm:$0xf]
      %v529 = vld [vmem:[%s2 + $0x18] sm:$0xf]
      %v530 = vld [vmem:[%s2 + $0x1c] sm:$0xf]
      %v531 = vld [vmem:[%s2 + $0x20] sm:$0xf]
      %v532 = vld [vmem:[%s2 + $0x24] sm:$0xf]
      %v533 = vld [vmem:[%s2 + $0x28] sm:$0xf]
      %v534 = vld [vmem:[%s2 + $0x2c] sm:$0xf]
      %v535 = vld [vmem:[%s2 + $0x30] sm:$0xf]
      %v536 = vld [vmem:[%s2 + $0x34] sm:$0xf]
      %v537 = vld [vmem:[%s2 + $0x38] sm:$0xf]
      %v538 = vld [vmem:[%s2 + $0x3c] sm:$0xf]
      %v555 = vunpack.c.l.b16 %v523
      %v556 = vunpack.c.l.b16 %v524
      %v557 = vunpack.c.l.b16 %v525
      %v558 = vunpack.c.l.b16 %v526
      %v559 = vunpack.c.l.b16 %v527
      %v560 = vunpack.c.l.b16 %v528
      %v561 = vunpack.c.l.b16 %v529
      %v562 = vunpack.c.l.b16 %v530
      %v563 = vunpack.c.l.b16 %v531
      %v564 = vunpack.c.l.b16 %v532
      %v565 = vunpack.c.l.b16 %v533
      %v566 = vunpack.c.l.b16 %v534
      %v567 = vunpack.c.l.b16 %v535
      %v568 = vunpack.c.l.b16 %v536
      %v569 = vunpack.c.l.b16 %v537
      %v570 = vunpack.c.l.b16 %v538
      %v571 = vpack.c.b16 %v556, %v555
      %v572 = vpack.c.b16 %v558, %v557
      %v573 = vpack.c.b16 %v560, %v559
      %v574 = vpack.c.b16 %v562, %v561
      %v575 = vpack.c.b16 %v564, %v563
      %v576 = vpack.c.b16 %v566, %v565
      %v577 = vpack.c.b16 %v568, %v567
      %v578 = vpack.c.b16 %v570, %v569
      %587 = vmatprep.subr.bf16.mxu0 0
      %588 = vmatpush1.bf16.msra.mxu0 %v578
      %589 = vmatprep.subr.bf16.mxu0 0
      %590 = vmatpush1.bf16.msra.mxu0 %v577
      %591 = vmatprep.subr.bf16.mxu0 0
      %592 = vmatpush1.bf16.msra.mxu0 %v576
      %593 = vmatprep.subr.bf16.mxu0 0
      %594 = vmatpush1.bf16.msra.mxu0 %v575
      %595 = vmatprep.subr.bf16.mxu0 0
      %596 = vmatpush1.bf16.msra.mxu0 %v574
      %597 = vmatprep.subr.bf16.mxu0 0
      %598 = vmatpush1.bf16.msra.mxu0 %v573
      %599 = vmatprep.subr.bf16.mxu0 0
      %600 = vmatpush1.bf16.msra.mxu0 %v572
      %601 = vmatprep.subr.bf16.mxu0 0
      %602 = vmatpush1.bf16.msra.mxu0 %v571
      %603 = vmatprep.subr.bf16.mxu0 0
      %604 = vmatpush2.bf16.msra.mxu0 0
      %605 = vmatprep.subr.bf16.mxu0 0
      %606 = vmatpush2.bf16.msra.mxu0 0
      %607 = vmatprep.subr.bf16.mxu0 0
      %608 = vmatpush2.bf16.msra.mxu0 0
      %609 = vmatprep.subr.bf16.mxu0 0
      %610 = vmatpush2.bf16.msra.mxu0 0
      %611 = vmatprep.subr.bf16.mxu0 0
      %612 = vmatpush2.bf16.msra.mxu0 0
      %613 = vmatprep.subr.bf16.mxu0 0
      %614 = vmatpush2.bf16.msra.mxu0 0
      %615 = vmatprep.subr.bf16.mxu0 0
      %616 = vmatpush2.bf16.msra.mxu0 0
      %617 = vmatprep.subr.bf16.mxu0 0
      %618 = vmatpush2.bf16.msra.mxu0 0
      %619 = vmatprep.mubr.bf16.mxu0 0
      %620 = vmatmul.mubr.bf16.gmra.mxu0 %v515
      %v621 = vpop.f32.mrf.mxu0
      %v622 = vadd.f32 0.0, %v621
      %v623 = vpop.f32.mrf.mxu0
      %v624 = vpop.f32.mrf.mxu0
      %v625 = vadd.f32 0.0, %v624
      %v626 = vpop.f32.mrf.mxu0
      %627 = vmatprep.mubr.bf16.mxu0 0
      %628 = vmatmul.mubr.bf16.gmra.mxu0 %v516
      %v629 = vpop.f32.mrf.mxu0
      %v630 = vadd.f32 0.0, %v629
      %v631 = vpop.f32.mrf.mxu0
      %v632 = vpop.f32.mrf.mxu0
      %v633 = vadd.f32 0.0, %v632
      %v634 = vpop.f32.mrf.mxu0
      %635 = vmatprep.mubr.bf16.mxu0 0
      %636 = vmatmul.mubr.bf16.gmra.mxu0 %v517
      %v637 = vpop.f32.mrf.mxu0
      %v638 = vadd.f32 0.0, %v637
      %v639 = vpop.f32.mrf.mxu0
      %v640 = vpop.f32.mrf.mxu0
      %v641 = vadd.f32 0.0, %v640
      %v642 = vpop.f32.mrf.mxu0
      %643 = vmatprep.mubr.bf16.mxu0 0
      %644 = vmatmul.mubr.bf16.gmra.mxu0 %v518
      %v645 = vpop.f32.mrf.mxu0
      %v646 = vadd.f32 0.0, %v645
      %v647 = vpop.f32.mrf.mxu0
      %v648 = vpop.f32.mrf.mxu0
      %v649 = vadd.f32 0.0, %v648
      %v650 = vpop.f32.mrf.mxu0
      %651 = vmatprep.mubr.bf16.mxu0 0
      %652 = vmatmul.mubr.bf16.gmra.mxu0 %v519
      %v653 = vpop.f32.mrf.mxu0
      %v654 = vadd.f32 0.0, %v653
      %v655 = vpop.f32.mrf.mxu0
      %v656 = vpop.f32.mrf.mxu0
      %v657 = vadd.f32 0.0, %v656
      %v658 = vpop.f32.mrf.mxu0
      %659 = vmatprep.mubr.bf16.mxu0 0
      %660 = vmatmul.mubr.bf16.gmra.mxu0 %v520
      %v661 = vpop.f32.mrf.mxu0
      %v662 = vadd.f32 0.0, %v661
      %v663 = vpop.f32.mrf.mxu0
      %v664 = vpop.f32.mrf.mxu0
      %v665 = vadd.f32 0.0, %v664
      %v666 = vpop.f32.mrf.mxu0
      %667 = vmatprep.mubr.bf16.mxu0 0
      %668 = vmatmul.mubr.bf16.gmra.mxu0 %v521
      %v669 = vpop.f32.mrf.mxu0
      %v670 = vadd.f32 0.0, %v669
      %v671 = vpop.f32.mrf.mxu0
      %v672 = vpop.f32.mrf.mxu0
      %v673 = vadd.f32 0.0, %v672
      %v674 = vpop.f32.mrf.mxu0
      %675 = vmatprep.mubr.bf16.mxu0 0
      %676 = vmatmul.mubr.bf16.gmra.mxu0 %v522
      %v677 = vpop.f32.mrf.mxu0
      %v678 = vadd.f32 0.0, %v677
      %v679 = vpop.f32.mrf.mxu0
      %v680 = vpop.f32.mrf.mxu0
      %v681 = vadd.f32 0.0, %v680
      %v682 = vpop.f32.mrf.mxu0
      %683 = vdwg.mxu0
      %v684 = vpack.c.bf16 %v625, %v622
      %v685 = vpack.c.bf16 %v633, %v630
      %v686 = vpack.c.bf16 %v641, %v638
      %v687 = vpack.c.bf16 %v649, %v646
      %v688 = vpack.c.bf16 %v657, %v654
      %v689 = vpack.c.bf16 %v665, %v662
      %v690 = vpack.c.bf16 %v673, %v670
      %v691 = vpack.c.bf16 %v681, %v678
      %v700 = vunpack.c.l.b16 %v684
      %v701 = vunpack.c.h.b16 %v684
      %v702 = vunpack.c.l.b16 %v685
      %v703 = vunpack.c.h.b16 %v685
      %v704 = vunpack.c.l.b16 %v686
      %v705 = vunpack.c.h.b16 %v686
      %v706 = vunpack.c.l.b16 %v687
      %v707 = vunpack.c.h.b16 %v687
      %v708 = vunpack.c.l.b16 %v688
      %v709 = vunpack.c.h.b16 %v688
      %v710 = vunpack.c.l.b16 %v689
      %v711 = vunpack.c.h.b16 %v689
      %v712 = vunpack.c.l.b16 %v690
      %v713 = vunpack.c.h.b16 %v690
      %v714 = vunpack.c.l.b16 %v691
      %v715 = vunpack.c.h.b16 %v691
      %v716 = vpack.c.b16 %v700, %v700
      %v717 = vpack.c.b16 %v701, %v701
      %v718 = vpack.c.b16 %v702, %v702
      %v719 = vpack.c.b16 %v703, %v703
      %v720 = vpack.c.b16 %v704, %v704
      %v721 = vpack.c.b16 %v705, %v705
      %v722 = vpack.c.b16 %v706, %v706
      %v723 = vpack.c.b16 %v707, %v707
      %v724 = vpack.c.b16 %v708, %v708
      %v725 = vpack.c.b16 %v709, %v709
      %v726 = vpack.c.b16 %v710, %v710
      %v727 = vpack.c.b16 %v711, %v711
      %v728 = vpack.c.b16 %v712, %v712
      %v729 = vpack.c.b16 %v713, %v713
      %v730 = vpack.c.b16 %v714, %v714
      %v731 = vpack.c.b16 %v715, %v715
      %748 = vst [vmem:[%s175] sm:$0xf] %v716
      %749 = vst [vmem:[%s175 + $0x4] sm:$0xf] %v717
      %750 = vst [vmem:[%s175 + $0x8] sm:$0xf] %v718
      %751 = vst [vmem:[%s175 + $0xc] sm:$0xf] %v719
      %752 = vst [vmem:[%s175 + $0x10] sm:$0xf] %v720
      %753 = vst [vmem:[%s175 + $0x14] sm:$0xf] %v721
      %754 = vst [vmem:[%s175 + $0x18] sm:$0xf] %v722
      %755 = vst [vmem:[%s175 + $0x1c] sm:$0xf] %v723
      %756 = vst [vmem:[%s175 + $0x20] sm:$0xf] %v724
      %757 = vst [vmem:[%s175 + $0x24] sm:$0xf] %v725
      %758 = vst [vmem:[%s175 + $0x28] sm:$0xf] %v726
      %759 = vst [vmem:[%s175 + $0x2c] sm:$0xf] %v727
      %760 = vst [vmem:[%s175 + $0x30] sm:$0xf] %v728
      %761 = vst [vmem:[%s175 + $0x34] sm:$0xf] %v729
      %762 = vst [vmem:[%s175 + $0x38] sm:$0xf] %v730
      %763 = vst [vmem:[%s175 + $0x3c] sm:$0xf] %v731
      %s764 = smul.u32 16, %s14
      %p765 = scmp.lt.s32.totalorder %s764, 31
      %s766 = scalar_select %p765, %s764, 31
      %s767 = smul.addr %s766, 4
      %s768 = scalar_lea.vmem %s3, %s767
      // Predicated region
      $region33: #{densenet6_forward.8} parent=31 // pred_check
        %p769 = pneg %p100
      $region34: #{densenet6_forward.8} parent=31 // pred_check_branch
        %771 = sbr.rel (%p769) target = $region36
      $region35: #{densenet6_forward.8} parent=31 // pred_region
        %s772 = smul.u32 16, %s14
      $region36: #{densenet6_forward.8} parent=31 // pred_fallthru
        _
    $region32: #{densenet6_forward.8} parent=5 // pred_fallthru
      _
    %p773 = scmp.le.s32.totalorder 2, %s9
    // Predicated region
    $region37: #{densenet6_forward.8} parent=5 // pred_check
      %p774 = pneg %p773
    $region38: #{densenet6_forward.8} parent=5 // pred_check_branch
      %776 = sbr.rel (%p774) target = $region40
    $region39: #{densenet6_forward.8} parent=5 // pred_region
      %s777 = ssub.s32 %s9, 2
      // Predicated region
      $region41: #{densenet6_forward.8} parent=39 // pred_check
        %p778 = pneg %p106
      $region42: #{densenet6_forward.8} parent=39 // pred_check_branch
        %780 = sbr.rel (%p778) target = $region44
      $region43: #{densenet6_forward.8} parent=39 // pred_region
        %s781 = smul.u32 16, %s15
        %p782 = scmp.lt.s32.totalorder %s781, 31
        %s783 = scalar_select %p782, %s781, 31
        %s784 = smul.addr %s783, 4
        %s785 = scalar_lea.vmem %s3, %s784
      $region44: #{densenet6_forward.8} parent=39 // pred_fallthru
        _
    $region40: #{densenet6_forward.8} parent=5 // pred_fallthru
      _
  $region6: #{densenet6_forward.8} parent=0 // loop_footer
    %s13 = sadd.s32 1, %s9
  $region7: #{densenet6_forward.8} parent=0 // loop_footer_branch
    %8 = sbr.rel target = $region3
  $region8: #{densenet6_forward.8} parent=0 // loop_exit
    _

// kernel: densenet6_forward.6
$region0: #{densenet6_forward.6}
  #allocation0 [shape = 'u32[]', space=smem, size = 0x4, offset = 0x4, fixed_abs, tag = 'smem constant byte address 0x4 - core index']
  #allocation1 [shape = 'u32[144,128]{1,0:T(1,128)}', space=vmem, size = 0x12000, scoped, tag = 'internal scratch']
  %s0 = inlined_call_operand.vmem [shape: bf16[256,256], index: 0, kind: input, shape index: {}]
  %s1 = inlined_call_operand.vmem [shape: bf16[256,128], index: 1, kind: input, shape index: {}]
  %s2 = inlined_call_operand.vmem [shape: bf16[128,128], index: 2, kind: input, shape index: {}]
  %s3 = inlined_call_operand.vmem [shape: bf16[128,128], index: 3, kind: input, shape index: {}]
  %s4 = inlined_call_operand.vmem [shape: bf16[256,128], index: 4, kind: output, shape index: {0}]
  %s5 = inlined_call_operand.vmem [shape: bf16[256,128], index: 5, kind: output, shape index: {1}]
  %s6 = inlined_call_operand.vmem [shape: bf16[256,128], index: 6, kind: output, shape index: {2}]
  %7 = xla_tuple %s4, %s5, %s6
  %s8 = sld [smem:[#allocation0]]
  $region65: #{densenet6_forward.6} parent=0
    _
  %s10 = ssub.s32 1, %s8
  %s11 = scalar_select 0, %s10, %s8
  loop: start=0, step=1, limit=4
  $region2: #{densenet6_forward.6} parent=0 // loop_pre_header
    _
  $region3: #{densenet6_forward.6} parent=0 // loop_header
    %s13 = sphi 0, %s17
    %p14 = scmp.ge.s32.totalorder %s13, 4
    %s23 = sphi 0, %s25
    %s26 = sphi 0, %s23
    %s27 = sphi 0, %s26
    %s43 = sphi 0, %s27
    %s47 = sphi 0, %s47
    %s49 = sphi 0, %s47
    %s50 = sphi 0, %s49
    %s64 = sphi 0, %s50
    %s68 = sphi 0, %s68
    %s70 = sphi 0, %s68
    %s71 = sphi 0, %s70
    %s85 = sphi 0, %s71
    %s89 = sphi 0, %s89
    %s91 = sphi 0, %s89
    %s92 = sphi 0, %s91
    %s106 = sphi 0, %s92
    %s112 = sphi 0, %s114
    %s115 = sphi 0, %s112
    %s116 = sphi 0, %s115
    %s132 = sphi 0, %s116
    %s138 = sphi 0, %s140
    %s141 = sphi 0, %s138
    %s142 = sphi 0, %s141
    %s158 = sphi 0, %s142
    %s164 = sphi 0, %s166
    %s167 = sphi 0, %s164
    %s168 = sphi 0, %s167
    %s184 = sphi 0, %s168
  $region4: #{densenet6_forward.6} parent=0 // loop_header_branch
    %16 = sbr.rel (%p14) target = $region8
  $region5: #{densenet6_forward.6} parent=0 // loop_body
    %s18 = ssub.s32 %s13, 1
    %s19 = ssub.s32 %s13, 2
    %s20 = sadd.s32 %s13, 1
    %s21 = ssub.s32 %s13, %s20
    %p22 = scmp.eq.s32.totalorder %s21, 0
    %s24 = sadd.s32 %s23, 1
    %s25 = scalar_select %p22, %s23, %s24
    %p28 = pneg %p22
    %p29 = scmp.eq.s32.totalorder %s13, 1
    %p30 = por %p28, %p29
    %p31 = scmp.ne.s32.totalorder %s23, %s26
    %p32 = scmp.eq.s32.totalorder %s13, 0
    %p33 = por %p31, %p32
    %p34 = scmp.ne.s32.totalorder %s23, %s26
    %p35 = scmp.eq.s32.totalorder %s18, 1
    %p36 = por %p34, %p35
    %p37 = scmp.ne.s32.totalorder %s26, %s27
    %p38 = scmp.eq.s32.totalorder %s18, 0
    %p39 = por %p37, %p38
    %p40 = scmp.ne.s32.totalorder %s26, %s27
    %p41 = scmp.eq.s32.totalorder %s19, 1
    %p42 = por %p40, %p41
    %p44 = scmp.ne.s32.totalorder %s27, %s43
    %p45 = scmp.eq.s32.totalorder %s19, 0
    %p46 = por %p44, %p45
    %s48 = sadd.s32 %s47, 1
    %p51 = scmp.eq.s32.totalorder %s13, 1
    %p52 = scmp.ne.s32.totalorder %s47, %s49
    %p53 = scmp.eq.s32.totalorder %s13, 0
    %p54 = por %p52, %p53
    %p55 = scmp.ne.s32.totalorder %s47, %s49
    %p56 = scmp.eq.s32.totalorder %s18, 1
    %p57 = por %p55, %p56
    %p58 = scmp.ne.s32.totalorder %s49, %s50
    %p59 = scmp.eq.s32.totalorder %s18, 0
    %p60 = por %p58, %p59
    %p61 = scmp.ne.s32.totalorder %s49, %s50
    %p62 = scmp.eq.s32.totalorder %s19, 1
    %p63 = por %p61, %p62
    %p65 = scmp.ne.s32.totalorder %s50, %s64
    %p66 = scmp.eq.s32.totalorder %s19, 0
    %p67 = por %p65, %p66
    %s69 = sadd.s32 %s68, 1
    %p72 = scmp.eq.s32.totalorder %s13, 1
    %p73 = scmp.ne.s32.totalorder %s68, %s70
    %p74 = scmp.eq.s32.totalorder %s13, 0
    %p75 = por %p73, %p74
    %p76 = scmp.ne.s32.totalorder %s68, %s70
    %p77 = scmp.eq.s32.totalorder %s18, 1
    %p78 = por %p76, %p77
    %p79 = scmp.ne.s32.totalorder %s70, %s71
    %p80 = scmp.eq.s32.totalorder %s18, 0
    %p81 = por %p79, %p80
    %p82 = scmp.ne.s32.totalorder %s70, %s71
    %p83 = scmp.eq.s32.totalorder %s19, 1
    %p84 = por %p82, %p83
    %p86 = scmp.ne.s32.totalorder %s71, %s85
    %p87 = scmp.eq.s32.totalorder %s19, 0
    %p88 = por %p86, %p87
    %s90 = sadd.s32 %s89, 1
    %p93 = scmp.eq.s32.totalorder %s13, 1
    %p94 = scmp.ne.s32.totalorder %s89, %s91
    %p95 = scmp.eq.s32.totalorder %s13, 0
    %p96 = por %p94, %p95
    %p97 = scmp.ne.s32.totalorder %s89, %s91
    %p98 = scmp.eq.s32.totalorder %s18, 1
    %p99 = por %p97, %p98
    %p100 = scmp.ne.s32.totalorder %s91, %s92
    %p101 = scmp.eq.s32.totalorder %s18, 0
    %p102 = por %p100, %p101
    %p103 = scmp.ne.s32.totalorder %s91, %s92
    %p104 = scmp.eq.s32.totalorder %s19, 1
    %p105 = por %p103, %p104
    %p107 = scmp.ne.s32.totalorder %s92, %s106
    %p108 = scmp.eq.s32.totalorder %s19, 0
    %p109 = por %p107, %p108
    %s110 = ssub.s32 %s13, %s20
    %p111 = scmp.eq.s32.totalorder %s110, 0
    %s113 = sadd.s32 %s112, 1
    %s114 = scalar_select %p111, %s112, %s113
    %p117 = pneg %p111
    %p118 = scmp.eq.s32.totalorder %s13, 1
    %p119 = por %p117, %p118
    %p120 = scmp.ne.s32.totalorder %s112, %s115
    %p121 = scmp.eq.s32.totalorder %s13, 0
    %p122 = por %p120, %p121
    %p123 = scmp.ne.s32.totalorder %s112, %s115
    %p124 = scmp.eq.s32.totalorder %s18, 1
    %p125 = por %p123, %p124
    %p126 = scmp.ne.s32.totalorder %s115, %s116
    %p127 = scmp.eq.s32.totalorder %s18, 0
    %p128 = por %p126, %p127
    %p129 = scmp.ne.s32.totalorder %s115, %s116
    %p130 = scmp.eq.s32.totalorder %s19, 1
    %p131 = por %p129, %p130
    %p133 = scmp.ne.s32.totalorder %s116, %s132
    %p134 = scmp.eq.s32.totalorder %s19, 0
    %p135 = por %p133, %p134
    %s136 = ssub.s32 %s13, %s20
    %p137 = scmp.eq.s32.totalorder %s136, 0
    %s139 = sadd.s32 %s138, 1
    %s140 = scalar_select %p137, %s138, %s139
    %p143 = pneg %p137
    %p144 = scmp.eq.s32.totalorder %s13, 1
    %p145 = por %p143, %p144
    %p146 = scmp.ne.s32.totalorder %s138, %s141
    %p147 = scmp.eq.s32.totalorder %s13, 0
    %p148 = por %p146, %p147
    %p149 = scmp.ne.s32.totalorder %s138, %s141
    %p150 = scmp.eq.s32.totalorder %s18, 1
    %p151 = por %p149, %p150
    %p152 = scmp.ne.s32.totalorder %s141, %s142
    %p153 = scmp.eq.s32.totalorder %s18, 0
    %p154 = por %p152, %p153
    %p155 = scmp.ne.s32.totalorder %s141, %s142
    %p156 = scmp.eq.s32.totalorder %s19, 1
    %p157 = por %p155, %p156
    %p159 = scmp.ne.s32.totalorder %s142, %s158
    %p160 = scmp.eq.s32.totalorder %s19, 0
    %p161 = por %p159, %p160
    %s162 = ssub.s32 %s13, %s20
    %p163 = scmp.eq.s32.totalorder %s162, 0
    %s165 = sadd.s32 %s164, 1
    %s166 = scalar_select %p163, %s164, %s165
    %p169 = pneg %p163
    %p170 = scmp.eq.s32.totalorder %s13, 1
    %p171 = por %p169, %p170
    %p172 = scmp.ne.s32.totalorder %s164, %s167
    %p173 = scmp.eq.s32.totalorder %s13, 0
    %p174 = por %p172, %p173
    %p175 = scmp.ne.s32.totalorder %s164, %s167
    %p176 = scmp.eq.s32.totalorder %s18, 1
    %p177 = por %p175, %p176
    %p178 = scmp.ne.s32.totalorder %s167, %s168
    %p179 = scmp.eq.s32.totalorder %s18, 0
    %p180 = por %p178, %p179
    %p181 = scmp.ne.s32.totalorder %s167, %s168
    %p182 = scmp.eq.s32.totalorder %s19, 1
    %p183 = por %p181, %p182
    %p185 = scmp.ne.s32.totalorder %s168, %s184
    %p186 = scmp.eq.s32.totalorder %s19, 0
    %p187 = por %p185, %p186
    %p188 = scmp.le.s32.totalorder 1, %s13
    %p189 = scmp.lt.s32.totalorder %s13, 3
    %p190 = pnand %p188, %p189
    %p191 = pneg %p190
    // Predicated region
    $region9: #{densenet6_forward.6} parent=5 // pred_check
      _
    $region10: #{densenet6_forward.6} parent=5 // pred_check_branch
      %193 = sbr.rel (%p190) target = $region12
    $region11: #{densenet6_forward.6} parent=5 // pred_region
      %s194 = ssub.s32 %s13, 1
      // Predicated region
      $region13: #{densenet6_forward.6} parent=11 // pred_check
        %p195 = pneg %p60
      $region14: #{densenet6_forward.6} parent=11 // pred_check_branch
        %197 = sbr.rel (%p195) target = $region16
      $region15: #{densenet6_forward.6} parent=11 // pred_region
        _
      $region16: #{densenet6_forward.6} parent=11 // pred_fallthru
        _
      // Predicated region
      $region17: #{densenet6_forward.6} parent=11 // pred_check
        %p198 = pneg %p81
      $region18: #{densenet6_forward.6} parent=11 // pred_check_branch
        %200 = sbr.rel (%p198) target = $region20
      $region19: #{densenet6_forward.6} parent=11 // pred_region
        _
      $region20: #{densenet6_forward.6} parent=11 // pred_fallthru
        _
      // Predicated region
      $region21: #{densenet6_forward.6} parent=11 // pred_check
        %p201 = pneg %p102
      $region22: #{densenet6_forward.6} parent=11 // pred_check_branch
        %203 = sbr.rel (%p201) target = $region24
      $region23: #{densenet6_forward.6} parent=11 // pred_region
        _
      $region24: #{densenet6_forward.6} parent=11 // pred_fallthru
        _
    $region12: #{densenet6_forward.6} parent=5 // pred_fallthru
      _
    %p204 = scmp.lt.s32.totalorder %s13, 2
    // Predicated region
    $region25: #{densenet6_forward.6} parent=5 // pred_check
      %p205 = pneg %p204
    $region26: #{densenet6_forward.6} parent=5 // pred_check_branch
      %207 = sbr.rel (%p205) target = $region28
    $region27: #{densenet6_forward.6} parent=5 // pred_region
      // Predicated region
      $region29: #{densenet6_forward.6} parent=27 // pred_check
        %p208 = pneg %p33
      $region30: #{densenet6_forward.6} parent=27 // pred_check_branch
        %210 = sbr.rel (%p208) target = $region32
      $region31: #{densenet6_forward.6} parent=27 // pred_region
        %s211 = smul.u32 16, %s13
        %p212 = scmp.lt.s32.totalorder %s211, 31
        %s213 = scalar_select %p212, %s211, 31
        %s214 = smul.addr %s213, 2
        %s215 = smul.addr %s214, 4
        %s216 = scalar_lea.vmem %s0, %s215
        %s217 = smul.u32 16, %s13
      $region32: #{densenet6_forward.6} parent=27 // pred_fallthru
        _
    $region28: #{densenet6_forward.6} parent=5 // pred_fallthru
      _
    %p218 = scmp.le.s32.totalorder 1, %s13
    %p219 = scmp.lt.s32.totalorder %s13, 3
    %p220 = pnand %p218, %p219
    %p221 = pneg %p220
    // Predicated region
    $region33: #{densenet6_forward.6} parent=5 // pred_check
      _
    $region34: #{densenet6_forward.6} parent=5 // pred_check_branch
      %223 = sbr.rel (%p220) target = $region36
    $region35: #{densenet6_forward.6} parent=5 // pred_region
      %s224 = ssub.s32 %s13, 1
      %s225 = smul.u32 16, %s18
      %p226 = scmp.lt.s32.totalorder %s225, 31
      %s227 = scalar_select %p226, %s225, 31
      %s228 = smul.addr %s227, 2
      %s229 = smul.addr %s228, 4
      %s230 = scalar_lea.vmem %s0, %s229
      %p231 = pneg %p39
      %p232 = pneg %p36
      %p233 = pneg %p60
      %p234 = pneg %p57
      %p235 = pneg %p81
      %p236 = pneg %p78
      %p237 = pneg %p102
      %p238 = pneg %p99
      %p239 = pneg %p128
      %p240 = pneg %p125
      %s241 = smul.u32 16, %s18
      %p242 = scmp.lt.s32.totalorder %s241, 31
      %s243 = scalar_select %p242, %s241, 31
      %s244 = smul.addr %s243, 4
      %s245 = scalar_lea.vmem %s4, %s244
      %p246 = pneg %p154
      %p247 = pneg %p151
      %s248 = smul.u32 16, %s18
      %p249 = scmp.lt.s32.totalorder %s248, 31
      %s250 = scalar_select %p249, %s248, 31
      %s251 = smul.addr %s250, 4
      %s252 = scalar_lea.vmem %s5, %s251
      %p253 = pneg %p180
      %p254 = pneg %p177
      %s255 = smul.u32 16, %s18
      %p256 = scmp.lt.s32.totalorder %s255, 31
      %s257 = scalar_select %p256, %s255, 31
      %s258 = smul.addr %s257, 4
      %s259 = scalar_lea.vmem %s6, %s258
      %s260 = smul.u32 16, %s18
      %p261 = scmp.lt.s32.totalorder %s260, 31
      %s262 = scalar_select %p261, %s260, 31
      %s263 = smul.addr %s262, 2
      %s264 = smul.addr %s263, 4
      %s265 = scalar_lea.vmem %s0, %s264
      %s266 = smul.u32 16, %s18
      %s267 = smul.u32 16, %s18
      %p268 = scmp.lt.s32.totalorder %s267, 31
      %s269 = scalar_select %p268, %s267, 31
      %s270 = smul.addr %s269, 4
      %s271 = scalar_lea.vmem %s4, %s270
      %s272 = smul.u32 16, %s18
      %s273 = smul.u32 16, %s18
      %p274 = scmp.lt.s32.totalorder %s273, 31
      %s275 = scalar_select %p274, %s273, 31
      %s276 = smul.addr %s275, 4
      %s277 = scalar_lea.vmem %s5, %s276
      %s278 = smul.u32 16, %s18
      %s279 = smul.u32 16, %s18
      %p280 = scmp.lt.s32.totalorder %s279, 31
      %s281 = scalar_select %p280, %s279, 31
      %s282 = smul.addr %s281, 4
      %s283 = scalar_lea.vmem %s6, %s282
      %s284 = smul.u32 16, %s18
      %v286 = vld [vmem:[%s265] sm:$0xff]
      %v287 = vld [vmem:[%s265 + $0x8] sm:$0xff]
      %v288 = vld [vmem:[%s265 + $0x10] sm:$0xff]
      %v289 = vld [vmem:[%s265 + $0x18] sm:$0xff]
      %v290 = vld [vmem:[%s265 + $0x20] sm:$0xff]
      %v291 = vld [vmem:[%s265 + $0x28] sm:$0xff]
      %v292 = vld [vmem:[%s265 + $0x30] sm:$0xff]
      %v293 = vld [vmem:[%s265 + $0x38] sm:$0xff]
      %v294 = vld [vmem:[%s265 + $0x40] sm:$0xff]
      %v295 = vld [vmem:[%s265 + $0x48] sm:$0xff]
      %v296 = vld [vmem:[%s265 + $0x50] sm:$0xff]
      %v297 = vld [vmem:[%s265 + $0x58] sm:$0xff]
      %v298 = vld [vmem:[%s265 + $0x60] sm:$0xff]
      %v299 = vld [vmem:[%s265 + $0x68] sm:$0xff]
      %v300 = vld [vmem:[%s265 + $0x70] sm:$0xff]
      %v301 = vld [vmem:[%s265 + $0x78] sm:$0xff]
      %v302 = vld [vmem:[%s1] sm:$0xf]
      %v303 = vld [vmem:[%s1 + $0x4] sm:$0xf]
      %v304 = vld [vmem:[%s1 + $0x8] sm:$0xf]
      %v305 = vld [vmem:[%s1 + $0xc] sm:$0xf]
      %v306 = vld [vmem:[%s1 + $0x10] sm:$0xf]
      %v307 = vld [vmem:[%s1 + $0x14] sm:$0xf]
      %v308 = vld [vmem:[%s1 + $0x18] sm:$0xf]
      %v309 = vld [vmem:[%s1 + $0x1c] sm:$0xf]
      %v310 = vld [vmem:[%s1 + $0x20] sm:$0xf]
      %v311 = vld [vmem:[%s1 + $0x24] sm:$0xf]
      %v312 = vld [vmem:[%s1 + $0x28] sm:$0xf]
      %v313 = vld [vmem:[%s1 + $0x2c] sm:$0xf]
      %v314 = vld [vmem:[%s1 + $0x30] sm:$0xf]
      %v315 = vld [vmem:[%s1 + $0x34] sm:$0xf]
      %v316 = vld [vmem:[%s1 + $0x38] sm:$0xf]
      %v317 = vld [vmem:[%s1 + $0x3c] sm:$0xf]
      %v318 = vld [vmem:[%s1 + $0x40] sm:$0xf]
      %v319 = vld [vmem:[%s1 + $0x44] sm:$0xf]
      %v320 = vld [vmem:[%s1 + $0x48] sm:$0xf]
      %v321 = vld [vmem:[%s1 + $0x4c] sm:$0xf]
      %v322 = vld [vmem:[%s1 + $0x50] sm:$0xf]
      %v323 = vld [vmem:[%s1 + $0x54] sm:$0xf]
      %v324 = vld [vmem:[%s1 + $0x58] sm:$0xf]
      %v325 = vld [vmem:[%s1 + $0x5c] sm:$0xf]
      %v326 = vld [vmem:[%s1 + $0x60] sm:$0xf]
      %v327 = vld [vmem:[%s1 + $0x64] sm:$0xf]
      %v328 = vld [vmem:[%s1 + $0x68] sm:$0xf]
      %v329 = vld [vmem:[%s1 + $0x6c] sm:$0xf]
      %v330 = vld [vmem:[%s1 + $0x70] sm:$0xf]
      %v331 = vld [vmem:[%s1 + $0x74] sm:$0xf]
      %v332 = vld [vmem:[%s1 + $0x78] sm:$0xf]
      %v333 = vld [vmem:[%s1 + $0x7c] sm:$0xf]
      %v350 = vunpack.c.l.b16 %v286
      %v351 = vunpack.c.h.b16 %v286
      %v352 = vunpack.c.l.b16 %v287
      %v353 = vunpack.c.h.b16 %v287
      %v354 = vunpack.c.l.b16 %v288
      %v355 = vunpack.c.h.b16 %v288
      %v356 = vunpack.c.l.b16 %v289
      %v357 = vunpack.c.h.b16 %v289
      %v358 = vunpack.c.l.b16 %v290
      %v359 = vunpack.c.h.b16 %v290
      %v360 = vunpack.c.l.b16 %v291
      %v361 = vunpack.c.h.b16 %v291
      %v362 = vunpack.c.l.b16 %v292
      %v363 = vunpack.c.h.b16 %v292
      %v364 = vunpack.c.l.b16 %v293
      %v365 = vunpack.c.h.b16 %v293
      %v366 = vunpack.c.l.b16 %v294
      %v367 = vunpack.c.h.b16 %v294
      %v368 = vunpack.c.l.b16 %v295
      %v369 = vunpack.c.h.b16 %v295
      %v370 = vunpack.c.l.b16 %v296
      %v371 = vunpack.c.h.b16 %v296
      %v372 = vunpack.c.l.b16 %v297
      %v373 = vunpack.c.h.b16 %v297
      %v374 = vunpack.c.l.b16 %v298
      %v375 = vunpack.c.h.b16 %v298
      %v376 = vunpack.c.l.b16 %v299
      %v377 = vunpack.c.h.b16 %v299
      %v378 = vunpack.c.l.b16 %v300
      %v379 = vunpack.c.h.b16 %v300
      %v380 = vunpack.c.l.b16 %v301
      %v381 = vunpack.c.h.b16 %v301
      %v382 = vpack.c.b16 %v352, %v350
      %v383 = vpack.c.b16 %v353, %v351
      %v384 = vpack.c.b16 %v356, %v354
      %v385 = vpack.c.b16 %v357, %v355
      %v386 = vpack.c.b16 %v360, %v358
      %v387 = vpack.c.b16 %v361, %v359
      %v388 = vpack.c.b16 %v364, %v362
      %v389 = vpack.c.b16 %v365, %v363
      %v390 = vpack.c.b16 %v368, %v366
      %v391 = vpack.c.b16 %v369, %v367
      %v392 = vpack.c.b16 %v372, %v370
      %v393 = vpack.c.b16 %v373, %v371
      %v394 = vpack.c.b16 %v376, %v374
      %v395 = vpack.c.b16 %v377, %v375
      %v396 = vpack.c.b16 %v380, %v378
      %v397 = vpack.c.b16 %v381, %v379
      %v446 = vunpack.c.l.b16 %v302
      %v447 = vunpack.c.l.b16 %v303
      %v448 = vunpack.c.l.b16 %v304
      %v449 = vunpack.c.l.b16 %v305
      %v450 = vunpack.c.l.b16 %v306
      %v451 = vunpack.c.l.b16 %v307
      %v452 = vunpack.c.l.b16 %v308
      %v453 = vunpack.c.l.b16 %v309
      %v454 = vunpack.c.l.b16 %v310
      %v455 = vunpack.c.l.b16 %v311
      %v456 = vunpack.c.l.b16 %v312
      %v457 = vunpack.c.l.b16 %v313
      %v458 = vunpack.c.l.b16 %v314
      %v459 = vunpack.c.l.b16 %v315
      %v460 = vunpack.c.l.b16 %v316
      %v461 = vunpack.c.l.b16 %v317
      %v462 = vunpack.c.l.b16 %v318
      %v463 = vunpack.c.l.b16 %v319
      %v464 = vunpack.c.l.b16 %v320
      %v465 = vunpack.c.l.b16 %v321
      %v466 = vunpack.c.l.b16 %v322
      %v467 = vunpack.c.l.b16 %v323
      %v468 = vunpack.c.l.b16 %v324
      %v469 = vunpack.c.l.b16 %v325
      %v470 = vunpack.c.l.b16 %v326
      %v471 = vunpack.c.l.b16 %v327
      %v472 = vunpack.c.l.b16 %v328
      %v473 = vunpack.c.l.b16 %v329
      %v474 = vunpack.c.l.b16 %v330
      %v475 = vunpack.c.l.b16 %v331
      %v476 = vunpack.c.l.b16 %v332
      %v477 = vunpack.c.l.b16 %v333
      %v478 = vpack.c.b16 %v447, %v446
      %v479 = vpack.c.b16 %v449, %v448
      %v480 = vpack.c.b16 %v451, %v450
      %v481 = vpack.c.b16 %v453, %v452
      %v482 = vpack.c.b16 %v455, %v454
      %v483 = vpack.c.b16 %v457, %v456
      %v484 = vpack.c.b16 %v459, %v458
      %v485 = vpack.c.b16 %v461, %v460
      %v486 = vpack.c.b16 %v463, %v462
      %v487 = vpack.c.b16 %v465, %v464
      %v488 = vpack.c.b16 %v467, %v466
      %v489 = vpack.c.b16 %v469, %v468
      %v490 = vpack.c.b16 %v471, %v470
      %v491 = vpack.c.b16 %v473, %v472
      %v492 = vpack.c.b16 %v475, %v474
      %v493 = vpack.c.b16 %v477, %v476
      %510 = vmatprep.subr.bf16.mxu0 0
      %511 = vmatpush1.bf16.msra.mxu0 %v485
      %512 = vmatprep.subr.bf16.mxu0 0
      %513 = vmatpush1.bf16.msra.mxu0 %v484
      %514 = vmatprep.subr.bf16.mxu0 0
      %515 = vmatpush1.bf16.msra.mxu0 %v483
      %516 = vmatprep.subr.bf16.mxu0 0
      %517 = vmatpush1.bf16.msra.mxu0 %v482
      %518 = vmatprep.subr.bf16.mxu0 0
      %519 = vmatpush1.bf16.msra.mxu0 %v481
      %520 = vmatprep.subr.bf16.mxu0 0
      %521 = vmatpush1.bf16.msra.mxu0 %v480
      %522 = vmatprep.subr.bf16.mxu0 0
      %523 = vmatpush1.bf16.msra.mxu0 %v479
      %524 = vmatprep.subr.bf16.mxu0 0
      %525 = vmatpush1.bf16.msra.mxu0 %v478
      %526 = vmatprep.subr.bf16.mxu0 0
      %527 = vmatpush2.bf16.msra.mxu0 %v493
      %528 = vmatprep.subr.bf16.mxu0 0
      %529 = vmatpush2.bf16.msra.mxu0 %v492
      %530 = vmatprep.subr.bf16.mxu0 0
      %531 = vmatpush2.bf16.msra.mxu0 %v491
      %532 = vmatprep.subr.bf16.mxu0 0
      %533 = vmatpush2.bf16.msra.mxu0 %v490
      %534 = vmatprep.subr.bf16.mxu0 0
      %535 = vmatpush2.bf16.msra.mxu0 %v489
      %536 = vmatprep.subr.bf16.mxu0 0
      %537 = vmatpush2.bf16.msra.mxu0 %v488
      %538 = vmatprep.subr.bf16.mxu0 0
      %539 = vmatpush2.bf16.msra.mxu0 %v487
      %540 = vmatprep.subr.bf16.mxu0 0
      %541 = vmatpush2.bf16.msra.mxu0 %v486
      %542 = vmatprep.mubr.bf16.mxu0 %v383
      %543 = vmatmul.mubr.bf16.gmra.mxu0 %v382
      %v544 = vpop.f32.mrf.mxu0
      %v545 = vadd.f32 0.0, %v544
      %v546 = vpop.f32.mrf.mxu0
      %v547 = vpop.f32.mrf.mxu0
      %v548 = vadd.f32 0.0, %v547
      %v549 = vpop.f32.mrf.mxu0
      %550 = vmatprep.mubr.bf16.mxu0 %v385
      %551 = vmatmul.mubr.bf16.gmra.mxu0 %v384
      %v552 = vpop.f32.mrf.mxu0
      %v553 = vadd.f32 0.0, %v552
      %v554 = vpop.f32.mrf.mxu0
      %v555 = vpop.f32.mrf.mxu0
      %v556 = vadd.f32 0.0, %v555
      %v557 = vpop.f32.mrf.mxu0
      %558 = vmatprep.mubr.bf16.mxu0 %v387
      %559 = vmatmul.mubr.bf16.gmra.mxu0 %v386
      %v560 = vpop.f32.mrf.mxu0
      %v561 = vadd.f32 0.0, %v560
      %v562 = vpop.f32.mrf.mxu0
      %v563 = vpop.f32.mrf.mxu0
      %v564 = vadd.f32 0.0, %v563
      %v565 = vpop.f32.mrf.mxu0
      %566 = vmatprep.mubr.bf16.mxu0 %v389
      %567 = vmatmul.mubr.bf16.gmra.mxu0 %v388
      %v568 = vpop.f32.mrf.mxu0
      %v569 = vadd.f32 0.0, %v568
      %v570 = vpop.f32.mrf.mxu0
      %v571 = vpop.f32.mrf.mxu0
      %v572 = vadd.f32 0.0, %v571
      %v573 = vpop.f32.mrf.mxu0
      %574 = vmatprep.mubr.bf16.mxu0 %v391
      %575 = vmatmul.mubr.bf16.gmra.mxu0 %v390
      %v576 = vpop.f32.mrf.mxu0
      %v577 = vadd.f32 0.0, %v576
      %v578 = vpop.f32.mrf.mxu0
      %v579 = vpop.f32.mrf.mxu0
      %v580 = vadd.f32 0.0, %v579
      %v581 = vpop.f32.mrf.mxu0
      %582 = vmatprep.mubr.bf16.mxu0 %v393
      %583 = vmatmul.mubr.bf16.gmra.mxu0 %v392
      %v584 = vpop.f32.mrf.mxu0
      %v585 = vadd.f32 0.0, %v584
      %v586 = vpop.f32.mrf.mxu0
      %v587 = vpop.f32.mrf.mxu0
      %v588 = vadd.f32 0.0, %v587
      %v589 = vpop.f32.mrf.mxu0
      %590 = vmatprep.mubr.bf16.mxu0 %v395
      %591 = vmatmul.mubr.bf16.gmra.mxu0 %v394
      %v592 = vpop.f32.mrf.mxu0
      %v593 = vadd.f32 0.0, %v592
      %v594 = vpop.f32.mrf.mxu0
      %v595 = vpop.f32.mrf.mxu0
      %v596 = vadd.f32 0.0, %v595
      %v597 = vpop.f32.mrf.mxu0
      %598 = vmatprep.mubr.bf16.mxu0 %v397
      %599 = vmatmul.mubr.bf16.gmra.mxu0 %v396
      %v600 = vpop.f32.mrf.mxu0
      %v601 = vadd.f32 0.0, %v600
      %v602 = vpop.f32.mrf.mxu0
      %v603 = vpop.f32.mrf.mxu0
      %v604 = vadd.f32 0.0, %v603
      %v605 = vpop.f32.mrf.mxu0
      %606 = vdwg.mxu0
      %v607 = vmax.f32 %v545, 0.0
      %v608 = vmax.f32 %v548, 0.0
      %v609 = vmax.f32 %v553, 0.0
      %v610 = vmax.f32 %v556, 0.0
      %v611 = vmax.f32 %v561, 0.0
      %v612 = vmax.f32 %v564, 0.0
      %v613 = vmax.f32 %v569, 0.0
      %v614 = vmax.f32 %v572, 0.0
      %v615 = vmax.f32 %v577, 0.0
      %v616 = vmax.f32 %v580, 0.0
      %v617 = vmax.f32 %v585, 0.0
      %v618 = vmax.f32 %v588, 0.0
      %v619 = vmax.f32 %v593, 0.0
      %v620 = vmax.f32 %v596, 0.0
      %v621 = vmax.f32 %v601, 0.0
      %v622 = vmax.f32 %v604, 0.0
      %v623 = vpack.c.bf16 %v608, %v607
      %v624 = vpack.c.bf16 %v610, %v609
      %v625 = vpack.c.bf16 %v612, %v611
      %v626 = vpack.c.bf16 %v614, %v613
      %v627 = vpack.c.bf16 %v616, %v615
      %v628 = vpack.c.bf16 %v618, %v617
      %v629 = vpack.c.bf16 %v620, %v619
      %v630 = vpack.c.bf16 %v622, %v621
      %v639 = vunpack.c.l.b16 %v623
      %v640 = vunpack.c.h.b16 %v623
      %v641 = vunpack.c.l.b16 %v624
      %v642 = vunpack.c.h.b16 %v624
      %v643 = vunpack.c.l.b16 %v625
      %v644 = vunpack.c.h.b16 %v625
      %v645 = vunpack.c.l.b16 %v626
      %v646 = vunpack.c.h.b16 %v626
      %v647 = vunpack.c.l.b16 %v627
      %v648 = vunpack.c.h.b16 %v627
      %v649 = vunpack.c.l.b16 %v628
      %v650 = vunpack.c.h.b16 %v628
      %v651 = vunpack.c.l.b16 %v629
      %v652 = vunpack.c.h.b16 %v629
      %v653 = vunpack.c.l.b16 %v630
      %v654 = vunpack.c.h.b16 %v630
      %v655 = vpack.c.b16 %v639, %v639
      %v656 = vpack.c.b16 %v640, %v640
      %v657 = vpack.c.b16 %v641, %v641
      %v658 = vpack.c.b16 %v642, %v642
      %v659 = vpack.c.b16 %v643, %v643
      %v660 = vpack.c.b16 %v644, %v644
      %v661 = vpack.c.b16 %v645, %v645
      %v662 = vpack.c.b16 %v646, %v646
      %v663 = vpack.c.b16 %v647, %v647
      %v664 = vpack.c.b16 %v648, %v648
      %v665 = vpack.c.b16 %v649, %v649
      %v666 = vpack.c.b16 %v650, %v650
      %v667 = vpack.c.b16 %v651, %v651
      %v668 = vpack.c.b16 %v652, %v652
      %v669 = vpack.c.b16 %v653, %v653
      %v670 = vpack.c.b16 %v654, %v654
      %687 = vst [vmem:[%s271] sm:$0xf] %v655
      %688 = vst [vmem:[%s271 + $0x4] sm:$0xf] %v656
      %689 = vst [vmem:[%s271 + $0x8] sm:$0xf] %v657
      %690 = vst [vmem:[%s271 + $0xc] sm:$0xf] %v658
      %691 = vst [vmem:[%s271 + $0x10] sm:$0xf] %v659
      %692 = vst [vmem:[%s271 + $0x14] sm:$0xf] %v660
      %693 = vst [vmem:[%s271 + $0x18] sm:$0xf] %v661
      %694 = vst [vmem:[%s271 + $0x1c] sm:$0xf] %v662
      %695 = vst [vmem:[%s271 + $0x20] sm:$0xf] %v663
      %696 = vst [vmem:[%s271 + $0x24] sm:$0xf] %v664
      %697 = vst [vmem:[%s271 + $0x28] sm:$0xf] %v665
      %698 = vst [vmem:[%s271 + $0x2c] sm:$0xf] %v666
      %699 = vst [vmem:[%s271 + $0x30] sm:$0xf] %v667
      %700 = vst [vmem:[%s271 + $0x34] sm:$0xf] %v668
      %701 = vst [vmem:[%s271 + $0x38] sm:$0xf] %v669
      %702 = vst [vmem:[%s271 + $0x3c] sm:$0xf] %v670
      %v703 = vld [vmem:[%s2] sm:$0xf]
      %v704 = vld [vmem:[%s2 + $0x4] sm:$0xf]
      %v705 = vld [vmem:[%s2 + $0x8] sm:$0xf]
      %v706 = vld [vmem:[%s2 + $0xc] sm:$0xf]
      %v707 = vld [vmem:[%s2 + $0x10] sm:$0xf]
      %v708 = vld [vmem:[%s2 + $0x14] sm:$0xf]
      %v709 = vld [vmem:[%s2 + $0x18] sm:$0xf]
      %v710 = vld [vmem:[%s2 + $0x1c] sm:$0xf]
      %v711 = vld [vmem:[%s2 + $0x20] sm:$0xf]
      %v712 = vld [vmem:[%s2 + $0x24] sm:$0xf]
      %v713 = vld [vmem:[%s2 + $0x28] sm:$0xf]
      %v714 = vld [vmem:[%s2 + $0x2c] sm:$0xf]
      %v715 = vld [vmem:[%s2 + $0x30] sm:$0xf]
      %v716 = vld [vmem:[%s2 + $0x34] sm:$0xf]
      %v717 = vld [vmem:[%s2 + $0x38] sm:$0xf]
      %v718 = vld [vmem:[%s2 + $0x3c] sm:$0xf]
      %v735 = vunpack.c.l.b16 %v703
      %v736 = vunpack.c.l.b16 %v704
      %v737 = vunpack.c.l.b16 %v705
      %v738 = vunpack.c.l.b16 %v706
      %v739 = vunpack.c.l.b16 %v707
      %v740 = vunpack.c.l.b16 %v708
      %v741 = vunpack.c.l.b16 %v709
      %v742 = vunpack.c.l.b16 %v710
      %v743 = vunpack.c.l.b16 %v711
      %v744 = vunpack.c.l.b16 %v712
      %v745 = vunpack.c.l.b16 %v713
      %v746 = vunpack.c.l.b16 %v714
      %v747 = vunpack.c.l.b16 %v715
      %v748 = vunpack.c.l.b16 %v716
      %v749 = vunpack.c.l.b16 %v717
      %v750 = vunpack.c.l.b16 %v718
      %v751 = vpack.c.b16 %v736, %v735
      %v752 = vpack.c.b16 %v738, %v737
      %v753 = vpack.c.b16 %v740, %v739
      %v754 = vpack.c.b16 %v742, %v741
      %v755 = vpack.c.b16 %v744, %v743
      %v756 = vpack.c.b16 %v746, %v745
      %v757 = vpack.c.b16 %v748, %v747
      %v758 = vpack.c.b16 %v750, %v749
      %767 = vmatprep.subr.bf16.mxu0 0
      %768 = vmatpush1.bf16.msra.mxu0 %v758
      %769 = vmatprep.subr.bf16.mxu0 0
      %770 = vmatpush1.bf16.msra.mxu0 %v757
      %771 = vmatprep.subr.bf16.mxu0 0
      %772 = vmatpush1.bf16.msra.mxu0 %v756
      %773 = vmatprep.subr.bf16.mxu0 0
      %774 = vmatpush1.bf16.msra.mxu0 %v755
      %775 = vmatprep.subr.bf16.mxu0 0
      %776 = vmatpush1.bf16.msra.mxu0 %v754
      %777 = vmatprep.subr.bf16.mxu0 0
      %778 = vmatpush1.bf16.msra.mxu0 %v753
      %779 = vmatprep.subr.bf16.mxu0 0
      %780 = vmatpush1.bf16.msra.mxu0 %v752
      %781 = vmatprep.subr.bf16.mxu0 0
      %782 = vmatpush1.bf16.msra.mxu0 %v751
      %783 = vmatprep.subr.bf16.mxu0 0
      %784 = vmatpush2.bf16.msra.mxu0 0
      %785 = vmatprep.subr.bf16.mxu0 0
      %786 = vmatpush2.bf16.msra.mxu0 0
      %787 = vmatprep.subr.bf16.mxu0 0
      %788 = vmatpush2.bf16.msra.mxu0 0
      %789 = vmatprep.subr.bf16.mxu0 0
      %790 = vmatpush2.bf16.msra.mxu0 0
      %791 = vmatprep.subr.bf16.mxu0 0
      %792 = vmatpush2.bf16.msra.mxu0 0
      %793 = vmatprep.subr.bf16.mxu0 0
      %794 = vmatpush2.bf16.msra.mxu0 0
      %795 = vmatprep.subr.bf16.mxu0 0
      %796 = vmatpush2.bf16.msra.mxu0 0
      %797 = vmatprep.subr.bf16.mxu0 0
      %798 = vmatpush2.bf16.msra.mxu0 0
      %799 = vmatprep.mubr.bf16.mxu0 0
      %800 = vmatmul.mubr.bf16.gmra.mxu0 %v623
      %v801 = vpop.f32.mrf.mxu0
      %v802 = vadd.f32 0.0, %v801
      %v803 = vpop.f32.mrf.mxu0
      %v804 = vpop.f32.mrf.mxu0
      %v805 = vadd.f32 0.0, %v804
      %v806 = vpop.f32.mrf.mxu0
      %807 = vmatprep.mubr.bf16.mxu0 0
      %808 = vmatmul.mubr.bf16.gmra.mxu0 %v624
      %v809 = vpop.f32.mrf.mxu0
      %v810 = vadd.f32 0.0, %v809
      %v811 = vpop.f32.mrf.mxu0
      %v812 = vpop.f32.mrf.mxu0
      %v813 = vadd.f32 0.0, %v812
      %v814 = vpop.f32.mrf.mxu0
      %815 = vmatprep.mubr.bf16.mxu0 0
      %816 = vmatmul.mubr.bf16.gmra.mxu0 %v625
      %v817 = vpop.f32.mrf.mxu0
      %v818 = vadd.f32 0.0, %v817
      %v819 = vpop.f32.mrf.mxu0
      %v820 = vpop.f32.mrf.mxu0
      %v821 = vadd.f32 0.0, %v820
      %v822 = vpop.f32.mrf.mxu0
      %823 = vmatprep.mubr.bf16.mxu0 0
      %824 = vmatmul.mubr.bf16.gmra.mxu0 %v626
      %v825 = vpop.f32.mrf.mxu0
      %v826 = vadd.f32 0.0, %v825
      %v827 = vpop.f32.mrf.mxu0
      %v828 = vpop.f32.mrf.mxu0
      %v829 = vadd.f32 0.0, %v828
      %v830 = vpop.f32.mrf.mxu0
      %831 = vmatprep.mubr.bf16.mxu0 0
      %832 = vmatmul.mubr.bf16.gmra.mxu0 %v627
      %v833 = vpop.f32.mrf.mxu0
      %v834 = vadd.f32 0.0, %v833
      %v835 = vpop.f32.mrf.mxu0
      %v836 = vpop.f32.mrf.mxu0
      %v837 = vadd.f32 0.0, %v836
      %v838 = vpop.f32.mrf.mxu0
      %839 = vmatprep.mubr.bf16.mxu0 0
      %840 = vmatmul.mubr.bf16.gmra.mxu0 %v628
      %v841 = vpop.f32.mrf.mxu0
      %v842 = vadd.f32 0.0, %v841
      %v843 = vpop.f32.mrf.mxu0
      %v844 = vpop.f32.mrf.mxu0
      %v845 = vadd.f32 0.0, %v844
      %v846 = vpop.f32.mrf.mxu0
      %847 = vmatprep.mubr.bf16.mxu0 0
      %848 = vmatmul.mubr.bf16.gmra.mxu0 %v629
      %v849 = vpop.f32.mrf.mxu0
      %v850 = vadd.f32 0.0, %v849
      %v851 = vpop.f32.mrf.mxu0
      %v852 = vpop.f32.mrf.mxu0
      %v853 = vadd.f32 0.0, %v852
      %v854 = vpop.f32.mrf.mxu0
      %855 = vmatprep.mubr.bf16.mxu0 0
      %856 = vmatmul.mubr.bf16.gmra.mxu0 %v630
      %v857 = vpop.f32.mrf.mxu0
      %v858 = vadd.f32 0.0, %v857
      %v859 = vpop.f32.mrf.mxu0
      %v860 = vpop.f32.mrf.mxu0
      %v861 = vadd.f32 0.0, %v860
      %v862 = vpop.f32.mrf.mxu0
      %863 = vdwg.mxu0
      %v864 = vpack.c.bf16 %v805, %v802
      %v865 = vpack.c.bf16 %v813, %v810
      %v866 = vpack.c.bf16 %v821, %v818
      %v867 = vpack.c.bf16 %v829, %v826
      %v868 = vpack.c.bf16 %v837, %v834
      %v869 = vpack.c.bf16 %v845, %v842
      %v870 = vpack.c.bf16 %v853, %v850
      %v871 = vpack.c.bf16 %v861, %v858
      %v880 = vunpack.c.l.b16 %v864
      %v881 = vunpack.c.h.b16 %v864
      %v882 = vunpack.c.l.b16 %v865
      %v883 = vunpack.c.h.b16 %v865
      %v884 = vunpack.c.l.b16 %v866
      %v885 = vunpack.c.h.b16 %v866
      %v886 = vunpack.c.l.b16 %v867
      %v887 = vunpack.c.h.b16 %v867
      %v888 = vunpack.c.l.b16 %v868
      %v889 = vunpack.c.h.b16 %v868
      %v890 = vunpack.c.l.b16 %v869
      %v891 = vunpack.c.h.b16 %v869
      %v892 = vunpack.c.l.b16 %v870
      %v893 = vunpack.c.h.b16 %v870
      %v894 = vunpack.c.l.b16 %v871
      %v895 = vunpack.c.h.b16 %v871
      %v896 = vpack.c.b16 %v880, %v880
      %v897 = vpack.c.b16 %v881, %v881
      %v898 = vpack.c.b16 %v882, %v882
      %v899 = vpack.c.b16 %v883, %v883
      %v900 = vpack.c.b16 %v884, %v884
      %v901 = vpack.c.b16 %v885, %v885
      %v902 = vpack.c.b16 %v886, %v886
      %v903 = vpack.c.b16 %v887, %v887
      %v904 = vpack.c.b16 %v888, %v888
      %v905 = vpack.c.b16 %v889, %v889
      %v906 = vpack.c.b16 %v890, %v890
      %v907 = vpack.c.b16 %v891, %v891
      %v908 = vpack.c.b16 %v892, %v892
      %v909 = vpack.c.b16 %v893, %v893
      %v910 = vpack.c.b16 %v894, %v894
      %v911 = vpack.c.b16 %v895, %v895
      %928 = vst [vmem:[%s277] sm:$0xf] %v896
      %929 = vst [vmem:[%s277 + $0x4] sm:$0xf] %v897
      %930 = vst [vmem:[%s277 + $0x8] sm:$0xf] %v898
      %931 = vst [vmem:[%s277 + $0xc] sm:$0xf] %v899
      %932 = vst [vmem:[%s277 + $0x10] sm:$0xf] %v900
      %933 = vst [vmem:[%s277 + $0x14] sm:$0xf] %v901
      %934 = vst [vmem:[%s277 + $0x18] sm:$0xf] %v902
      %935 = vst [vmem:[%s277 + $0x1c] sm:$0xf] %v903
      %936 = vst [vmem:[%s277 + $0x20] sm:$0xf] %v904
      %937 = vst [vmem:[%s277 + $0x24] sm:$0xf] %v905
      %938 = vst [vmem:[%s277 + $0x28] sm:$0xf] %v906
      %939 = vst [vmem:[%s277 + $0x2c] sm:$0xf] %v907
      %940 = vst [vmem:[%s277 + $0x30] sm:$0xf] %v908
      %941 = vst [vmem:[%s277 + $0x34] sm:$0xf] %v909
      %942 = vst [vmem:[%s277 + $0x38] sm:$0xf] %v910
      %943 = vst [vmem:[%s277 + $0x3c] sm:$0xf] %v911
      %v944 = vld [vmem:[%s3] sm:$0xf]
      %v945 = vld [vmem:[%s3 + $0x4] sm:$0xf]
      %v946 = vld [vmem:[%s3 + $0x8] sm:$0xf]
      %v947 = vld [vmem:[%s3 + $0xc] sm:$0xf]
      %v948 = vld [vmem:[%s3 + $0x10] sm:$0xf]
      %v949 = vld [vmem:[%s3 + $0x14] sm:$0xf]
      %v950 = vld [vmem:[%s3 + $0x18] sm:$0xf]
      %v951 = vld [vmem:[%s3 + $0x1c] sm:$0xf]
      %v952 = vld [vmem:[%s3 + $0x20] sm:$0xf]
      %v953 = vld [vmem:[%s3 + $0x24] sm:$0xf]
      %v954 = vld [vmem:[%s3 + $0x28] sm:$0xf]
      %v955 = vld [vmem:[%s3 + $0x2c] sm:$0xf]
      %v956 = vld [vmem:[%s3 + $0x30] sm:$0xf]
      %v957 = vld [vmem:[%s3 + $0x34] sm:$0xf]
      %v958 = vld [vmem:[%s3 + $0x38] sm:$0xf]
      %v959 = vld [vmem:[%s3 + $0x3c] sm:$0xf]
      %v976 = vunpack.c.l.b16 %v944
      %v977 = vunpack.c.l.b16 %v945
      %v978 = vunpack.c.l.b16 %v946
      %v979 = vunpack.c.l.b16 %v947
      %v980 = vunpack.c.l.b16 %v948
      %v981 = vunpack.c.l.b16 %v949
      %v982 = vunpack.c.l.b16 %v950
      %v983 = vunpack.c.l.b16 %v951
      %v984 = vunpack.c.l.b16 %v952
      %v985 = vunpack.c.l.b16 %v953
      %v986 = vunpack.c.l.b16 %v954
      %v987 = vunpack.c.l.b16 %v955
      %v988 = vunpack.c.l.b16 %v956
      %v989 = vunpack.c.l.b16 %v957
      %v990 = vunpack.c.l.b16 %v958
      %v991 = vunpack.c.l.b16 %v959
      %v992 = vpack.c.b16 %v977, %v976
      %v993 = vpack.c.b16 %v979, %v978
      %v994 = vpack.c.b16 %v981, %v980
      %v995 = vpack.c.b16 %v983, %v982
      %v996 = vpack.c.b16 %v985, %v984
      %v997 = vpack.c.b16 %v987, %v986
      %v998 = vpack.c.b16 %v989, %v988
      %v999 = vpack.c.b16 %v991, %v990
      %1008 = vmatprep.subr.bf16.mxu0 0
      %1009 = vmatpush1.bf16.msra.mxu0 %v999
      %1010 = vmatprep.subr.bf16.mxu0 0
      %1011 = vmatpush1.bf16.msra.mxu0 %v998
      %1012 = vmatprep.subr.bf16.mxu0 0
      %1013 = vmatpush1.bf16.msra.mxu0 %v997
      %1014 = vmatprep.subr.bf16.mxu0 0
      %1015 = vmatpush1.bf16.msra.mxu0 %v996
      %1016 = vmatprep.subr.bf16.mxu0 0
      %1017 = vmatpush1.bf16.msra.mxu0 %v995
      %1018 = vmatprep.subr.bf16.mxu0 0
      %1019 = vmatpush1.bf16.msra.mxu0 %v994
      %1020 = vmatprep.subr.bf16.mxu0 0
      %1021 = vmatpush1.bf16.msra.mxu0 %v993
      %1022 = vmatprep.subr.bf16.mxu0 0
      %1023 = vmatpush1.bf16.msra.mxu0 %v992
      %1024 = vmatprep.subr.bf16.mxu0 0
      %1025 = vmatpush2.bf16.msra.mxu0 0
      %1026 = vmatprep.subr.bf16.mxu0 0
      %1027 = vmatpush2.bf16.msra.mxu0 0
      %1028 = vmatprep.subr.bf16.mxu0 0
      %1029 = vmatpush2.bf16.msra.mxu0 0
      %1030 = vmatprep.subr.bf16.mxu0 0
      %1031 = vmatpush2.bf16.msra.mxu0 0
      %1032 = vmatprep.subr.bf16.mxu0 0
      %1033 = vmatpush2.bf16.msra.mxu0 0
      %1034 = vmatprep.subr.bf16.mxu0 0
      %1035 = vmatpush2.bf16.msra.mxu0 0
      %1036 = vmatprep.subr.bf16.mxu0 0
      %1037 = vmatpush2.bf16.msra.mxu0 0
      %1038 = vmatprep.subr.bf16.mxu0 0
      %1039 = vmatpush2.bf16.msra.mxu0 0
      %1040 = vmatprep.mubr.bf16.mxu0 0
      %1041 = vmatmul.mubr.bf16.gmra.mxu0 %v623
      %v1042 = vpop.f32.mrf.mxu0
      %v1043 = vadd.f32 0.0, %v1042
      %v1044 = vpop.f32.mrf.mxu0
      %v1045 = vpop.f32.mrf.mxu0
      %v1046 = vadd.f32 0.0, %v1045
      %v1047 = vpop.f32.mrf.mxu0
      %1048 = vmatprep.mubr.bf16.mxu0 0
      %1049 = vmatmul.mubr.bf16.gmra.mxu0 %v624
      %v1050 = vpop.f32.mrf.mxu0
      %v1051 = vadd.f32 0.0, %v1050
      %v1052 = vpop.f32.mrf.mxu0
      %v1053 = vpop.f32.mrf.mxu0
      %v1054 = vadd.f32 0.0, %v1053
      %v1055 = vpop.f32.mrf.mxu0
      %1056 = vmatprep.mubr.bf16.mxu0 0
      %1057 = vmatmul.mubr.bf16.gmra.mxu0 %v625
      %v1058 = vpop.f32.mrf.mxu0
      %v1059 = vadd.f32 0.0, %v1058
      %v1060 = vpop.f32.mrf.mxu0
      %v1061 = vpop.f32.mrf.mxu0
      %v1062 = vadd.f32 0.0, %v1061
      %v1063 = vpop.f32.mrf.mxu0
      %1064 = vmatprep.mubr.bf16.mxu0 0
      %1065 = vmatmul.mubr.bf16.gmra.mxu0 %v626
      %v1066 = vpop.f32.mrf.mxu0
      %v1067 = vadd.f32 0.0, %v1066
      %v1068 = vpop.f32.mrf.mxu0
      %v1069 = vpop.f32.mrf.mxu0
      %v1070 = vadd.f32 0.0, %v1069
      %v1071 = vpop.f32.mrf.mxu0
      %1072 = vmatprep.mubr.bf16.mxu0 0
      %1073 = vmatmul.mubr.bf16.gmra.mxu0 %v627
      %v1074 = vpop.f32.mrf.mxu0
      %v1075 = vadd.f32 0.0, %v1074
      %v1076 = vpop.f32.mrf.mxu0
      %v1077 = vpop.f32.mrf.mxu0
      %v1078 = vadd.f32 0.0, %v1077
      %v1079 = vpop.f32.mrf.mxu0
      %1080 = vmatprep.mubr.bf16.mxu0 0
      %1081 = vmatmul.mubr.bf16.gmra.mxu0 %v628
      %v1082 = vpop.f32.mrf.mxu0
      %v1083 = vadd.f32 0.0, %v1082
      %v1084 = vpop.f32.mrf.mxu0
      %v1085 = vpop.f32.mrf.mxu0
      %v1086 = vadd.f32 0.0, %v1085
      %v1087 = vpop.f32.mrf.mxu0
      %1088 = vmatprep.mubr.bf16.mxu0 0
      %1089 = vmatmul.mubr.bf16.gmra.mxu0 %v629
      %v1090 = vpop.f32.mrf.mxu0
      %v1091 = vadd.f32 0.0, %v1090
      %v1092 = vpop.f32.mrf.mxu0
      %v1093 = vpop.f32.mrf.mxu0
      %v1094 = vadd.f32 0.0, %v1093
      %v1095 = vpop.f32.mrf.mxu0
      %1096 = vmatprep.mubr.bf16.mxu0 0
      %1097 = vmatmul.mubr.bf16.gmra.mxu0 %v630
      %v1098 = vpop.f32.mrf.mxu0
      %v1099 = vadd.f32 0.0, %v1098
      %v1100 = vpop.f32.mrf.mxu0
      %v1101 = vpop.f32.mrf.mxu0
      %v1102 = vadd.f32 0.0, %v1101
      %v1103 = vpop.f32.mrf.mxu0
      %1104 = vdwg.mxu0
      %v1105 = vpack.c.bf16 %v1046, %v1043
      %v1106 = vpack.c.bf16 %v1054, %v1051
      %v1107 = vpack.c.bf16 %v1062, %v1059
      %v1108 = vpack.c.bf16 %v1070, %v1067
      %v1109 = vpack.c.bf16 %v1078, %v1075
      %v1110 = vpack.c.bf16 %v1086, %v1083
      %v1111 = vpack.c.bf16 %v1094, %v1091
      %v1112 = vpack.c.bf16 %v1102, %v1099
      %v1121 = vunpack.c.l.b16 %v1105
      %v1122 = vunpack.c.h.b16 %v1105
      %v1123 = vunpack.c.l.b16 %v1106
      %v1124 = vunpack.c.h.b16 %v1106
      %v1125 = vunpack.c.l.b16 %v1107
      %v1126 = vunpack.c.h.b16 %v1107
      %v1127 = vunpack.c.l.b16 %v1108
      %v1128 = vunpack.c.h.b16 %v1108
      %v1129 = vunpack.c.l.b16 %v1109
      %v1130 = vunpack.c.h.b16 %v1109
      %v1131 = vunpack.c.l.b16 %v1110
      %v1132 = vunpack.c.h.b16 %v1110
      %v1133 = vunpack.c.l.b16 %v1111
      %v1134 = vunpack.c.h.b16 %v1111
      %v1135 = vunpack.c.l.b16 %v1112
      %v1136 = vunpack.c.h.b16 %v1112
      %v1137 = vpack.c.b16 %v1121, %v1121
      %v1138 = vpack.c.b16 %v1122, %v1122
      %v1139 = vpack.c.b16 %v1123, %v1123
      %v1140 = vpack.c.b16 %v1124, %v1124
      %v1141 = vpack.c.b16 %v1125, %v1125
      %v1142 = vpack.c.b16 %v1126, %v1126
      %v1143 = vpack.c.b16 %v1127, %v1127
      %v1144 = vpack.c.b16 %v1128, %v1128
      %v1145 = vpack.c.b16 %v1129, %v1129
      %v1146 = vpack.c.b16 %v1130, %v1130
      %v1147 = vpack.c.b16 %v1131, %v1131
      %v1148 = vpack.c.b16 %v1132, %v1132
      %v1149 = vpack.c.b16 %v1133, %v1133
      %v1150 = vpack.c.b16 %v1134, %v1134
      %v1151 = vpack.c.b16 %v1135, %v1135
      %v1152 = vpack.c.b16 %v1136, %v1136
      %1169 = vst [vmem:[%s283] sm:$0xf] %v1137
      %1170 = vst [vmem:[%s283 + $0x4] sm:$0xf] %v1138
      %1171 = vst [vmem:[%s283 + $0x8] sm:$0xf] %v1139
      %1172 = vst [vmem:[%s283 + $0xc] sm:$0xf] %v1140
      %1173 = vst [vmem:[%s283 + $0x10] sm:$0xf] %v1141
      %1174 = vst [vmem:[%s283 + $0x14] sm:$0xf] %v1142
      %1175 = vst [vmem:[%s283 + $0x18] sm:$0xf] %v1143
      %1176 = vst [vmem:[%s283 + $0x1c] sm:$0xf] %v1144
      %1177 = vst [vmem:[%s283 + $0x20] sm:$0xf] %v1145
      %1178 = vst [vmem:[%s283 + $0x24] sm:$0xf] %v1146
      %1179 = vst [vmem:[%s283 + $0x28] sm:$0xf] %v1147
      %1180 = vst [vmem:[%s283 + $0x2c] sm:$0xf] %v1148
      %1181 = vst [vmem:[%s283 + $0x30] sm:$0xf] %v1149
      %1182 = vst [vmem:[%s283 + $0x34] sm:$0xf] %v1150
      %1183 = vst [vmem:[%s283 + $0x38] sm:$0xf] %v1151
      %1184 = vst [vmem:[%s283 + $0x3c] sm:$0xf] %v1152
      %s1185 = smul.u32 16, %s18
      %p1186 = scmp.lt.s32.totalorder %s1185, 31
      %s1187 = scalar_select %p1186, %s1185, 31
      %s1188 = smul.addr %s1187, 4
      %s1189 = scalar_lea.vmem %s4, %s1188
      %s1190 = smul.u32 16, %s18
      %p1191 = scmp.lt.s32.totalorder %s1190, 31
      %s1192 = scalar_select %p1191, %s1190, 31
      %s1193 = smul.addr %s1192, 4
      %s1194 = scalar_lea.vmem %s5, %s1193
      %s1195 = smul.u32 16, %s18
      %p1196 = scmp.lt.s32.totalorder %s1195, 31
      %s1197 = scalar_select %p1196, %s1195, 31
      %s1198 = smul.addr %s1197, 4
      %s1199 = scalar_lea.vmem %s6, %s1198
      // Predicated region
      $region37: #{densenet6_forward.6} parent=35 // pred_check
        %p1200 = pneg %p125
      $region38: #{densenet6_forward.6} parent=35 // pred_check_branch
        %1202 = sbr.rel (%p1200) target = $region40
      $region39: #{densenet6_forward.6} parent=35 // pred_region
        %s1203 = smul.u32 16, %s18
      $region40: #{densenet6_forward.6} parent=35 // pred_fallthru
        _
      // Predicated region
      $region41: #{densenet6_forward.6} parent=35 // pred_check
        %p1204 = pneg %p151
      $region42: #{densenet6_forward.6} parent=35 // pred_check_branch
        %1206 = sbr.rel (%p1204) target = $region44
      $region43: #{densenet6_forward.6} parent=35 // pred_region
        %s1207 = smul.u32 16, %s18
      $region44: #{densenet6_forward.6} parent=35 // pred_fallthru
        _
      // Predicated region
      $region45: #{densenet6_forward.6} parent=35 // pred_check
        %p1208 = pneg %p177
      $region46: #{densenet6_forward.6} parent=35 // pred_check_branch
        %1210 = sbr.rel (%p1208) target = $region48
      $region47: #{densenet6_forward.6} parent=35 // pred_region
        %s1211 = smul.u32 16, %s18
      $region48: #{densenet6_forward.6} parent=35 // pred_fallthru
        _
    $region36: #{densenet6_forward.6} parent=5 // pred_fallthru
      _
    %p1212 = scmp.le.s32.totalorder 2, %s13
    // Predicated region
    $region49: #{densenet6_forward.6} parent=5 // pred_check
      %p1213 = pneg %p1212
    $region50: #{densenet6_forward.6} parent=5 // pred_check_branch
      %1215 = sbr.rel (%p1213) target = $region52
    $region51: #{densenet6_forward.6} parent=5 // pred_region
      %s1216 = ssub.s32 %s13, 2
      // Predicated region
      $region53: #{densenet6_forward.6} parent=51 // pred_check
        %p1217 = pneg %p131
      $region54: #{densenet6_forward.6} parent=51 // pred_check_branch
        %1219 = sbr.rel (%p1217) target = $region56
      $region55: #{densenet6_forward.6} parent=51 // pred_region
        %s1220 = smul.u32 16, %s19
        %p1221 = scmp.lt.s32.totalorder %s1220, 31
        %s1222 = scalar_select %p1221, %s1220, 31
        %s1223 = smul.addr %s1222, 4
        %s1224 = scalar_lea.vmem %s4, %s1223
      $region56: #{densenet6_forward.6} parent=51 // pred_fallthru
        _
      // Predicated region
      $region57: #{densenet6_forward.6} parent=51 // pred_check
        %p1225 = pneg %p157
      $region58: #{densenet6_forward.6} parent=51 // pred_check_branch
        %1227 = sbr.rel (%p1225) target = $region60
      $region59: #{densenet6_forward.6} parent=51 // pred_region
        %s1228 = smul.u32 16, %s19
        %p1229 = scmp.lt.s32.totalorder %s1228, 31
        %s1230 = scalar_select %p1229, %s1228, 31
        %s1231 = smul.addr %s1230, 4
        %s1232 = scalar_lea.vmem %s5, %s1231
      $region60: #{densenet6_forward.6} parent=51 // pred_fallthru
        _
      // Predicated region
      $region61: #{densenet6_forward.6} parent=51 // pred_check
        %p1233 = pneg %p183
      $region62: #{densenet6_forward.6} parent=51 // pred_check_branch
        %1235 = sbr.rel (%p1233) target = $region64
      $region63: #{densenet6_forward.6} parent=51 // pred_region
        %s1236 = smul.u32 16, %s19
        %p1237 = scmp.lt.s32.totalorder %s1236, 31
        %s1238 = scalar_select %p1237, %s1236, 31
        %s1239 = smul.addr %s1238, 4
        %s1240 = scalar_lea.vmem %s6, %s1239
      $region64: #{densenet6_forward.6} parent=51 // pred_fallthru
        _
    $region52: #{densenet6_forward.6} parent=5 // pred_fallthru
      _
  $region6: #{densenet6_forward.6} parent=0 // loop_footer
    %s17 = sadd.s32 1, %s13
  $region7: #{densenet6_forward.6} parent=0 // loop_footer_branch
    %12 = sbr.rel target = $region3
  $region8: #{densenet6_forward.6} parent=0 // loop_exit
    _

// kernel: densenet6_forward.5
$region0: #{densenet6_forward.5}
  #allocation0 [shape = 'u32[]', space=smem, size = 0x4, offset = 0x4, fixed_abs, tag = 'smem constant byte address 0x4 - core index']
  #allocation1 [shape = 'u32[144,128]{1,0:T(1,128)}', space=vmem, size = 0x12000, scoped, tag = 'internal scratch']
  %s0 = inlined_call_operand.vmem [shape: bf16[256,256], index: 0, kind: input, shape index: {}]
  %s1 = inlined_call_operand.vmem [shape: bf16[256,128], index: 1, kind: input, shape index: {}]
  %s2 = inlined_call_operand.vmem [shape: bf16[128,128], index: 2, kind: input, shape index: {}]
  %s3 = inlined_call_operand.vmem [shape: bf16[128,128], index: 3, kind: input, shape index: {}]
  %s4 = inlined_call_operand.vmem [shape: bf16[256,128], index: 4, kind: output, shape index: {}]
  %s5 = sld [smem:[#allocation0]]
  $region49: #{densenet6_forward.5} parent=0
    _
  %s7 = ssub.s32 1, %s5
  %s8 = scalar_select 0, %s7, %s5
  loop: start=0, step=1, limit=4
  $region2: #{densenet6_forward.5} parent=0 // loop_pre_header
    _
  $region3: #{densenet6_forward.5} parent=0 // loop_header
    %s10 = sphi 0, %s14
    %p11 = scmp.ge.s32.totalorder %s10, 4
    %s20 = sphi 0, %s22
    %s23 = sphi 0, %s20
    %s24 = sphi 0, %s23
    %s40 = sphi 0, %s24
    %s44 = sphi 0, %s44
    %s46 = sphi 0, %s44
    %s47 = sphi 0, %s46
    %s61 = sphi 0, %s47
    %s65 = sphi 0, %s65
    %s67 = sphi 0, %s65
    %s68 = sphi 0, %s67
    %s82 = sphi 0, %s68
    %s86 = sphi 0, %s86
    %s88 = sphi 0, %s86
    %s89 = sphi 0, %s88
    %s103 = sphi 0, %s89
    %s109 = sphi 0, %s111
    %s112 = sphi 0, %s109
    %s113 = sphi 0, %s112
    %s129 = sphi 0, %s113
  $region4: #{densenet6_forward.5} parent=0 // loop_header_branch
    %13 = sbr.rel (%p11) target = $region8
  $region5: #{densenet6_forward.5} parent=0 // loop_body
    %s15 = ssub.s32 %s10, 1
    %s16 = ssub.s32 %s10, 2
    %s17 = sadd.s32 %s10, 1
    %s18 = ssub.s32 %s10, %s17
    %p19 = scmp.eq.s32.totalorder %s18, 0
    %s21 = sadd.s32 %s20, 1
    %s22 = scalar_select %p19, %s20, %s21
    %p25 = pneg %p19
    %p26 = scmp.eq.s32.totalorder %s10, 1
    %p27 = por %p25, %p26
    %p28 = scmp.ne.s32.totalorder %s20, %s23
    %p29 = scmp.eq.s32.totalorder %s10, 0
    %p30 = por %p28, %p29
    %p31 = scmp.ne.s32.totalorder %s20, %s23
    %p32 = scmp.eq.s32.totalorder %s15, 1
    %p33 = por %p31, %p32
    %p34 = scmp.ne.s32.totalorder %s23, %s24
    %p35 = scmp.eq.s32.totalorder %s15, 0
    %p36 = por %p34, %p35
    %p37 = scmp.ne.s32.totalorder %s23, %s24
    %p38 = scmp.eq.s32.totalorder %s16, 1
    %p39 = por %p37, %p38
    %p41 = scmp.ne.s32.totalorder %s24, %s40
    %p42 = scmp.eq.s32.totalorder %s16, 0
    %p43 = por %p41, %p42
    %s45 = sadd.s32 %s44, 1
    %p48 = scmp.eq.s32.totalorder %s10, 1
    %p49 = scmp.ne.s32.totalorder %s44, %s46
    %p50 = scmp.eq.s32.totalorder %s10, 0
    %p51 = por %p49, %p50
    %p52 = scmp.ne.s32.totalorder %s44, %s46
    %p53 = scmp.eq.s32.totalorder %s15, 1
    %p54 = por %p52, %p53
    %p55 = scmp.ne.s32.totalorder %s46, %s47
    %p56 = scmp.eq.s32.totalorder %s15, 0
    %p57 = por %p55, %p56
    %p58 = scmp.ne.s32.totalorder %s46, %s47
    %p59 = scmp.eq.s32.totalorder %s16, 1
    %p60 = por %p58, %p59
    %p62 = scmp.ne.s32.totalorder %s47, %s61
    %p63 = scmp.eq.s32.totalorder %s16, 0
    %p64 = por %p62, %p63
    %s66 = sadd.s32 %s65, 1
    %p69 = scmp.eq.s32.totalorder %s10, 1
    %p70 = scmp.ne.s32.totalorder %s65, %s67
    %p71 = scmp.eq.s32.totalorder %s10, 0
    %p72 = por %p70, %p71
    %p73 = scmp.ne.s32.totalorder %s65, %s67
    %p74 = scmp.eq.s32.totalorder %s15, 1
    %p75 = por %p73, %p74
    %p76 = scmp.ne.s32.totalorder %s67, %s68
    %p77 = scmp.eq.s32.totalorder %s15, 0
    %p78 = por %p76, %p77
    %p79 = scmp.ne.s32.totalorder %s67, %s68
    %p80 = scmp.eq.s32.totalorder %s16, 1
    %p81 = por %p79, %p80
    %p83 = scmp.ne.s32.totalorder %s68, %s82
    %p84 = scmp.eq.s32.totalorder %s16, 0
    %p85 = por %p83, %p84
    %s87 = sadd.s32 %s86, 1
    %p90 = scmp.eq.s32.totalorder %s10, 1
    %p91 = scmp.ne.s32.totalorder %s86, %s88
    %p92 = scmp.eq.s32.totalorder %s10, 0
    %p93 = por %p91, %p92
    %p94 = scmp.ne.s32.totalorder %s86, %s88
    %p95 = scmp.eq.s32.totalorder %s15, 1
    %p96 = por %p94, %p95
    %p97 = scmp.ne.s32.totalorder %s88, %s89
    %p98 = scmp.eq.s32.totalorder %s15, 0
    %p99 = por %p97, %p98
    %p100 = scmp.ne.s32.totalorder %s88, %s89
    %p101 = scmp.eq.s32.totalorder %s16, 1
    %p102 = por %p100, %p101
    %p104 = scmp.ne.s32.totalorder %s89, %s103
    %p105 = scmp.eq.s32.totalorder %s16, 0
    %p106 = por %p104, %p105
    %s107 = ssub.s32 %s10, %s17
    %p108 = scmp.eq.s32.totalorder %s107, 0
    %s110 = sadd.s32 %s109, 1
    %s111 = scalar_select %p108, %s109, %s110
    %p114 = pneg %p108
    %p115 = scmp.eq.s32.totalorder %s10, 1
    %p116 = por %p114, %p115
    %p117 = scmp.ne.s32.totalorder %s109, %s112
    %p118 = scmp.eq.s32.totalorder %s10, 0
    %p119 = por %p117, %p118
    %p120 = scmp.ne.s32.totalorder %s109, %s112
    %p121 = scmp.eq.s32.totalorder %s15, 1
    %p122 = por %p120, %p121
    %p123 = scmp.ne.s32.totalorder %s112, %s113
    %p124 = scmp.eq.s32.totalorder %s15, 0
    %p125 = por %p123, %p124
    %p126 = scmp.ne.s32.totalorder %s112, %s113
    %p127 = scmp.eq.s32.totalorder %s16, 1
    %p128 = por %p126, %p127
    %p130 = scmp.ne.s32.totalorder %s113, %s129
    %p131 = scmp.eq.s32.totalorder %s16, 0
    %p132 = por %p130, %p131
    %p133 = scmp.le.s32.totalorder 1, %s10
    %p134 = scmp.lt.s32.totalorder %s10, 3
    %p135 = pnand %p133, %p134
    %p136 = pneg %p135
    // Predicated region
    $region9: #{densenet6_forward.5} parent=5 // pred_check
      _
    $region10: #{densenet6_forward.5} parent=5 // pred_check_branch
      %138 = sbr.rel (%p135) target = $region12
    $region11: #{densenet6_forward.5} parent=5 // pred_region
      %s139 = ssub.s32 %s10, 1
      // Predicated region
      $region13: #{densenet6_forward.5} parent=11 // pred_check
        %p140 = pneg %p57
      $region14: #{densenet6_forward.5} parent=11 // pred_check_branch
        %142 = sbr.rel (%p140) target = $region16
      $region15: #{densenet6_forward.5} parent=11 // pred_region
        _
      $region16: #{densenet6_forward.5} parent=11 // pred_fallthru
        _
      // Predicated region
      $region17: #{densenet6_forward.5} parent=11 // pred_check
        %p143 = pneg %p78
      $region18: #{densenet6_forward.5} parent=11 // pred_check_branch
        %145 = sbr.rel (%p143) target = $region20
      $region19: #{densenet6_forward.5} parent=11 // pred_region
        _
      $region20: #{densenet6_forward.5} parent=11 // pred_fallthru
        _
      // Predicated region
      $region21: #{densenet6_forward.5} parent=11 // pred_check
        %p146 = pneg %p99
      $region22: #{densenet6_forward.5} parent=11 // pred_check_branch
        %148 = sbr.rel (%p146) target = $region24
      $region23: #{densenet6_forward.5} parent=11 // pred_region
        _
      $region24: #{densenet6_forward.5} parent=11 // pred_fallthru
        _
    $region12: #{densenet6_forward.5} parent=5 // pred_fallthru
      _
    %p149 = scmp.lt.s32.totalorder %s10, 2
    // Predicated region
    $region25: #{densenet6_forward.5} parent=5 // pred_check
      %p150 = pneg %p149
    $region26: #{densenet6_forward.5} parent=5 // pred_check_branch
      %152 = sbr.rel (%p150) target = $region28
    $region27: #{densenet6_forward.5} parent=5 // pred_region
      // Predicated region
      $region29: #{densenet6_forward.5} parent=27 // pred_check
        %p153 = pneg %p30
      $region30: #{densenet6_forward.5} parent=27 // pred_check_branch
        %155 = sbr.rel (%p153) target = $region32
      $region31: #{densenet6_forward.5} parent=27 // pred_region
        %s156 = smul.u32 16, %s10
        %p157 = scmp.lt.s32.totalorder %s156, 31
        %s158 = scalar_select %p157, %s156, 31
        %s159 = smul.addr %s158, 2
        %s160 = smul.addr %s159, 4
        %s161 = scalar_lea.vmem %s0, %s160
        %s162 = smul.u32 16, %s10
      $region32: #{densenet6_forward.5} parent=27 // pred_fallthru
        _
    $region28: #{densenet6_forward.5} parent=5 // pred_fallthru
      _
    %p163 = scmp.le.s32.totalorder 1, %s10
    %p164 = scmp.lt.s32.totalorder %s10, 3
    %p165 = pnand %p163, %p164
    %p166 = pneg %p165
    // Predicated region
    $region33: #{densenet6_forward.5} parent=5 // pred_check
      _
    $region34: #{densenet6_forward.5} parent=5 // pred_check_branch
      %168 = sbr.rel (%p165) target = $region36
    $region35: #{densenet6_forward.5} parent=5 // pred_region
      %s169 = ssub.s32 %s10, 1
      %s170 = smul.u32 16, %s15
      %p171 = scmp.lt.s32.totalorder %s170, 31
      %s172 = scalar_select %p171, %s170, 31
      %s173 = smul.addr %s172, 2
      %s174 = smul.addr %s173, 4
      %s175 = scalar_lea.vmem %s0, %s174
      %p176 = pneg %p36
      %p177 = pneg %p33
      %p178 = pneg %p57
      %p179 = pneg %p54
      %p180 = pneg %p78
      %p181 = pneg %p75
      %p182 = pneg %p99
      %p183 = pneg %p96
      %p184 = pneg %p125
      %p185 = pneg %p122
      %s186 = smul.u32 16, %s15
      %p187 = scmp.lt.s32.totalorder %s186, 31
      %s188 = scalar_select %p187, %s186, 31
      %s189 = smul.addr %s188, 4
      %s190 = scalar_lea.vmem %s4, %s189
      %s191 = smul.u32 16, %s15
      %p192 = scmp.lt.s32.totalorder %s191, 31
      %s193 = scalar_select %p192, %s191, 31
      %s194 = smul.addr %s193, 2
      %s195 = smul.addr %s194, 4
      %s196 = scalar_lea.vmem %s0, %s195
      %s197 = smul.u32 16, %s15
      %s198 = smul.u32 16, %s15
      %p199 = scmp.lt.s32.totalorder %s198, 31
      %s200 = scalar_select %p199, %s198, 31
      %s201 = smul.addr %s200, 4
      %s202 = scalar_lea.vmem %s4, %s201
      %s203 = smul.u32 16, %s15
      %v205 = vld [vmem:[%s196] sm:$0xff]
      %v206 = vld [vmem:[%s196 + $0x8] sm:$0xff]
      %v207 = vld [vmem:[%s196 + $0x10] sm:$0xff]
      %v208 = vld [vmem:[%s196 + $0x18] sm:$0xff]
      %v209 = vld [vmem:[%s196 + $0x20] sm:$0xff]
      %v210 = vld [vmem:[%s196 + $0x28] sm:$0xff]
      %v211 = vld [vmem:[%s196 + $0x30] sm:$0xff]
      %v212 = vld [vmem:[%s196 + $0x38] sm:$0xff]
      %v213 = vld [vmem:[%s196 + $0x40] sm:$0xff]
      %v214 = vld [vmem:[%s196 + $0x48] sm:$0xff]
      %v215 = vld [vmem:[%s196 + $0x50] sm:$0xff]
      %v216 = vld [vmem:[%s196 + $0x58] sm:$0xff]
      %v217 = vld [vmem:[%s196 + $0x60] sm:$0xff]
      %v218 = vld [vmem:[%s196 + $0x68] sm:$0xff]
      %v219 = vld [vmem:[%s196 + $0x70] sm:$0xff]
      %v220 = vld [vmem:[%s196 + $0x78] sm:$0xff]
      %v221 = vld [vmem:[%s1] sm:$0xf]
      %v222 = vld [vmem:[%s1 + $0x4] sm:$0xf]
      %v223 = vld [vmem:[%s1 + $0x8] sm:$0xf]
      %v224 = vld [vmem:[%s1 + $0xc] sm:$0xf]
      %v225 = vld [vmem:[%s1 + $0x10] sm:$0xf]
      %v226 = vld [vmem:[%s1 + $0x14] sm:$0xf]
      %v227 = vld [vmem:[%s1 + $0x18] sm:$0xf]
      %v228 = vld [vmem:[%s1 + $0x1c] sm:$0xf]
      %v229 = vld [vmem:[%s1 + $0x20] sm:$0xf]
      %v230 = vld [vmem:[%s1 + $0x24] sm:$0xf]
      %v231 = vld [vmem:[%s1 + $0x28] sm:$0xf]
      %v232 = vld [vmem:[%s1 + $0x2c] sm:$0xf]
      %v233 = vld [vmem:[%s1 + $0x30] sm:$0xf]
      %v234 = vld [vmem:[%s1 + $0x34] sm:$0xf]
      %v235 = vld [vmem:[%s1 + $0x38] sm:$0xf]
      %v236 = vld [vmem:[%s1 + $0x3c] sm:$0xf]
      %v237 = vld [vmem:[%s1 + $0x40] sm:$0xf]
      %v238 = vld [vmem:[%s1 + $0x44] sm:$0xf]
      %v239 = vld [vmem:[%s1 + $0x48] sm:$0xf]
      %v240 = vld [vmem:[%s1 + $0x4c] sm:$0xf]
      %v241 = vld [vmem:[%s1 + $0x50] sm:$0xf]
      %v242 = vld [vmem:[%s1 + $0x54] sm:$0xf]
      %v243 = vld [vmem:[%s1 + $0x58] sm:$0xf]
      %v244 = vld [vmem:[%s1 + $0x5c] sm:$0xf]
      %v245 = vld [vmem:[%s1 + $0x60] sm:$0xf]
      %v246 = vld [vmem:[%s1 + $0x64] sm:$0xf]
      %v247 = vld [vmem:[%s1 + $0x68] sm:$0xf]
      %v248 = vld [vmem:[%s1 + $0x6c] sm:$0xf]
      %v249 = vld [vmem:[%s1 + $0x70] sm:$0xf]
      %v250 = vld [vmem:[%s1 + $0x74] sm:$0xf]
      %v251 = vld [vmem:[%s1 + $0x78] sm:$0xf]
      %v252 = vld [vmem:[%s1 + $0x7c] sm:$0xf]
      %v269 = vunpack.c.l.b16 %v205
      %v270 = vunpack.c.h.b16 %v205
      %v271 = vunpack.c.l.b16 %v206
      %v272 = vunpack.c.h.b16 %v206
      %v273 = vunpack.c.l.b16 %v207
      %v274 = vunpack.c.h.b16 %v207
      %v275 = vunpack.c.l.b16 %v208
      %v276 = vunpack.c.h.b16 %v208
      %v277 = vunpack.c.l.b16 %v209
      %v278 = vunpack.c.h.b16 %v209
      %v279 = vunpack.c.l.b16 %v210
      %v280 = vunpack.c.h.b16 %v210
      %v281 = vunpack.c.l.b16 %v211
      %v282 = vunpack.c.h.b16 %v211
      %v283 = vunpack.c.l.b16 %v212
      %v284 = vunpack.c.h.b16 %v212
      %v285 = vunpack.c.l.b16 %v213
      %v286 = vunpack.c.h.b16 %v213
      %v287 = vunpack.c.l.b16 %v214
      %v288 = vunpack.c.h.b16 %v214
      %v289 = vunpack.c.l.b16 %v215
      %v290 = vunpack.c.h.b16 %v215
      %v291 = vunpack.c.l.b16 %v216
      %v292 = vunpack.c.h.b16 %v216
      %v293 = vunpack.c.l.b16 %v217
      %v294 = vunpack.c.h.b16 %v217
      %v295 = vunpack.c.l.b16 %v218
      %v296 = vunpack.c.h.b16 %v218
      %v297 = vunpack.c.l.b16 %v219
      %v298 = vunpack.c.h.b16 %v219
      %v299 = vunpack.c.l.b16 %v220
      %v300 = vunpack.c.h.b16 %v220
      %v301 = vpack.c.b16 %v271, %v269
      %v302 = vpack.c.b16 %v272, %v270
      %v303 = vpack.c.b16 %v275, %v273
      %v304 = vpack.c.b16 %v276, %v274
      %v305 = vpack.c.b16 %v279, %v277
      %v306 = vpack.c.b16 %v280, %v278
      %v307 = vpack.c.b16 %v283, %v281
      %v308 = vpack.c.b16 %v284, %v282
      %v309 = vpack.c.b16 %v287, %v285
      %v310 = vpack.c.b16 %v288, %v286
      %v311 = vpack.c.b16 %v291, %v289
      %v312 = vpack.c.b16 %v292, %v290
      %v313 = vpack.c.b16 %v295, %v293
      %v314 = vpack.c.b16 %v296, %v294
      %v315 = vpack.c.b16 %v299, %v297
      %v316 = vpack.c.b16 %v300, %v298
      %v365 = vunpack.c.l.b16 %v221
      %v366 = vunpack.c.l.b16 %v222
      %v367 = vunpack.c.l.b16 %v223
      %v368 = vunpack.c.l.b16 %v224
      %v369 = vunpack.c.l.b16 %v225
      %v370 = vunpack.c.l.b16 %v226
      %v371 = vunpack.c.l.b16 %v227
      %v372 = vunpack.c.l.b16 %v228
      %v373 = vunpack.c.l.b16 %v229
      %v374 = vunpack.c.l.b16 %v230
      %v375 = vunpack.c.l.b16 %v231
      %v376 = vunpack.c.l.b16 %v232
      %v377 = vunpack.c.l.b16 %v233
      %v378 = vunpack.c.l.b16 %v234
      %v379 = vunpack.c.l.b16 %v235
      %v380 = vunpack.c.l.b16 %v236
      %v381 = vunpack.c.l.b16 %v237
      %v382 = vunpack.c.l.b16 %v238
      %v383 = vunpack.c.l.b16 %v239
      %v384 = vunpack.c.l.b16 %v240
      %v385 = vunpack.c.l.b16 %v241
      %v386 = vunpack.c.l.b16 %v242
      %v387 = vunpack.c.l.b16 %v243
      %v388 = vunpack.c.l.b16 %v244
      %v389 = vunpack.c.l.b16 %v245
      %v390 = vunpack.c.l.b16 %v246
      %v391 = vunpack.c.l.b16 %v247
      %v392 = vunpack.c.l.b16 %v248
      %v393 = vunpack.c.l.b16 %v249
      %v394 = vunpack.c.l.b16 %v250
      %v395 = vunpack.c.l.b16 %v251
      %v396 = vunpack.c.l.b16 %v252
      %v397 = vpack.c.b16 %v366, %v365
      %v398 = vpack.c.b16 %v368, %v367
      %v399 = vpack.c.b16 %v370, %v369
      %v400 = vpack.c.b16 %v372, %v371
      %v401 = vpack.c.b16 %v374, %v373
      %v402 = vpack.c.b16 %v376, %v375
      %v403 = vpack.c.b16 %v378, %v377
      %v404 = vpack.c.b16 %v380, %v379
      %v405 = vpack.c.b16 %v382, %v381
      %v406 = vpack.c.b16 %v384, %v383
      %v407 = vpack.c.b16 %v386, %v385
      %v408 = vpack.c.b16 %v388, %v387
      %v409 = vpack.c.b16 %v390, %v389
      %v410 = vpack.c.b16 %v392, %v391
      %v411 = vpack.c.b16 %v394, %v393
      %v412 = vpack.c.b16 %v396, %v395
      %429 = vmatprep.subr.bf16.mxu0 0
      %430 = vmatpush1.bf16.msra.mxu0 %v404
      %431 = vmatprep.subr.bf16.mxu0 0
      %432 = vmatpush1.bf16.msra.mxu0 %v403
      %433 = vmatprep.subr.bf16.mxu0 0
      %434 = vmatpush1.bf16.msra.mxu0 %v402
      %435 = vmatprep.subr.bf16.mxu0 0
      %436 = vmatpush1.bf16.msra.mxu0 %v401
      %437 = vmatprep.subr.bf16.mxu0 0
      %438 = vmatpush1.bf16.msra.mxu0 %v400
      %439 = vmatprep.subr.bf16.mxu0 0
      %440 = vmatpush1.bf16.msra.mxu0 %v399
      %441 = vmatprep.subr.bf16.mxu0 0
      %442 = vmatpush1.bf16.msra.mxu0 %v398
      %443 = vmatprep.subr.bf16.mxu0 0
      %444 = vmatpush1.bf16.msra.mxu0 %v397
      %445 = vmatprep.subr.bf16.mxu0 0
      %446 = vmatpush2.bf16.msra.mxu0 %v412
      %447 = vmatprep.subr.bf16.mxu0 0
      %448 = vmatpush2.bf16.msra.mxu0 %v411
      %449 = vmatprep.subr.bf16.mxu0 0
      %450 = vmatpush2.bf16.msra.mxu0 %v410
      %451 = vmatprep.subr.bf16.mxu0 0
      %452 = vmatpush2.bf16.msra.mxu0 %v409
      %453 = vmatprep.subr.bf16.mxu0 0
      %454 = vmatpush2.bf16.msra.mxu0 %v408
      %455 = vmatprep.subr.bf16.mxu0 0
      %456 = vmatpush2.bf16.msra.mxu0 %v407
      %457 = vmatprep.subr.bf16.mxu0 0
      %458 = vmatpush2.bf16.msra.mxu0 %v406
      %459 = vmatprep.subr.bf16.mxu0 0
      %460 = vmatpush2.bf16.msra.mxu0 %v405
      %461 = vmatprep.mubr.bf16.mxu0 %v302
      %462 = vmatmul.mubr.bf16.gmra.mxu0 %v301
      %v463 = vpop.f32.mrf.mxu0
      %v464 = vadd.f32 0.0, %v463
      %v465 = vpop.f32.mrf.mxu0
      %v466 = vpop.f32.mrf.mxu0
      %v467 = vadd.f32 0.0, %v466
      %v468 = vpop.f32.mrf.mxu0
      %469 = vmatprep.mubr.bf16.mxu0 %v304
      %470 = vmatmul.mubr.bf16.gmra.mxu0 %v303
      %v471 = vpop.f32.mrf.mxu0
      %v472 = vadd.f32 0.0, %v471
      %v473 = vpop.f32.mrf.mxu0
      %v474 = vpop.f32.mrf.mxu0
      %v475 = vadd.f32 0.0, %v474
      %v476 = vpop.f32.mrf.mxu0
      %477 = vmatprep.mubr.bf16.mxu0 %v306
      %478 = vmatmul.mubr.bf16.gmra.mxu0 %v305
      %v479 = vpop.f32.mrf.mxu0
      %v480 = vadd.f32 0.0, %v479
      %v481 = vpop.f32.mrf.mxu0
      %v482 = vpop.f32.mrf.mxu0
      %v483 = vadd.f32 0.0, %v482
      %v484 = vpop.f32.mrf.mxu0
      %485 = vmatprep.mubr.bf16.mxu0 %v308
      %486 = vmatmul.mubr.bf16.gmra.mxu0 %v307
      %v487 = vpop.f32.mrf.mxu0
      %v488 = vadd.f32 0.0, %v487
      %v489 = vpop.f32.mrf.mxu0
      %v490 = vpop.f32.mrf.mxu0
      %v491 = vadd.f32 0.0, %v490
      %v492 = vpop.f32.mrf.mxu0
      %493 = vmatprep.mubr.bf16.mxu0 %v310
      %494 = vmatmul.mubr.bf16.gmra.mxu0 %v309
      %v495 = vpop.f32.mrf.mxu0
      %v496 = vadd.f32 0.0, %v495
      %v497 = vpop.f32.mrf.mxu0
      %v498 = vpop.f32.mrf.mxu0
      %v499 = vadd.f32 0.0, %v498
      %v500 = vpop.f32.mrf.mxu0
      %501 = vmatprep.mubr.bf16.mxu0 %v312
      %502 = vmatmul.mubr.bf16.gmra.mxu0 %v311
      %v503 = vpop.f32.mrf.mxu0
      %v504 = vadd.f32 0.0, %v503
      %v505 = vpop.f32.mrf.mxu0
      %v506 = vpop.f32.mrf.mxu0
      %v507 = vadd.f32 0.0, %v506
      %v508 = vpop.f32.mrf.mxu0
      %509 = vmatprep.mubr.bf16.mxu0 %v314
      %510 = vmatmul.mubr.bf16.gmra.mxu0 %v313
      %v511 = vpop.f32.mrf.mxu0
      %v512 = vadd.f32 0.0, %v511
      %v513 = vpop.f32.mrf.mxu0
      %v514 = vpop.f32.mrf.mxu0
      %v515 = vadd.f32 0.0, %v514
      %v516 = vpop.f32.mrf.mxu0
      %517 = vmatprep.mubr.bf16.mxu0 %v316
      %518 = vmatmul.mubr.bf16.gmra.mxu0 %v315
      %v519 = vpop.f32.mrf.mxu0
      %v520 = vadd.f32 0.0, %v519
      %v521 = vpop.f32.mrf.mxu0
      %v522 = vpop.f32.mrf.mxu0
      %v523 = vadd.f32 0.0, %v522
      %v524 = vpop.f32.mrf.mxu0
      %525 = vdwg.mxu0
      %v526 = vpack.c.bf16 %v467, %v464
      %v527 = vpack.c.bf16 %v475, %v472
      %v528 = vpack.c.bf16 %v483, %v480
      %v529 = vpack.c.bf16 %v491, %v488
      %v530 = vpack.c.bf16 %v499, %v496
      %v531 = vpack.c.bf16 %v507, %v504
      %v532 = vpack.c.bf16 %v515, %v512
      %v533 = vpack.c.bf16 %v523, %v520
      %v534 = vld [vmem:[%s2] sm:$0xf]
      %v535 = vld [vmem:[%s2 + $0x4] sm:$0xf]
      %v536 = vld [vmem:[%s2 + $0x8] sm:$0xf]
      %v537 = vld [vmem:[%s2 + $0xc] sm:$0xf]
      %v538 = vld [vmem:[%s2 + $0x10] sm:$0xf]
      %v539 = vld [vmem:[%s2 + $0x14] sm:$0xf]
      %v540 = vld [vmem:[%s2 + $0x18] sm:$0xf]
      %v541 = vld [vmem:[%s2 + $0x1c] sm:$0xf]
      %v542 = vld [vmem:[%s2 + $0x20] sm:$0xf]
      %v543 = vld [vmem:[%s2 + $0x24] sm:$0xf]
      %v544 = vld [vmem:[%s2 + $0x28] sm:$0xf]
      %v545 = vld [vmem:[%s2 + $0x2c] sm:$0xf]
      %v546 = vld [vmem:[%s2 + $0x30] sm:$0xf]
      %v547 = vld [vmem:[%s2 + $0x34] sm:$0xf]
      %v548 = vld [vmem:[%s2 + $0x38] sm:$0xf]
      %v549 = vld [vmem:[%s2 + $0x3c] sm:$0xf]
      %v566 = vunpack.c.l.b16 %v534
      %v567 = vunpack.c.l.b16 %v535
      %v568 = vunpack.c.l.b16 %v536
      %v569 = vunpack.c.l.b16 %v537
      %v570 = vunpack.c.l.b16 %v538
      %v571 = vunpack.c.l.b16 %v539
      %v572 = vunpack.c.l.b16 %v540
      %v573 = vunpack.c.l.b16 %v541
      %v574 = vunpack.c.l.b16 %v542
      %v575 = vunpack.c.l.b16 %v543
      %v576 = vunpack.c.l.b16 %v544
      %v577 = vunpack.c.l.b16 %v545
      %v578 = vunpack.c.l.b16 %v546
      %v579 = vunpack.c.l.b16 %v547
      %v580 = vunpack.c.l.b16 %v548
      %v581 = vunpack.c.l.b16 %v549
      %v582 = vpack.c.b16 %v567, %v566
      %v583 = vpack.c.b16 %v569, %v568
      %v584 = vpack.c.b16 %v571, %v570
      %v585 = vpack.c.b16 %v573, %v572
      %v586 = vpack.c.b16 %v575, %v574
      %v587 = vpack.c.b16 %v577, %v576
      %v588 = vpack.c.b16 %v579, %v578
      %v589 = vpack.c.b16 %v581, %v580
      %598 = vmatprep.subr.bf16.mxu0 0
      %599 = vmatpush1.bf16.msra.mxu0 %v589
      %600 = vmatprep.subr.bf16.mxu0 0
      %601 = vmatpush1.bf16.msra.mxu0 %v588
      %602 = vmatprep.subr.bf16.mxu0 0
      %603 = vmatpush1.bf16.msra.mxu0 %v587
      %604 = vmatprep.subr.bf16.mxu0 0
      %605 = vmatpush1.bf16.msra.mxu0 %v586
      %606 = vmatprep.subr.bf16.mxu0 0
      %607 = vmatpush1.bf16.msra.mxu0 %v585
      %608 = vmatprep.subr.bf16.mxu0 0
      %609 = vmatpush1.bf16.msra.mxu0 %v584
      %610 = vmatprep.subr.bf16.mxu0 0
      %611 = vmatpush1.bf16.msra.mxu0 %v583
      %612 = vmatprep.subr.bf16.mxu0 0
      %613 = vmatpush1.bf16.msra.mxu0 %v582
      %614 = vmatprep.subr.bf16.mxu0 0
      %615 = vmatpush2.bf16.msra.mxu0 0
      %616 = vmatprep.subr.bf16.mxu0 0
      %617 = vmatpush2.bf16.msra.mxu0 0
      %618 = vmatprep.subr.bf16.mxu0 0
      %619 = vmatpush2.bf16.msra.mxu0 0
      %620 = vmatprep.subr.bf16.mxu0 0
      %621 = vmatpush2.bf16.msra.mxu0 0
      %622 = vmatprep.subr.bf16.mxu0 0
      %623 = vmatpush2.bf16.msra.mxu0 0
      %624 = vmatprep.subr.bf16.mxu0 0
      %625 = vmatpush2.bf16.msra.mxu0 0
      %626 = vmatprep.subr.bf16.mxu0 0
      %627 = vmatpush2.bf16.msra.mxu0 0
      %628 = vmatprep.subr.bf16.mxu0 0
      %629 = vmatpush2.bf16.msra.mxu0 0
      %630 = vmatprep.mubr.bf16.mxu0 0
      %631 = vmatmul.mubr.bf16.gmra.mxu0 %v526
      %v632 = vpop.f32.mrf.mxu0
      %v633 = vadd.f32 0.0, %v632
      %v634 = vpop.f32.mrf.mxu0
      %v635 = vpop.f32.mrf.mxu0
      %v636 = vadd.f32 0.0, %v635
      %v637 = vpop.f32.mrf.mxu0
      %638 = vmatprep.mubr.bf16.mxu0 0
      %639 = vmatmul.mubr.bf16.gmra.mxu0 %v527
      %v640 = vpop.f32.mrf.mxu0
      %v641 = vadd.f32 0.0, %v640
      %v642 = vpop.f32.mrf.mxu0
      %v643 = vpop.f32.mrf.mxu0
      %v644 = vadd.f32 0.0, %v643
      %v645 = vpop.f32.mrf.mxu0
      %646 = vmatprep.mubr.bf16.mxu0 0
      %647 = vmatmul.mubr.bf16.gmra.mxu0 %v528
      %v648 = vpop.f32.mrf.mxu0
      %v649 = vadd.f32 0.0, %v648
      %v650 = vpop.f32.mrf.mxu0
      %v651 = vpop.f32.mrf.mxu0
      %v652 = vadd.f32 0.0, %v651
      %v653 = vpop.f32.mrf.mxu0
      %654 = vmatprep.mubr.bf16.mxu0 0
      %655 = vmatmul.mubr.bf16.gmra.mxu0 %v529
      %v656 = vpop.f32.mrf.mxu0
      %v657 = vadd.f32 0.0, %v656
      %v658 = vpop.f32.mrf.mxu0
      %v659 = vpop.f32.mrf.mxu0
      %v660 = vadd.f32 0.0, %v659
      %v661 = vpop.f32.mrf.mxu0
      %662 = vmatprep.mubr.bf16.mxu0 0
      %663 = vmatmul.mubr.bf16.gmra.mxu0 %v530
      %v664 = vpop.f32.mrf.mxu0
      %v665 = vadd.f32 0.0, %v664
      %v666 = vpop.f32.mrf.mxu0
      %v667 = vpop.f32.mrf.mxu0
      %v668 = vadd.f32 0.0, %v667
      %v669 = vpop.f32.mrf.mxu0
      %670 = vmatprep.mubr.bf16.mxu0 0
      %671 = vmatmul.mubr.bf16.gmra.mxu0 %v531
      %v672 = vpop.f32.mrf.mxu0
      %v673 = vadd.f32 0.0, %v672
      %v674 = vpop.f32.mrf.mxu0
      %v675 = vpop.f32.mrf.mxu0
      %v676 = vadd.f32 0.0, %v675
      %v677 = vpop.f32.mrf.mxu0
      %678 = vmatprep.mubr.bf16.mxu0 0
      %679 = vmatmul.mubr.bf16.gmra.mxu0 %v532
      %v680 = vpop.f32.mrf.mxu0
      %v681 = vadd.f32 0.0, %v680
      %v682 = vpop.f32.mrf.mxu0
      %v683 = vpop.f32.mrf.mxu0
      %v684 = vadd.f32 0.0, %v683
      %v685 = vpop.f32.mrf.mxu0
      %686 = vmatprep.mubr.bf16.mxu0 0
      %687 = vmatmul.mubr.bf16.gmra.mxu0 %v533
      %v688 = vpop.f32.mrf.mxu0
      %v689 = vadd.f32 0.0, %v688
      %v690 = vpop.f32.mrf.mxu0
      %v691 = vpop.f32.mrf.mxu0
      %v692 = vadd.f32 0.0, %v691
      %v693 = vpop.f32.mrf.mxu0
      %694 = vdwg.mxu0
      %v695 = vmax.f32 %v633, 0.0
      %v696 = vmax.f32 %v636, 0.0
      %v697 = vmax.f32 %v641, 0.0
      %v698 = vmax.f32 %v644, 0.0
      %v699 = vmax.f32 %v649, 0.0
      %v700 = vmax.f32 %v652, 0.0
      %v701 = vmax.f32 %v657, 0.0
      %v702 = vmax.f32 %v660, 0.0
      %v703 = vmax.f32 %v665, 0.0
      %v704 = vmax.f32 %v668, 0.0
      %v705 = vmax.f32 %v673, 0.0
      %v706 = vmax.f32 %v676, 0.0
      %v707 = vmax.f32 %v681, 0.0
      %v708 = vmax.f32 %v684, 0.0
      %v709 = vmax.f32 %v689, 0.0
      %v710 = vmax.f32 %v692, 0.0
      %v711 = vpack.c.bf16 %v696, %v695
      %v712 = vpack.c.bf16 %v698, %v697
      %v713 = vpack.c.bf16 %v700, %v699
      %v714 = vpack.c.bf16 %v702, %v701
      %v715 = vpack.c.bf16 %v704, %v703
      %v716 = vpack.c.bf16 %v706, %v705
      %v717 = vpack.c.bf16 %v708, %v707
      %v718 = vpack.c.bf16 %v710, %v709
      %v719 = vld [vmem:[%s3] sm:$0xf]
      %v720 = vld [vmem:[%s3 + $0x4] sm:$0xf]
      %v721 = vld [vmem:[%s3 + $0x8] sm:$0xf]
      %v722 = vld [vmem:[%s3 + $0xc] sm:$0xf]
      %v723 = vld [vmem:[%s3 + $0x10] sm:$0xf]
      %v724 = vld [vmem:[%s3 + $0x14] sm:$0xf]
      %v725 = vld [vmem:[%s3 + $0x18] sm:$0xf]
      %v726 = vld [vmem:[%s3 + $0x1c] sm:$0xf]
      %v727 = vld [vmem:[%s3 + $0x20] sm:$0xf]
      %v728 = vld [vmem:[%s3 + $0x24] sm:$0xf]
      %v729 = vld [vmem:[%s3 + $0x28] sm:$0xf]
      %v730 = vld [vmem:[%s3 + $0x2c] sm:$0xf]
      %v731 = vld [vmem:[%s3 + $0x30] sm:$0xf]
      %v732 = vld [vmem:[%s3 + $0x34] sm:$0xf]
      %v733 = vld [vmem:[%s3 + $0x38] sm:$0xf]
      %v734 = vld [vmem:[%s3 + $0x3c] sm:$0xf]
      %v751 = vunpack.c.l.b16 %v719
      %v752 = vunpack.c.l.b16 %v720
      %v753 = vunpack.c.l.b16 %v721
      %v754 = vunpack.c.l.b16 %v722
      %v755 = vunpack.c.l.b16 %v723
      %v756 = vunpack.c.l.b16 %v724
      %v757 = vunpack.c.l.b16 %v725
      %v758 = vunpack.c.l.b16 %v726
      %v759 = vunpack.c.l.b16 %v727
      %v760 = vunpack.c.l.b16 %v728
      %v761 = vunpack.c.l.b16 %v729
      %v762 = vunpack.c.l.b16 %v730
      %v763 = vunpack.c.l.b16 %v731
      %v764 = vunpack.c.l.b16 %v732
      %v765 = vunpack.c.l.b16 %v733
      %v766 = vunpack.c.l.b16 %v734
      %v767 = vpack.c.b16 %v752, %v751
      %v768 = vpack.c.b16 %v754, %v753
      %v769 = vpack.c.b16 %v756, %v755
      %v770 = vpack.c.b16 %v758, %v757
      %v771 = vpack.c.b16 %v760, %v759
      %v772 = vpack.c.b16 %v762, %v761
      %v773 = vpack.c.b16 %v764, %v763
      %v774 = vpack.c.b16 %v766, %v765
      %783 = vmatprep.subr.bf16.mxu0 0
      %784 = vmatpush1.bf16.msra.mxu0 %v774
      %785 = vmatprep.subr.bf16.mxu0 0
      %786 = vmatpush1.bf16.msra.mxu0 %v773
      %787 = vmatprep.subr.bf16.mxu0 0
      %788 = vmatpush1.bf16.msra.mxu0 %v772
      %789 = vmatprep.subr.bf16.mxu0 0
      %790 = vmatpush1.bf16.msra.mxu0 %v771
      %791 = vmatprep.subr.bf16.mxu0 0
      %792 = vmatpush1.bf16.msra.mxu0 %v770
      %793 = vmatprep.subr.bf16.mxu0 0
      %794 = vmatpush1.bf16.msra.mxu0 %v769
      %795 = vmatprep.subr.bf16.mxu0 0
      %796 = vmatpush1.bf16.msra.mxu0 %v768
      %797 = vmatprep.subr.bf16.mxu0 0
      %798 = vmatpush1.bf16.msra.mxu0 %v767
      %799 = vmatprep.subr.bf16.mxu0 0
      %800 = vmatpush2.bf16.msra.mxu0 0
      %801 = vmatprep.subr.bf16.mxu0 0
      %802 = vmatpush2.bf16.msra.mxu0 0
      %803 = vmatprep.subr.bf16.mxu0 0
      %804 = vmatpush2.bf16.msra.mxu0 0
      %805 = vmatprep.subr.bf16.mxu0 0
      %806 = vmatpush2.bf16.msra.mxu0 0
      %807 = vmatprep.subr.bf16.mxu0 0
      %808 = vmatpush2.bf16.msra.mxu0 0
      %809 = vmatprep.subr.bf16.mxu0 0
      %810 = vmatpush2.bf16.msra.mxu0 0
      %811 = vmatprep.subr.bf16.mxu0 0
      %812 = vmatpush2.bf16.msra.mxu0 0
      %813 = vmatprep.subr.bf16.mxu0 0
      %814 = vmatpush2.bf16.msra.mxu0 0
      %815 = vmatprep.mubr.bf16.mxu0 0
      %816 = vmatmul.mubr.bf16.gmra.mxu0 %v711
      %v817 = vpop.f32.mrf.mxu0
      %v818 = vadd.f32 0.0, %v817
      %v819 = vpop.f32.mrf.mxu0
      %v820 = vpop.f32.mrf.mxu0
      %v821 = vadd.f32 0.0, %v820
      %v822 = vpop.f32.mrf.mxu0
      %823 = vmatprep.mubr.bf16.mxu0 0
      %824 = vmatmul.mubr.bf16.gmra.mxu0 %v712
      %v825 = vpop.f32.mrf.mxu0
      %v826 = vadd.f32 0.0, %v825
      %v827 = vpop.f32.mrf.mxu0
      %v828 = vpop.f32.mrf.mxu0
      %v829 = vadd.f32 0.0, %v828
      %v830 = vpop.f32.mrf.mxu0
      %831 = vmatprep.mubr.bf16.mxu0 0
      %832 = vmatmul.mubr.bf16.gmra.mxu0 %v713
      %v833 = vpop.f32.mrf.mxu0
      %v834 = vadd.f32 0.0, %v833
      %v835 = vpop.f32.mrf.mxu0
      %v836 = vpop.f32.mrf.mxu0
      %v837 = vadd.f32 0.0, %v836
      %v838 = vpop.f32.mrf.mxu0
      %839 = vmatprep.mubr.bf16.mxu0 0
      %840 = vmatmul.mubr.bf16.gmra.mxu0 %v714
      %v841 = vpop.f32.mrf.mxu0
      %v842 = vadd.f32 0.0, %v841
      %v843 = vpop.f32.mrf.mxu0
      %v844 = vpop.f32.mrf.mxu0
      %v845 = vadd.f32 0.0, %v844
      %v846 = vpop.f32.mrf.mxu0
      %847 = vmatprep.mubr.bf16.mxu0 0
      %848 = vmatmul.mubr.bf16.gmra.mxu0 %v715
      %v849 = vpop.f32.mrf.mxu0
      %v850 = vadd.f32 0.0, %v849
      %v851 = vpop.f32.mrf.mxu0
      %v852 = vpop.f32.mrf.mxu0
      %v853 = vadd.f32 0.0, %v852
      %v854 = vpop.f32.mrf.mxu0
      %855 = vmatprep.mubr.bf16.mxu0 0
      %856 = vmatmul.mubr.bf16.gmra.mxu0 %v716
      %v857 = vpop.f32.mrf.mxu0
      %v858 = vadd.f32 0.0, %v857
      %v859 = vpop.f32.mrf.mxu0
      %v860 = vpop.f32.mrf.mxu0
      %v861 = vadd.f32 0.0, %v860
      %v862 = vpop.f32.mrf.mxu0
      %863 = vmatprep.mubr.bf16.mxu0 0
      %864 = vmatmul.mubr.bf16.gmra.mxu0 %v717
      %v865 = vpop.f32.mrf.mxu0
      %v866 = vadd.f32 0.0, %v865
      %v867 = vpop.f32.mrf.mxu0
      %v868 = vpop.f32.mrf.mxu0
      %v869 = vadd.f32 0.0, %v868
      %v870 = vpop.f32.mrf.mxu0
      %871 = vmatprep.mubr.bf16.mxu0 0
      %872 = vmatmul.mubr.bf16.gmra.mxu0 %v718
      %v873 = vpop.f32.mrf.mxu0
      %v874 = vadd.f32 0.0, %v873
      %v875 = vpop.f32.mrf.mxu0
      %v876 = vpop.f32.mrf.mxu0
      %v877 = vadd.f32 0.0, %v876
      %v878 = vpop.f32.mrf.mxu0
      %879 = vdwg.mxu0
      %v880 = vpack.c.bf16 %v821, %v818
      %v881 = vpack.c.bf16 %v829, %v826
      %v882 = vpack.c.bf16 %v837, %v834
      %v883 = vpack.c.bf16 %v845, %v842
      %v884 = vpack.c.bf16 %v853, %v850
      %v885 = vpack.c.bf16 %v861, %v858
      %v886 = vpack.c.bf16 %v869, %v866
      %v887 = vpack.c.bf16 %v877, %v874
      %v896 = vunpack.c.l.b16 %v880
      %v897 = vunpack.c.h.b16 %v880
      %v898 = vunpack.c.l.b16 %v881
      %v899 = vunpack.c.h.b16 %v881
      %v900 = vunpack.c.l.b16 %v882
      %v901 = vunpack.c.h.b16 %v882
      %v902 = vunpack.c.l.b16 %v883
      %v903 = vunpack.c.h.b16 %v883
      %v904 = vunpack.c.l.b16 %v884
      %v905 = vunpack.c.h.b16 %v884
      %v906 = vunpack.c.l.b16 %v885
      %v907 = vunpack.c.h.b16 %v885
      %v908 = vunpack.c.l.b16 %v886
      %v909 = vunpack.c.h.b16 %v886
      %v910 = vunpack.c.l.b16 %v887
      %v911 = vunpack.c.h.b16 %v887
      %v912 = vpack.c.b16 %v896, %v896
      %v913 = vpack.c.b16 %v897, %v897
      %v914 = vpack.c.b16 %v898, %v898
      %v915 = vpack.c.b16 %v899, %v899
      %v916 = vpack.c.b16 %v900, %v900
      %v917 = vpack.c.b16 %v901, %v901
      %v918 = vpack.c.b16 %v902, %v902
      %v919 = vpack.c.b16 %v903, %v903
      %v920 = vpack.c.b16 %v904, %v904
      %v921 = vpack.c.b16 %v905, %v905
      %v922 = vpack.c.b16 %v906, %v906
      %v923 = vpack.c.b16 %v907, %v907
      %v924 = vpack.c.b16 %v908, %v908
      %v925 = vpack.c.b16 %v909, %v909
      %v926 = vpack.c.b16 %v910, %v910
      %v927 = vpack.c.b16 %v911, %v911
      %944 = vst [vmem:[%s202] sm:$0xf] %v912
      %945 = vst [vmem:[%s202 + $0x4] sm:$0xf] %v913
      %946 = vst [vmem:[%s202 + $0x8] sm:$0xf] %v914
      %947 = vst [vmem:[%s202 + $0xc] sm:$0xf] %v915
      %948 = vst [vmem:[%s202 + $0x10] sm:$0xf] %v916
      %949 = vst [vmem:[%s202 + $0x14] sm:$0xf] %v917
      %950 = vst [vmem:[%s202 + $0x18] sm:$0xf] %v918
      %951 = vst [vmem:[%s202 + $0x1c] sm:$0xf] %v919
      %952 = vst [vmem:[%s202 + $0x20] sm:$0xf] %v920
      %953 = vst [vmem:[%s202 + $0x24] sm:$0xf] %v921
      %954 = vst [vmem:[%s202 + $0x28] sm:$0xf] %v922
      %955 = vst [vmem:[%s202 + $0x2c] sm:$0xf] %v923
      %956 = vst [vmem:[%s202 + $0x30] sm:$0xf] %v924
      %957 = vst [vmem:[%s202 + $0x34] sm:$0xf] %v925
      %958 = vst [vmem:[%s202 + $0x38] sm:$0xf] %v926
      %959 = vst [vmem:[%s202 + $0x3c] sm:$0xf] %v927
      %s960 = smul.u32 16, %s15
      %p961 = scmp.lt.s32.totalorder %s960, 31
      %s962 = scalar_select %p961, %s960, 31
      %s963 = smul.addr %s962, 4
      %s964 = scalar_lea.vmem %s4, %s963
      // Predicated region
      $region37: #{densenet6_forward.5} parent=35 // pred_check
        %p965 = pneg %p122
      $region38: #{densenet6_forward.5} parent=35 // pred_check_branch
        %967 = sbr.rel (%p965) target = $region40
      $region39: #{densenet6_forward.5} parent=35 // pred_region
        %s968 = smul.u32 16, %s15
      $region40: #{densenet6_forward.5} parent=35 // pred_fallthru
        _
    $region36: #{densenet6_forward.5} parent=5 // pred_fallthru
      _
    %p969 = scmp.le.s32.totalorder 2, %s10
    // Predicated region
    $region41: #{densenet6_forward.5} parent=5 // pred_check
      %p970 = pneg %p969
    $region42: #{densenet6_forward.5} parent=5 // pred_check_branch
      %972 = sbr.rel (%p970) target = $region44
    $region43: #{densenet6_forward.5} parent=5 // pred_region
      %s973 = ssub.s32 %s10, 2
      // Predicated region
      $region45: #{densenet6_forward.5} parent=43 // pred_check
        %p974 = pneg %p128
      $region46: #{densenet6_forward.5} parent=43 // pred_check_branch
        %976 = sbr.rel (%p974) target = $region48
      $region47: #{densenet6_forward.5} parent=43 // pred_region
        %s977 = smul.u32 16, %s16
        %p978 = scmp.lt.s32.totalorder %s977, 31
        %s979 = scalar_select %p978, %s977, 31
        %s980 = smul.addr %s979, 4
        %s981 = scalar_lea.vmem %s4, %s980
      $region48: #{densenet6_forward.5} parent=43 // pred_fallthru
        _
    $region44: #{densenet6_forward.5} parent=5 // pred_fallthru
      _
  $region6: #{densenet6_forward.5} parent=0 // loop_footer
    %s14 = sadd.s32 1, %s10
  $region7: #{densenet6_forward.5} parent=0 // loop_footer_branch
    %9 = sbr.rel target = $region3
  $region8: #{densenet6_forward.5} parent=0 // loop_exit
    _

// kernel: densenet6_forward.7
$region0: #{densenet6_forward.7}
  #allocation0 [shape = 'u32[]', space=smem, size = 0x4, offset = 0x4, fixed_abs, tag = 'smem constant byte address 0x4 - core index']
  #allocation1 [shape = 'u32[144,128]{1,0:T(1,128)}', space=vmem, size = 0x12000, scoped, tag = 'internal scratch']
  %s0 = inlined_call_operand.vmem [shape: bf16[256,128], index: 0, kind: input, shape index: {}]
  %s1 = inlined_call_operand.vmem [shape: bf16[256,128], index: 1, kind: input, shape index: {}]
  %s2 = inlined_call_operand.vmem [shape: bf16[256,128], index: 2, kind: input, shape index: {}]
  %s3 = inlined_call_operand.vmem [shape: bf16[128,128], index: 3, kind: input, shape index: {}]
  %s4 = inlined_call_operand.vmem [shape: bf16[128,128], index: 4, kind: input, shape index: {}]
  %s5 = inlined_call_operand.vmem [shape: bf16[6,128,128], index: 5, kind: input, shape index: {}]
  %s6 = inlined_call_operand.vmem [shape: f32[6,128], index: 6, kind: input, shape index: {}]
  %s7 = inlined_call_operand.vmem [shape: bf16[128,128], index: 7, kind: input, shape index: {}]
  %s8 = inlined_call_operand.vmem [shape: bf16[256,128], index: 8, kind: output, shape index: {0}]
  %s9 = inlined_call_operand.vmem [shape: bf16[256,128], index: 9, kind: output, shape index: {1}]
  %10 = xla_tuple %s8, %s9
  %s11 = sld [smem:[#allocation0]]
  $region73: #{densenet6_forward.7} parent=0
    _
  %s13 = ssub.s32 1, %s11
  %s14 = scalar_select 0, %s13, %s11
  loop: start=0, step=1, limit=4
  $region2: #{densenet6_forward.7} parent=0 // loop_pre_header
    _
  $region3: #{densenet6_forward.7} parent=0 // loop_header
    %s16 = sphi 0, %s20
    %p17 = scmp.ge.s32.totalorder %s16, 4
    %s26 = sphi 0, %s28
    %s29 = sphi 0, %s26
    %s30 = sphi 0, %s29
    %s46 = sphi 0, %s30
    %s50 = sphi 0, %s50
    %s52 = sphi 0, %s50
    %s53 = sphi 0, %s52
    %s67 = sphi 0, %s53
    %s71 = sphi 0, %s71
    %s73 = sphi 0, %s71
    %s74 = sphi 0, %s73
    %s88 = sphi 0, %s74
    %s92 = sphi 0, %s92
    %s94 = sphi 0, %s92
    %s95 = sphi 0, %s94
    %s109 = sphi 0, %s95
    %s113 = sphi 0, %s113
    %s115 = sphi 0, %s113
    %s116 = sphi 0, %s115
    %s130 = sphi 0, %s116
    %s134 = sphi 0, %s134
    %s136 = sphi 0, %s134
    %s137 = sphi 0, %s136
    %s151 = sphi 0, %s137
    %s155 = sphi 0, %s155
    %s157 = sphi 0, %s155
    %s158 = sphi 0, %s157
    %s172 = sphi 0, %s158
    %s176 = sphi 0, %s176
    %s178 = sphi 0, %s176
    %s179 = sphi 0, %s178
    %s193 = sphi 0, %s179
    %s199 = sphi 0, %s201
    %s202 = sphi 0, %s199
    %s203 = sphi 0, %s202
    %s219 = sphi 0, %s203
    %s225 = sphi 0, %s227
    %s228 = sphi 0, %s225
    %s229 = sphi 0, %s228
    %s245 = sphi 0, %s229
  $region4: #{densenet6_forward.7} parent=0 // loop_header_branch
    %19 = sbr.rel (%p17) target = $region8
  $region5: #{densenet6_forward.7} parent=0 // loop_body
    %s21 = ssub.s32 %s16, 1
    %s22 = ssub.s32 %s16, 2
    %s23 = sadd.s32 %s16, 1
    %s24 = ssub.s32 %s16, %s23
    %p25 = scmp.eq.s32.totalorder %s24, 0
    %s27 = sadd.s32 %s26, 1
    %s28 = scalar_select %p25, %s26, %s27
    %p31 = pneg %p25
    %p32 = scmp.eq.s32.totalorder %s16, 1
    %p33 = por %p31, %p32
    %p34 = scmp.ne.s32.totalorder %s26, %s29
    %p35 = scmp.eq.s32.totalorder %s16, 0
    %p36 = por %p34, %p35
    %p37 = scmp.ne.s32.totalorder %s26, %s29
    %p38 = scmp.eq.s32.totalorder %s21, 1
    %p39 = por %p37, %p38
    %p40 = scmp.ne.s32.totalorder %s29, %s30
    %p41 = scmp.eq.s32.totalorder %s21, 0
    %p42 = por %p40, %p41
    %p43 = scmp.ne.s32.totalorder %s29, %s30
    %p44 = scmp.eq.s32.totalorder %s22, 1
    %p45 = por %p43, %p44
    %p47 = scmp.ne.s32.totalorder %s30, %s46
    %p48 = scmp.eq.s32.totalorder %s22, 0
    %p49 = por %p47, %p48
    %s51 = sadd.s32 %s50, 1
    %p54 = scmp.eq.s32.totalorder %s16, 1
    %p55 = scmp.ne.s32.totalorder %s50, %s52
    %p56 = scmp.eq.s32.totalorder %s16, 0
    %p57 = por %p55, %p56
    %p58 = scmp.ne.s32.totalorder %s50, %s52
    %p59 = scmp.eq.s32.totalorder %s21, 1
    %p60 = por %p58, %p59
    %p61 = scmp.ne.s32.totalorder %s52, %s53
    %p62 = scmp.eq.s32.totalorder %s21, 0
    %p63 = por %p61, %p62
    %p64 = scmp.ne.s32.totalorder %s52, %s53
    %p65 = scmp.eq.s32.totalorder %s22, 1
    %p66 = por %p64, %p65
    %p68 = scmp.ne.s32.totalorder %s53, %s67
    %p69 = scmp.eq.s32.totalorder %s22, 0
    %p70 = por %p68, %p69
    %s72 = sadd.s32 %s71, 1
    %p75 = scmp.eq.s32.totalorder %s16, 1
    %p76 = scmp.ne.s32.totalorder %s71, %s73
    %p77 = scmp.eq.s32.totalorder %s16, 0
    %p78 = por %p76, %p77
    %p79 = scmp.ne.s32.totalorder %s71, %s73
    %p80 = scmp.eq.s32.totalorder %s21, 1
    %p81 = por %p79, %p80
    %p82 = scmp.ne.s32.totalorder %s73, %s74
    %p83 = scmp.eq.s32.totalorder %s21, 0
    %p84 = por %p82, %p83
    %p85 = scmp.ne.s32.totalorder %s73, %s74
    %p86 = scmp.eq.s32.totalorder %s22, 1
    %p87 = por %p85, %p86
    %p89 = scmp.ne.s32.totalorder %s74, %s88
    %p90 = scmp.eq.s32.totalorder %s22, 0
    %p91 = por %p89, %p90
    %s93 = sadd.s32 %s92, 1
    %p96 = scmp.eq.s32.totalorder %s16, 1
    %p97 = scmp.ne.s32.totalorder %s92, %s94
    %p98 = scmp.eq.s32.totalorder %s16, 0
    %p99 = por %p97, %p98
    %p100 = scmp.ne.s32.totalorder %s92, %s94
    %p101 = scmp.eq.s32.totalorder %s21, 1
    %p102 = por %p100, %p101
    %p103 = scmp.ne.s32.totalorder %s94, %s95
    %p104 = scmp.eq.s32.totalorder %s21, 0
    %p105 = por %p103, %p104
    %p106 = scmp.ne.s32.totalorder %s94, %s95
    %p107 = scmp.eq.s32.totalorder %s22, 1
    %p108 = por %p106, %p107
    %p110 = scmp.ne.s32.totalorder %s95, %s109
    %p111 = scmp.eq.s32.totalorder %s22, 0
    %p112 = por %p110, %p111
    %s114 = sadd.s32 %s113, 1
    %p117 = scmp.eq.s32.totalorder %s16, 1
    %p118 = scmp.ne.s32.totalorder %s113, %s115
    %p119 = scmp.eq.s32.totalorder %s16, 0
    %p120 = por %p118, %p119
    %p121 = scmp.ne.s32.totalorder %s113, %s115
    %p122 = scmp.eq.s32.totalorder %s21, 1
    %p123 = por %p121, %p122
    %p124 = scmp.ne.s32.totalorder %s115, %s116
    %p125 = scmp.eq.s32.totalorder %s21, 0
    %p126 = por %p124, %p125
    %p127 = scmp.ne.s32.totalorder %s115, %s116
    %p128 = scmp.eq.s32.totalorder %s22, 1
    %p129 = por %p127, %p128
    %p131 = scmp.ne.s32.totalorder %s116, %s130
    %p132 = scmp.eq.s32.totalorder %s22, 0
    %p133 = por %p131, %p132
    %s135 = sadd.s32 %s134, 1
    %p138 = scmp.eq.s32.totalorder %s16, 1
    %p139 = scmp.ne.s32.totalorder %s134, %s136
    %p140 = scmp.eq.s32.totalorder %s16, 0
    %p141 = por %p139, %p140
    %p142 = scmp.ne.s32.totalorder %s134, %s136
    %p143 = scmp.eq.s32.totalorder %s21, 1
    %p144 = por %p142, %p143
    %p145 = scmp.ne.s32.totalorder %s136, %s137
    %p146 = scmp.eq.s32.totalorder %s21, 0
    %p147 = por %p145, %p146
    %p148 = scmp.ne.s32.totalorder %s136, %s137
    %p149 = scmp.eq.s32.totalorder %s22, 1
    %p150 = por %p148, %p149
    %p152 = scmp.ne.s32.totalorder %s137, %s151
    %p153 = scmp.eq.s32.totalorder %s22, 0
    %p154 = por %p152, %p153
    %s156 = sadd.s32 %s155, 1
    %p159 = scmp.eq.s32.totalorder %s16, 1
    %p160 = scmp.ne.s32.totalorder %s155, %s157
    %p161 = scmp.eq.s32.totalorder %s16, 0
    %p162 = por %p160, %p161
    %p163 = scmp.ne.s32.totalorder %s155, %s157
    %p164 = scmp.eq.s32.totalorder %s21, 1
    %p165 = por %p163, %p164
    %p166 = scmp.ne.s32.totalorder %s157, %s158
    %p167 = scmp.eq.s32.totalorder %s21, 0
    %p168 = por %p166, %p167
    %p169 = scmp.ne.s32.totalorder %s157, %s158
    %p170 = scmp.eq.s32.totalorder %s22, 1
    %p171 = por %p169, %p170
    %p173 = scmp.ne.s32.totalorder %s158, %s172
    %p174 = scmp.eq.s32.totalorder %s22, 0
    %p175 = por %p173, %p174
    %s177 = sadd.s32 %s176, 1
    %p180 = scmp.eq.s32.totalorder %s16, 1
    %p181 = scmp.ne.s32.totalorder %s176, %s178
    %p182 = scmp.eq.s32.totalorder %s16, 0
    %p183 = por %p181, %p182
    %p184 = scmp.ne.s32.totalorder %s176, %s178
    %p185 = scmp.eq.s32.totalorder %s21, 1
    %p186 = por %p184, %p185
    %p187 = scmp.ne.s32.totalorder %s178, %s179
    %p188 = scmp.eq.s32.totalorder %s21, 0
    %p189 = por %p187, %p188
    %p190 = scmp.ne.s32.totalorder %s178, %s179
    %p191 = scmp.eq.s32.totalorder %s22, 1
    %p192 = por %p190, %p191
    %p194 = scmp.ne.s32.totalorder %s179, %s193
    %p195 = scmp.eq.s32.totalorder %s22, 0
    %p196 = por %p194, %p195
    %s197 = ssub.s32 %s16, %s23
    %p198 = scmp.eq.s32.totalorder %s197, 0
    %s200 = sadd.s32 %s199, 1
    %s201 = scalar_select %p198, %s199, %s200
    %p204 = pneg %p198
    %p205 = scmp.eq.s32.totalorder %s16, 1
    %p206 = por %p204, %p205
    %p207 = scmp.ne.s32.totalorder %s199, %s202
    %p208 = scmp.eq.s32.totalorder %s16, 0
    %p209 = por %p207, %p208
    %p210 = scmp.ne.s32.totalorder %s199, %s202
    %p211 = scmp.eq.s32.totalorder %s21, 1
    %p212 = por %p210, %p211
    %p213 = scmp.ne.s32.totalorder %s202, %s203
    %p214 = scmp.eq.s32.totalorder %s21, 0
    %p215 = por %p213, %p214
    %p216 = scmp.ne.s32.totalorder %s202, %s203
    %p217 = scmp.eq.s32.totalorder %s22, 1
    %p218 = por %p216, %p217
    %p220 = scmp.ne.s32.totalorder %s203, %s219
    %p221 = scmp.eq.s32.totalorder %s22, 0
    %p222 = por %p220, %p221
    %s223 = ssub.s32 %s16, %s23
    %p224 = scmp.eq.s32.totalorder %s223, 0
    %s226 = sadd.s32 %s225, 1
    %s227 = scalar_select %p224, %s225, %s226
    %p230 = pneg %p224
    %p231 = scmp.eq.s32.totalorder %s16, 1
    %p232 = por %p230, %p231
    %p233 = scmp.ne.s32.totalorder %s225, %s228
    %p234 = scmp.eq.s32.totalorder %s16, 0
    %p235 = por %p233, %p234
    %p236 = scmp.ne.s32.totalorder %s225, %s228
    %p237 = scmp.eq.s32.totalorder %s21, 1
    %p238 = por %p236, %p237
    %p239 = scmp.ne.s32.totalorder %s228, %s229
    %p240 = scmp.eq.s32.totalorder %s21, 0
    %p241 = por %p239, %p240
    %p242 = scmp.ne.s32.totalorder %s228, %s229
    %p243 = scmp.eq.s32.totalorder %s22, 1
    %p244 = por %p242, %p243
    %p246 = scmp.ne.s32.totalorder %s229, %s245
    %p247 = scmp.eq.s32.totalorder %s22, 0
    %p248 = por %p246, %p247
    %p249 = scmp.le.s32.totalorder 1, %s16
    %p250 = scmp.lt.s32.totalorder %s16, 3
    %p251 = pnand %p249, %p250
    %p252 = pneg %p251
    // Predicated region
    $region9: #{densenet6_forward.7} parent=5 // pred_check
      _
    $region10: #{densenet6_forward.7} parent=5 // pred_check_branch
      %254 = sbr.rel (%p251) target = $region12
    $region11: #{densenet6_forward.7} parent=5 // pred_region
      %s255 = ssub.s32 %s16, 1
      // Predicated region
      $region13: #{densenet6_forward.7} parent=11 // pred_check
        %p256 = pneg %p63
      $region14: #{densenet6_forward.7} parent=11 // pred_check_branch
        %258 = sbr.rel (%p256) target = $region16
      $region15: #{densenet6_forward.7} parent=11 // pred_region
        _
      $region16: #{densenet6_forward.7} parent=11 // pred_fallthru
        _
      // Predicated region
      $region17: #{densenet6_forward.7} parent=11 // pred_check
        %p259 = pneg %p84
      $region18: #{densenet6_forward.7} parent=11 // pred_check_branch
        %261 = sbr.rel (%p259) target = $region20
      $region19: #{densenet6_forward.7} parent=11 // pred_region
        _
      $region20: #{densenet6_forward.7} parent=11 // pred_fallthru
        _
      // Predicated region
      $region21: #{densenet6_forward.7} parent=11 // pred_check
        %p262 = pneg %p105
      $region22: #{densenet6_forward.7} parent=11 // pred_check_branch
        %264 = sbr.rel (%p262) target = $region24
      $region23: #{densenet6_forward.7} parent=11 // pred_region
        _
      $region24: #{densenet6_forward.7} parent=11 // pred_fallthru
        _
      // Predicated region
      $region25: #{densenet6_forward.7} parent=11 // pred_check
        %p265 = pneg %p126
      $region26: #{densenet6_forward.7} parent=11 // pred_check_branch
        %267 = sbr.rel (%p265) target = $region28
      $region27: #{densenet6_forward.7} parent=11 // pred_region
        _
      $region28: #{densenet6_forward.7} parent=11 // pred_fallthru
        _
      // Predicated region
      $region29: #{densenet6_forward.7} parent=11 // pred_check
        %p268 = pneg %p147
      $region30: #{densenet6_forward.7} parent=11 // pred_check_branch
        %270 = sbr.rel (%p268) target = $region32
      $region31: #{densenet6_forward.7} parent=11 // pred_region
        _
      $region32: #{densenet6_forward.7} parent=11 // pred_fallthru
        _
      // Predicated region
      $region33: #{densenet6_forward.7} parent=11 // pred_check
        %p271 = pneg %p168
      $region34: #{densenet6_forward.7} parent=11 // pred_check_branch
        %273 = sbr.rel (%p271) target = $region36
      $region35: #{densenet6_forward.7} parent=11 // pred_region
        _
      $region36: #{densenet6_forward.7} parent=11 // pred_fallthru
        _
      // Predicated region
      $region37: #{densenet6_forward.7} parent=11 // pred_check
        %p274 = pneg %p189
      $region38: #{densenet6_forward.7} parent=11 // pred_check_branch
        %276 = sbr.rel (%p274) target = $region40
      $region39: #{densenet6_forward.7} parent=11 // pred_region
        _
      $region40: #{densenet6_forward.7} parent=11 // pred_fallthru
        _
    $region12: #{densenet6_forward.7} parent=5 // pred_fallthru
      _
    %p277 = scmp.lt.s32.totalorder %s16, 2
    // Predicated region
    $region41: #{densenet6_forward.7} parent=5 // pred_check
      %p278 = pneg %p277
    $region42: #{densenet6_forward.7} parent=5 // pred_check_branch
      %280 = sbr.rel (%p278) target = $region44
    $region43: #{densenet6_forward.7} parent=5 // pred_region
      // Predicated region
      $region45: #{densenet6_forward.7} parent=43 // pred_check
        %p281 = pneg %p36
      $region46: #{densenet6_forward.7} parent=43 // pred_check_branch
        %283 = sbr.rel (%p281) target = $region48
      $region47: #{densenet6_forward.7} parent=43 // pred_region
        %s284 = smul.u32 16, %s16
        %p285 = scmp.lt.s32.totalorder %s284, 31
        %s286 = scalar_select %p285, %s284, 31
        %s287 = smul.addr %s286, 4
        %s288 = scalar_lea.vmem %s0, %s287
        %s289 = smul.u32 16, %s16
      $region48: #{densenet6_forward.7} parent=43 // pred_fallthru
        _
    $region44: #{densenet6_forward.7} parent=5 // pred_fallthru
      _
    %p290 = scmp.le.s32.totalorder 1, %s16
    %p291 = scmp.lt.s32.totalorder %s16, 3
    %p292 = pnand %p290, %p291
    %p293 = pneg %p292
    // Predicated region
    $region49: #{densenet6_forward.7} parent=5 // pred_check
      _
    $region50: #{densenet6_forward.7} parent=5 // pred_check_branch
      %295 = sbr.rel (%p292) target = $region52
    $region51: #{densenet6_forward.7} parent=5 // pred_region
      %s296 = ssub.s32 %s16, 1
      %s297 = smul.u32 16, %s21
      %p298 = scmp.lt.s32.totalorder %s297, 31
      %s299 = scalar_select %p298, %s297, 31
      %s300 = smul.addr %s299, 4
      %s301 = scalar_lea.vmem %s0, %s300
      %p302 = pneg %p42
      %p303 = pneg %p39
      %p304 = pneg %p63
      %p305 = pneg %p60
      %p306 = pneg %p84
      %p307 = pneg %p81
      %p308 = pneg %p105
      %p309 = pneg %p102
      %p310 = pneg %p126
      %p311 = pneg %p123
      %p312 = pneg %p147
      %p313 = pneg %p144
      %p314 = pneg %p168
      %p315 = pneg %p165
      %p316 = pneg %p189
      %p317 = pneg %p186
      %p318 = pneg %p215
      %p319 = pneg %p212
      %s320 = smul.u32 16, %s21
      %p321 = scmp.lt.s32.totalorder %s320, 31
      %s322 = scalar_select %p321, %s320, 31
      %s323 = smul.addr %s322, 4
      %s324 = scalar_lea.vmem %s8, %s323
      %p325 = pneg %p241
      %p326 = pneg %p238
      %s327 = smul.u32 16, %s21
      %p328 = scmp.lt.s32.totalorder %s327, 31
      %s329 = scalar_select %p328, %s327, 31
      %s330 = smul.addr %s329, 4
      %s331 = scalar_lea.vmem %s9, %s330
      %s332 = smul.u32 16, %s21
      %p333 = scmp.lt.s32.totalorder %s332, 31
      %s334 = scalar_select %p333, %s332, 31
      %s335 = smul.addr %s334, 4
      %s336 = scalar_lea.vmem %s0, %s335
      %s337 = smul.u32 16, %s21
      %s338 = smul.u32 16, %s21
      %p339 = scmp.lt.s32.totalorder %s338, 31
      %s340 = scalar_select %p339, %s338, 31
      %s341 = smul.addr %s340, 4
      %s342 = scalar_lea.vmem %s8, %s341
      %s343 = smul.u32 16, %s21
      %s344 = smul.u32 16, %s21
      %p345 = scmp.lt.s32.totalorder %s344, 31
      %s346 = scalar_select %p345, %s344, 31
      %s347 = smul.addr %s346, 4
      %s348 = scalar_lea.vmem %s9, %s347
      %s349 = smul.u32 16, %s21
      %v351 = vld [vmem:[%s336] sm:$0xf]
      %v352 = vld [vmem:[%s336 + $0x4] sm:$0xf]
      %v353 = vld [vmem:[%s336 + $0x8] sm:$0xf]
      %v354 = vld [vmem:[%s336 + $0xc] sm:$0xf]
      %v355 = vld [vmem:[%s336 + $0x10] sm:$0xf]
      %v356 = vld [vmem:[%s336 + $0x14] sm:$0xf]
      %v357 = vld [vmem:[%s336 + $0x18] sm:$0xf]
      %v358 = vld [vmem:[%s336 + $0x1c] sm:$0xf]
      %v359 = vld [vmem:[%s336 + $0x20] sm:$0xf]
      %v360 = vld [vmem:[%s336 + $0x24] sm:$0xf]
      %v361 = vld [vmem:[%s336 + $0x28] sm:$0xf]
      %v362 = vld [vmem:[%s336 + $0x2c] sm:$0xf]
      %v363 = vld [vmem:[%s336 + $0x30] sm:$0xf]
      %v364 = vld [vmem:[%s336 + $0x34] sm:$0xf]
      %v365 = vld [vmem:[%s336 + $0x38] sm:$0xf]
      %v366 = vld [vmem:[%s336 + $0x3c] sm:$0xf]
      %v367 = vld [vmem:[%s3] sm:$0xf]
      %v368 = vld [vmem:[%s3 + $0x4] sm:$0xf]
      %v369 = vld [vmem:[%s3 + $0x8] sm:$0xf]
      %v370 = vld [vmem:[%s3 + $0xc] sm:$0xf]
      %v371 = vld [vmem:[%s3 + $0x10] sm:$0xf]
      %v372 = vld [vmem:[%s3 + $0x14] sm:$0xf]
      %v373 = vld [vmem:[%s3 + $0x18] sm:$0xf]
      %v374 = vld [vmem:[%s3 + $0x1c] sm:$0xf]
      %v375 = vld [vmem:[%s3 + $0x20] sm:$0xf]
      %v376 = vld [vmem:[%s3 + $0x24] sm:$0xf]
      %v377 = vld [vmem:[%s3 + $0x28] sm:$0xf]
      %v378 = vld [vmem:[%s3 + $0x2c] sm:$0xf]
      %v379 = vld [vmem:[%s3 + $0x30] sm:$0xf]
      %v380 = vld [vmem:[%s3 + $0x34] sm:$0xf]
      %v381 = vld [vmem:[%s3 + $0x38] sm:$0xf]
      %v382 = vld [vmem:[%s3 + $0x3c] sm:$0xf]
      %v399 = vunpack.c.l.b16 %v351
      %v400 = vunpack.c.l.b16 %v352
      %v401 = vunpack.c.l.b16 %v353
      %v402 = vunpack.c.l.b16 %v354
      %v403 = vunpack.c.l.b16 %v355
      %v404 = vunpack.c.l.b16 %v356
      %v405 = vunpack.c.l.b16 %v357
      %v406 = vunpack.c.l.b16 %v358
      %v407 = vunpack.c.l.b16 %v359
      %v408 = vunpack.c.l.b16 %v360
      %v409 = vunpack.c.l.b16 %v361
      %v410 = vunpack.c.l.b16 %v362
      %v411 = vunpack.c.l.b16 %v363
      %v412 = vunpack.c.l.b16 %v364
      %v413 = vunpack.c.l.b16 %v365
      %v414 = vunpack.c.l.b16 %v366
      %v415 = vpack.c.b16 %v400, %v399
      %v416 = vpack.c.b16 %v402, %v401
      %v417 = vpack.c.b16 %v404, %v403
      %v418 = vpack.c.b16 %v406, %v405
      %v419 = vpack.c.b16 %v408, %v407
      %v420 = vpack.c.b16 %v410, %v409
      %v421 = vpack.c.b16 %v412, %v411
      %v422 = vpack.c.b16 %v414, %v413
      %v447 = vunpack.c.l.b16 %v367
      %v448 = vunpack.c.l.b16 %v368
      %v449 = vunpack.c.l.b16 %v369
      %v450 = vunpack.c.l.b16 %v370
      %v451 = vunpack.c.l.b16 %v371
      %v452 = vunpack.c.l.b16 %v372
      %v453 = vunpack.c.l.b16 %v373
      %v454 = vunpack.c.l.b16 %v374
      %v455 = vunpack.c.l.b16 %v375
      %v456 = vunpack.c.l.b16 %v376
      %v457 = vunpack.c.l.b16 %v377
      %v458 = vunpack.c.l.b16 %v378
      %v459 = vunpack.c.l.b16 %v379
      %v460 = vunpack.c.l.b16 %v380
      %v461 = vunpack.c.l.b16 %v381
      %v462 = vunpack.c.l.b16 %v382
      %v463 = vpack.c.b16 %v448, %v447
      %v464 = vpack.c.b16 %v450, %v449
      %v465 = vpack.c.b16 %v452, %v451
      %v466 = vpack.c.b16 %v454, %v453
      %v467 = vpack.c.b16 %v456, %v455
      %v468 = vpack.c.b16 %v458, %v457
      %v469 = vpack.c.b16 %v460, %v459
      %v470 = vpack.c.b16 %v462, %v461
      %479 = vmatprep.subr.bf16.mxu0 0
      %480 = vmatpush1.bf16.msra.mxu0 %v470
      %481 = vmatprep.subr.bf16.mxu0 0
      %482 = vmatpush1.bf16.msra.mxu0 %v469
      %483 = vmatprep.subr.bf16.mxu0 0
      %484 = vmatpush1.bf16.msra.mxu0 %v468
      %485 = vmatprep.subr.bf16.mxu0 0
      %486 = vmatpush1.bf16.msra.mxu0 %v467
      %487 = vmatprep.subr.bf16.mxu0 0
      %488 = vmatpush1.bf16.msra.mxu0 %v466
      %489 = vmatprep.subr.bf16.mxu0 0
      %490 = vmatpush1.bf16.msra.mxu0 %v465
      %491 = vmatprep.subr.bf16.mxu0 0
      %492 = vmatpush1.bf16.msra.mxu0 %v464
      %493 = vmatprep.subr.bf16.mxu0 0
      %494 = vmatpush1.bf16.msra.mxu0 %v463
      %495 = vmatprep.subr.bf16.mxu0 0
      %496 = vmatpush2.bf16.msra.mxu0 0
      %497 = vmatprep.subr.bf16.mxu0 0
      %498 = vmatpush2.bf16.msra.mxu0 0
      %499 = vmatprep.subr.bf16.mxu0 0
      %500 = vmatpush2.bf16.msra.mxu0 0
      %501 = vmatprep.subr.bf16.mxu0 0
      %502 = vmatpush2.bf16.msra.mxu0 0
      %503 = vmatprep.subr.bf16.mxu0 0
      %504 = vmatpush2.bf16.msra.mxu0 0
      %505 = vmatprep.subr.bf16.mxu0 0
      %506 = vmatpush2.bf16.msra.mxu0 0
      %507 = vmatprep.subr.bf16.mxu0 0
      %508 = vmatpush2.bf16.msra.mxu0 0
      %509 = vmatprep.subr.bf16.mxu0 0
      %510 = vmatpush2.bf16.msra.mxu0 0
      %511 = vmatprep.mubr.bf16.mxu0 0
      %512 = vmatmul.mubr.bf16.gmra.mxu0 %v415
      %v513 = vpop.f32.mrf.mxu0
      %v514 = vadd.f32 0.0, %v513
      %v515 = vpop.f32.mrf.mxu0
      %v516 = vpop.f32.mrf.mxu0
      %v517 = vadd.f32 0.0, %v516
      %v518 = vpop.f32.mrf.mxu0
      %519 = vmatprep.mubr.bf16.mxu0 0
      %520 = vmatmul.mubr.bf16.gmra.mxu0 %v416
      %v521 = vpop.f32.mrf.mxu0
      %v522 = vadd.f32 0.0, %v521
      %v523 = vpop.f32.mrf.mxu0
      %v524 = vpop.f32.mrf.mxu0
      %v525 = vadd.f32 0.0, %v524
      %v526 = vpop.f32.mrf.mxu0
      %527 = vmatprep.mubr.bf16.mxu0 0
      %528 = vmatmul.mubr.bf16.gmra.mxu0 %v417
      %v529 = vpop.f32.mrf.mxu0
      %v530 = vadd.f32 0.0, %v529
      %v531 = vpop.f32.mrf.mxu0
      %v532 = vpop.f32.mrf.mxu0
      %v533 = vadd.f32 0.0, %v532
      %v534 = vpop.f32.mrf.mxu0
      %535 = vmatprep.mubr.bf16.mxu0 0
      %536 = vmatmul.mubr.bf16.gmra.mxu0 %v418
      %v537 = vpop.f32.mrf.mxu0
      %v538 = vadd.f32 0.0, %v537
      %v539 = vpop.f32.mrf.mxu0
      %v540 = vpop.f32.mrf.mxu0
      %v541 = vadd.f32 0.0, %v540
      %v542 = vpop.f32.mrf.mxu0
      %543 = vmatprep.mubr.bf16.mxu0 0
      %544 = vmatmul.mubr.bf16.gmra.mxu0 %v419
      %v545 = vpop.f32.mrf.mxu0
      %v546 = vadd.f32 0.0, %v545
      %v547 = vpop.f32.mrf.mxu0
      %v548 = vpop.f32.mrf.mxu0
      %v549 = vadd.f32 0.0, %v548
      %v550 = vpop.f32.mrf.mxu0
      %551 = vmatprep.mubr.bf16.mxu0 0
      %552 = vmatmul.mubr.bf16.gmra.mxu0 %v420
      %v553 = vpop.f32.mrf.mxu0
      %v554 = vadd.f32 0.0, %v553
      %v555 = vpop.f32.mrf.mxu0
      %v556 = vpop.f32.mrf.mxu0
      %v557 = vadd.f32 0.0, %v556
      %v558 = vpop.f32.mrf.mxu0
      %559 = vmatprep.mubr.bf16.mxu0 0
      %560 = vmatmul.mubr.bf16.gmra.mxu0 %v421
      %v561 = vpop.f32.mrf.mxu0
      %v562 = vadd.f32 0.0, %v561
      %v563 = vpop.f32.mrf.mxu0
      %v564 = vpop.f32.mrf.mxu0
      %v565 = vadd.f32 0.0, %v564
      %v566 = vpop.f32.mrf.mxu0
      %567 = vmatprep.mubr.bf16.mxu0 0
      %568 = vmatmul.mubr.bf16.gmra.mxu0 %v422
      %v569 = vpop.f32.mrf.mxu0
      %v570 = vadd.f32 0.0, %v569
      %v571 = vpop.f32.mrf.mxu0
      %v572 = vpop.f32.mrf.mxu0
      %v573 = vadd.f32 0.0, %v572
      %v574 = vpop.f32.mrf.mxu0
      %575 = vdwg.mxu0
      %v576 = vpack.c.bf16 %v517, %v514
      %v577 = vpack.c.bf16 %v525, %v522
      %v578 = vpack.c.bf16 %v533, %v530
      %v579 = vpack.c.bf16 %v541, %v538
      %v580 = vpack.c.bf16 %v549, %v546
      %v581 = vpack.c.bf16 %v557, %v554
      %v582 = vpack.c.bf16 %v565, %v562
      %v583 = vpack.c.bf16 %v573, %v570
      %v584 = vld [vmem:[%s1] sm:$0xf]
      %v585 = vld [vmem:[%s1 + $0x4] sm:$0xf]
      %v586 = vld [vmem:[%s1 + $0x8] sm:$0xf]
      %v587 = vld [vmem:[%s1 + $0xc] sm:$0xf]
      %v588 = vld [vmem:[%s1 + $0x10] sm:$0xf]
      %v589 = vld [vmem:[%s1 + $0x14] sm:$0xf]
      %v590 = vld [vmem:[%s1 + $0x18] sm:$0xf]
      %v591 = vld [vmem:[%s1 + $0x1c] sm:$0xf]
      %v592 = vld [vmem:[%s1 + $0x20] sm:$0xf]
      %v593 = vld [vmem:[%s1 + $0x24] sm:$0xf]
      %v594 = vld [vmem:[%s1 + $0x28] sm:$0xf]
      %v595 = vld [vmem:[%s1 + $0x2c] sm:$0xf]
      %v596 = vld [vmem:[%s1 + $0x30] sm:$0xf]
      %v597 = vld [vmem:[%s1 + $0x34] sm:$0xf]
      %v598 = vld [vmem:[%s1 + $0x38] sm:$0xf]
      %v599 = vld [vmem:[%s1 + $0x3c] sm:$0xf]
      %v600 = vld [vmem:[%s1 + $0x40] sm:$0xf]
      %v601 = vld [vmem:[%s1 + $0x44] sm:$0xf]
      %v602 = vld [vmem:[%s1 + $0x48] sm:$0xf]
      %v603 = vld [vmem:[%s1 + $0x4c] sm:$0xf]
      %v604 = vld [vmem:[%s1 + $0x50] sm:$0xf]
      %v605 = vld [vmem:[%s1 + $0x54] sm:$0xf]
      %v606 = vld [vmem:[%s1 + $0x58] sm:$0xf]
      %v607 = vld [vmem:[%s1 + $0x5c] sm:$0xf]
      %v608 = vld [vmem:[%s1 + $0x60] sm:$0xf]
      %v609 = vld [vmem:[%s1 + $0x64] sm:$0xf]
      %v610 = vld [vmem:[%s1 + $0x68] sm:$0xf]
      %v611 = vld [vmem:[%s1 + $0x6c] sm:$0xf]
      %v612 = vld [vmem:[%s1 + $0x70] sm:$0xf]
      %v613 = vld [vmem:[%s1 + $0x74] sm:$0xf]
      %v614 = vld [vmem:[%s1 + $0x78] sm:$0xf]
      %v615 = vld [vmem:[%s1 + $0x7c] sm:$0xf]
      %v648 = vunpack.c.l.b16 %v584
      %v649 = vunpack.c.l.b16 %v585
      %v650 = vunpack.c.l.b16 %v586
      %v651 = vunpack.c.l.b16 %v587
      %v652 = vunpack.c.l.b16 %v588
      %v653 = vunpack.c.l.b16 %v589
      %v654 = vunpack.c.l.b16 %v590
      %v655 = vunpack.c.l.b16 %v591
      %v656 = vunpack.c.l.b16 %v592
      %v657 = vunpack.c.l.b16 %v593
      %v658 = vunpack.c.l.b16 %v594
      %v659 = vunpack.c.l.b16 %v595
      %v660 = vunpack.c.l.b16 %v596
      %v661 = vunpack.c.l.b16 %v597
      %v662 = vunpack.c.l.b16 %v598
      %v663 = vunpack.c.l.b16 %v599
      %v664 = vunpack.c.l.b16 %v600
      %v665 = vunpack.c.l.b16 %v601
      %v666 = vunpack.c.l.b16 %v602
      %v667 = vunpack.c.l.b16 %v603
      %v668 = vunpack.c.l.b16 %v604
      %v669 = vunpack.c.l.b16 %v605
      %v670 = vunpack.c.l.b16 %v606
      %v671 = vunpack.c.l.b16 %v607
      %v672 = vunpack.c.l.b16 %v608
      %v673 = vunpack.c.l.b16 %v609
      %v674 = vunpack.c.l.b16 %v610
      %v675 = vunpack.c.l.b16 %v611
      %v676 = vunpack.c.l.b16 %v612
      %v677 = vunpack.c.l.b16 %v613
      %v678 = vunpack.c.l.b16 %v614
      %v679 = vunpack.c.l.b16 %v615
      %v680 = vpack.c.b16 %v649, %v648
      %v681 = vpack.c.b16 %v651, %v650
      %v682 = vpack.c.b16 %v653, %v652
      %v683 = vpack.c.b16 %v655, %v654
      %v684 = vpack.c.b16 %v657, %v656
      %v685 = vpack.c.b16 %v659, %v658
      %v686 = vpack.c.b16 %v661, %v660
      %v687 = vpack.c.b16 %v663, %v662
      %v688 = vpack.c.b16 %v665, %v664
      %v689 = vpack.c.b16 %v667, %v666
      %v690 = vpack.c.b16 %v669, %v668
      %v691 = vpack.c.b16 %v671, %v670
      %v692 = vpack.c.b16 %v673, %v672
      %v693 = vpack.c.b16 %v675, %v674
      %v694 = vpack.c.b16 %v677, %v676
      %v695 = vpack.c.b16 %v679, %v678
      %712 = vmatprep.subr.bf16.mxu0 0
      %713 = vmatpush1.bf16.xpose.msra.mxu0 %v687
      %714 = vmatprep.subr.bf16.mxu0 0
      %715 = vmatpush1.bf16.xpose.msra.mxu0 %v686
      %716 = vmatprep.subr.bf16.mxu0 0
      %717 = vmatpush1.bf16.xpose.msra.mxu0 %v685
      %718 = vmatprep.subr.bf16.mxu0 0
      %719 = vmatpush1.bf16.xpose.msra.mxu0 %v684
      %720 = vmatprep.subr.bf16.mxu0 0
      %721 = vmatpush1.bf16.xpose.msra.mxu0 %v683
      %722 = vmatprep.subr.bf16.mxu0 0
      %723 = vmatpush1.bf16.xpose.msra.mxu0 %v682
      %724 = vmatprep.subr.bf16.mxu0 0
      %725 = vmatpush1.bf16.xpose.msra.mxu0 %v681
      %726 = vmatprep.subr.bf16.mxu0 0
      %727 = vmatpush1.bf16.xpose.msra.mxu0 %v680
      %728 = vmatprep.subr.bf16.mxu0 0
      %729 = vmatpush2.bf16.xpose.msra.mxu0 %v695
      %730 = vmatprep.subr.bf16.mxu0 0
      %731 = vmatpush2.bf16.xpose.msra.mxu0 %v694
      %732 = vmatprep.subr.bf16.mxu0 0
      %733 = vmatpush2.bf16.xpose.msra.mxu0 %v693
      %734 = vmatprep.subr.bf16.mxu0 0
      %735 = vmatpush2.bf16.xpose.msra.mxu0 %v692
      %736 = vmatprep.subr.bf16.mxu0 0
      %737 = vmatpush2.bf16.xpose.msra.mxu0 %v691
      %738 = vmatprep.subr.bf16.mxu0 0
      %739 = vmatpush2.bf16.xpose.msra.mxu0 %v690
      %740 = vmatprep.subr.bf16.mxu0 0
      %741 = vmatpush2.bf16.xpose.msra.mxu0 %v689
      %742 = vmatprep.subr.bf16.mxu0 0
      %743 = vmatpush2.bf16.xpose.msra.mxu0 %v688
      %744 = vmatprep.mubr.bf16.mxu0 0
      %745 = vmatmul.mubr.bf16.gmra.mxu0 %v576
      %v746 = vpop.f32.mrf.mxu0
      %v747 = vadd.f32 0.0, %v746
      %v748 = vpop.f32.mrf.mxu0
      %v749 = vadd.f32 0.0, %v748
      %v750 = vpop.f32.mrf.mxu0
      %v751 = vadd.f32 0.0, %v750
      %v752 = vpop.f32.mrf.mxu0
      %v753 = vadd.f32 0.0, %v752
      %754 = vmatprep.mubr.bf16.mxu0 0
      %755 = vmatmul.mubr.bf16.gmra.mxu0 %v577
      %v756 = vpop.f32.mrf.mxu0
      %v757 = vadd.f32 0.0, %v756
      %v758 = vpop.f32.mrf.mxu0
      %v759 = vadd.f32 0.0, %v758
      %v760 = vpop.f32.mrf.mxu0
      %v761 = vadd.f32 0.0, %v760
      %v762 = vpop.f32.mrf.mxu0
      %v763 = vadd.f32 0.0, %v762
      %764 = vmatprep.mubr.bf16.mxu0 0
      %765 = vmatmul.mubr.bf16.gmra.mxu0 %v578
      %v766 = vpop.f32.mrf.mxu0
      %v767 = vadd.f32 0.0, %v766
      %v768 = vpop.f32.mrf.mxu0
      %v769 = vadd.f32 0.0, %v768
      %v770 = vpop.f32.mrf.mxu0
      %v771 = vadd.f32 0.0, %v770
      %v772 = vpop.f32.mrf.mxu0
      %v773 = vadd.f32 0.0, %v772
      %774 = vmatprep.mubr.bf16.mxu0 0
      %775 = vmatmul.mubr.bf16.gmra.mxu0 %v579
      %v776 = vpop.f32.mrf.mxu0
      %v777 = vadd.f32 0.0, %v776
      %v778 = vpop.f32.mrf.mxu0
      %v779 = vadd.f32 0.0, %v778
      %v780 = vpop.f32.mrf.mxu0
      %v781 = vadd.f32 0.0, %v780
      %v782 = vpop.f32.mrf.mxu0
      %v783 = vadd.f32 0.0, %v782
      %784 = vmatprep.mubr.bf16.mxu0 0
      %785 = vmatmul.mubr.bf16.gmra.mxu0 %v580
      %v786 = vpop.f32.mrf.mxu0
      %v787 = vadd.f32 0.0, %v786
      %v788 = vpop.f32.mrf.mxu0
      %v789 = vadd.f32 0.0, %v788
      %v790 = vpop.f32.mrf.mxu0
      %v791 = vadd.f32 0.0, %v790
      %v792 = vpop.f32.mrf.mxu0
      %v793 = vadd.f32 0.0, %v792
      %794 = vmatprep.mubr.bf16.mxu0 0
      %795 = vmatmul.mubr.bf16.gmra.mxu0 %v581
      %v796 = vpop.f32.mrf.mxu0
      %v797 = vadd.f32 0.0, %v796
      %v798 = vpop.f32.mrf.mxu0
      %v799 = vadd.f32 0.0, %v798
      %v800 = vpop.f32.mrf.mxu0
      %v801 = vadd.f32 0.0, %v800
      %v802 = vpop.f32.mrf.mxu0
      %v803 = vadd.f32 0.0, %v802
      %804 = vmatprep.mubr.bf16.mxu0 0
      %805 = vmatmul.mubr.bf16.gmra.mxu0 %v582
      %v806 = vpop.f32.mrf.mxu0
      %v807 = vadd.f32 0.0, %v806
      %v808 = vpop.f32.mrf.mxu0
      %v809 = vadd.f32 0.0, %v808
      %v810 = vpop.f32.mrf.mxu0
      %v811 = vadd.f32 0.0, %v810
      %v812 = vpop.f32.mrf.mxu0
      %v813 = vadd.f32 0.0, %v812
      %814 = vmatprep.mubr.bf16.mxu0 0
      %815 = vmatmul.mubr.bf16.gmra.mxu0 %v583
      %v816 = vpop.f32.mrf.mxu0
      %v817 = vadd.f32 0.0, %v816
      %v818 = vpop.f32.mrf.mxu0
      %v819 = vadd.f32 0.0, %v818
      %v820 = vpop.f32.mrf.mxu0
      %v821 = vadd.f32 0.0, %v820
      %v822 = vpop.f32.mrf.mxu0
      %v823 = vadd.f32 0.0, %v822
      %824 = vdwg.mxu0
      %v825 = vmul.f32 %v747, 0.17677669
      %v826 = vmul.f32 %v749, 0.17677669
      %v827 = vmul.f32 %v751, 0.17677669
      %v828 = vmul.f32 %v753, 0.17677669
      %v829 = vmul.f32 %v757, 0.17677669
      %v830 = vmul.f32 %v759, 0.17677669
      %v831 = vmul.f32 %v761, 0.17677669
      %v832 = vmul.f32 %v763, 0.17677669
      %v833 = vmul.f32 %v767, 0.17677669
      %v834 = vmul.f32 %v769, 0.17677669
      %v835 = vmul.f32 %v771, 0.17677669
      %v836 = vmul.f32 %v773, 0.17677669
      %v837 = vmul.f32 %v777, 0.17677669
      %v838 = vmul.f32 %v779, 0.17677669
      %v839 = vmul.f32 %v781, 0.17677669
      %v840 = vmul.f32 %v783, 0.17677669
      %v841 = vmul.f32 %v787, 0.17677669
      %v842 = vmul.f32 %v789, 0.17677669
      %v843 = vmul.f32 %v791, 0.17677669
      %v844 = vmul.f32 %v793, 0.17677669
      %v845 = vmul.f32 %v797, 0.17677669
      %v846 = vmul.f32 %v799, 0.17677669
      %v847 = vmul.f32 %v801, 0.17677669
      %v848 = vmul.f32 %v803, 0.17677669
      %v849 = vmul.f32 %v807, 0.17677669
      %v850 = vmul.f32 %v809, 0.17677669
      %v851 = vmul.f32 %v811, 0.17677669
      %v852 = vmul.f32 %v813, 0.17677669
      %v853 = vmul.f32 %v817, 0.17677669
      %v854 = vmul.f32 %v819, 0.17677669
      %v855 = vmul.f32 %v821, 0.17677669
      %v856 = vmul.f32 %v823, 0.17677669
      %v857 = vmax.f32 %v825, %v826
      %858 = vmax.xlane.f32.xlu0 %v857
      %v859 = vpop.xlane.xlu0 %858
      %v860 = vmax.f32 %v827, %v828
      %861 = vmax.xlane.f32.xlu0 %v860
      %v862 = vpop.xlane.xlu0 %861
      %v863 = vmax.f32 %v829, %v830
      %864 = vmax.xlane.f32.xlu0 %v863
      %v865 = vpop.xlane.xlu0 %864
      %v866 = vmax.f32 %v831, %v832
      %867 = vmax.xlane.f32.xlu0 %v866
      %v868 = vpop.xlane.xlu0 %867
      %v869 = vmax.f32 %v833, %v834
      %870 = vmax.xlane.f32.xlu0 %v869
      %v871 = vpop.xlane.xlu0 %870
      %v872 = vmax.f32 %v835, %v836
      %873 = vmax.xlane.f32.xlu0 %v872
      %v874 = vpop.xlane.xlu0 %873
      %v875 = vmax.f32 %v837, %v838
      %876 = vmax.xlane.f32.xlu0 %v875
      %v877 = vpop.xlane.xlu0 %876
      %v878 = vmax.f32 %v839, %v840
      %879 = vmax.xlane.f32.xlu0 %v878
      %v880 = vpop.xlane.xlu0 %879
      %v881 = vmax.f32 %v841, %v842
      %882 = vmax.xlane.f32.xlu0 %v881
      %v883 = vpop.xlane.xlu0 %882
      %v884 = vmax.f32 %v843, %v844
      %885 = vmax.xlane.f32.xlu0 %v884
      %v886 = vpop.xlane.xlu0 %885
      %v887 = vmax.f32 %v845, %v846
      %888 = vmax.xlane.f32.xlu0 %v887
      %v889 = vpop.xlane.xlu0 %888
      %v890 = vmax.f32 %v847, %v848
      %891 = vmax.xlane.f32.xlu0 %v890
      %v892 = vpop.xlane.xlu0 %891
      %v893 = vmax.f32 %v849, %v850
      %894 = vmax.xlane.f32.xlu0 %v893
      %v895 = vpop.xlane.xlu0 %894
      %v896 = vmax.f32 %v851, %v852
      %897 = vmax.xlane.f32.xlu0 %v896
      %v898 = vpop.xlane.xlu0 %897
      %v899 = vmax.f32 %v853, %v854
      %900 = vmax.xlane.f32.xlu0 %v899
      %v901 = vpop.xlane.xlu0 %900
      %v902 = vmax.f32 %v855, %v856
      %903 = vmax.xlane.f32.xlu0 %v902
      %v904 = vpop.xlane.xlu0 %903
      %v905 = vsub.f32 %v825, %v859
      %v906 = vsub.f32 %v826, %v859
      %v907 = vsub.f32 %v827, %v862
      %v908 = vsub.f32 %v828, %v862
      %v909 = vsub.f32 %v829, %v865
      %v910 = vsub.f32 %v830, %v865
      %v911 = vsub.f32 %v831, %v868
      %v912 = vsub.f32 %v832, %v868
      %v913 = vsub.f32 %v833, %v871
      %v914 = vsub.f32 %v834, %v871
      %v915 = vsub.f32 %v835, %v874
      %v916 = vsub.f32 %v836, %v874
      %v917 = vsub.f32 %v837, %v877
      %v918 = vsub.f32 %v838, %v877
      %v919 = vsub.f32 %v839, %v880
      %v920 = vsub.f32 %v840, %v880
      %v921 = vsub.f32 %v841, %v883
      %v922 = vsub.f32 %v842, %v883
      %v923 = vsub.f32 %v843, %v886
      %v924 = vsub.f32 %v844, %v886
      %v925 = vsub.f32 %v845, %v889
      %v926 = vsub.f32 %v846, %v889
      %v927 = vsub.f32 %v847, %v892
      %v928 = vsub.f32 %v848, %v892
      %v929 = vsub.f32 %v849, %v895
      %v930 = vsub.f32 %v850, %v895
      %v931 = vsub.f32 %v851, %v898
      %v932 = vsub.f32 %v852, %v898
      %v933 = vsub.f32 %v853, %v901
      %v934 = vsub.f32 %v854, %v901
      %v935 = vsub.f32 %v855, %v904
      %v936 = vsub.f32 %v856, %v904
      %v937 = vmul.f32 %v905, 1.442695
      %v938 = vpow.pop %v937
      %v939 = vmul.f32 %v906, 1.442695
      %v940 = vpow.pop %v939
      %v941 = vmul.f32 %v907, 1.442695
      %v942 = vpow.pop %v941
      %v943 = vmul.f32 %v908, 1.442695
      %v944 = vpow.pop %v943
      %v945 = vmul.f32 %v909, 1.442695
      %v946 = vpow.pop %v945
      %v947 = vmul.f32 %v910, 1.442695
      %v948 = vpow.pop %v947
      %v949 = vmul.f32 %v911, 1.442695
      %v950 = vpow.pop %v949
      %v951 = vmul.f32 %v912, 1.442695
      %v952 = vpow.pop %v951
      %v953 = vmul.f32 %v913, 1.442695
      %v954 = vpow.pop %v953
      %v955 = vmul.f32 %v914, 1.442695
      %v956 = vpow.pop %v955
      %v957 = vmul.f32 %v915, 1.442695
      %v958 = vpow.pop %v957
      %v959 = vmul.f32 %v916, 1.442695
      %v960 = vpow.pop %v959
      %v961 = vmul.f32 %v917, 1.442695
      %v962 = vpow.pop %v961
      %v963 = vmul.f32 %v918, 1.442695
      %v964 = vpow.pop %v963
      %v965 = vmul.f32 %v919, 1.442695
      %v966 = vpow.pop %v965
      %v967 = vmul.f32 %v920, 1.442695
      %v968 = vpow.pop %v967
      %v969 = vmul.f32 %v921, 1.442695
      %v970 = vpow.pop %v969
      %v971 = vmul.f32 %v922, 1.442695
      %v972 = vpow.pop %v971
      %v973 = vmul.f32 %v923, 1.442695
      %v974 = vpow.pop %v973
      %v975 = vmul.f32 %v924, 1.442695
      %v976 = vpow.pop %v975
      %v977 = vmul.f32 %v925, 1.442695
      %v978 = vpow.pop %v977
      %v979 = vmul.f32 %v926, 1.442695
      %v980 = vpow.pop %v979
      %v981 = vmul.f32 %v927, 1.442695
      %v982 = vpow.pop %v981
      %v983 = vmul.f32 %v928, 1.442695
      %v984 = vpow.pop %v983
      %v985 = vmul.f32 %v929, 1.442695
      %v986 = vpow.pop %v985
      %v987 = vmul.f32 %v930, 1.442695
      %v988 = vpow.pop %v987
      %v989 = vmul.f32 %v931, 1.442695
      %v990 = vpow.pop %v989
      %v991 = vmul.f32 %v932, 1.442695
      %v992 = vpow.pop %v991
      %v993 = vmul.f32 %v933, 1.442695
      %v994 = vpow.pop %v993
      %v995 = vmul.f32 %v934, 1.442695
      %v996 = vpow.pop %v995
      %v997 = vmul.f32 %v935, 1.442695
      %v998 = vpow.pop %v997
      %v999 = vmul.f32 %v936, 1.442695
      %v1000 = vpow.pop %v999
      %v1001 = vadd.f32 %v938, %v940
      %1002 = vadd.xlane.f32.xlu0 %v1001
      %v1003 = vpop.xlane.xlu0 %1002
      %v1004 = vadd.f32 %v942, %v944
      %1005 = vadd.xlane.f32.xlu0 %v1004
      %v1006 = vpop.xlane.xlu0 %1005
      %v1007 = vadd.f32 %v946, %v948
      %1008 = vadd.xlane.f32.xlu0 %v1007
      %v1009 = vpop.xlane.xlu0 %1008
      %v1010 = vadd.f32 %v950, %v952
      %1011 = vadd.xlane.f32.xlu0 %v1010
      %v1012 = vpop.xlane.xlu0 %1011
      %v1013 = vadd.f32 %v954, %v956
      %1014 = vadd.xlane.f32.xlu0 %v1013
      %v1015 = vpop.xlane.xlu0 %1014
      %v1016 = vadd.f32 %v958, %v960
      %1017 = vadd.xlane.f32.xlu0 %v1016
      %v1018 = vpop.xlane.xlu0 %1017
      %v1019 = vadd.f32 %v962, %v964
      %1020 = vadd.xlane.f32.xlu0 %v1019
      %v1021 = vpop.xlane.xlu0 %1020
      %v1022 = vadd.f32 %v966, %v968
      %1023 = vadd.xlane.f32.xlu0 %v1022
      %v1024 = vpop.xlane.xlu0 %1023
      %v1025 = vadd.f32 %v970, %v972
      %1026 = vadd.xlane.f32.xlu0 %v1025
      %v1027 = vpop.xlane.xlu0 %1026
      %v1028 = vadd.f32 %v974, %v976
      %1029 = vadd.xlane.f32.xlu0 %v1028
      %v1030 = vpop.xlane.xlu0 %1029
      %v1031 = vadd.f32 %v978, %v980
      %1032 = vadd.xlane.f32.xlu0 %v1031
      %v1033 = vpop.xlane.xlu0 %1032
      %v1034 = vadd.f32 %v982, %v984
      %1035 = vadd.xlane.f32.xlu0 %v1034
      %v1036 = vpop.xlane.xlu0 %1035
      %v1037 = vadd.f32 %v986, %v988
      %1038 = vadd.xlane.f32.xlu0 %v1037
      %v1039 = vpop.xlane.xlu0 %1038
      %v1040 = vadd.f32 %v990, %v992
      %1041 = vadd.xlane.f32.xlu0 %v1040
      %v1042 = vpop.xlane.xlu0 %1041
      %v1043 = vadd.f32 %v994, %v996
      %1044 = vadd.xlane.f32.xlu0 %v1043
      %v1045 = vpop.xlane.xlu0 %1044
      %v1046 = vadd.f32 %v998, %v1000
      %1047 = vadd.xlane.f32.xlu0 %v1046
      %v1048 = vpop.xlane.xlu0 %1047
      %v1049 = vrcp.pop %v1003
      %v1050 = vrcp.pop %v1006
      %v1051 = vrcp.pop %v1009
      %v1052 = vrcp.pop %v1012
      %v1053 = vrcp.pop %v1015
      %v1054 = vrcp.pop %v1018
      %v1055 = vrcp.pop %v1021
      %v1056 = vrcp.pop %v1024
      %v1057 = vrcp.pop %v1027
      %v1058 = vrcp.pop %v1030
      %v1059 = vrcp.pop %v1033
      %v1060 = vrcp.pop %v1036
      %v1061 = vrcp.pop %v1039
      %v1062 = vrcp.pop %v1042
      %v1063 = vrcp.pop %v1045
      %v1064 = vrcp.pop %v1048
      %v1065 = vmul.f32 %v938, %v1049
      %v1066 = vmul.f32 %v940, %v1049
      %v1067 = vmul.f32 %v942, %v1050
      %v1068 = vmul.f32 %v944, %v1050
      %v1069 = vmul.f32 %v946, %v1051
      %v1070 = vmul.f32 %v948, %v1051
      %v1071 = vmul.f32 %v950, %v1052
      %v1072 = vmul.f32 %v952, %v1052
      %v1073 = vmul.f32 %v954, %v1053
      %v1074 = vmul.f32 %v956, %v1053
      %v1075 = vmul.f32 %v958, %v1054
      %v1076 = vmul.f32 %v960, %v1054
      %v1077 = vmul.f32 %v962, %v1055
      %v1078 = vmul.f32 %v964, %v1055
      %v1079 = vmul.f32 %v966, %v1056
      %v1080 = vmul.f32 %v968, %v1056
      %v1081 = vmul.f32 %v970, %v1057
      %v1082 = vmul.f32 %v972, %v1057
      %v1083 = vmul.f32 %v974, %v1058
      %v1084 = vmul.f32 %v976, %v1058
      %v1085 = vmul.f32 %v978, %v1059
      %v1086 = vmul.f32 %v980, %v1059
      %v1087 = vmul.f32 %v982, %v1060
      %v1088 = vmul.f32 %v984, %v1060
      %v1089 = vmul.f32 %v986, %v1061
      %v1090 = vmul.f32 %v988, %v1061
      %v1091 = vmul.f32 %v990, %v1062
      %v1092 = vmul.f32 %v992, %v1062
      %v1093 = vmul.f32 %v994, %v1063
      %v1094 = vmul.f32 %v996, %v1063
      %v1095 = vmul.f32 %v998, %v1064
      %v1096 = vmul.f32 %v1000, %v1064
      %v1097 = vpack.c.bf16 %v1067, %v1065
      %v1098 = vpack.c.bf16 %v1068, %v1066
      %v1099 = vpack.c.bf16 %v1071, %v1069
      %v1100 = vpack.c.bf16 %v1072, %v1070
      %v1101 = vpack.c.bf16 %v1075, %v1073
      %v1102 = vpack.c.bf16 %v1076, %v1074
      %v1103 = vpack.c.bf16 %v1079, %v1077
      %v1104 = vpack.c.bf16 %v1080, %v1078
      %v1105 = vpack.c.bf16 %v1083, %v1081
      %v1106 = vpack.c.bf16 %v1084, %v1082
      %v1107 = vpack.c.bf16 %v1087, %v1085
      %v1108 = vpack.c.bf16 %v1088, %v1086
      %v1109 = vpack.c.bf16 %v1091, %v1089
      %v1110 = vpack.c.bf16 %v1092, %v1090
      %v1111 = vpack.c.bf16 %v1095, %v1093
      %v1112 = vpack.c.bf16 %v1096, %v1094
      %v1113 = vld [vmem:[%s2] sm:$0xf]
      %v1114 = vld [vmem:[%s2 + $0x4] sm:$0xf]
      %v1115 = vld [vmem:[%s2 + $0x8] sm:$0xf]
      %v1116 = vld [vmem:[%s2 + $0xc] sm:$0xf]
      %v1117 = vld [vmem:[%s2 + $0x10] sm:$0xf]
      %v1118 = vld [vmem:[%s2 + $0x14] sm:$0xf]
      %v1119 = vld [vmem:[%s2 + $0x18] sm:$0xf]
      %v1120 = vld [vmem:[%s2 + $0x1c] sm:$0xf]
      %v1121 = vld [vmem:[%s2 + $0x20] sm:$0xf]
      %v1122 = vld [vmem:[%s2 + $0x24] sm:$0xf]
      %v1123 = vld [vmem:[%s2 + $0x28] sm:$0xf]
      %v1124 = vld [vmem:[%s2 + $0x2c] sm:$0xf]
      %v1125 = vld [vmem:[%s2 + $0x30] sm:$0xf]
      %v1126 = vld [vmem:[%s2 + $0x34] sm:$0xf]
      %v1127 = vld [vmem:[%s2 + $0x38] sm:$0xf]
      %v1128 = vld [vmem:[%s2 + $0x3c] sm:$0xf]
      %v1129 = vld [vmem:[%s2 + $0x40] sm:$0xf]
      %v1130 = vld [vmem:[%s2 + $0x44] sm:$0xf]
      %v1131 = vld [vmem:[%s2 + $0x48] sm:$0xf]
      %v1132 = vld [vmem:[%s2 + $0x4c] sm:$0xf]
      %v1133 = vld [vmem:[%s2 + $0x50] sm:$0xf]
      %v1134 = vld [vmem:[%s2 + $0x54] sm:$0xf]
      %v1135 = vld [vmem:[%s2 + $0x58] sm:$0xf]
      %v1136 = vld [vmem:[%s2 + $0x5c] sm:$0xf]
      %v1137 = vld [vmem:[%s2 + $0x60] sm:$0xf]
      %v1138 = vld [vmem:[%s2 + $0x64] sm:$0xf]
      %v1139 = vld [vmem:[%s2 + $0x68] sm:$0xf]
      %v1140 = vld [vmem:[%s2 + $0x6c] sm:$0xf]
      %v1141 = vld [vmem:[%s2 + $0x70] sm:$0xf]
      %v1142 = vld [vmem:[%s2 + $0x74] sm:$0xf]
      %v1143 = vld [vmem:[%s2 + $0x78] sm:$0xf]
      %v1144 = vld [vmem:[%s2 + $0x7c] sm:$0xf]
      %v1177 = vunpack.c.l.b16 %v1113
      %v1178 = vunpack.c.l.b16 %v1114
      %v1179 = vunpack.c.l.b16 %v1115
      %v1180 = vunpack.c.l.b16 %v1116
      %v1181 = vunpack.c.l.b16 %v1117
      %v1182 = vunpack.c.l.b16 %v1118
      %v1183 = vunpack.c.l.b16 %v1119
      %v1184 = vunpack.c.l.b16 %v1120
      %v1185 = vunpack.c.l.b16 %v1121
      %v1186 = vunpack.c.l.b16 %v1122
      %v1187 = vunpack.c.l.b16 %v1123
      %v1188 = vunpack.c.l.b16 %v1124
      %v1189 = vunpack.c.l.b16 %v1125
      %v1190 = vunpack.c.l.b16 %v1126
      %v1191 = vunpack.c.l.b16 %v1127
      %v1192 = vunpack.c.l.b16 %v1128
      %v1193 = vunpack.c.l.b16 %v1129
      %v1194 = vunpack.c.l.b16 %v1130
      %v1195 = vunpack.c.l.b16 %v1131
      %v1196 = vunpack.c.l.b16 %v1132
      %v1197 = vunpack.c.l.b16 %v1133
      %v1198 = vunpack.c.l.b16 %v1134
      %v1199 = vunpack.c.l.b16 %v1135
      %v1200 = vunpack.c.l.b16 %v1136
      %v1201 = vunpack.c.l.b16 %v1137
      %v1202 = vunpack.c.l.b16 %v1138
      %v1203 = vunpack.c.l.b16 %v1139
      %v1204 = vunpack.c.l.b16 %v1140
      %v1205 = vunpack.c.l.b16 %v1141
      %v1206 = vunpack.c.l.b16 %v1142
      %v1207 = vunpack.c.l.b16 %v1143
      %v1208 = vunpack.c.l.b16 %v1144
      %v1209 = vpack.c.b16 %v1178, %v1177
      %v1210 = vpack.c.b16 %v1180, %v1179
      %v1211 = vpack.c.b16 %v1182, %v1181
      %v1212 = vpack.c.b16 %v1184, %v1183
      %v1213 = vpack.c.b16 %v1186, %v1185
      %v1214 = vpack.c.b16 %v1188, %v1187
      %v1215 = vpack.c.b16 %v1190, %v1189
      %v1216 = vpack.c.b16 %v1192, %v1191
      %v1217 = vpack.c.b16 %v1194, %v1193
      %v1218 = vpack.c.b16 %v1196, %v1195
      %v1219 = vpack.c.b16 %v1198, %v1197
      %v1220 = vpack.c.b16 %v1200, %v1199
      %v1221 = vpack.c.b16 %v1202, %v1201
      %v1222 = vpack.c.b16 %v1204, %v1203
      %v1223 = vpack.c.b16 %v1206, %v1205
      %v1224 = vpack.c.b16 %v1208, %v1207
      %1241 = vmatprep.subr.bf16.mxu0 0
      %1242 = vmatpush1.bf16.msra.mxu0 %v1216
      %1243 = vmatprep.subr.bf16.mxu0 0
      %1244 = vmatpush1.bf16.msra.mxu0 %v1215
      %1245 = vmatprep.subr.bf16.mxu0 0
      %1246 = vmatpush1.bf16.msra.mxu0 %v1214
      %1247 = vmatprep.subr.bf16.mxu0 0
      %1248 = vmatpush1.bf16.msra.mxu0 %v1213
      %1249 = vmatprep.subr.bf16.mxu0 0
      %1250 = vmatpush1.bf16.msra.mxu0 %v1212
      %1251 = vmatprep.subr.bf16.mxu0 0
      %1252 = vmatpush1.bf16.msra.mxu0 %v1211
      %1253 = vmatprep.subr.bf16.mxu0 0
      %1254 = vmatpush1.bf16.msra.mxu0 %v1210
      %1255 = vmatprep.subr.bf16.mxu0 0
      %1256 = vmatpush1.bf16.msra.mxu0 %v1209
      %1257 = vmatprep.subr.bf16.mxu0 0
      %1258 = vmatpush2.bf16.msra.mxu0 %v1224
      %1259 = vmatprep.subr.bf16.mxu0 0
      %1260 = vmatpush2.bf16.msra.mxu0 %v1223
      %1261 = vmatprep.subr.bf16.mxu0 0
      %1262 = vmatpush2.bf16.msra.mxu0 %v1222
      %1263 = vmatprep.subr.bf16.mxu0 0
      %1264 = vmatpush2.bf16.msra.mxu0 %v1221
      %1265 = vmatprep.subr.bf16.mxu0 0
      %1266 = vmatpush2.bf16.msra.mxu0 %v1220
      %1267 = vmatprep.subr.bf16.mxu0 0
      %1268 = vmatpush2.bf16.msra.mxu0 %v1219
      %1269 = vmatprep.subr.bf16.mxu0 0
      %1270 = vmatpush2.bf16.msra.mxu0 %v1218
      %1271 = vmatprep.subr.bf16.mxu0 0
      %1272 = vmatpush2.bf16.msra.mxu0 %v1217
      %1273 = vmatprep.mubr.bf16.mxu0 %v1098
      %1274 = vmatmul.mubr.bf16.gmra.mxu0 %v1097
      %v1275 = vpop.f32.mrf.mxu0
      %v1276 = vadd.f32 0.0, %v1275
      %v1277 = vpop.f32.mrf.mxu0
      %v1278 = vpop.f32.mrf.mxu0
      %v1279 = vadd.f32 0.0, %v1278
      %v1280 = vpop.f32.mrf.mxu0
      %1281 = vmatprep.mubr.bf16.mxu0 %v1100
      %1282 = vmatmul.mubr.bf16.gmra.mxu0 %v1099
      %v1283 = vpop.f32.mrf.mxu0
      %v1284 = vadd.f32 0.0, %v1283
      %v1285 = vpop.f32.mrf.mxu0
      %v1286 = vpop.f32.mrf.mxu0
      %v1287 = vadd.f32 0.0, %v1286
      %v1288 = vpop.f32.mrf.mxu0
      %1289 = vmatprep.mubr.bf16.mxu0 %v1102
      %1290 = vmatmul.mubr.bf16.gmra.mxu0 %v1101
      %v1291 = vpop.f32.mrf.mxu0
      %v1292 = vadd.f32 0.0, %v1291
      %v1293 = vpop.f32.mrf.mxu0
      %v1294 = vpop.f32.mrf.mxu0
      %v1295 = vadd.f32 0.0, %v1294
      %v1296 = vpop.f32.mrf.mxu0
      %1297 = vmatprep.mubr.bf16.mxu0 %v1104
      %1298 = vmatmul.mubr.bf16.gmra.mxu0 %v1103
      %v1299 = vpop.f32.mrf.mxu0
      %v1300 = vadd.f32 0.0, %v1299
      %v1301 = vpop.f32.mrf.mxu0
      %v1302 = vpop.f32.mrf.mxu0
      %v1303 = vadd.f32 0.0, %v1302
      %v1304 = vpop.f32.mrf.mxu0
      %1305 = vmatprep.mubr.bf16.mxu0 %v1106
      %1306 = vmatmul.mubr.bf16.gmra.mxu0 %v1105
      %v1307 = vpop.f32.mrf.mxu0
      %v1308 = vadd.f32 0.0, %v1307
      %v1309 = vpop.f32.mrf.mxu0
      %v1310 = vpop.f32.mrf.mxu0
      %v1311 = vadd.f32 0.0, %v1310
      %v1312 = vpop.f32.mrf.mxu0
      %1313 = vmatprep.mubr.bf16.mxu0 %v1108
      %1314 = vmatmul.mubr.bf16.gmra.mxu0 %v1107
      %v1315 = vpop.f32.mrf.mxu0
      %v1316 = vadd.f32 0.0, %v1315
      %v1317 = vpop.f32.mrf.mxu0
      %v1318 = vpop.f32.mrf.mxu0
      %v1319 = vadd.f32 0.0, %v1318
      %v1320 = vpop.f32.mrf.mxu0
      %1321 = vmatprep.mubr.bf16.mxu0 %v1110
      %1322 = vmatmul.mubr.bf16.gmra.mxu0 %v1109
      %v1323 = vpop.f32.mrf.mxu0
      %v1324 = vadd.f32 0.0, %v1323
      %v1325 = vpop.f32.mrf.mxu0
      %v1326 = vpop.f32.mrf.mxu0
      %v1327 = vadd.f32 0.0, %v1326
      %v1328 = vpop.f32.mrf.mxu0
      %1329 = vmatprep.mubr.bf16.mxu0 %v1112
      %1330 = vmatmul.mubr.bf16.gmra.mxu0 %v1111
      %v1331 = vpop.f32.mrf.mxu0
      %v1332 = vadd.f32 0.0, %v1331
      %v1333 = vpop.f32.mrf.mxu0
      %v1334 = vpop.f32.mrf.mxu0
      %v1335 = vadd.f32 0.0, %v1334
      %v1336 = vpop.f32.mrf.mxu0
      %1337 = vdwg.mxu0
      %v1338 = vpack.c.bf16 %v1279, %v1276
      %v1339 = vpack.c.bf16 %v1287, %v1284
      %v1340 = vpack.c.bf16 %v1295, %v1292
      %v1341 = vpack.c.bf16 %v1303, %v1300
      %v1342 = vpack.c.bf16 %v1311, %v1308
      %v1343 = vpack.c.bf16 %v1319, %v1316
      %v1344 = vpack.c.bf16 %v1327, %v1324
      %v1345 = vpack.c.bf16 %v1335, %v1332
      %v1346 = vld [vmem:[%s4] sm:$0xf]
      %v1347 = vld [vmem:[%s4 + $0x4] sm:$0xf]
      %v1348 = vld [vmem:[%s4 + $0x8] sm:$0xf]
      %v1349 = vld [vmem:[%s4 + $0xc] sm:$0xf]
      %v1350 = vld [vmem:[%s4 + $0x10] sm:$0xf]
      %v1351 = vld [vmem:[%s4 + $0x14] sm:$0xf]
      %v1352 = vld [vmem:[%s4 + $0x18] sm:$0xf]
      %v1353 = vld [vmem:[%s4 + $0x1c] sm:$0xf]
      %v1354 = vld [vmem:[%s4 + $0x20] sm:$0xf]
      %v1355 = vld [vmem:[%s4 + $0x24] sm:$0xf]
      %v1356 = vld [vmem:[%s4 + $0x28] sm:$0xf]
      %v1357 = vld [vmem:[%s4 + $0x2c] sm:$0xf]
      %v1358 = vld [vmem:[%s4 + $0x30] sm:$0xf]
      %v1359 = vld [vmem:[%s4 + $0x34] sm:$0xf]
      %v1360 = vld [vmem:[%s4 + $0x38] sm:$0xf]
      %v1361 = vld [vmem:[%s4 + $0x3c] sm:$0xf]
      %v1378 = vunpack.c.l.b16 %v1346
      %v1379 = vunpack.c.l.b16 %v1347
      %v1380 = vunpack.c.l.b16 %v1348
      %v1381 = vunpack.c.l.b16 %v1349
      %v1382 = vunpack.c.l.b16 %v1350
      %v1383 = vunpack.c.l.b16 %v1351
      %v1384 = vunpack.c.l.b16 %v1352
      %v1385 = vunpack.c.l.b16 %v1353
      %v1386 = vunpack.c.l.b16 %v1354
      %v1387 = vunpack.c.l.b16 %v1355
      %v1388 = vunpack.c.l.b16 %v1356
      %v1389 = vunpack.c.l.b16 %v1357
      %v1390 = vunpack.c.l.b16 %v1358
      %v1391 = vunpack.c.l.b16 %v1359
      %v1392 = vunpack.c.l.b16 %v1360
      %v1393 = vunpack.c.l.b16 %v1361
      %v1394 = vpack.c.b16 %v1379, %v1378
      %v1395 = vpack.c.b16 %v1381, %v1380
      %v1396 = vpack.c.b16 %v1383, %v1382
      %v1397 = vpack.c.b16 %v1385, %v1384
      %v1398 = vpack.c.b16 %v1387, %v1386
      %v1399 = vpack.c.b16 %v1389, %v1388
      %v1400 = vpack.c.b16 %v1391, %v1390
      %v1401 = vpack.c.b16 %v1393, %v1392
      %1410 = vmatprep.subr.bf16.mxu0 0
      %1411 = vmatpush1.bf16.msra.mxu0 %v1401
      %1412 = vmatprep.subr.bf16.mxu0 0
      %1413 = vmatpush1.bf16.msra.mxu0 %v1400
      %1414 = vmatprep.subr.bf16.mxu0 0
      %1415 = vmatpush1.bf16.msra.mxu0 %v1399
      %1416 = vmatprep.subr.bf16.mxu0 0
      %1417 = vmatpush1.bf16.msra.mxu0 %v1398
      %1418 = vmatprep.subr.bf16.mxu0 0
      %1419 = vmatpush1.bf16.msra.mxu0 %v1397
      %1420 = vmatprep.subr.bf16.mxu0 0
      %1421 = vmatpush1.bf16.msra.mxu0 %v1396
      %1422 = vmatprep.subr.bf16.mxu0 0
      %1423 = vmatpush1.bf16.msra.mxu0 %v1395
      %1424 = vmatprep.subr.bf16.mxu0 0
      %1425 = vmatpush1.bf16.msra.mxu0 %v1394
      %1426 = vmatprep.subr.bf16.mxu0 0
      %1427 = vmatpush2.bf16.msra.mxu0 0
      %1428 = vmatprep.subr.bf16.mxu0 0
      %1429 = vmatpush2.bf16.msra.mxu0 0
      %1430 = vmatprep.subr.bf16.mxu0 0
      %1431 = vmatpush2.bf16.msra.mxu0 0
      %1432 = vmatprep.subr.bf16.mxu0 0
      %1433 = vmatpush2.bf16.msra.mxu0 0
      %1434 = vmatprep.subr.bf16.mxu0 0
      %1435 = vmatpush2.bf16.msra.mxu0 0
      %1436 = vmatprep.subr.bf16.mxu0 0
      %1437 = vmatpush2.bf16.msra.mxu0 0
      %1438 = vmatprep.subr.bf16.mxu0 0
      %1439 = vmatpush2.bf16.msra.mxu0 0
      %1440 = vmatprep.subr.bf16.mxu0 0
      %1441 = vmatpush2.bf16.msra.mxu0 0
      %1442 = vmatprep.mubr.bf16.mxu0 0
      %1443 = vmatmul.mubr.bf16.gmra.mxu0 %v1338
      %v1444 = vpop.f32.mrf.mxu0
      %v1445 = vadd.f32 0.0, %v1444
      %v1446 = vpop.f32.mrf.mxu0
      %v1447 = vpop.f32.mrf.mxu0
      %v1448 = vadd.f32 0.0, %v1447
      %v1449 = vpop.f32.mrf.mxu0
      %1450 = vmatprep.mubr.bf16.mxu0 0
      %1451 = vmatmul.mubr.bf16.gmra.mxu0 %v1339
      %v1452 = vpop.f32.mrf.mxu0
      %v1453 = vadd.f32 0.0, %v1452
      %v1454 = vpop.f32.mrf.mxu0
      %v1455 = vpop.f32.mrf.mxu0
      %v1456 = vadd.f32 0.0, %v1455
      %v1457 = vpop.f32.mrf.mxu0
      %1458 = vmatprep.mubr.bf16.mxu0 0
      %1459 = vmatmul.mubr.bf16.gmra.mxu0 %v1340
      %v1460 = vpop.f32.mrf.mxu0
      %v1461 = vadd.f32 0.0, %v1460
      %v1462 = vpop.f32.mrf.mxu0
      %v1463 = vpop.f32.mrf.mxu0
      %v1464 = vadd.f32 0.0, %v1463
      %v1465 = vpop.f32.mrf.mxu0
      %1466 = vmatprep.mubr.bf16.mxu0 0
      %1467 = vmatmul.mubr.bf16.gmra.mxu0 %v1341
      %v1468 = vpop.f32.mrf.mxu0
      %v1469 = vadd.f32 0.0, %v1468
      %v1470 = vpop.f32.mrf.mxu0
      %v1471 = vpop.f32.mrf.mxu0
      %v1472 = vadd.f32 0.0, %v1471
      %v1473 = vpop.f32.mrf.mxu0
      %1474 = vmatprep.mubr.bf16.mxu0 0
      %1475 = vmatmul.mubr.bf16.gmra.mxu0 %v1342
      %v1476 = vpop.f32.mrf.mxu0
      %v1477 = vadd.f32 0.0, %v1476
      %v1478 = vpop.f32.mrf.mxu0
      %v1479 = vpop.f32.mrf.mxu0
      %v1480 = vadd.f32 0.0, %v1479
      %v1481 = vpop.f32.mrf.mxu0
      %1482 = vmatprep.mubr.bf16.mxu0 0
      %1483 = vmatmul.mubr.bf16.gmra.mxu0 %v1343
      %v1484 = vpop.f32.mrf.mxu0
      %v1485 = vadd.f32 0.0, %v1484
      %v1486 = vpop.f32.mrf.mxu0
      %v1487 = vpop.f32.mrf.mxu0
      %v1488 = vadd.f32 0.0, %v1487
      %v1489 = vpop.f32.mrf.mxu0
      %1490 = vmatprep.mubr.bf16.mxu0 0
      %1491 = vmatmul.mubr.bf16.gmra.mxu0 %v1344
      %v1492 = vpop.f32.mrf.mxu0
      %v1493 = vadd.f32 0.0, %v1492
      %v1494 = vpop.f32.mrf.mxu0
      %v1495 = vpop.f32.mrf.mxu0
      %v1496 = vadd.f32 0.0, %v1495
      %v1497 = vpop.f32.mrf.mxu0
      %1498 = vmatprep.mubr.bf16.mxu0 0
      %1499 = vmatmul.mubr.bf16.gmra.mxu0 %v1345
      %v1500 = vpop.f32.mrf.mxu0
      %v1501 = vadd.f32 0.0, %v1500
      %v1502 = vpop.f32.mrf.mxu0
      %v1503 = vpop.f32.mrf.mxu0
      %v1504 = vadd.f32 0.0, %v1503
      %v1505 = vpop.f32.mrf.mxu0
      %1506 = vdwg.mxu0
      %v1507 = vunpack.c.l.bf16 %v351
      %v1508 = vunpack.c.l.bf16 %v352
      %v1509 = vunpack.c.l.bf16 %v353
      %v1510 = vunpack.c.l.bf16 %v354
      %v1511 = vunpack.c.l.bf16 %v355
      %v1512 = vunpack.c.l.bf16 %v356
      %v1513 = vunpack.c.l.bf16 %v357
      %v1514 = vunpack.c.l.bf16 %v358
      %v1515 = vunpack.c.l.bf16 %v359
      %v1516 = vunpack.c.l.bf16 %v360
      %v1517 = vunpack.c.l.bf16 %v361
      %v1518 = vunpack.c.l.bf16 %v362
      %v1519 = vunpack.c.l.bf16 %v363
      %v1520 = vunpack.c.l.bf16 %v364
      %v1521 = vunpack.c.l.bf16 %v365
      %v1522 = vunpack.c.l.bf16 %v366
      %v1523 = vadd.f32 %v1507, %v1445
      %v1524 = vadd.f32 %v1508, %v1448
      %v1525 = vadd.f32 %v1509, %v1453
      %v1526 = vadd.f32 %v1510, %v1456
      %v1527 = vadd.f32 %v1511, %v1461
      %v1528 = vadd.f32 %v1512, %v1464
      %v1529 = vadd.f32 %v1513, %v1469
      %v1530 = vadd.f32 %v1514, %v1472
      %v1531 = vadd.f32 %v1515, %v1477
      %v1532 = vadd.f32 %v1516, %v1480
      %v1533 = vadd.f32 %v1517, %v1485
      %v1534 = vadd.f32 %v1518, %v1488
      %v1535 = vadd.f32 %v1519, %v1493
      %v1536 = vadd.f32 %v1520, %v1496
      %v1537 = vadd.f32 %v1521, %v1501
      %v1538 = vadd.f32 %v1522, %v1504
      %v1539 = vpack.c.bf16 %v1524, %v1523
      %v1540 = vpack.c.bf16 %v1526, %v1525
      %v1541 = vpack.c.bf16 %v1528, %v1527
      %v1542 = vpack.c.bf16 %v1530, %v1529
      %v1543 = vpack.c.bf16 %v1532, %v1531
      %v1544 = vpack.c.bf16 %v1534, %v1533
      %v1545 = vpack.c.bf16 %v1536, %v1535
      %v1546 = vpack.c.bf16 %v1538, %v1537
      %v1555 = vunpack.c.l.b16 %v1539
      %v1556 = vunpack.c.h.b16 %v1539
      %v1557 = vunpack.c.l.b16 %v1540
      %v1558 = vunpack.c.h.b16 %v1540
      %v1559 = vunpack.c.l.b16 %v1541
      %v1560 = vunpack.c.h.b16 %v1541
      %v1561 = vunpack.c.l.b16 %v1542
      %v1562 = vunpack.c.h.b16 %v1542
      %v1563 = vunpack.c.l.b16 %v1543
      %v1564 = vunpack.c.h.b16 %v1543
      %v1565 = vunpack.c.l.b16 %v1544
      %v1566 = vunpack.c.h.b16 %v1544
      %v1567 = vunpack.c.l.b16 %v1545
      %v1568 = vunpack.c.h.b16 %v1545
      %v1569 = vunpack.c.l.b16 %v1546
      %v1570 = vunpack.c.h.b16 %v1546
      %v1571 = vpack.c.b16 %v1555, %v1555
      %v1572 = vpack.c.b16 %v1556, %v1556
      %v1573 = vpack.c.b16 %v1557, %v1557
      %v1574 = vpack.c.b16 %v1558, %v1558
      %v1575 = vpack.c.b16 %v1559, %v1559
      %v1576 = vpack.c.b16 %v1560, %v1560
      %v1577 = vpack.c.b16 %v1561, %v1561
      %v1578 = vpack.c.b16 %v1562, %v1562
      %v1579 = vpack.c.b16 %v1563, %v1563
      %v1580 = vpack.c.b16 %v1564, %v1564
      %v1581 = vpack.c.b16 %v1565, %v1565
      %v1582 = vpack.c.b16 %v1566, %v1566
      %v1583 = vpack.c.b16 %v1567, %v1567
      %v1584 = vpack.c.b16 %v1568, %v1568
      %v1585 = vpack.c.b16 %v1569, %v1569
      %v1586 = vpack.c.b16 %v1570, %v1570
      %1603 = vst [vmem:[%s342] sm:$0xf] %v1571
      %1604 = vst [vmem:[%s342 + $0x4] sm:$0xf] %v1572
      %1605 = vst [vmem:[%s342 + $0x8] sm:$0xf] %v1573
      %1606 = vst [vmem:[%s342 + $0xc] sm:$0xf] %v1574
      %1607 = vst [vmem:[%s342 + $0x10] sm:$0xf] %v1575
      %1608 = vst [vmem:[%s342 + $0x14] sm:$0xf] %v1576
      %1609 = vst [vmem:[%s342 + $0x18] sm:$0xf] %v1577
      %1610 = vst [vmem:[%s342 + $0x1c] sm:$0xf] %v1578
      %1611 = vst [vmem:[%s342 + $0x20] sm:$0xf] %v1579
      %1612 = vst [vmem:[%s342 + $0x24] sm:$0xf] %v1580
      %1613 = vst [vmem:[%s342 + $0x28] sm:$0xf] %v1581
      %1614 = vst [vmem:[%s342 + $0x2c] sm:$0xf] %v1582
      %1615 = vst [vmem:[%s342 + $0x30] sm:$0xf] %v1583
      %1616 = vst [vmem:[%s342 + $0x34] sm:$0xf] %v1584
      %1617 = vst [vmem:[%s342 + $0x38] sm:$0xf] %v1585
      %1618 = vst [vmem:[%s342 + $0x3c] sm:$0xf] %v1586
      %v1619 = vld [vmem:[%s5] sm:$0xf]
      %v1620 = vld [vmem:[%s5 + $0x4] sm:$0xf]
      %v1621 = vld [vmem:[%s5 + $0x8] sm:$0xf]
      %v1622 = vld [vmem:[%s5 + $0xc] sm:$0xf]
      %v1623 = vld [vmem:[%s5 + $0x10] sm:$0xf]
      %v1624 = vld [vmem:[%s5 + $0x14] sm:$0xf]
      %v1625 = vld [vmem:[%s5 + $0x18] sm:$0xf]
      %v1626 = vld [vmem:[%s5 + $0x1c] sm:$0xf]
      %v1627 = vld [vmem:[%s5 + $0x20] sm:$0xf]
      %v1628 = vld [vmem:[%s5 + $0x24] sm:$0xf]
      %v1629 = vld [vmem:[%s5 + $0x28] sm:$0xf]
      %v1630 = vld [vmem:[%s5 + $0x2c] sm:$0xf]
      %v1631 = vld [vmem:[%s5 + $0x30] sm:$0xf]
      %v1632 = vld [vmem:[%s5 + $0x34] sm:$0xf]
      %v1633 = vld [vmem:[%s5 + $0x38] sm:$0xf]
      %v1634 = vld [vmem:[%s5 + $0x3c] sm:$0xf]
      %v1635 = vld [vmem:[%s5 + $0x40] sm:$0xf]
      %v1636 = vld [vmem:[%s5 + $0x44] sm:$0xf]
      %v1637 = vld [vmem:[%s5 + $0x48] sm:$0xf]
      %v1638 = vld [vmem:[%s5 + $0x4c] sm:$0xf]
      %v1639 = vld [vmem:[%s5 + $0x50] sm:$0xf]
      %v1640 = vld [vmem:[%s5 + $0x54] sm:$0xf]
      %v1641 = vld [vmem:[%s5 + $0x58] sm:$0xf]
      %v1642 = vld [vmem:[%s5 + $0x5c] sm:$0xf]
      %v1643 = vld [vmem:[%s5 + $0x60] sm:$0xf]
      %v1644 = vld [vmem:[%s5 + $0x64] sm:$0xf]
      %v1645 = vld [vmem:[%s5 + $0x68] sm:$0xf]
      %v1646 = vld [vmem:[%s5 + $0x6c] sm:$0xf]
      %v1647 = vld [vmem:[%s5 + $0x70] sm:$0xf]
      %v1648 = vld [vmem:[%s5 + $0x74] sm:$0xf]
      %v1649 = vld [vmem:[%s5 + $0x78] sm:$0xf]
      %v1650 = vld [vmem:[%s5 + $0x7c] sm:$0xf]
      %v1651 = vld [vmem:[%s5 + $0x80] sm:$0xf]
      %v1652 = vld [vmem:[%s5 + $0x84] sm:$0xf]
      %v1653 = vld [vmem:[%s5 + $0x88] sm:$0xf]
      %v1654 = vld [vmem:[%s5 + $0x8c] sm:$0xf]
      %v1655 = vld [vmem:[%s5 + $0x90] sm:$0xf]
      %v1656 = vld [vmem:[%s5 + $0x94] sm:$0xf]
      %v1657 = vld [vmem:[%s5 + $0x98] sm:$0xf]
      %v1658 = vld [vmem:[%s5 + $0x9c] sm:$0xf]
      %v1659 = vld [vmem:[%s5 + $0xa0] sm:$0xf]
      %v1660 = vld [vmem:[%s5 + $0xa4] sm:$0xf]
      %v1661 = vld [vmem:[%s5 + $0xa8] sm:$0xf]
      %v1662 = vld [vmem:[%s5 + $0xac] sm:$0xf]
      %v1663 = vld [vmem:[%s5 + $0xb0] sm:$0xf]
      %v1664 = vld [vmem:[%s5 + $0xb4] sm:$0xf]
      %v1665 = vld [vmem:[%s5 + $0xb8] sm:$0xf]
      %v1666 = vld [vmem:[%s5 + $0xbc] sm:$0xf]
      %v1667 = vld [vmem:[%s5 + $0xc0] sm:$0xf]
      %v1668 = vld [vmem:[%s5 + $0xc4] sm:$0xf]
      %v1669 = vld [vmem:[%s5 + $0xc8] sm:$0xf]
      %v1670 = vld [vmem:[%s5 + $0xcc] sm:$0xf]
      %v1671 = vld [vmem:[%s5 + $0xd0] sm:$0xf]
      %v1672 = vld [vmem:[%s5 + $0xd4] sm:$0xf]
      %v1673 = vld [vmem:[%s5 + $0xd8] sm:$0xf]
      %v1674 = vld [vmem:[%s5 + $0xdc] sm:$0xf]
      %v1675 = vld [vmem:[%s5 + $0xe0] sm:$0xf]
      %v1676 = vld [vmem:[%s5 + $0xe4] sm:$0xf]
      %v1677 = vld [vmem:[%s5 + $0xe8] sm:$0xf]
      %v1678 = vld [vmem:[%s5 + $0xec] sm:$0xf]
      %v1679 = vld [vmem:[%s5 + $0xf0] sm:$0xf]
      %v1680 = vld [vmem:[%s5 + $0xf4] sm:$0xf]
      %v1681 = vld [vmem:[%s5 + $0xf8] sm:$0xf]
      %v1682 = vld [vmem:[%s5 + $0xfc] sm:$0xf]
      %v1683 = vld [vmem:[%s5 + $0x100] sm:$0xf]
      %v1684 = vld [vmem:[%s5 + $0x104] sm:$0xf]
      %v1685 = vld [vmem:[%s5 + $0x108] sm:$0xf]
      %v1686 = vld [vmem:[%s5 + $0x10c] sm:$0xf]
      %v1687 = vld [vmem:[%s5 + $0x110] sm:$0xf]
      %v1688 = vld [vmem:[%s5 + $0x114] sm:$0xf]
      %v1689 = vld [vmem:[%s5 + $0x118] sm:$0xf]
      %v1690 = vld [vmem:[%s5 + $0x11c] sm:$0xf]
      %v1691 = vld [vmem:[%s5 + $0x120] sm:$0xf]
      %v1692 = vld [vmem:[%s5 + $0x124] sm:$0xf]
      %v1693 = vld [vmem:[%s5 + $0x128] sm:$0xf]
      %v1694 = vld [vmem:[%s5 + $0x12c] sm:$0xf]
      %v1695 = vld [vmem:[%s5 + $0x130] sm:$0xf]
      %v1696 = vld [vmem:[%s5 + $0x134] sm:$0xf]
      %v1697 = vld [vmem:[%s5 + $0x138] sm:$0xf]
      %v1698 = vld [vmem:[%s5 + $0x13c] sm:$0xf]
      %v1699 = vld [vmem:[%s5 + $0x140] sm:$0xf]
      %v1700 = vld [vmem:[%s5 + $0x144] sm:$0xf]
      %v1701 = vld [vmem:[%s5 + $0x148] sm:$0xf]
      %v1702 = vld [vmem:[%s5 + $0x14c] sm:$0xf]
      %v1703 = vld [vmem:[%s5 + $0x150] sm:$0xf]
      %v1704 = vld [vmem:[%s5 + $0x154] sm:$0xf]
      %v1705 = vld [vmem:[%s5 + $0x158] sm:$0xf]
      %v1706 = vld [vmem:[%s5 + $0x15c] sm:$0xf]
      %v1707 = vld [vmem:[%s5 + $0x160] sm:$0xf]
      %v1708 = vld [vmem:[%s5 + $0x164] sm:$0xf]
      %v1709 = vld [vmem:[%s5 + $0x168] sm:$0xf]
      %v1710 = vld [vmem:[%s5 + $0x16c] sm:$0xf]
      %v1711 = vld [vmem:[%s5 + $0x170] sm:$0xf]
      %v1712 = vld [vmem:[%s5 + $0x174] sm:$0xf]
      %v1713 = vld [vmem:[%s5 + $0x178] sm:$0xf]
      %v1714 = vld [vmem:[%s5 + $0x17c] sm:$0xf]
      %v1715 = vld [vmem:[%s6] sm:$0x3f]
      %v1716 = vlaneseq
      %v1717 = vshrl.u32 %v1716, 7
      %v1718 = vsub.s32 0, %v1717
      %v1719 = vrot.slane %v1715, %v1718
      %v1736 = vunpack.c.l.b16 %v1619
      %v1737 = vunpack.c.l.b16 %v1620
      %v1738 = vunpack.c.l.b16 %v1621
      %v1739 = vunpack.c.l.b16 %v1622
      %v1740 = vunpack.c.l.b16 %v1623
      %v1741 = vunpack.c.l.b16 %v1624
      %v1742 = vunpack.c.l.b16 %v1625
      %v1743 = vunpack.c.l.b16 %v1626
      %v1744 = vunpack.c.l.b16 %v1627
      %v1745 = vunpack.c.l.b16 %v1628
      %v1746 = vunpack.c.l.b16 %v1629
      %v1747 = vunpack.c.l.b16 %v1630
      %v1748 = vunpack.c.l.b16 %v1631
      %v1749 = vunpack.c.l.b16 %v1632
      %v1750 = vunpack.c.l.b16 %v1633
      %v1751 = vunpack.c.l.b16 %v1634
      %v1752 = vpack.c.b16 %v1737, %v1736
      %v1753 = vpack.c.b16 %v1739, %v1738
      %v1754 = vpack.c.b16 %v1741, %v1740
      %v1755 = vpack.c.b16 %v1743, %v1742
      %v1756 = vpack.c.b16 %v1745, %v1744
      %v1757 = vpack.c.b16 %v1747, %v1746
      %v1758 = vpack.c.b16 %v1749, %v1748
      %v1759 = vpack.c.b16 %v1751, %v1750
      %1768 = vmatprep.subr.bf16.mxu0 0
      %1769 = vmatpush1.bf16.msra.mxu0 %v1759
      %1770 = vmatprep.subr.bf16.mxu0 0
      %1771 = vmatpush1.bf16.msra.mxu0 %v1758
      %1772 = vmatprep.subr.bf16.mxu0 0
      %1773 = vmatpush1.bf16.msra.mxu0 %v1757
      %1774 = vmatprep.subr.bf16.mxu0 0
      %1775 = vmatpush1.bf16.msra.mxu0 %v1756
      %1776 = vmatprep.subr.bf16.mxu0 0
      %1777 = vmatpush1.bf16.msra.mxu0 %v1755
      %1778 = vmatprep.subr.bf16.mxu0 0
      %1779 = vmatpush1.bf16.msra.mxu0 %v1754
      %1780 = vmatprep.subr.bf16.mxu0 0
      %1781 = vmatpush1.bf16.msra.mxu0 %v1753
      %1782 = vmatprep.subr.bf16.mxu0 0
      %1783 = vmatpush1.bf16.msra.mxu0 %v1752
      %1784 = vmatprep.subr.bf16.mxu0 0
      %1785 = vmatpush2.bf16.msra.mxu0 0
      %1786 = vmatprep.subr.bf16.mxu0 0
      %1787 = vmatpush2.bf16.msra.mxu0 0
      %1788 = vmatprep.subr.bf16.mxu0 0
      %1789 = vmatpush2.bf16.msra.mxu0 0
      %1790 = vmatprep.subr.bf16.mxu0 0
      %1791 = vmatpush2.bf16.msra.mxu0 0
      %1792 = vmatprep.subr.bf16.mxu0 0
      %1793 = vmatpush2.bf16.msra.mxu0 0
      %1794 = vmatprep.subr.bf16.mxu0 0
      %1795 = vmatpush2.bf16.msra.mxu0 0
      %1796 = vmatprep.subr.bf16.mxu0 0
      %1797 = vmatpush2.bf16.msra.mxu0 0
      %1798 = vmatprep.subr.bf16.mxu0 0
      %1799 = vmatpush2.bf16.msra.mxu0 0
      %1800 = vmatprep.mubr.bf16.mxu0 0
      %1801 = vmatmul.mubr.bf16.gmra.mxu0 %v1539
      %v1802 = vpop.f32.mrf.mxu0
      %v1803 = vadd.f32 %v1719, %v1802
      %v1804 = vpop.f32.mrf.mxu0
      %v1805 = vpop.f32.mrf.mxu0
      %v1806 = vadd.f32 %v1719, %v1805
      %v1807 = vpop.f32.mrf.mxu0
      %1808 = vmatprep.mubr.bf16.mxu0 0
      %1809 = vmatmul.mubr.bf16.gmra.mxu0 %v1540
      %v1810 = vpop.f32.mrf.mxu0
      %v1811 = vadd.f32 %v1719, %v1810
      %v1812 = vpop.f32.mrf.mxu0
      %v1813 = vpop.f32.mrf.mxu0
      %v1814 = vadd.f32 %v1719, %v1813
      %v1815 = vpop.f32.mrf.mxu0
      %1816 = vmatprep.mubr.bf16.mxu0 0
      %1817 = vmatmul.mubr.bf16.gmra.mxu0 %v1541
      %v1818 = vpop.f32.mrf.mxu0
      %v1819 = vadd.f32 %v1719, %v1818
      %v1820 = vpop.f32.mrf.mxu0
      %v1821 = vpop.f32.mrf.mxu0
      %v1822 = vadd.f32 %v1719, %v1821
      %v1823 = vpop.f32.mrf.mxu0
      %1824 = vmatprep.mubr.bf16.mxu0 0
      %1825 = vmatmul.mubr.bf16.gmra.mxu0 %v1542
      %v1826 = vpop.f32.mrf.mxu0
      %v1827 = vadd.f32 %v1719, %v1826
      %v1828 = vpop.f32.mrf.mxu0
      %v1829 = vpop.f32.mrf.mxu0
      %v1830 = vadd.f32 %v1719, %v1829
      %v1831 = vpop.f32.mrf.mxu0
      %1832 = vmatprep.mubr.bf16.mxu0 0
      %1833 = vmatmul.mubr.bf16.gmra.mxu0 %v1543
      %v1834 = vpop.f32.mrf.mxu0
      %v1835 = vadd.f32 %v1719, %v1834
      %v1836 = vpop.f32.mrf.mxu0
      %v1837 = vpop.f32.mrf.mxu0
      %v1838 = vadd.f32 %v1719, %v1837
      %v1839 = vpop.f32.mrf.mxu0
      %1840 = vmatprep.mubr.bf16.mxu0 0
      %1841 = vmatmul.mubr.bf16.gmra.mxu0 %v1544
      %v1842 = vpop.f32.mrf.mxu0
      %v1843 = vadd.f32 %v1719, %v1842
      %v1844 = vpop.f32.mrf.mxu0
      %v1845 = vpop.f32.mrf.mxu0
      %v1846 = vadd.f32 %v1719, %v1845
      %v1847 = vpop.f32.mrf.mxu0
      %1848 = vmatprep.mubr.bf16.mxu0 0
      %1849 = vmatmul.mubr.bf16.gmra.mxu0 %v1545
      %v1850 = vpop.f32.mrf.mxu0
      %v1851 = vadd.f32 %v1719, %v1850
      %v1852 = vpop.f32.mrf.mxu0
      %v1853 = vpop.f32.mrf.mxu0
      %v1854 = vadd.f32 %v1719, %v1853
      %v1855 = vpop.f32.mrf.mxu0
      %1856 = vmatprep.mubr.bf16.mxu0 0
      %1857 = vmatmul.mubr.bf16.gmra.mxu0 %v1546
      %v1858 = vpop.f32.mrf.mxu0
      %v1859 = vadd.f32 %v1719, %v1858
      %v1860 = vpop.f32.mrf.mxu0
      %v1861 = vpop.f32.mrf.mxu0
      %v1862 = vadd.f32 %v1719, %v1861
      %v1863 = vpop.f32.mrf.mxu0
      %1864 = vdwg.mxu0
      %v1865 = vmax.f32 %v1803, 0.0
      %v1866 = vmax.f32 %v1806, 0.0
      %v1867 = vmax.f32 %v1811, 0.0
      %v1868 = vmax.f32 %v1814, 0.0
      %v1869 = vmax.f32 %v1819, 0.0
      %v1870 = vmax.f32 %v1822, 0.0
      %v1871 = vmax.f32 %v1827, 0.0
      %v1872 = vmax.f32 %v1830, 0.0
      %v1873 = vmax.f32 %v1835, 0.0
      %v1874 = vmax.f32 %v1838, 0.0
      %v1875 = vmax.f32 %v1843, 0.0
      %v1876 = vmax.f32 %v1846, 0.0
      %v1877 = vmax.f32 %v1851, 0.0
      %v1878 = vmax.f32 %v1854, 0.0
      %v1879 = vmax.f32 %v1859, 0.0
      %v1880 = vmax.f32 %v1862, 0.0
      %v1881 = vpack.c.bf16 %v1866, %v1865
      %v1882 = vpack.c.bf16 %v1868, %v1867
      %v1883 = vpack.c.bf16 %v1870, %v1869
      %v1884 = vpack.c.bf16 %v1872, %v1871
      %v1885 = vpack.c.bf16 %v1874, %v1873
      %v1886 = vpack.c.bf16 %v1876, %v1875
      %v1887 = vpack.c.bf16 %v1878, %v1877
      %v1888 = vpack.c.bf16 %v1880, %v1879
      %v1889 = vlaneseq
      %v1890 = vshrl.u32 %v1889, 7
      %v1891 = vsub.s32 1, %v1890
      %v1892 = vrot.slane %v1715, %v1891
      %v1909 = vunpack.c.l.b16 %v1635
      %v1910 = vunpack.c.l.b16 %v1636
      %v1911 = vunpack.c.l.b16 %v1637
      %v1912 = vunpack.c.l.b16 %v1638
      %v1913 = vunpack.c.l.b16 %v1639
      %v1914 = vunpack.c.l.b16 %v1640
      %v1915 = vunpack.c.l.b16 %v1641
      %v1916 = vunpack.c.l.b16 %v1642
      %v1917 = vunpack.c.l.b16 %v1643
      %v1918 = vunpack.c.l.b16 %v1644
      %v1919 = vunpack.c.l.b16 %v1645
      %v1920 = vunpack.c.l.b16 %v1646
      %v1921 = vunpack.c.l.b16 %v1647
      %v1922 = vunpack.c.l.b16 %v1648
      %v1923 = vunpack.c.l.b16 %v1649
      %v1924 = vunpack.c.l.b16 %v1650
      %v1925 = vpack.c.b16 %v1910, %v1909
      %v1926 = vpack.c.b16 %v1912, %v1911
      %v1927 = vpack.c.b16 %v1914, %v1913
      %v1928 = vpack.c.b16 %v1916, %v1915
      %v1929 = vpack.c.b16 %v1918, %v1917
      %v1930 = vpack.c.b16 %v1920, %v1919
      %v1931 = vpack.c.b16 %v1922, %v1921
      %v1932 = vpack.c.b16 %v1924, %v1923
      %1941 = vmatprep.subr.bf16.mxu0 0
      %1942 = vmatpush1.bf16.msra.mxu0 %v1932
      %1943 = vmatprep.subr.bf16.mxu0 0
      %1944 = vmatpush1.bf16.msra.mxu0 %v1931
      %1945 = vmatprep.subr.bf16.mxu0 0
      %1946 = vmatpush1.bf16.msra.mxu0 %v1930
      %1947 = vmatprep.subr.bf16.mxu0 0
      %1948 = vmatpush1.bf16.msra.mxu0 %v1929
      %1949 = vmatprep.subr.bf16.mxu0 0
      %1950 = vmatpush1.bf16.msra.mxu0 %v1928
      %1951 = vmatprep.subr.bf16.mxu0 0
      %1952 = vmatpush1.bf16.msra.mxu0 %v1927
      %1953 = vmatprep.subr.bf16.mxu0 0
      %1954 = vmatpush1.bf16.msra.mxu0 %v1926
      %1955 = vmatprep.subr.bf16.mxu0 0
      %1956 = vmatpush1.bf16.msra.mxu0 %v1925
      %1957 = vmatprep.subr.bf16.mxu0 0
      %1958 = vmatpush2.bf16.msra.mxu0 0
      %1959 = vmatprep.subr.bf16.mxu0 0
      %1960 = vmatpush2.bf16.msra.mxu0 0
      %1961 = vmatprep.subr.bf16.mxu0 0
      %1962 = vmatpush2.bf16.msra.mxu0 0
      %1963 = vmatprep.subr.bf16.mxu0 0
      %1964 = vmatpush2.bf16.msra.mxu0 0
      %1965 = vmatprep.subr.bf16.mxu0 0
      %1966 = vmatpush2.bf16.msra.mxu0 0
      %1967 = vmatprep.subr.bf16.mxu0 0
      %1968 = vmatpush2.bf16.msra.mxu0 0
      %1969 = vmatprep.subr.bf16.mxu0 0
      %1970 = vmatpush2.bf16.msra.mxu0 0
      %1971 = vmatprep.subr.bf16.mxu0 0
      %1972 = vmatpush2.bf16.msra.mxu0 0
      %1973 = vmatprep.mubr.bf16.mxu0 0
      %1974 = vmatmul.mubr.bf16.gmra.mxu0 %v1881
      %v1975 = vpop.f32.mrf.mxu0
      %v1976 = vadd.f32 %v1892, %v1975
      %v1977 = vpop.f32.mrf.mxu0
      %v1978 = vpop.f32.mrf.mxu0
      %v1979 = vadd.f32 %v1892, %v1978
      %v1980 = vpop.f32.mrf.mxu0
      %1981 = vmatprep.mubr.bf16.mxu0 0
      %1982 = vmatmul.mubr.bf16.gmra.mxu0 %v1882
      %v1983 = vpop.f32.mrf.mxu0
      %v1984 = vadd.f32 %v1892, %v1983
      %v1985 = vpop.f32.mrf.mxu0
      %v1986 = vpop.f32.mrf.mxu0
      %v1987 = vadd.f32 %v1892, %v1986
      %v1988 = vpop.f32.mrf.mxu0
      %1989 = vmatprep.mubr.bf16.mxu0 0
      %1990 = vmatmul.mubr.bf16.gmra.mxu0 %v1883
      %v1991 = vpop.f32.mrf.mxu0
      %v1992 = vadd.f32 %v1892, %v1991
      %v1993 = vpop.f32.mrf.mxu0
      %v1994 = vpop.f32.mrf.mxu0
      %v1995 = vadd.f32 %v1892, %v1994
      %v1996 = vpop.f32.mrf.mxu0
      %1997 = vmatprep.mubr.bf16.mxu0 0
      %1998 = vmatmul.mubr.bf16.gmra.mxu0 %v1884
      %v1999 = vpop.f32.mrf.mxu0
      %v2000 = vadd.f32 %v1892, %v1999
      %v2001 = vpop.f32.mrf.mxu0
      %v2002 = vpop.f32.mrf.mxu0
      %v2003 = vadd.f32 %v1892, %v2002
      %v2004 = vpop.f32.mrf.mxu0
      %2005 = vmatprep.mubr.bf16.mxu0 0
      %2006 = vmatmul.mubr.bf16.gmra.mxu0 %v1885
      %v2007 = vpop.f32.mrf.mxu0
      %v2008 = vadd.f32 %v1892, %v2007
      %v2009 = vpop.f32.mrf.mxu0
      %v2010 = vpop.f32.mrf.mxu0
      %v2011 = vadd.f32 %v1892, %v2010
      %v2012 = vpop.f32.mrf.mxu0
      %2013 = vmatprep.mubr.bf16.mxu0 0
      %2014 = vmatmul.mubr.bf16.gmra.mxu0 %v1886
      %v2015 = vpop.f32.mrf.mxu0
      %v2016 = vadd.f32 %v1892, %v2015
      %v2017 = vpop.f32.mrf.mxu0
      %v2018 = vpop.f32.mrf.mxu0
      %v2019 = vadd.f32 %v1892, %v2018
      %v2020 = vpop.f32.mrf.mxu0
      %2021 = vmatprep.mubr.bf16.mxu0 0
      %2022 = vmatmul.mubr.bf16.gmra.mxu0 %v1887
      %v2023 = vpop.f32.mrf.mxu0
      %v2024 = vadd.f32 %v1892, %v2023
      %v2025 = vpop.f32.mrf.mxu0
      %v2026 = vpop.f32.mrf.mxu0
      %v2027 = vadd.f32 %v1892, %v2026
      %v2028 = vpop.f32.mrf.mxu0
      %2029 = vmatprep.mubr.bf16.mxu0 0
      %2030 = vmatmul.mubr.bf16.gmra.mxu0 %v1888
      %v2031 = vpop.f32.mrf.mxu0
      %v2032 = vadd.f32 %v1892, %v2031
      %v2033 = vpop.f32.mrf.mxu0
      %v2034 = vpop.f32.mrf.mxu0
      %v2035 = vadd.f32 %v1892, %v2034
      %v2036 = vpop.f32.mrf.mxu0
      %2037 = vdwg.mxu0
      %v2038 = vmax.f32 %v1976, 0.0
      %v2039 = vmax.f32 %v1979, 0.0
      %v2040 = vmax.f32 %v1984, 0.0
      %v2041 = vmax.f32 %v1987, 0.0
      %v2042 = vmax.f32 %v1992, 0.0
      %v2043 = vmax.f32 %v1995, 0.0
      %v2044 = vmax.f32 %v2000, 0.0
      %v2045 = vmax.f32 %v2003, 0.0
      %v2046 = vmax.f32 %v2008, 0.0
      %v2047 = vmax.f32 %v2011, 0.0
      %v2048 = vmax.f32 %v2016, 0.0
      %v2049 = vmax.f32 %v2019, 0.0
      %v2050 = vmax.f32 %v2024, 0.0
      %v2051 = vmax.f32 %v2027, 0.0
      %v2052 = vmax.f32 %v2032, 0.0
      %v2053 = vmax.f32 %v2035, 0.0
      %v2054 = vpack.c.bf16 %v2039, %v2038
      %v2055 = vpack.c.bf16 %v2041, %v2040
      %v2056 = vpack.c.bf16 %v2043, %v2042
      %v2057 = vpack.c.bf16 %v2045, %v2044
      %v2058 = vpack.c.bf16 %v2047, %v2046
      %v2059 = vpack.c.bf16 %v2049, %v2048
      %v2060 = vpack.c.bf16 %v2051, %v2050
      %v2061 = vpack.c.bf16 %v2053, %v2052
      %v2062 = vlaneseq
      %v2063 = vshrl.u32 %v2062, 7
      %v2064 = vsub.s32 2, %v2063
      %v2065 = vrot.slane %v1715, %v2064
      %v2082 = vunpack.c.l.b16 %v1651
      %v2083 = vunpack.c.l.b16 %v1652
      %v2084 = vunpack.c.l.b16 %v1653
      %v2085 = vunpack.c.l.b16 %v1654
      %v2086 = vunpack.c.l.b16 %v1655
      %v2087 = vunpack.c.l.b16 %v1656
      %v2088 = vunpack.c.l.b16 %v1657
      %v2089 = vunpack.c.l.b16 %v1658
      %v2090 = vunpack.c.l.b16 %v1659
      %v2091 = vunpack.c.l.b16 %v1660
      %v2092 = vunpack.c.l.b16 %v1661
      %v2093 = vunpack.c.l.b16 %v1662
      %v2094 = vunpack.c.l.b16 %v1663
      %v2095 = vunpack.c.l.b16 %v1664
      %v2096 = vunpack.c.l.b16 %v1665
      %v2097 = vunpack.c.l.b16 %v1666
      %v2098 = vpack.c.b16 %v2083, %v2082
      %v2099 = vpack.c.b16 %v2085, %v2084
      %v2100 = vpack.c.b16 %v2087, %v2086
      %v2101 = vpack.c.b16 %v2089, %v2088
      %v2102 = vpack.c.b16 %v2091, %v2090
      %v2103 = vpack.c.b16 %v2093, %v2092
      %v2104 = vpack.c.b16 %v2095, %v2094
      %v2105 = vpack.c.b16 %v2097, %v2096
      %2114 = vmatprep.subr.bf16.mxu0 0
      %2115 = vmatpush1.bf16.msra.mxu0 %v2105
      %2116 = vmatprep.subr.bf16.mxu0 0
      %2117 = vmatpush1.bf16.msra.mxu0 %v2104
      %2118 = vmatprep.subr.bf16.mxu0 0
      %2119 = vmatpush1.bf16.msra.mxu0 %v2103
      %2120 = vmatprep.subr.bf16.mxu0 0
      %2121 = vmatpush1.bf16.msra.mxu0 %v2102
      %2122 = vmatprep.subr.bf16.mxu0 0
      %2123 = vmatpush1.bf16.msra.mxu0 %v2101
      %2124 = vmatprep.subr.bf16.mxu0 0
      %2125 = vmatpush1.bf16.msra.mxu0 %v2100
      %2126 = vmatprep.subr.bf16.mxu0 0
      %2127 = vmatpush1.bf16.msra.mxu0 %v2099
      %2128 = vmatprep.subr.bf16.mxu0 0
      %2129 = vmatpush1.bf16.msra.mxu0 %v2098
      %2130 = vmatprep.subr.bf16.mxu0 0
      %2131 = vmatpush2.bf16.msra.mxu0 0
      %2132 = vmatprep.subr.bf16.mxu0 0
      %2133 = vmatpush2.bf16.msra.mxu0 0
      %2134 = vmatprep.subr.bf16.mxu0 0
      %2135 = vmatpush2.bf16.msra.mxu0 0
      %2136 = vmatprep.subr.bf16.mxu0 0
      %2137 = vmatpush2.bf16.msra.mxu0 0
      %2138 = vmatprep.subr.bf16.mxu0 0
      %2139 = vmatpush2.bf16.msra.mxu0 0
      %2140 = vmatprep.subr.bf16.mxu0 0
      %2141 = vmatpush2.bf16.msra.mxu0 0
      %2142 = vmatprep.subr.bf16.mxu0 0
      %2143 = vmatpush2.bf16.msra.mxu0 0
      %2144 = vmatprep.subr.bf16.mxu0 0
      %2145 = vmatpush2.bf16.msra.mxu0 0
      %2146 = vmatprep.mubr.bf16.mxu0 0
      %2147 = vmatmul.mubr.bf16.gmra.mxu0 %v2054
      %v2148 = vpop.f32.mrf.mxu0
      %v2149 = vadd.f32 %v2065, %v2148
      %v2150 = vpop.f32.mrf.mxu0
      %v2151 = vpop.f32.mrf.mxu0
      %v2152 = vadd.f32 %v2065, %v2151
      %v2153 = vpop.f32.mrf.mxu0
      %2154 = vmatprep.mubr.bf16.mxu0 0
      %2155 = vmatmul.mubr.bf16.gmra.mxu0 %v2055
      %v2156 = vpop.f32.mrf.mxu0
      %v2157 = vadd.f32 %v2065, %v2156
      %v2158 = vpop.f32.mrf.mxu0
      %v2159 = vpop.f32.mrf.mxu0
      %v2160 = vadd.f32 %v2065, %v2159
      %v2161 = vpop.f32.mrf.mxu0
      %2162 = vmatprep.mubr.bf16.mxu0 0
      %2163 = vmatmul.mubr.bf16.gmra.mxu0 %v2056
      %v2164 = vpop.f32.mrf.mxu0
      %v2165 = vadd.f32 %v2065, %v2164
      %v2166 = vpop.f32.mrf.mxu0
      %v2167 = vpop.f32.mrf.mxu0
      %v2168 = vadd.f32 %v2065, %v2167
      %v2169 = vpop.f32.mrf.mxu0
      %2170 = vmatprep.mubr.bf16.mxu0 0
      %2171 = vmatmul.mubr.bf16.gmra.mxu0 %v2057
      %v2172 = vpop.f32.mrf.mxu0
      %v2173 = vadd.f32 %v2065, %v2172
      %v2174 = vpop.f32.mrf.mxu0
      %v2175 = vpop.f32.mrf.mxu0
      %v2176 = vadd.f32 %v2065, %v2175
      %v2177 = vpop.f32.mrf.mxu0
      %2178 = vmatprep.mubr.bf16.mxu0 0
      %2179 = vmatmul.mubr.bf16.gmra.mxu0 %v2058
      %v2180 = vpop.f32.mrf.mxu0
      %v2181 = vadd.f32 %v2065, %v2180
      %v2182 = vpop.f32.mrf.mxu0
      %v2183 = vpop.f32.mrf.mxu0
      %v2184 = vadd.f32 %v2065, %v2183
      %v2185 = vpop.f32.mrf.mxu0
      %2186 = vmatprep.mubr.bf16.mxu0 0
      %2187 = vmatmul.mubr.bf16.gmra.mxu0 %v2059
      %v2188 = vpop.f32.mrf.mxu0
      %v2189 = vadd.f32 %v2065, %v2188
      %v2190 = vpop.f32.mrf.mxu0
      %v2191 = vpop.f32.mrf.mxu0
      %v2192 = vadd.f32 %v2065, %v2191
      %v2193 = vpop.f32.mrf.mxu0
      %2194 = vmatprep.mubr.bf16.mxu0 0
      %2195 = vmatmul.mubr.bf16.gmra.mxu0 %v2060
      %v2196 = vpop.f32.mrf.mxu0
      %v2197 = vadd.f32 %v2065, %v2196
      %v2198 = vpop.f32.mrf.mxu0
      %v2199 = vpop.f32.mrf.mxu0
      %v2200 = vadd.f32 %v2065, %v2199
      %v2201 = vpop.f32.mrf.mxu0
      %2202 = vmatprep.mubr.bf16.mxu0 0
      %2203 = vmatmul.mubr.bf16.gmra.mxu0 %v2061
      %v2204 = vpop.f32.mrf.mxu0
      %v2205 = vadd.f32 %v2065, %v2204
      %v2206 = vpop.f32.mrf.mxu0
      %v2207 = vpop.f32.mrf.mxu0
      %v2208 = vadd.f32 %v2065, %v2207
      %v2209 = vpop.f32.mrf.mxu0
      %2210 = vdwg.mxu0
      %v2211 = vmax.f32 %v2149, 0.0
      %v2212 = vmax.f32 %v2152, 0.0
      %v2213 = vmax.f32 %v2157, 0.0
      %v2214 = vmax.f32 %v2160, 0.0
      %v2215 = vmax.f32 %v2165, 0.0
      %v2216 = vmax.f32 %v2168, 0.0
      %v2217 = vmax.f32 %v2173, 0.0
      %v2218 = vmax.f32 %v2176, 0.0
      %v2219 = vmax.f32 %v2181, 0.0
      %v2220 = vmax.f32 %v2184, 0.0
      %v2221 = vmax.f32 %v2189, 0.0
      %v2222 = vmax.f32 %v2192, 0.0
      %v2223 = vmax.f32 %v2197, 0.0
      %v2224 = vmax.f32 %v2200, 0.0
      %v2225 = vmax.f32 %v2205, 0.0
      %v2226 = vmax.f32 %v2208, 0.0
      %v2227 = vpack.c.bf16 %v2212, %v2211
      %v2228 = vpack.c.bf16 %v2214, %v2213
      %v2229 = vpack.c.bf16 %v2216, %v2215
      %v2230 = vpack.c.bf16 %v2218, %v2217
      %v2231 = vpack.c.bf16 %v2220, %v2219
      %v2232 = vpack.c.bf16 %v2222, %v2221
      %v2233 = vpack.c.bf16 %v2224, %v2223
      %v2234 = vpack.c.bf16 %v2226, %v2225
      %v2235 = vlaneseq
      %v2236 = vshrl.u32 %v2235, 7
      %v2237 = vsub.s32 3, %v2236
      %v2238 = vrot.slane %v1715, %v2237
      %v2255 = vunpack.c.l.b16 %v1667
      %v2256 = vunpack.c.l.b16 %v1668
      %v2257 = vunpack.c.l.b16 %v1669
      %v2258 = vunpack.c.l.b16 %v1670
      %v2259 = vunpack.c.l.b16 %v1671
      %v2260 = vunpack.c.l.b16 %v1672
      %v2261 = vunpack.c.l.b16 %v1673
      %v2262 = vunpack.c.l.b16 %v1674
      %v2263 = vunpack.c.l.b16 %v1675
      %v2264 = vunpack.c.l.b16 %v1676
      %v2265 = vunpack.c.l.b16 %v1677
      %v2266 = vunpack.c.l.b16 %v1678
      %v2267 = vunpack.c.l.b16 %v1679
      %v2268 = vunpack.c.l.b16 %v1680
      %v2269 = vunpack.c.l.b16 %v1681
      %v2270 = vunpack.c.l.b16 %v1682
      %v2271 = vpack.c.b16 %v2256, %v2255
      %v2272 = vpack.c.b16 %v2258, %v2257
      %v2273 = vpack.c.b16 %v2260, %v2259
      %v2274 = vpack.c.b16 %v2262, %v2261
      %v2275 = vpack.c.b16 %v2264, %v2263
      %v2276 = vpack.c.b16 %v2266, %v2265
      %v2277 = vpack.c.b16 %v2268, %v2267
      %v2278 = vpack.c.b16 %v2270, %v2269
      %2287 = vmatprep.subr.bf16.mxu0 0
      %2288 = vmatpush1.bf16.msra.mxu0 %v2278
      %2289 = vmatprep.subr.bf16.mxu0 0
      %2290 = vmatpush1.bf16.msra.mxu0 %v2277
      %2291 = vmatprep.subr.bf16.mxu0 0
      %2292 = vmatpush1.bf16.msra.mxu0 %v2276
      %2293 = vmatprep.subr.bf16.mxu0 0
      %2294 = vmatpush1.bf16.msra.mxu0 %v2275
      %2295 = vmatprep.subr.bf16.mxu0 0
      %2296 = vmatpush1.bf16.msra.mxu0 %v2274
      %2297 = vmatprep.subr.bf16.mxu0 0
      %2298 = vmatpush1.bf16.msra.mxu0 %v2273
      %2299 = vmatprep.subr.bf16.mxu0 0
      %2300 = vmatpush1.bf16.msra.mxu0 %v2272
      %2301 = vmatprep.subr.bf16.mxu0 0
      %2302 = vmatpush1.bf16.msra.mxu0 %v2271
      %2303 = vmatprep.subr.bf16.mxu0 0
      %2304 = vmatpush2.bf16.msra.mxu0 0
      %2305 = vmatprep.subr.bf16.mxu0 0
      %2306 = vmatpush2.bf16.msra.mxu0 0
      %2307 = vmatprep.subr.bf16.mxu0 0
      %2308 = vmatpush2.bf16.msra.mxu0 0
      %2309 = vmatprep.subr.bf16.mxu0 0
      %2310 = vmatpush2.bf16.msra.mxu0 0
      %2311 = vmatprep.subr.bf16.mxu0 0
      %2312 = vmatpush2.bf16.msra.mxu0 0
      %2313 = vmatprep.subr.bf16.mxu0 0
      %2314 = vmatpush2.bf16.msra.mxu0 0
      %2315 = vmatprep.subr.bf16.mxu0 0
      %2316 = vmatpush2.bf16.msra.mxu0 0
      %2317 = vmatprep.subr.bf16.mxu0 0
      %2318 = vmatpush2.bf16.msra.mxu0 0
      %2319 = vmatprep.mubr.bf16.mxu0 0
      %2320 = vmatmul.mubr.bf16.gmra.mxu0 %v2227
      %v2321 = vpop.f32.mrf.mxu0
      %v2322 = vadd.f32 %v2238, %v2321
      %v2323 = vpop.f32.mrf.mxu0
      %v2324 = vpop.f32.mrf.mxu0
      %v2325 = vadd.f32 %v2238, %v2324
      %v2326 = vpop.f32.mrf.mxu0
      %2327 = vmatprep.mubr.bf16.mxu0 0
      %2328 = vmatmul.mubr.bf16.gmra.mxu0 %v2228
      %v2329 = vpop.f32.mrf.mxu0
      %v2330 = vadd.f32 %v2238, %v2329
      %v2331 = vpop.f32.mrf.mxu0
      %v2332 = vpop.f32.mrf.mxu0
      %v2333 = vadd.f32 %v2238, %v2332
      %v2334 = vpop.f32.mrf.mxu0
      %2335 = vmatprep.mubr.bf16.mxu0 0
      %2336 = vmatmul.mubr.bf16.gmra.mxu0 %v2229
      %v2337 = vpop.f32.mrf.mxu0
      %v2338 = vadd.f32 %v2238, %v2337
      %v2339 = vpop.f32.mrf.mxu0
      %v2340 = vpop.f32.mrf.mxu0
      %v2341 = vadd.f32 %v2238, %v2340
      %v2342 = vpop.f32.mrf.mxu0
      %2343 = vmatprep.mubr.bf16.mxu0 0
      %2344 = vmatmul.mubr.bf16.gmra.mxu0 %v2230
      %v2345 = vpop.f32.mrf.mxu0
      %v2346 = vadd.f32 %v2238, %v2345
      %v2347 = vpop.f32.mrf.mxu0
      %v2348 = vpop.f32.mrf.mxu0
      %v2349 = vadd.f32 %v2238, %v2348
      %v2350 = vpop.f32.mrf.mxu0
      %2351 = vmatprep.mubr.bf16.mxu0 0
      %2352 = vmatmul.mubr.bf16.gmra.mxu0 %v2231
      %v2353 = vpop.f32.mrf.mxu0
      %v2354 = vadd.f32 %v2238, %v2353
      %v2355 = vpop.f32.mrf.mxu0
      %v2356 = vpop.f32.mrf.mxu0
      %v2357 = vadd.f32 %v2238, %v2356
      %v2358 = vpop.f32.mrf.mxu0
      %2359 = vmatprep.mubr.bf16.mxu0 0
      %2360 = vmatmul.mubr.bf16.gmra.mxu0 %v2232
      %v2361 = vpop.f32.mrf.mxu0
      %v2362 = vadd.f32 %v2238, %v2361
      %v2363 = vpop.f32.mrf.mxu0
      %v2364 = vpop.f32.mrf.mxu0
      %v2365 = vadd.f32 %v2238, %v2364
      %v2366 = vpop.f32.mrf.mxu0
      %2367 = vmatprep.mubr.bf16.mxu0 0
      %2368 = vmatmul.mubr.bf16.gmra.mxu0 %v2233
      %v2369 = vpop.f32.mrf.mxu0
      %v2370 = vadd.f32 %v2238, %v2369
      %v2371 = vpop.f32.mrf.mxu0
      %v2372 = vpop.f32.mrf.mxu0
      %v2373 = vadd.f32 %v2238, %v2372
      %v2374 = vpop.f32.mrf.mxu0
      %2375 = vmatprep.mubr.bf16.mxu0 0
      %2376 = vmatmul.mubr.bf16.gmra.mxu0 %v2234
      %v2377 = vpop.f32.mrf.mxu0
      %v2378 = vadd.f32 %v2238, %v2377
      %v2379 = vpop.f32.mrf.mxu0
      %v2380 = vpop.f32.mrf.mxu0
      %v2381 = vadd.f32 %v2238, %v2380
      %v2382 = vpop.f32.mrf.mxu0
      %2383 = vdwg.mxu0
      %v2384 = vmax.f32 %v2322, 0.0
      %v2385 = vmax.f32 %v2325, 0.0
      %v2386 = vmax.f32 %v2330, 0.0
      %v2387 = vmax.f32 %v2333, 0.0
      %v2388 = vmax.f32 %v2338, 0.0
      %v2389 = vmax.f32 %v2341, 0.0
      %v2390 = vmax.f32 %v2346, 0.0
      %v2391 = vmax.f32 %v2349, 0.0
      %v2392 = vmax.f32 %v2354, 0.0
      %v2393 = vmax.f32 %v2357, 0.0
      %v2394 = vmax.f32 %v2362, 0.0
      %v2395 = vmax.f32 %v2365, 0.0
      %v2396 = vmax.f32 %v2370, 0.0
      %v2397 = vmax.f32 %v2373, 0.0
      %v2398 = vmax.f32 %v2378, 0.0
      %v2399 = vmax.f32 %v2381, 0.0
      %v2400 = vpack.c.bf16 %v2385, %v2384
      %v2401 = vpack.c.bf16 %v2387, %v2386
      %v2402 = vpack.c.bf16 %v2389, %v2388
      %v2403 = vpack.c.bf16 %v2391, %v2390
      %v2404 = vpack.c.bf16 %v2393, %v2392
      %v2405 = vpack.c.bf16 %v2395, %v2394
      %v2406 = vpack.c.bf16 %v2397, %v2396
      %v2407 = vpack.c.bf16 %v2399, %v2398
      %v2408 = vlaneseq
      %v2409 = vshrl.u32 %v2408, 7
      %v2410 = vsub.s32 4, %v2409
      %v2411 = vrot.slane %v1715, %v2410
      %v2428 = vunpack.c.l.b16 %v1683
      %v2429 = vunpack.c.l.b16 %v1684
      %v2430 = vunpack.c.l.b16 %v1685
      %v2431 = vunpack.c.l.b16 %v1686
      %v2432 = vunpack.c.l.b16 %v1687
      %v2433 = vunpack.c.l.b16 %v1688
      %v2434 = vunpack.c.l.b16 %v1689
      %v2435 = vunpack.c.l.b16 %v1690
      %v2436 = vunpack.c.l.b16 %v1691
      %v2437 = vunpack.c.l.b16 %v1692
      %v2438 = vunpack.c.l.b16 %v1693
      %v2439 = vunpack.c.l.b16 %v1694
      %v2440 = vunpack.c.l.b16 %v1695
      %v2441 = vunpack.c.l.b16 %v1696
      %v2442 = vunpack.c.l.b16 %v1697
      %v2443 = vunpack.c.l.b16 %v1698
      %v2444 = vpack.c.b16 %v2429, %v2428
      %v2445 = vpack.c.b16 %v2431, %v2430
      %v2446 = vpack.c.b16 %v2433, %v2432
      %v2447 = vpack.c.b16 %v2435, %v2434
      %v2448 = vpack.c.b16 %v2437, %v2436
      %v2449 = vpack.c.b16 %v2439, %v2438
      %v2450 = vpack.c.b16 %v2441, %v2440
      %v2451 = vpack.c.b16 %v2443, %v2442
      %2460 = vmatprep.subr.bf16.mxu0 0
      %2461 = vmatpush1.bf16.msra.mxu0 %v2451
      %2462 = vmatprep.subr.bf16.mxu0 0
      %2463 = vmatpush1.bf16.msra.mxu0 %v2450
      %2464 = vmatprep.subr.bf16.mxu0 0
      %2465 = vmatpush1.bf16.msra.mxu0 %v2449
      %2466 = vmatprep.subr.bf16.mxu0 0
      %2467 = vmatpush1.bf16.msra.mxu0 %v2448
      %2468 = vmatprep.subr.bf16.mxu0 0
      %2469 = vmatpush1.bf16.msra.mxu0 %v2447
      %2470 = vmatprep.subr.bf16.mxu0 0
      %2471 = vmatpush1.bf16.msra.mxu0 %v2446
      %2472 = vmatprep.subr.bf16.mxu0 0
      %2473 = vmatpush1.bf16.msra.mxu0 %v2445
      %2474 = vmatprep.subr.bf16.mxu0 0
      %2475 = vmatpush1.bf16.msra.mxu0 %v2444
      %2476 = vmatprep.subr.bf16.mxu0 0
      %2477 = vmatpush2.bf16.msra.mxu0 0
      %2478 = vmatprep.subr.bf16.mxu0 0
      %2479 = vmatpush2.bf16.msra.mxu0 0
      %2480 = vmatprep.subr.bf16.mxu0 0
      %2481 = vmatpush2.bf16.msra.mxu0 0
      %2482 = vmatprep.subr.bf16.mxu0 0
      %2483 = vmatpush2.bf16.msra.mxu0 0
      %2484 = vmatprep.subr.bf16.mxu0 0
      %2485 = vmatpush2.bf16.msra.mxu0 0
      %2486 = vmatprep.subr.bf16.mxu0 0
      %2487 = vmatpush2.bf16.msra.mxu0 0
      %2488 = vmatprep.subr.bf16.mxu0 0
      %2489 = vmatpush2.bf16.msra.mxu0 0
      %2490 = vmatprep.subr.bf16.mxu0 0
      %2491 = vmatpush2.bf16.msra.mxu0 0
      %2492 = vmatprep.mubr.bf16.mxu0 0
      %2493 = vmatmul.mubr.bf16.gmra.mxu0 %v2400
      %v2494 = vpop.f32.mrf.mxu0
      %v2495 = vadd.f32 %v2411, %v2494
      %v2496 = vpop.f32.mrf.mxu0
      %v2497 = vpop.f32.mrf.mxu0
      %v2498 = vadd.f32 %v2411, %v2497
      %v2499 = vpop.f32.mrf.mxu0
      %2500 = vmatprep.mubr.bf16.mxu0 0
      %2501 = vmatmul.mubr.bf16.gmra.mxu0 %v2401
      %v2502 = vpop.f32.mrf.mxu0
      %v2503 = vadd.f32 %v2411, %v2502
      %v2504 = vpop.f32.mrf.mxu0
      %v2505 = vpop.f32.mrf.mxu0
      %v2506 = vadd.f32 %v2411, %v2505
      %v2507 = vpop.f32.mrf.mxu0
      %2508 = vmatprep.mubr.bf16.mxu0 0
      %2509 = vmatmul.mubr.bf16.gmra.mxu0 %v2402
      %v2510 = vpop.f32.mrf.mxu0
      %v2511 = vadd.f32 %v2411, %v2510
      %v2512 = vpop.f32.mrf.mxu0
      %v2513 = vpop.f32.mrf.mxu0
      %v2514 = vadd.f32 %v2411, %v2513
      %v2515 = vpop.f32.mrf.mxu0
      %2516 = vmatprep.mubr.bf16.mxu0 0
      %2517 = vmatmul.mubr.bf16.gmra.mxu0 %v2403
      %v2518 = vpop.f32.mrf.mxu0
      %v2519 = vadd.f32 %v2411, %v2518
      %v2520 = vpop.f32.mrf.mxu0
      %v2521 = vpop.f32.mrf.mxu0
      %v2522 = vadd.f32 %v2411, %v2521
      %v2523 = vpop.f32.mrf.mxu0
      %2524 = vmatprep.mubr.bf16.mxu0 0
      %2525 = vmatmul.mubr.bf16.gmra.mxu0 %v2404
      %v2526 = vpop.f32.mrf.mxu0
      %v2527 = vadd.f32 %v2411, %v2526
      %v2528 = vpop.f32.mrf.mxu0
      %v2529 = vpop.f32.mrf.mxu0
      %v2530 = vadd.f32 %v2411, %v2529
      %v2531 = vpop.f32.mrf.mxu0
      %2532 = vmatprep.mubr.bf16.mxu0 0
      %2533 = vmatmul.mubr.bf16.gmra.mxu0 %v2405
      %v2534 = vpop.f32.mrf.mxu0
      %v2535 = vadd.f32 %v2411, %v2534
      %v2536 = vpop.f32.mrf.mxu0
      %v2537 = vpop.f32.mrf.mxu0
      %v2538 = vadd.f32 %v2411, %v2537
      %v2539 = vpop.f32.mrf.mxu0
      %2540 = vmatprep.mubr.bf16.mxu0 0
      %2541 = vmatmul.mubr.bf16.gmra.mxu0 %v2406
      %v2542 = vpop.f32.mrf.mxu0
      %v2543 = vadd.f32 %v2411, %v2542
      %v2544 = vpop.f32.mrf.mxu0
      %v2545 = vpop.f32.mrf.mxu0
      %v2546 = vadd.f32 %v2411, %v2545
      %v2547 = vpop.f32.mrf.mxu0
      %2548 = vmatprep.mubr.bf16.mxu0 0
      %2549 = vmatmul.mubr.bf16.gmra.mxu0 %v2407
      %v2550 = vpop.f32.mrf.mxu0
      %v2551 = vadd.f32 %v2411, %v2550
      %v2552 = vpop.f32.mrf.mxu0
      %v2553 = vpop.f32.mrf.mxu0
      %v2554 = vadd.f32 %v2411, %v2553
      %v2555 = vpop.f32.mrf.mxu0
      %2556 = vdwg.mxu0
      %v2557 = vmax.f32 %v2495, 0.0
      %v2558 = vmax.f32 %v2498, 0.0
      %v2559 = vmax.f32 %v2503, 0.0
      %v2560 = vmax.f32 %v2506, 0.0
      %v2561 = vmax.f32 %v2511, 0.0
      %v2562 = vmax.f32 %v2514, 0.0
      %v2563 = vmax.f32 %v2519, 0.0
      %v2564 = vmax.f32 %v2522, 0.0
      %v2565 = vmax.f32 %v2527, 0.0
      %v2566 = vmax.f32 %v2530, 0.0
      %v2567 = vmax.f32 %v2535, 0.0
      %v2568 = vmax.f32 %v2538, 0.0
      %v2569 = vmax.f32 %v2543, 0.0
      %v2570 = vmax.f32 %v2546, 0.0
      %v2571 = vmax.f32 %v2551, 0.0
      %v2572 = vmax.f32 %v2554, 0.0
      %v2573 = vpack.c.bf16 %v2558, %v2557
      %v2574 = vpack.c.bf16 %v2560, %v2559
      %v2575 = vpack.c.bf16 %v2562, %v2561
      %v2576 = vpack.c.bf16 %v2564, %v2563
      %v2577 = vpack.c.bf16 %v2566, %v2565
      %v2578 = vpack.c.bf16 %v2568, %v2567
      %v2579 = vpack.c.bf16 %v2570, %v2569
      %v2580 = vpack.c.bf16 %v2572, %v2571
      %v2581 = vlaneseq
      %v2582 = vshrl.u32 %v2581, 7
      %v2583 = vsub.s32 5, %v2582
      %v2584 = vrot.slane %v1715, %v2583
      %v2601 = vunpack.c.l.b16 %v1699
      %v2602 = vunpack.c.l.b16 %v1700
      %v2603 = vunpack.c.l.b16 %v1701
      %v2604 = vunpack.c.l.b16 %v1702
      %v2605 = vunpack.c.l.b16 %v1703
      %v2606 = vunpack.c.l.b16 %v1704
      %v2607 = vunpack.c.l.b16 %v1705
      %v2608 = vunpack.c.l.b16 %v1706
      %v2609 = vunpack.c.l.b16 %v1707
      %v2610 = vunpack.c.l.b16 %v1708
      %v2611 = vunpack.c.l.b16 %v1709
      %v2612 = vunpack.c.l.b16 %v1710
      %v2613 = vunpack.c.l.b16 %v1711
      %v2614 = vunpack.c.l.b16 %v1712
      %v2615 = vunpack.c.l.b16 %v1713
      %v2616 = vunpack.c.l.b16 %v1714
      %v2617 = vpack.c.b16 %v2602, %v2601
      %v2618 = vpack.c.b16 %v2604, %v2603
      %v2619 = vpack.c.b16 %v2606, %v2605
      %v2620 = vpack.c.b16 %v2608, %v2607
      %v2621 = vpack.c.b16 %v2610, %v2609
      %v2622 = vpack.c.b16 %v2612, %v2611
      %v2623 = vpack.c.b16 %v2614, %v2613
      %v2624 = vpack.c.b16 %v2616, %v2615
      %2633 = vmatprep.subr.bf16.mxu0 0
      %2634 = vmatpush1.bf16.msra.mxu0 %v2624
      %2635 = vmatprep.subr.bf16.mxu0 0
      %2636 = vmatpush1.bf16.msra.mxu0 %v2623
      %2637 = vmatprep.subr.bf16.mxu0 0
      %2638 = vmatpush1.bf16.msra.mxu0 %v2622
      %2639 = vmatprep.subr.bf16.mxu0 0
      %2640 = vmatpush1.bf16.msra.mxu0 %v2621
      %2641 = vmatprep.subr.bf16.mxu0 0
      %2642 = vmatpush1.bf16.msra.mxu0 %v2620
      %2643 = vmatprep.subr.bf16.mxu0 0
      %2644 = vmatpush1.bf16.msra.mxu0 %v2619
      %2645 = vmatprep.subr.bf16.mxu0 0
      %2646 = vmatpush1.bf16.msra.mxu0 %v2618
      %2647 = vmatprep.subr.bf16.mxu0 0
      %2648 = vmatpush1.bf16.msra.mxu0 %v2617
      %2649 = vmatprep.subr.bf16.mxu0 0
      %2650 = vmatpush2.bf16.msra.mxu0 0
      %2651 = vmatprep.subr.bf16.mxu0 0
      %2652 = vmatpush2.bf16.msra.mxu0 0
      %2653 = vmatprep.subr.bf16.mxu0 0
      %2654 = vmatpush2.bf16.msra.mxu0 0
      %2655 = vmatprep.subr.bf16.mxu0 0
      %2656 = vmatpush2.bf16.msra.mxu0 0
      %2657 = vmatprep.subr.bf16.mxu0 0
      %2658 = vmatpush2.bf16.msra.mxu0 0
      %2659 = vmatprep.subr.bf16.mxu0 0
      %2660 = vmatpush2.bf16.msra.mxu0 0
      %2661 = vmatprep.subr.bf16.mxu0 0
      %2662 = vmatpush2.bf16.msra.mxu0 0
      %2663 = vmatprep.subr.bf16.mxu0 0
      %2664 = vmatpush2.bf16.msra.mxu0 0
      %2665 = vmatprep.mubr.bf16.mxu0 0
      %2666 = vmatmul.mubr.bf16.gmra.mxu0 %v2573
      %v2667 = vpop.f32.mrf.mxu0
      %v2668 = vadd.f32 %v2584, %v2667
      %v2669 = vpop.f32.mrf.mxu0
      %v2670 = vpop.f32.mrf.mxu0
      %v2671 = vadd.f32 %v2584, %v2670
      %v2672 = vpop.f32.mrf.mxu0
      %2673 = vmatprep.mubr.bf16.mxu0 0
      %2674 = vmatmul.mubr.bf16.gmra.mxu0 %v2574
      %v2675 = vpop.f32.mrf.mxu0
      %v2676 = vadd.f32 %v2584, %v2675
      %v2677 = vpop.f32.mrf.mxu0
      %v2678 = vpop.f32.mrf.mxu0
      %v2679 = vadd.f32 %v2584, %v2678
      %v2680 = vpop.f32.mrf.mxu0
      %2681 = vmatprep.mubr.bf16.mxu0 0
      %2682 = vmatmul.mubr.bf16.gmra.mxu0 %v2575
      %v2683 = vpop.f32.mrf.mxu0
      %v2684 = vadd.f32 %v2584, %v2683
      %v2685 = vpop.f32.mrf.mxu0
      %v2686 = vpop.f32.mrf.mxu0
      %v2687 = vadd.f32 %v2584, %v2686
      %v2688 = vpop.f32.mrf.mxu0
      %2689 = vmatprep.mubr.bf16.mxu0 0
      %2690 = vmatmul.mubr.bf16.gmra.mxu0 %v2576
      %v2691 = vpop.f32.mrf.mxu0
      %v2692 = vadd.f32 %v2584, %v2691
      %v2693 = vpop.f32.mrf.mxu0
      %v2694 = vpop.f32.mrf.mxu0
      %v2695 = vadd.f32 %v2584, %v2694
      %v2696 = vpop.f32.mrf.mxu0
      %2697 = vmatprep.mubr.bf16.mxu0 0
      %2698 = vmatmul.mubr.bf16.gmra.mxu0 %v2577
      %v2699 = vpop.f32.mrf.mxu0
      %v2700 = vadd.f32 %v2584, %v2699
      %v2701 = vpop.f32.mrf.mxu0
      %v2702 = vpop.f32.mrf.mxu0
      %v2703 = vadd.f32 %v2584, %v2702
      %v2704 = vpop.f32.mrf.mxu0
      %2705 = vmatprep.mubr.bf16.mxu0 0
      %2706 = vmatmul.mubr.bf16.gmra.mxu0 %v2578
      %v2707 = vpop.f32.mrf.mxu0
      %v2708 = vadd.f32 %v2584, %v2707
      %v2709 = vpop.f32.mrf.mxu0
      %v2710 = vpop.f32.mrf.mxu0
      %v2711 = vadd.f32 %v2584, %v2710
      %v2712 = vpop.f32.mrf.mxu0
      %2713 = vmatprep.mubr.bf16.mxu0 0
      %2714 = vmatmul.mubr.bf16.gmra.mxu0 %v2579
      %v2715 = vpop.f32.mrf.mxu0
      %v2716 = vadd.f32 %v2584, %v2715
      %v2717 = vpop.f32.mrf.mxu0
      %v2718 = vpop.f32.mrf.mxu0
      %v2719 = vadd.f32 %v2584, %v2718
      %v2720 = vpop.f32.mrf.mxu0
      %2721 = vmatprep.mubr.bf16.mxu0 0
      %2722 = vmatmul.mubr.bf16.gmra.mxu0 %v2580
      %v2723 = vpop.f32.mrf.mxu0
      %v2724 = vadd.f32 %v2584, %v2723
      %v2725 = vpop.f32.mrf.mxu0
      %v2726 = vpop.f32.mrf.mxu0
      %v2727 = vadd.f32 %v2584, %v2726
      %v2728 = vpop.f32.mrf.mxu0
      %2729 = vdwg.mxu0
      %v2730 = vmax.f32 %v2668, 0.0
      %v2731 = vmax.f32 %v2671, 0.0
      %v2732 = vmax.f32 %v2676, 0.0
      %v2733 = vmax.f32 %v2679, 0.0
      %v2734 = vmax.f32 %v2684, 0.0
      %v2735 = vmax.f32 %v2687, 0.0
      %v2736 = vmax.f32 %v2692, 0.0
      %v2737 = vmax.f32 %v2695, 0.0
      %v2738 = vmax.f32 %v2700, 0.0
      %v2739 = vmax.f32 %v2703, 0.0
      %v2740 = vmax.f32 %v2708, 0.0
      %v2741 = vmax.f32 %v2711, 0.0
      %v2742 = vmax.f32 %v2716, 0.0
      %v2743 = vmax.f32 %v2719, 0.0
      %v2744 = vmax.f32 %v2724, 0.0
      %v2745 = vmax.f32 %v2727, 0.0
      %v2746 = vpack.c.bf16 %v2731, %v2730
      %v2747 = vpack.c.bf16 %v2733, %v2732
      %v2748 = vpack.c.bf16 %v2735, %v2734
      %v2749 = vpack.c.bf16 %v2737, %v2736
      %v2750 = vpack.c.bf16 %v2739, %v2738
      %v2751 = vpack.c.bf16 %v2741, %v2740
      %v2752 = vpack.c.bf16 %v2743, %v2742
      %v2753 = vpack.c.bf16 %v2745, %v2744
      %v2754 = vld [vmem:[%s7] sm:$0xf]
      %v2755 = vld [vmem:[%s7 + $0x4] sm:$0xf]
      %v2756 = vld [vmem:[%s7 + $0x8] sm:$0xf]
      %v2757 = vld [vmem:[%s7 + $0xc] sm:$0xf]
      %v2758 = vld [vmem:[%s7 + $0x10] sm:$0xf]
      %v2759 = vld [vmem:[%s7 + $0x14] sm:$0xf]
      %v2760 = vld [vmem:[%s7 + $0x18] sm:$0xf]
      %v2761 = vld [vmem:[%s7 + $0x1c] sm:$0xf]
      %v2762 = vld [vmem:[%s7 + $0x20] sm:$0xf]
      %v2763 = vld [vmem:[%s7 + $0x24] sm:$0xf]
      %v2764 = vld [vmem:[%s7 + $0x28] sm:$0xf]
      %v2765 = vld [vmem:[%s7 + $0x2c] sm:$0xf]
      %v2766 = vld [vmem:[%s7 + $0x30] sm:$0xf]
      %v2767 = vld [vmem:[%s7 + $0x34] sm:$0xf]
      %v2768 = vld [vmem:[%s7 + $0x38] sm:$0xf]
      %v2769 = vld [vmem:[%s7 + $0x3c] sm:$0xf]
      %v2786 = vunpack.c.l.b16 %v2754
      %v2787 = vunpack.c.l.b16 %v2755
      %v2788 = vunpack.c.l.b16 %v2756
      %v2789 = vunpack.c.l.b16 %v2757
      %v2790 = vunpack.c.l.b16 %v2758
      %v2791 = vunpack.c.l.b16 %v2759
      %v2792 = vunpack.c.l.b16 %v2760
      %v2793 = vunpack.c.l.b16 %v2761
      %v2794 = vunpack.c.l.b16 %v2762
      %v2795 = vunpack.c.l.b16 %v2763
      %v2796 = vunpack.c.l.b16 %v2764
      %v2797 = vunpack.c.l.b16 %v2765
      %v2798 = vunpack.c.l.b16 %v2766
      %v2799 = vunpack.c.l.b16 %v2767
      %v2800 = vunpack.c.l.b16 %v2768
      %v2801 = vunpack.c.l.b16 %v2769
      %v2802 = vpack.c.b16 %v2787, %v2786
      %v2803 = vpack.c.b16 %v2789, %v2788
      %v2804 = vpack.c.b16 %v2791, %v2790
      %v2805 = vpack.c.b16 %v2793, %v2792
      %v2806 = vpack.c.b16 %v2795, %v2794
      %v2807 = vpack.c.b16 %v2797, %v2796
      %v2808 = vpack.c.b16 %v2799, %v2798
      %v2809 = vpack.c.b16 %v2801, %v2800
      %2818 = vmatprep.subr.bf16.mxu0 0
      %2819 = vmatpush1.bf16.msra.mxu0 %v2809
      %2820 = vmatprep.subr.bf16.mxu0 0
      %2821 = vmatpush1.bf16.msra.mxu0 %v2808
      %2822 = vmatprep.subr.bf16.mxu0 0
      %2823 = vmatpush1.bf16.msra.mxu0 %v2807
      %2824 = vmatprep.subr.bf16.mxu0 0
      %2825 = vmatpush1.bf16.msra.mxu0 %v2806
      %2826 = vmatprep.subr.bf16.mxu0 0
      %2827 = vmatpush1.bf16.msra.mxu0 %v2805
      %2828 = vmatprep.subr.bf16.mxu0 0
      %2829 = vmatpush1.bf16.msra.mxu0 %v2804
      %2830 = vmatprep.subr.bf16.mxu0 0
      %2831 = vmatpush1.bf16.msra.mxu0 %v2803
      %2832 = vmatprep.subr.bf16.mxu0 0
      %2833 = vmatpush1.bf16.msra.mxu0 %v2802
      %2834 = vmatprep.subr.bf16.mxu0 0
      %2835 = vmatpush2.bf16.msra.mxu0 0
      %2836 = vmatprep.subr.bf16.mxu0 0
      %2837 = vmatpush2.bf16.msra.mxu0 0
      %2838 = vmatprep.subr.bf16.mxu0 0
      %2839 = vmatpush2.bf16.msra.mxu0 0
      %2840 = vmatprep.subr.bf16.mxu0 0
      %2841 = vmatpush2.bf16.msra.mxu0 0
      %2842 = vmatprep.subr.bf16.mxu0 0
      %2843 = vmatpush2.bf16.msra.mxu0 0
      %2844 = vmatprep.subr.bf16.mxu0 0
      %2845 = vmatpush2.bf16.msra.mxu0 0
      %2846 = vmatprep.subr.bf16.mxu0 0
      %2847 = vmatpush2.bf16.msra.mxu0 0
      %2848 = vmatprep.subr.bf16.mxu0 0
      %2849 = vmatpush2.bf16.msra.mxu0 0
      %2850 = vmatprep.mubr.bf16.mxu0 0
      %2851 = vmatmul.mubr.bf16.gmra.mxu0 %v2746
      %v2852 = vpop.f32.mrf.mxu0
      %v2853 = vadd.f32 0.0, %v2852
      %v2854 = vpop.f32.mrf.mxu0
      %v2855 = vpop.f32.mrf.mxu0
      %v2856 = vadd.f32 0.0, %v2855
      %v2857 = vpop.f32.mrf.mxu0
      %2858 = vmatprep.mubr.bf16.mxu0 0
      %2859 = vmatmul.mubr.bf16.gmra.mxu0 %v2747
      %v2860 = vpop.f32.mrf.mxu0
      %v2861 = vadd.f32 0.0, %v2860
      %v2862 = vpop.f32.mrf.mxu0
      %v2863 = vpop.f32.mrf.mxu0
      %v2864 = vadd.f32 0.0, %v2863
      %v2865 = vpop.f32.mrf.mxu0
      %2866 = vmatprep.mubr.bf16.mxu0 0
      %2867 = vmatmul.mubr.bf16.gmra.mxu0 %v2748
      %v2868 = vpop.f32.mrf.mxu0
      %v2869 = vadd.f32 0.0, %v2868
      %v2870 = vpop.f32.mrf.mxu0
      %v2871 = vpop.f32.mrf.mxu0
      %v2872 = vadd.f32 0.0, %v2871
      %v2873 = vpop.f32.mrf.mxu0
      %2874 = vmatprep.mubr.bf16.mxu0 0
      %2875 = vmatmul.mubr.bf16.gmra.mxu0 %v2749
      %v2876 = vpop.f32.mrf.mxu0
      %v2877 = vadd.f32 0.0, %v2876
      %v2878 = vpop.f32.mrf.mxu0
      %v2879 = vpop.f32.mrf.mxu0
      %v2880 = vadd.f32 0.0, %v2879
      %v2881 = vpop.f32.mrf.mxu0
      %2882 = vmatprep.mubr.bf16.mxu0 0
      %2883 = vmatmul.mubr.bf16.gmra.mxu0 %v2750
      %v2884 = vpop.f32.mrf.mxu0
      %v2885 = vadd.f32 0.0, %v2884
      %v2886 = vpop.f32.mrf.mxu0
      %v2887 = vpop.f32.mrf.mxu0
      %v2888 = vadd.f32 0.0, %v2887
      %v2889 = vpop.f32.mrf.mxu0
      %2890 = vmatprep.mubr.bf16.mxu0 0
      %2891 = vmatmul.mubr.bf16.gmra.mxu0 %v2751
      %v2892 = vpop.f32.mrf.mxu0
      %v2893 = vadd.f32 0.0, %v2892
      %v2894 = vpop.f32.mrf.mxu0
      %v2895 = vpop.f32.mrf.mxu0
      %v2896 = vadd.f32 0.0, %v2895
      %v2897 = vpop.f32.mrf.mxu0
      %2898 = vmatprep.mubr.bf16.mxu0 0
      %2899 = vmatmul.mubr.bf16.gmra.mxu0 %v2752
      %v2900 = vpop.f32.mrf.mxu0
      %v2901 = vadd.f32 0.0, %v2900
      %v2902 = vpop.f32.mrf.mxu0
      %v2903 = vpop.f32.mrf.mxu0
      %v2904 = vadd.f32 0.0, %v2903
      %v2905 = vpop.f32.mrf.mxu0
      %2906 = vmatprep.mubr.bf16.mxu0 0
      %2907 = vmatmul.mubr.bf16.gmra.mxu0 %v2753
      %v2908 = vpop.f32.mrf.mxu0
      %v2909 = vadd.f32 0.0, %v2908
      %v2910 = vpop.f32.mrf.mxu0
      %v2911 = vpop.f32.mrf.mxu0
      %v2912 = vadd.f32 0.0, %v2911
      %v2913 = vpop.f32.mrf.mxu0
      %2914 = vdwg.mxu0
      %v2915 = vpack.c.bf16 %v2856, %v2853
      %v2916 = vpack.c.bf16 %v2864, %v2861
      %v2917 = vpack.c.bf16 %v2872, %v2869
      %v2918 = vpack.c.bf16 %v2880, %v2877
      %v2919 = vpack.c.bf16 %v2888, %v2885
      %v2920 = vpack.c.bf16 %v2896, %v2893
      %v2921 = vpack.c.bf16 %v2904, %v2901
      %v2922 = vpack.c.bf16 %v2912, %v2909
      %v2931 = vunpack.c.l.b16 %v2915
      %v2932 = vunpack.c.h.b16 %v2915
      %v2933 = vunpack.c.l.b16 %v2916
      %v2934 = vunpack.c.h.b16 %v2916
      %v2935 = vunpack.c.l.b16 %v2917
      %v2936 = vunpack.c.h.b16 %v2917
      %v2937 = vunpack.c.l.b16 %v2918
      %v2938 = vunpack.c.h.b16 %v2918
      %v2939 = vunpack.c.l.b16 %v2919
      %v2940 = vunpack.c.h.b16 %v2919
      %v2941 = vunpack.c.l.b16 %v2920
      %v2942 = vunpack.c.h.b16 %v2920
      %v2943 = vunpack.c.l.b16 %v2921
      %v2944 = vunpack.c.h.b16 %v2921
      %v2945 = vunpack.c.l.b16 %v2922
      %v2946 = vunpack.c.h.b16 %v2922
      %v2947 = vpack.c.b16 %v2931, %v2931
      %v2948 = vpack.c.b16 %v2932, %v2932
      %v2949 = vpack.c.b16 %v2933, %v2933
      %v2950 = vpack.c.b16 %v2934, %v2934
      %v2951 = vpack.c.b16 %v2935, %v2935
      %v2952 = vpack.c.b16 %v2936, %v2936
      %v2953 = vpack.c.b16 %v2937, %v2937
      %v2954 = vpack.c.b16 %v2938, %v2938
      %v2955 = vpack.c.b16 %v2939, %v2939
      %v2956 = vpack.c.b16 %v2940, %v2940
      %v2957 = vpack.c.b16 %v2941, %v2941
      %v2958 = vpack.c.b16 %v2942, %v2942
      %v2959 = vpack.c.b16 %v2943, %v2943
      %v2960 = vpack.c.b16 %v2944, %v2944
      %v2961 = vpack.c.b16 %v2945, %v2945
      %v2962 = vpack.c.b16 %v2946, %v2946
      %2979 = vst [vmem:[%s348] sm:$0xf] %v2947
      %2980 = vst [vmem:[%s348 + $0x4] sm:$0xf] %v2948
      %2981 = vst [vmem:[%s348 + $0x8] sm:$0xf] %v2949
      %2982 = vst [vmem:[%s348 + $0xc] sm:$0xf] %v2950
      %2983 = vst [vmem:[%s348 + $0x10] sm:$0xf] %v2951
      %2984 = vst [vmem:[%s348 + $0x14] sm:$0xf] %v2952
      %2985 = vst [vmem:[%s348 + $0x18] sm:$0xf] %v2953
      %2986 = vst [vmem:[%s348 + $0x1c] sm:$0xf] %v2954
      %2987 = vst [vmem:[%s348 + $0x20] sm:$0xf] %v2955
      %2988 = vst [vmem:[%s348 + $0x24] sm:$0xf] %v2956
      %2989 = vst [vmem:[%s348 + $0x28] sm:$0xf] %v2957
      %2990 = vst [vmem:[%s348 + $0x2c] sm:$0xf] %v2958
      %2991 = vst [vmem:[%s348 + $0x30] sm:$0xf] %v2959
      %2992 = vst [vmem:[%s348 + $0x34] sm:$0xf] %v2960
      %2993 = vst [vmem:[%s348 + $0x38] sm:$0xf] %v2961
      %2994 = vst [vmem:[%s348 + $0x3c] sm:$0xf] %v2962
      %s2995 = smul.u32 16, %s21
      %p2996 = scmp.lt.s32.totalorder %s2995, 31
      %s2997 = scalar_select %p2996, %s2995, 31
      %s2998 = smul.addr %s2997, 4
      %s2999 = scalar_lea.vmem %s8, %s2998
      %s3000 = smul.u32 16, %s21
      %p3001 = scmp.lt.s32.totalorder %s3000, 31
      %s3002 = scalar_select %p3001, %s3000, 31
      %s3003 = smul.addr %s3002, 4
      %s3004 = scalar_lea.vmem %s9, %s3003
      // Predicated region
      $region53: #{densenet6_forward.7} parent=51 // pred_check
        %p3005 = pneg %p212
      $region54: #{densenet6_forward.7} parent=51 // pred_check_branch
        %3007 = sbr.rel (%p3005) target = $region56
      $region55: #{densenet6_forward.7} parent=51 // pred_region
        %s3008 = smul.u32 16, %s21
      $region56: #{densenet6_forward.7} parent=51 // pred_fallthru
        _
      // Predicated region
      $region57: #{densenet6_forward.7} parent=51 // pred_check
        %p3009 = pneg %p238
      $region58: #{densenet6_forward.7} parent=51 // pred_check_branch
        %3011 = sbr.rel (%p3009) target = $region60
      $region59: #{densenet6_forward.7} parent=51 // pred_region
        %s3012 = smul.u32 16, %s21
      $region60: #{densenet6_forward.7} parent=51 // pred_fallthru
        _
    $region52: #{densenet6_forward.7} parent=5 // pred_fallthru
      _
    %p3013 = scmp.le.s32.totalorder 2, %s16
    // Predicated region
    $region61: #{densenet6_forward.7} parent=5 // pred_check
      %p3014 = pneg %p3013
    $region62: #{densenet6_forward.7} parent=5 // pred_check_branch
      %3016 = sbr.rel (%p3014) target = $region64
    $region63: #{densenet6_forward.7} parent=5 // pred_region
      %s3017 = ssub.s32 %s16, 2
      // Predicated region
      $region65: #{densenet6_forward.7} parent=63 // pred_check
        %p3018 = pneg %p218
      $region66: #{densenet6_forward.7} parent=63 // pred_check_branch
        %3020 = sbr.rel (%p3018) target = $region68
      $region67: #{densenet6_forward.7} parent=63 // pred_region
        %s3021 = smul.u32 16, %s22
        %p3022 = scmp.lt.s32.totalorder %s3021, 31
        %s3023 = scalar_select %p3022, %s3021, 31
        %s3024 = smul.addr %s3023, 4
        %s3025 = scalar_lea.vmem %s8, %s3024
      $region68: #{densenet6_forward.7} parent=63 // pred_fallthru
        _
      // Predicated region
      $region69: #{densenet6_forward.7} parent=63 // pred_check
        %p3026 = pneg %p244
      $region70: #{densenet6_forward.7} parent=63 // pred_check_branch
        %3028 = sbr.rel (%p3026) target = $region72
      $region71: #{densenet6_forward.7} parent=63 // pred_region
        %s3029 = smul.u32 16, %s22
        %p3030 = scmp.lt.s32.totalorder %s3029, 31
        %s3031 = scalar_select %p3030, %s3029, 31
        %s3032 = smul.addr %s3031, 4
        %s3033 = scalar_lea.vmem %s9, %s3032
      $region72: #{densenet6_forward.7} parent=63 // pred_fallthru
        _
    $region64: #{densenet6_forward.7} parent=5 // pred_fallthru
      _
  $region6: #{densenet6_forward.7} parent=0 // loop_footer
    %s20 = sadd.s32 1, %s16
  $region7: #{densenet6_forward.7} parent=0 // loop_footer_branch
    %15 = sbr.rel target = $region3
  $region8: #{densenet6_forward.7} parent=0 // loop_exit
    _

// kernel: densenet6_forward.9
$region0: #{densenet6_forward.9}
  #allocation0 [shape = 'u32[]', space=smem, size = 0x4, offset = 0x4, fixed_abs, tag = 'smem constant byte address 0x4 - core index']
  #allocation1 [shape = 'u32[144,128]{1,0:T(1,128)}', space=vmem, size = 0x12000, scoped, tag = 'internal scratch']
  %s0 = inlined_call_operand.vmem [shape: bf16[256,256], index: 0, kind: input, shape index: {}]
  %s1 = inlined_call_operand.vmem [shape: bf16[256,128], index: 1, kind: input, shape index: {}]
  %s2 = inlined_call_operand.vmem [shape: bf16[256,128], index: 2, kind: input, shape index: {}, may-alias: {2,3}]
  %s3 = inlined_call_operand.vmem [shape: bf16[256,128], index: 3, kind: input, shape index: {}, may-alias: {2,3}]
  %s4 = inlined_call_operand.vmem [shape: f32[256,128], index: 4, kind: output, shape index: {0}]
  %s5 = inlined_call_operand.hbm [shape: f32[256,256], index: 5, kind: output, shape index: {1}]
  %6 = xla_tuple %s4, %s5
  %s7 = sld [smem:[#allocation0]]
  $region57: #{densenet6_forward.9} parent=0
    _
  %s9 = ssub.s32 1, %s7
  %s10 = scalar_select 0, %s9, %s7
  $region1: #{densenet6_forward.9} parent=0
    #allocation2 [shape = 'u8[262144]{0}', space=vmem, size = 0x40000, scoped, tag = 'output window, operand 1']
    #allocation3 [shape = 's32[2]{0}', space=sflag, size = 0x8, scoped, tag = 'scoped memory for densenet6_forward.9']
    %11 = vsyncpa [#allocation3], 0
    %s12 = scalar_lea.sflag [#allocation3], 1
    %13 = vsyncpa %s12, 0
    loop: start=0, step=1, limit=4
    $region2: #{densenet6_forward.9} parent=1 // loop_pre_header
      _
    $region3: #{densenet6_forward.9} parent=1 // loop_header
      %s15 = sphi 0, %s19
      %p16 = scmp.ge.s32.totalorder %s15, 4
      %s25 = sphi 0, %s27
      %s28 = sphi 0, %s25
      %s29 = sphi 0, %s28
      %s45 = sphi 0, %s29
      %s49 = sphi 0, %s49
      %s51 = sphi 0, %s49
      %s52 = sphi 0, %s51
      %s66 = sphi 0, %s52
      %s72 = sphi 0, %s74
      %s75 = sphi 0, %s72
      %s76 = sphi 0, %s75
      %s92 = sphi 0, %s76
      %s96 = sphi 0, %s96
      %s98 = sphi 0, %s96
      %s99 = sphi 0, %s98
      %s113 = sphi 0, %s99
      %s119 = sphi 0, %s121
      %s122 = sphi 0, %s119
      %s123 = sphi 0, %s122
      %s139 = sphi 0, %s123
      %s145 = sphi 0, %s147
      %s148 = sphi 0, %s145
      %s149 = sphi 0, %s148
      %s165 = sphi 0, %s149
    $region4: #{densenet6_forward.9} parent=1 // loop_header_branch
      %18 = sbr.rel (%p16) target = $region8
    $region5: #{densenet6_forward.9} parent=1 // loop_body
      %s20 = ssub.s32 %s15, 1
      %s21 = ssub.s32 %s15, 2
      %s22 = sadd.s32 %s15, 1
      %s23 = ssub.s32 %s15, %s22
      %p24 = scmp.eq.s32.totalorder %s23, 0
      %s26 = sadd.s32 %s25, 1
      %s27 = scalar_select %p24, %s25, %s26
      %p30 = pneg %p24
      %p31 = scmp.eq.s32.totalorder %s15, 1
      %p32 = por %p30, %p31
      %p33 = scmp.ne.s32.totalorder %s25, %s28
      %p34 = scmp.eq.s32.totalorder %s15, 0
      %p35 = por %p33, %p34
      %p36 = scmp.ne.s32.totalorder %s25, %s28
      %p37 = scmp.eq.s32.totalorder %s20, 1
      %p38 = por %p36, %p37
      %p39 = scmp.ne.s32.totalorder %s28, %s29
      %p40 = scmp.eq.s32.totalorder %s20, 0
      %p41 = por %p39, %p40
      %p42 = scmp.ne.s32.totalorder %s28, %s29
      %p43 = scmp.eq.s32.totalorder %s21, 1
      %p44 = por %p42, %p43
      %p46 = scmp.ne.s32.totalorder %s29, %s45
      %p47 = scmp.eq.s32.totalorder %s21, 0
      %p48 = por %p46, %p47
      %s50 = sadd.s32 %s49, 1
      %p53 = scmp.eq.s32.totalorder %s15, 1
      %p54 = scmp.ne.s32.totalorder %s49, %s51
      %p55 = scmp.eq.s32.totalorder %s15, 0
      %p56 = por %p54, %p55
      %p57 = scmp.ne.s32.totalorder %s49, %s51
      %p58 = scmp.eq.s32.totalorder %s20, 1
      %p59 = por %p57, %p58
      %p60 = scmp.ne.s32.totalorder %s51, %s52
      %p61 = scmp.eq.s32.totalorder %s20, 0
      %p62 = por %p60, %p61
      %p63 = scmp.ne.s32.totalorder %s51, %s52
      %p64 = scmp.eq.s32.totalorder %s21, 1
      %p65 = por %p63, %p64
      %p67 = scmp.ne.s32.totalorder %s52, %s66
      %p68 = scmp.eq.s32.totalorder %s21, 0
      %p69 = por %p67, %p68
      %s70 = ssub.s32 %s15, %s22
      %p71 = scmp.eq.s32.totalorder %s70, 0
      %s73 = sadd.s32 %s72, 1
      %s74 = scalar_select %p71, %s72, %s73
      %p77 = pneg %p71
      %p78 = scmp.eq.s32.totalorder %s15, 1
      %p79 = por %p77, %p78
      %p80 = scmp.ne.s32.totalorder %s72, %s75
      %p81 = scmp.eq.s32.totalorder %s15, 0
      %p82 = por %p80, %p81
      %p83 = scmp.ne.s32.totalorder %s72, %s75
      %p84 = scmp.eq.s32.totalorder %s20, 1
      %p85 = por %p83, %p84
      %p86 = scmp.ne.s32.totalorder %s75, %s76
      %p87 = scmp.eq.s32.totalorder %s20, 0
      %p88 = por %p86, %p87
      %p89 = scmp.ne.s32.totalorder %s75, %s76
      %p90 = scmp.eq.s32.totalorder %s21, 1
      %p91 = por %p89, %p90
      %p93 = scmp.ne.s32.totalorder %s76, %s92
      %p94 = scmp.eq.s32.totalorder %s21, 0
      %p95 = por %p93, %p94
      %s97 = sadd.s32 %s96, 1
      %p100 = scmp.eq.s32.totalorder %s15, 1
      %p101 = scmp.ne.s32.totalorder %s96, %s98
      %p102 = scmp.eq.s32.totalorder %s15, 0
      %p103 = por %p101, %p102
      %p104 = scmp.ne.s32.totalorder %s96, %s98
      %p105 = scmp.eq.s32.totalorder %s20, 1
      %p106 = por %p104, %p105
      %p107 = scmp.ne.s32.totalorder %s98, %s99
      %p108 = scmp.eq.s32.totalorder %s20, 0
      %p109 = por %p107, %p108
      %p110 = scmp.ne.s32.totalorder %s98, %s99
      %p111 = scmp.eq.s32.totalorder %s21, 1
      %p112 = por %p110, %p111
      %p114 = scmp.ne.s32.totalorder %s99, %s113
      %p115 = scmp.eq.s32.totalorder %s21, 0
      %p116 = por %p114, %p115
      %s117 = ssub.s32 %s15, %s22
      %p118 = scmp.eq.s32.totalorder %s117, 0
      %s120 = sadd.s32 %s119, 1
      %s121 = scalar_select %p118, %s119, %s120
      %p124 = pneg %p118
      %p125 = scmp.eq.s32.totalorder %s15, 1
      %p126 = por %p124, %p125
      %p127 = scmp.ne.s32.totalorder %s119, %s122
      %p128 = scmp.eq.s32.totalorder %s15, 0
      %p129 = por %p127, %p128
      %p130 = scmp.ne.s32.totalorder %s119, %s122
      %p131 = scmp.eq.s32.totalorder %s20, 1
      %p132 = por %p130, %p131
      %p133 = scmp.ne.s32.totalorder %s122, %s123
      %p134 = scmp.eq.s32.totalorder %s20, 0
      %p135 = por %p133, %p134
      %p136 = scmp.ne.s32.totalorder %s122, %s123
      %p137 = scmp.eq.s32.totalorder %s21, 1
      %p138 = por %p136, %p137
      %p140 = scmp.ne.s32.totalorder %s123, %s139
      %p141 = scmp.eq.s32.totalorder %s21, 0
      %p142 = por %p140, %p141
      %s143 = ssub.s32 %s15, %s22
      %p144 = scmp.eq.s32.totalorder %s143, 0
      %s146 = sadd.s32 %s145, 1
      %s147 = scalar_select %p144, %s145, %s146
      %p150 = pneg %p144
      %p151 = scmp.eq.s32.totalorder %s15, 1
      %p152 = por %p150, %p151
      %p153 = scmp.ne.s32.totalorder %s145, %s148
      %p154 = scmp.eq.s32.totalorder %s15, 0
      %p155 = por %p153, %p154
      %p156 = scmp.ne.s32.totalorder %s145, %s148
      %p157 = scmp.eq.s32.totalorder %s20, 1
      %p158 = por %p156, %p157
      %p159 = scmp.ne.s32.totalorder %s148, %s149
      %p160 = scmp.eq.s32.totalorder %s20, 0
      %p161 = por %p159, %p160
      %p162 = scmp.ne.s32.totalorder %s148, %s149
      %p163 = scmp.eq.s32.totalorder %s21, 1
      %p164 = por %p162, %p163
      %p166 = scmp.ne.s32.totalorder %s149, %s165
      %p167 = scmp.eq.s32.totalorder %s21, 0
      %p168 = por %p166, %p167
      %p169 = scmp.le.s32.totalorder 1, %s15
      %p170 = scmp.lt.s32.totalorder %s15, 3
      %p171 = pnand %p169, %p170
      %p172 = pneg %p171
      // Predicated region
      $region9: #{densenet6_forward.9} parent=5 // pred_check
        _
      $region10: #{densenet6_forward.9} parent=5 // pred_check_branch
        %174 = sbr.rel (%p171) target = $region12
      $region11: #{densenet6_forward.9} parent=5 // pred_region
        %s175 = ssub.s32 %s15, 1
        // Predicated region
        $region13: #{densenet6_forward.9} parent=11 // pred_check
          %p176 = pneg %p62
        $region14: #{densenet6_forward.9} parent=11 // pred_check_branch
          %178 = sbr.rel (%p176) target = $region16
        $region15: #{densenet6_forward.9} parent=11 // pred_region
          _
        $region16: #{densenet6_forward.9} parent=11 // pred_fallthru
          _
        // Predicated region
        $region17: #{densenet6_forward.9} parent=11 // pred_check
          %p179 = pneg %p109
        $region18: #{densenet6_forward.9} parent=11 // pred_check_branch
          %181 = sbr.rel (%p179) target = $region20
        $region19: #{densenet6_forward.9} parent=11 // pred_region
          _
        $region20: #{densenet6_forward.9} parent=11 // pred_fallthru
          _
      $region12: #{densenet6_forward.9} parent=5 // pred_fallthru
        _
      %p182 = scmp.lt.s32.totalorder %s15, 2
      // Predicated region
      $region21: #{densenet6_forward.9} parent=5 // pred_check
        %p183 = pneg %p182
      $region22: #{densenet6_forward.9} parent=5 // pred_check_branch
        %185 = sbr.rel (%p183) target = $region24
      $region23: #{densenet6_forward.9} parent=5 // pred_region
        // Predicated region
        $region25: #{densenet6_forward.9} parent=23 // pred_check
          %p186 = pneg %p35
        $region26: #{densenet6_forward.9} parent=23 // pred_check_branch
          %188 = sbr.rel (%p186) target = $region28
        $region27: #{densenet6_forward.9} parent=23 // pred_region
          %s189 = smul.u32 16, %s15
          %p190 = scmp.lt.s32.totalorder %s189, 31
          %s191 = scalar_select %p190, %s189, 31
          %s192 = smul.addr %s191, 2
          %s193 = smul.addr %s192, 4
          %s194 = scalar_lea.vmem %s0, %s193
          %s195 = smul.u32 16, %s15
        $region28: #{densenet6_forward.9} parent=23 // pred_fallthru
          _
        // Predicated region
        $region29: #{densenet6_forward.9} parent=23 // pred_check
          %p196 = pneg %p82
        $region30: #{densenet6_forward.9} parent=23 // pred_check_branch
          %198 = sbr.rel (%p196) target = $region32
        $region31: #{densenet6_forward.9} parent=23 // pred_region
          %s199 = smul.u32 16, %s15
          %p200 = scmp.lt.s32.totalorder %s199, 31
          %s201 = scalar_select %p200, %s199, 31
          %s202 = smul.addr %s201, 4
          %s203 = scalar_lea.vmem %s2, %s202
          %s204 = smul.u32 16, %s15
        $region32: #{densenet6_forward.9} parent=23 // pred_fallthru
          _
      $region24: #{densenet6_forward.9} parent=5 // pred_fallthru
        _
      %p205 = scmp.le.s32.totalorder 1, %s15
      %p206 = scmp.lt.s32.totalorder %s15, 3
      %p207 = pnand %p205, %p206
      %p208 = pneg %p207
      // Predicated region
      $region33: #{densenet6_forward.9} parent=5 // pred_check
        _
      $region34: #{densenet6_forward.9} parent=5 // pred_check_branch
        %210 = sbr.rel (%p207) target = $region36
      $region35: #{densenet6_forward.9} parent=5 // pred_region
        %s211 = ssub.s32 %s15, 1
        %s212 = smul.u32 16, %s20
        %p213 = scmp.lt.s32.totalorder %s212, 31
        %s214 = scalar_select %p213, %s212, 31
        %s215 = smul.addr %s214, 2
        %s216 = smul.addr %s215, 4
        %s217 = scalar_lea.vmem %s0, %s216
        %p218 = pneg %p41
        %p219 = pneg %p38
        %p220 = pneg %p62
        %p221 = pneg %p59
        %s222 = smul.u32 16, %s20
        %p223 = scmp.lt.s32.totalorder %s222, 31
        %s224 = scalar_select %p223, %s222, 31
        %s225 = smul.addr %s224, 4
        %s226 = scalar_lea.vmem %s2, %s225
        %p227 = pneg %p88
        %p228 = pneg %p85
        %p229 = pneg %p109
        %p230 = pneg %p106
        %p231 = pneg %p135
        %p232 = pneg %p132
        %s233 = smul.u32 16, %s20
        %p234 = scmp.lt.s32.totalorder %s233, 31
        %s235 = scalar_select %p234, %s233, 31
        %s236 = smul.addr %s235, 8
        %s237 = scalar_lea.vmem %s4, %s236
        %p238 = pneg %p161
        %p239 = pneg %p158
        %s240 = sand.u32 %s148, 1
        %s241 = scalar_lea.sflag [#allocation3], %s240
        %s242 = sand.u32 %s148, 1
        %s243 = smul.addr %s242, 256
        %s244 = scalar_lea.vmem [#allocation2], %s243
        %s245 = smul.u32 16, %s20
        %p246 = scmp.lt.s32.totalorder %s245, 31
        %s247 = scalar_select %p246, %s245, 31
        %s248 = smul.addr %s247, 2
        %s249 = smul.addr %s248, 4
        %s250 = scalar_lea.vmem %s0, %s249
        %s251 = smul.u32 16, %s20
        %s252 = smul.u32 16, %s20
        %p253 = scmp.lt.s32.totalorder %s252, 31
        %s254 = scalar_select %p253, %s252, 31
        %s255 = smul.addr %s254, 4
        %s256 = scalar_lea.vmem %s2, %s255
        %s257 = smul.u32 16, %s20
        %s258 = smul.u32 16, %s20
        %p259 = scmp.lt.s32.totalorder %s258, 31
        %s260 = scalar_select %p259, %s258, 31
        %s261 = smul.addr %s260, 8
        %s262 = scalar_lea.vmem %s4, %s261
        %s263 = smul.u32 16, %s20
        %s264 = smul.u32 16, %s20
        %v266 = vld [vmem:[%s256] sm:$0xf]
        %v267 = vld [vmem:[%s256 + $0x4] sm:$0xf]
        %v268 = vld [vmem:[%s256 + $0x8] sm:$0xf]
        %v269 = vld [vmem:[%s256 + $0xc] sm:$0xf]
        %v270 = vld [vmem:[%s256 + $0x10] sm:$0xf]
        %v271 = vld [vmem:[%s256 + $0x14] sm:$0xf]
        %v272 = vld [vmem:[%s256 + $0x18] sm:$0xf]
        %v273 = vld [vmem:[%s256 + $0x1c] sm:$0xf]
        %v274 = vld [vmem:[%s256 + $0x20] sm:$0xf]
        %v275 = vld [vmem:[%s256 + $0x24] sm:$0xf]
        %v276 = vld [vmem:[%s256 + $0x28] sm:$0xf]
        %v277 = vld [vmem:[%s256 + $0x2c] sm:$0xf]
        %v278 = vld [vmem:[%s256 + $0x30] sm:$0xf]
        %v279 = vld [vmem:[%s256 + $0x34] sm:$0xf]
        %v280 = vld [vmem:[%s256 + $0x38] sm:$0xf]
        %v281 = vld [vmem:[%s256 + $0x3c] sm:$0xf]
        %v282 = vld [vmem:[%s3] sm:$0xf]
        %v283 = vld [vmem:[%s3 + $0x4] sm:$0xf]
        %v284 = vld [vmem:[%s3 + $0x8] sm:$0xf]
        %v285 = vld [vmem:[%s3 + $0xc] sm:$0xf]
        %v286 = vld [vmem:[%s3 + $0x10] sm:$0xf]
        %v287 = vld [vmem:[%s3 + $0x14] sm:$0xf]
        %v288 = vld [vmem:[%s3 + $0x18] sm:$0xf]
        %v289 = vld [vmem:[%s3 + $0x1c] sm:$0xf]
        %v290 = vld [vmem:[%s3 + $0x20] sm:$0xf]
        %v291 = vld [vmem:[%s3 + $0x24] sm:$0xf]
        %v292 = vld [vmem:[%s3 + $0x28] sm:$0xf]
        %v293 = vld [vmem:[%s3 + $0x2c] sm:$0xf]
        %v294 = vld [vmem:[%s3 + $0x30] sm:$0xf]
        %v295 = vld [vmem:[%s3 + $0x34] sm:$0xf]
        %v296 = vld [vmem:[%s3 + $0x38] sm:$0xf]
        %v297 = vld [vmem:[%s3 + $0x3c] sm:$0xf]
        %v298 = vld [vmem:[%s3 + $0x40] sm:$0xf]
        %v299 = vld [vmem:[%s3 + $0x44] sm:$0xf]
        %v300 = vld [vmem:[%s3 + $0x48] sm:$0xf]
        %v301 = vld [vmem:[%s3 + $0x4c] sm:$0xf]
        %v302 = vld [vmem:[%s3 + $0x50] sm:$0xf]
        %v303 = vld [vmem:[%s3 + $0x54] sm:$0xf]
        %v304 = vld [vmem:[%s3 + $0x58] sm:$0xf]
        %v305 = vld [vmem:[%s3 + $0x5c] sm:$0xf]
        %v306 = vld [vmem:[%s3 + $0x60] sm:$0xf]
        %v307 = vld [vmem:[%s3 + $0x64] sm:$0xf]
        %v308 = vld [vmem:[%s3 + $0x68] sm:$0xf]
        %v309 = vld [vmem:[%s3 + $0x6c] sm:$0xf]
        %v310 = vld [vmem:[%s3 + $0x70] sm:$0xf]
        %v311 = vld [vmem:[%s3 + $0x74] sm:$0xf]
        %v312 = vld [vmem:[%s3 + $0x78] sm:$0xf]
        %v313 = vld [vmem:[%s3 + $0x7c] sm:$0xf]
        %v330 = vunpack.c.l.b16 %v266
        %v331 = vunpack.c.l.b16 %v267
        %v332 = vunpack.c.l.b16 %v268
        %v333 = vunpack.c.l.b16 %v269
        %v334 = vunpack.c.l.b16 %v270
        %v335 = vunpack.c.l.b16 %v271
        %v336 = vunpack.c.l.b16 %v272
        %v337 = vunpack.c.l.b16 %v273
        %v338 = vunpack.c.l.b16 %v274
        %v339 = vunpack.c.l.b16 %v275
        %v340 = vunpack.c.l.b16 %v276
        %v341 = vunpack.c.l.b16 %v277
        %v342 = vunpack.c.l.b16 %v278
        %v343 = vunpack.c.l.b16 %v279
        %v344 = vunpack.c.l.b16 %v280
        %v345 = vunpack.c.l.b16 %v281
        %v346 = vpack.c.b16 %v331, %v330
        %v347 = vpack.c.b16 %v333, %v332
        %v348 = vpack.c.b16 %v335, %v334
        %v349 = vpack.c.b16 %v337, %v336
        %v350 = vpack.c.b16 %v339, %v338
        %v351 = vpack.c.b16 %v341, %v340
        %v352 = vpack.c.b16 %v343, %v342
        %v353 = vpack.c.b16 %v345, %v344
        %v394 = vunpack.c.l.b16 %v282
        %v395 = vunpack.c.l.b16 %v283
        %v396 = vunpack.c.l.b16 %v284
        %v397 = vunpack.c.l.b16 %v285
        %v398 = vunpack.c.l.b16 %v286
        %v399 = vunpack.c.l.b16 %v287
        %v400 = vunpack.c.l.b16 %v288
        %v401 = vunpack.c.l.b16 %v289
        %v402 = vunpack.c.l.b16 %v290
        %v403 = vunpack.c.l.b16 %v291
        %v404 = vunpack.c.l.b16 %v292
        %v405 = vunpack.c.l.b16 %v293
        %v406 = vunpack.c.l.b16 %v294
        %v407 = vunpack.c.l.b16 %v295
        %v408 = vunpack.c.l.b16 %v296
        %v409 = vunpack.c.l.b16 %v297
        %v410 = vunpack.c.l.b16 %v298
        %v411 = vunpack.c.l.b16 %v299
        %v412 = vunpack.c.l.b16 %v300
        %v413 = vunpack.c.l.b16 %v301
        %v414 = vunpack.c.l.b16 %v302
        %v415 = vunpack.c.l.b16 %v303
        %v416 = vunpack.c.l.b16 %v304
        %v417 = vunpack.c.l.b16 %v305
        %v418 = vunpack.c.l.b16 %v306
        %v419 = vunpack.c.l.b16 %v307
        %v420 = vunpack.c.l.b16 %v308
        %v421 = vunpack.c.l.b16 %v309
        %v422 = vunpack.c.l.b16 %v310
        %v423 = vunpack.c.l.b16 %v311
        %v424 = vunpack.c.l.b16 %v312
        %v425 = vunpack.c.l.b16 %v313
        %v426 = vpack.c.b16 %v395, %v394
        %v427 = vpack.c.b16 %v397, %v396
        %v428 = vpack.c.b16 %v399, %v398
        %v429 = vpack.c.b16 %v401, %v400
        %v430 = vpack.c.b16 %v403, %v402
        %v431 = vpack.c.b16 %v405, %v404
        %v432 = vpack.c.b16 %v407, %v406
        %v433 = vpack.c.b16 %v409, %v408
        %v434 = vpack.c.b16 %v411, %v410
        %v435 = vpack.c.b16 %v413, %v412
        %v436 = vpack.c.b16 %v415, %v414
        %v437 = vpack.c.b16 %v417, %v416
        %v438 = vpack.c.b16 %v419, %v418
        %v439 = vpack.c.b16 %v421, %v420
        %v440 = vpack.c.b16 %v423, %v422
        %v441 = vpack.c.b16 %v425, %v424
        %458 = vmatprep.subr.bf16.mxu0 0
        %459 = vmatpush1.bf16.xpose.msra.mxu0 %v433
        %460 = vmatprep.subr.bf16.mxu0 0
        %461 = vmatpush1.bf16.xpose.msra.mxu0 %v432
        %462 = vmatprep.subr.bf16.mxu0 0
        %463 = vmatpush1.bf16.xpose.msra.mxu0 %v431
        %464 = vmatprep.subr.bf16.mxu0 0
        %465 = vmatpush1.bf16.xpose.msra.mxu0 %v430
        %466 = vmatprep.subr.bf16.mxu0 0
        %467 = vmatpush1.bf16.xpose.msra.mxu0 %v429
        %468 = vmatprep.subr.bf16.mxu0 0
        %469 = vmatpush1.bf16.xpose.msra.mxu0 %v428
        %470 = vmatprep.subr.bf16.mxu0 0
        %471 = vmatpush1.bf16.xpose.msra.mxu0 %v427
        %472 = vmatprep.subr.bf16.mxu0 0
        %473 = vmatpush1.bf16.xpose.msra.mxu0 %v426
        %474 = vmatprep.subr.bf16.mxu0 0
        %475 = vmatpush2.bf16.xpose.msra.mxu0 %v441
        %476 = vmatprep.subr.bf16.mxu0 0
        %477 = vmatpush2.bf16.xpose.msra.mxu0 %v440
        %478 = vmatprep.subr.bf16.mxu0 0
        %479 = vmatpush2.bf16.xpose.msra.mxu0 %v439
        %480 = vmatprep.subr.bf16.mxu0 0
        %481 = vmatpush2.bf16.xpose.msra.mxu0 %v438
        %482 = vmatprep.subr.bf16.mxu0 0
        %483 = vmatpush2.bf16.xpose.msra.mxu0 %v437
        %484 = vmatprep.subr.bf16.mxu0 0
        %485 = vmatpush2.bf16.xpose.msra.mxu0 %v436
        %486 = vmatprep.subr.bf16.mxu0 0
        %487 = vmatpush2.bf16.xpose.msra.mxu0 %v435
        %488 = vmatprep.subr.bf16.mxu0 0
        %489 = vmatpush2.bf16.xpose.msra.mxu0 %v434
        %490 = vmatprep.mubr.bf16.mxu0 0
        %491 = vmatmul.mubr.bf16.gmra.mxu0 %v346
        %v492 = vpop.f32.mrf.mxu0
        %v493 = vadd.f32 0.0, %v492
        %v494 = vpop.f32.mrf.mxu0
        %v495 = vadd.f32 0.0, %v494
        %v496 = vpop.f32.mrf.mxu0
        %v497 = vadd.f32 0.0, %v496
        %v498 = vpop.f32.mrf.mxu0
        %v499 = vadd.f32 0.0, %v498
        %500 = vmatprep.mubr.bf16.mxu0 0
        %501 = vmatmul.mubr.bf16.gmra.mxu0 %v347
        %v502 = vpop.f32.mrf.mxu0
        %v503 = vadd.f32 0.0, %v502
        %v504 = vpop.f32.mrf.mxu0
        %v505 = vadd.f32 0.0, %v504
        %v506 = vpop.f32.mrf.mxu0
        %v507 = vadd.f32 0.0, %v506
        %v508 = vpop.f32.mrf.mxu0
        %v509 = vadd.f32 0.0, %v508
        %510 = vmatprep.mubr.bf16.mxu0 0
        %511 = vmatmul.mubr.bf16.gmra.mxu0 %v348
        %v512 = vpop.f32.mrf.mxu0
        %v513 = vadd.f32 0.0, %v512
        %v514 = vpop.f32.mrf.mxu0
        %v515 = vadd.f32 0.0, %v514
        %v516 = vpop.f32.mrf.mxu0
        %v517 = vadd.f32 0.0, %v516
        %v518 = vpop.f32.mrf.mxu0
        %v519 = vadd.f32 0.0, %v518
        %520 = vmatprep.mubr.bf16.mxu0 0
        %521 = vmatmul.mubr.bf16.gmra.mxu0 %v349
        %v522 = vpop.f32.mrf.mxu0
        %v523 = vadd.f32 0.0, %v522
        %v524 = vpop.f32.mrf.mxu0
        %v525 = vadd.f32 0.0, %v524
        %v526 = vpop.f32.mrf.mxu0
        %v527 = vadd.f32 0.0, %v526
        %v528 = vpop.f32.mrf.mxu0
        %v529 = vadd.f32 0.0, %v528
        %530 = vmatprep.mubr.bf16.mxu0 0
        %531 = vmatmul.mubr.bf16.gmra.mxu0 %v350
        %v532 = vpop.f32.mrf.mxu0
        %v533 = vadd.f32 0.0, %v532
        %v534 = vpop.f32.mrf.mxu0
        %v535 = vadd.f32 0.0, %v534
        %v536 = vpop.f32.mrf.mxu0
        %v537 = vadd.f32 0.0, %v536
        %v538 = vpop.f32.mrf.mxu0
        %v539 = vadd.f32 0.0, %v538
        %540 = vmatprep.mubr.bf16.mxu0 0
        %541 = vmatmul.mubr.bf16.gmra.mxu0 %v351
        %v542 = vpop.f32.mrf.mxu0
        %v543 = vadd.f32 0.0, %v542
        %v544 = vpop.f32.mrf.mxu0
        %v545 = vadd.f32 0.0, %v544
        %v546 = vpop.f32.mrf.mxu0
        %v547 = vadd.f32 0.0, %v546
        %v548 = vpop.f32.mrf.mxu0
        %v549 = vadd.f32 0.0, %v548
        %550 = vmatprep.mubr.bf16.mxu0 0
        %551 = vmatmul.mubr.bf16.gmra.mxu0 %v352
        %v552 = vpop.f32.mrf.mxu0
        %v553 = vadd.f32 0.0, %v552
        %v554 = vpop.f32.mrf.mxu0
        %v555 = vadd.f32 0.0, %v554
        %v556 = vpop.f32.mrf.mxu0
        %v557 = vadd.f32 0.0, %v556
        %v558 = vpop.f32.mrf.mxu0
        %v559 = vadd.f32 0.0, %v558
        %560 = vmatprep.mubr.bf16.mxu0 0
        %561 = vmatmul.mubr.bf16.gmra.mxu0 %v353
        %v562 = vpop.f32.mrf.mxu0
        %v563 = vadd.f32 0.0, %v562
        %v564 = vpop.f32.mrf.mxu0
        %v565 = vadd.f32 0.0, %v564
        %v566 = vpop.f32.mrf.mxu0
        %v567 = vadd.f32 0.0, %v566
        %v568 = vpop.f32.mrf.mxu0
        %v569 = vadd.f32 0.0, %v568
        %570 = vdwg.mxu0
        %v571 = vsub.f32 0.0, %v493
        %v572 = vsub.f32 0.0, %v495
        %v573 = vsub.f32 0.0, %v497
        %v574 = vsub.f32 0.0, %v499
        %v575 = vsub.f32 0.0, %v503
        %v576 = vsub.f32 0.0, %v505
        %v577 = vsub.f32 0.0, %v507
        %v578 = vsub.f32 0.0, %v509
        %v579 = vsub.f32 0.0, %v513
        %v580 = vsub.f32 0.0, %v515
        %v581 = vsub.f32 0.0, %v517
        %v582 = vsub.f32 0.0, %v519
        %v583 = vsub.f32 0.0, %v523
        %v584 = vsub.f32 0.0, %v525
        %v585 = vsub.f32 0.0, %v527
        %v586 = vsub.f32 0.0, %v529
        %v587 = vsub.f32 0.0, %v533
        %v588 = vsub.f32 0.0, %v535
        %v589 = vsub.f32 0.0, %v537
        %v590 = vsub.f32 0.0, %v539
        %v591 = vsub.f32 0.0, %v543
        %v592 = vsub.f32 0.0, %v545
        %v593 = vsub.f32 0.0, %v547
        %v594 = vsub.f32 0.0, %v549
        %v595 = vsub.f32 0.0, %v553
        %v596 = vsub.f32 0.0, %v555
        %v597 = vsub.f32 0.0, %v557
        %v598 = vsub.f32 0.0, %v559
        %v599 = vsub.f32 0.0, %v563
        %v600 = vsub.f32 0.0, %v565
        %v601 = vsub.f32 0.0, %v567
        %v602 = vsub.f32 0.0, %v569
        %v603 = vmul.f32 %v571, 1.442695
        %v604 = vpow.pop %v603
        %v605 = vmul.f32 %v572, 1.442695
        %v606 = vpow.pop %v605
        %v607 = vmul.f32 %v573, 1.442695
        %v608 = vpow.pop %v607
        %v609 = vmul.f32 %v574, 1.442695
        %v610 = vpow.pop %v609
        %v611 = vmul.f32 %v575, 1.442695
        %v612 = vpow.pop %v611
        %v613 = vmul.f32 %v576, 1.442695
        %v614 = vpow.pop %v613
        %v615 = vmul.f32 %v577, 1.442695
        %v616 = vpow.pop %v615
        %v617 = vmul.f32 %v578, 1.442695
        %v618 = vpow.pop %v617
        %v619 = vmul.f32 %v579, 1.442695
        %v620 = vpow.pop %v619
        %v621 = vmul.f32 %v580, 1.442695
        %v622 = vpow.pop %v621
        %v623 = vmul.f32 %v581, 1.442695
        %v624 = vpow.pop %v623
        %v625 = vmul.f32 %v582, 1.442695
        %v626 = vpow.pop %v625
        %v627 = vmul.f32 %v583, 1.442695
        %v628 = vpow.pop %v627
        %v629 = vmul.f32 %v584, 1.442695
        %v630 = vpow.pop %v629
        %v631 = vmul.f32 %v585, 1.442695
        %v632 = vpow.pop %v631
        %v633 = vmul.f32 %v586, 1.442695
        %v634 = vpow.pop %v633
        %v635 = vmul.f32 %v587, 1.442695
        %v636 = vpow.pop %v635
        %v637 = vmul.f32 %v588, 1.442695
        %v638 = vpow.pop %v637
        %v639 = vmul.f32 %v589, 1.442695
        %v640 = vpow.pop %v639
        %v641 = vmul.f32 %v590, 1.442695
        %v642 = vpow.pop %v641
        %v643 = vmul.f32 %v591, 1.442695
        %v644 = vpow.pop %v643
        %v645 = vmul.f32 %v592, 1.442695
        %v646 = vpow.pop %v645
        %v647 = vmul.f32 %v593, 1.442695
        %v648 = vpow.pop %v647
        %v649 = vmul.f32 %v594, 1.442695
        %v650 = vpow.pop %v649
        %v651 = vmul.f32 %v595, 1.442695
        %v652 = vpow.pop %v651
        %v653 = vmul.f32 %v596, 1.442695
        %v654 = vpow.pop %v653
        %v655 = vmul.f32 %v597, 1.442695
        %v656 = vpow.pop %v655
        %v657 = vmul.f32 %v598, 1.442695
        %v658 = vpow.pop %v657
        %v659 = vmul.f32 %v599, 1.442695
        %v660 = vpow.pop %v659
        %v661 = vmul.f32 %v600, 1.442695
        %v662 = vpow.pop %v661
        %v663 = vmul.f32 %v601, 1.442695
        %v664 = vpow.pop %v663
        %v665 = vmul.f32 %v602, 1.442695
        %v666 = vpow.pop %v665
        %v667 = vadd.f32 %v604, 1.0
        %v668 = vadd.f32 %v606, 1.0
        %v669 = vadd.f32 %v608, 1.0
        %v670 = vadd.f32 %v610, 1.0
        %v671 = vadd.f32 %v612, 1.0
        %v672 = vadd.f32 %v614, 1.0
        %v673 = vadd.f32 %v616, 1.0
        %v674 = vadd.f32 %v618, 1.0
        %v675 = vadd.f32 %v620, 1.0
        %v676 = vadd.f32 %v622, 1.0
        %v677 = vadd.f32 %v624, 1.0
        %v678 = vadd.f32 %v626, 1.0
        %v679 = vadd.f32 %v628, 1.0
        %v680 = vadd.f32 %v630, 1.0
        %v681 = vadd.f32 %v632, 1.0
        %v682 = vadd.f32 %v634, 1.0
        %v683 = vadd.f32 %v636, 1.0
        %v684 = vadd.f32 %v638, 1.0
        %v685 = vadd.f32 %v640, 1.0
        %v686 = vadd.f32 %v642, 1.0
        %v687 = vadd.f32 %v644, 1.0
        %v688 = vadd.f32 %v646, 1.0
        %v689 = vadd.f32 %v648, 1.0
        %v690 = vadd.f32 %v650, 1.0
        %v691 = vadd.f32 %v652, 1.0
        %v692 = vadd.f32 %v654, 1.0
        %v693 = vadd.f32 %v656, 1.0
        %v694 = vadd.f32 %v658, 1.0
        %v695 = vadd.f32 %v660, 1.0
        %v696 = vadd.f32 %v662, 1.0
        %v697 = vadd.f32 %v664, 1.0
        %v698 = vadd.f32 %v666, 1.0
        %v699 = vrcp.pop %v667
        %v700 = vrcp.pop %v668
        %v701 = vrcp.pop %v669
        %v702 = vrcp.pop %v670
        %v703 = vrcp.pop %v671
        %v704 = vrcp.pop %v672
        %v705 = vrcp.pop %v673
        %v706 = vrcp.pop %v674
        %v707 = vrcp.pop %v675
        %v708 = vrcp.pop %v676
        %v709 = vrcp.pop %v677
        %v710 = vrcp.pop %v678
        %v711 = vrcp.pop %v679
        %v712 = vrcp.pop %v680
        %v713 = vrcp.pop %v681
        %v714 = vrcp.pop %v682
        %v715 = vrcp.pop %v683
        %v716 = vrcp.pop %v684
        %v717 = vrcp.pop %v685
        %v718 = vrcp.pop %v686
        %v719 = vrcp.pop %v687
        %v720 = vrcp.pop %v688
        %v721 = vrcp.pop %v689
        %v722 = vrcp.pop %v690
        %v723 = vrcp.pop %v691
        %v724 = vrcp.pop %v692
        %v725 = vrcp.pop %v693
        %v726 = vrcp.pop %v694
        %v727 = vrcp.pop %v695
        %v728 = vrcp.pop %v696
        %v729 = vrcp.pop %v697
        %v730 = vrcp.pop %v698
        %731 = vst [vmem:[%s244] sm:$0xff] %v699
        %732 = vst [vmem:[%s244 + $0x8] sm:$0xff] %v700
        %733 = vst [vmem:[%s244 + $0x10] sm:$0xff] %v701
        %734 = vst [vmem:[%s244 + $0x18] sm:$0xff] %v702
        %735 = vst [vmem:[%s244 + $0x20] sm:$0xff] %v703
        %736 = vst [vmem:[%s244 + $0x28] sm:$0xff] %v704
        %737 = vst [vmem:[%s244 + $0x30] sm:$0xff] %v705
        %738 = vst [vmem:[%s244 + $0x38] sm:$0xff] %v706
        %739 = vst [vmem:[%s244 + $0x40] sm:$0xff] %v707
        %740 = vst [vmem:[%s244 + $0x48] sm:$0xff] %v708
        %741 = vst [vmem:[%s244 + $0x50] sm:$0xff] %v709
        %742 = vst [vmem:[%s244 + $0x58] sm:$0xff] %v710
        %743 = vst [vmem:[%s244 + $0x60] sm:$0xff] %v711
        %744 = vst [vmem:[%s244 + $0x68] sm:$0xff] %v712
        %745 = vst [vmem:[%s244 + $0x70] sm:$0xff] %v713
        %746 = vst [vmem:[%s244 + $0x78] sm:$0xff] %v714
        %747 = vst [vmem:[%s244 + $0x80] sm:$0xff] %v715
        %748 = vst [vmem:[%s244 + $0x88] sm:$0xff] %v716
        %749 = vst [vmem:[%s244 + $0x90] sm:$0xff] %v717
        %750 = vst [vmem:[%s244 + $0x98] sm:$0xff] %v718
        %751 = vst [vmem:[%s244 + $0xa0] sm:$0xff] %v719
        %752 = vst [vmem:[%s244 + $0xa8] sm:$0xff] %v720
        %753 = vst [vmem:[%s244 + $0xb0] sm:$0xff] %v721
        %754 = vst [vmem:[%s244 + $0xb8] sm:$0xff] %v722
        %755 = vst [vmem:[%s244 + $0xc0] sm:$0xff] %v723
        %756 = vst [vmem:[%s244 + $0xc8] sm:$0xff] %v724
        %757 = vst [vmem:[%s244 + $0xd0] sm:$0xff] %v725
        %758 = vst [vmem:[%s244 + $0xd8] sm:$0xff] %v726
        %759 = vst [vmem:[%s244 + $0xe0] sm:$0xff] %v727
        %760 = vst [vmem:[%s244 + $0xe8] sm:$0xff] %v728
        %761 = vst [vmem:[%s244 + $0xf0] sm:$0xff] %v729
        %762 = vst [vmem:[%s244 + $0xf8] sm:$0xff] %v730
        %v763 = vld [vmem:[%s250] sm:$0xff]
        %v764 = vld [vmem:[%s250 + $0x8] sm:$0xff]
        %v765 = vld [vmem:[%s250 + $0x10] sm:$0xff]
        %v766 = vld [vmem:[%s250 + $0x18] sm:$0xff]
        %v767 = vld [vmem:[%s250 + $0x20] sm:$0xff]
        %v768 = vld [vmem:[%s250 + $0x28] sm:$0xff]
        %v769 = vld [vmem:[%s250 + $0x30] sm:$0xff]
        %v770 = vld [vmem:[%s250 + $0x38] sm:$0xff]
        %v771 = vld [vmem:[%s250 + $0x40] sm:$0xff]
        %v772 = vld [vmem:[%s250 + $0x48] sm:$0xff]
        %v773 = vld [vmem:[%s250 + $0x50] sm:$0xff]
        %v774 = vld [vmem:[%s250 + $0x58] sm:$0xff]
        %v775 = vld [vmem:[%s250 + $0x60] sm:$0xff]
        %v776 = vld [vmem:[%s250 + $0x68] sm:$0xff]
        %v777 = vld [vmem:[%s250 + $0x70] sm:$0xff]
        %v778 = vld [vmem:[%s250 + $0x78] sm:$0xff]
        %v779 = vld [vmem:[%s1] sm:$0xf]
        %v780 = vld [vmem:[%s1 + $0x4] sm:$0xf]
        %v781 = vld [vmem:[%s1 + $0x8] sm:$0xf]
        %v782 = vld [vmem:[%s1 + $0xc] sm:$0xf]
        %v783 = vld [vmem:[%s1 + $0x10] sm:$0xf]
        %v784 = vld [vmem:[%s1 + $0x14] sm:$0xf]
        %v785 = vld [vmem:[%s1 + $0x18] sm:$0xf]
        %v786 = vld [vmem:[%s1 + $0x1c] sm:$0xf]
        %v787 = vld [vmem:[%s1 + $0x20] sm:$0xf]
        %v788 = vld [vmem:[%s1 + $0x24] sm:$0xf]
        %v789 = vld [vmem:[%s1 + $0x28] sm:$0xf]
        %v790 = vld [vmem:[%s1 + $0x2c] sm:$0xf]
        %v791 = vld [vmem:[%s1 + $0x30] sm:$0xf]
        %v792 = vld [vmem:[%s1 + $0x34] sm:$0xf]
        %v793 = vld [vmem:[%s1 + $0x38] sm:$0xf]
        %v794 = vld [vmem:[%s1 + $0x3c] sm:$0xf]
        %v795 = vld [vmem:[%s1 + $0x40] sm:$0xf]
        %v796 = vld [vmem:[%s1 + $0x44] sm:$0xf]
        %v797 = vld [vmem:[%s1 + $0x48] sm:$0xf]
        %v798 = vld [vmem:[%s1 + $0x4c] sm:$0xf]
        %v799 = vld [vmem:[%s1 + $0x50] sm:$0xf]
        %v800 = vld [vmem:[%s1 + $0x54] sm:$0xf]
        %v801 = vld [vmem:[%s1 + $0x58] sm:$0xf]
        %v802 = vld [vmem:[%s1 + $0x5c] sm:$0xf]
        %v803 = vld [vmem:[%s1 + $0x60] sm:$0xf]
        %v804 = vld [vmem:[%s1 + $0x64] sm:$0xf]
        %v805 = vld [vmem:[%s1 + $0x68] sm:$0xf]
        %v806 = vld [vmem:[%s1 + $0x6c] sm:$0xf]
        %v807 = vld [vmem:[%s1 + $0x70] sm:$0xf]
        %v808 = vld [vmem:[%s1 + $0x74] sm:$0xf]
        %v809 = vld [vmem:[%s1 + $0x78] sm:$0xf]
        %v810 = vld [vmem:[%s1 + $0x7c] sm:$0xf]
        %v827 = vunpack.c.l.b16 %v763
        %v828 = vunpack.c.h.b16 %v763
        %v829 = vunpack.c.l.b16 %v764
        %v830 = vunpack.c.h.b16 %v764
        %v831 = vunpack.c.l.b16 %v765
        %v832 = vunpack.c.h.b16 %v765
        %v833 = vunpack.c.l.b16 %v766
        %v834 = vunpack.c.h.b16 %v766
        %v835 = vunpack.c.l.b16 %v767
        %v836 = vunpack.c.h.b16 %v767
        %v837 = vunpack.c.l.b16 %v768
        %v838 = vunpack.c.h.b16 %v768
        %v839 = vunpack.c.l.b16 %v769
        %v840 = vunpack.c.h.b16 %v769
        %v841 = vunpack.c.l.b16 %v770
        %v842 = vunpack.c.h.b16 %v770
        %v843 = vunpack.c.l.b16 %v771
        %v844 = vunpack.c.h.b16 %v771
        %v845 = vunpack.c.l.b16 %v772
        %v846 = vunpack.c.h.b16 %v772
        %v847 = vunpack.c.l.b16 %v773
        %v848 = vunpack.c.h.b16 %v773
        %v849 = vunpack.c.l.b16 %v774
        %v850 = vunpack.c.h.b16 %v774
        %v851 = vunpack.c.l.b16 %v775
        %v852 = vunpack.c.h.b16 %v775
        %v853 = vunpack.c.l.b16 %v776
        %v854 = vunpack.c.h.b16 %v776
        %v855 = vunpack.c.l.b16 %v777
        %v856 = vunpack.c.h.b16 %v777
        %v857 = vunpack.c.l.b16 %v778
        %v858 = vunpack.c.h.b16 %v778
        %v859 = vpack.c.b16 %v829, %v827
        %v860 = vpack.c.b16 %v830, %v828
        %v861 = vpack.c.b16 %v833, %v831
        %v862 = vpack.c.b16 %v834, %v832
        %v863 = vpack.c.b16 %v837, %v835
        %v864 = vpack.c.b16 %v838, %v836
        %v865 = vpack.c.b16 %v841, %v839
        %v866 = vpack.c.b16 %v842, %v840
        %v867 = vpack.c.b16 %v845, %v843
        %v868 = vpack.c.b16 %v846, %v844
        %v869 = vpack.c.b16 %v849, %v847
        %v870 = vpack.c.b16 %v850, %v848
        %v871 = vpack.c.b16 %v853, %v851
        %v872 = vpack.c.b16 %v854, %v852
        %v873 = vpack.c.b16 %v857, %v855
        %v874 = vpack.c.b16 %v858, %v856
        %v923 = vunpack.c.l.b16 %v779
        %v924 = vunpack.c.l.b16 %v780
        %v925 = vunpack.c.l.b16 %v781
        %v926 = vunpack.c.l.b16 %v782
        %v927 = vunpack.c.l.b16 %v783
        %v928 = vunpack.c.l.b16 %v784
        %v929 = vunpack.c.l.b16 %v785
        %v930 = vunpack.c.l.b16 %v786
        %v931 = vunpack.c.l.b16 %v787
        %v932 = vunpack.c.l.b16 %v788
        %v933 = vunpack.c.l.b16 %v789
        %v934 = vunpack.c.l.b16 %v790
        %v935 = vunpack.c.l.b16 %v791
        %v936 = vunpack.c.l.b16 %v792
        %v937 = vunpack.c.l.b16 %v793
        %v938 = vunpack.c.l.b16 %v794
        %v939 = vunpack.c.l.b16 %v795
        %v940 = vunpack.c.l.b16 %v796
        %v941 = vunpack.c.l.b16 %v797
        %v942 = vunpack.c.l.b16 %v798
        %v943 = vunpack.c.l.b16 %v799
        %v944 = vunpack.c.l.b16 %v800
        %v945 = vunpack.c.l.b16 %v801
        %v946 = vunpack.c.l.b16 %v802
        %v947 = vunpack.c.l.b16 %v803
        %v948 = vunpack.c.l.b16 %v804
        %v949 = vunpack.c.l.b16 %v805
        %v950 = vunpack.c.l.b16 %v806
        %v951 = vunpack.c.l.b16 %v807
        %v952 = vunpack.c.l.b16 %v808
        %v953 = vunpack.c.l.b16 %v809
        %v954 = vunpack.c.l.b16 %v810
        %v955 = vpack.c.b16 %v924, %v923
        %v956 = vpack.c.b16 %v926, %v925
        %v957 = vpack.c.b16 %v928, %v927
        %v958 = vpack.c.b16 %v930, %v929
        %v959 = vpack.c.b16 %v932, %v931
        %v960 = vpack.c.b16 %v934, %v933
        %v961 = vpack.c.b16 %v936, %v935
        %v962 = vpack.c.b16 %v938, %v937
        %v963 = vpack.c.b16 %v940, %v939
        %v964 = vpack.c.b16 %v942, %v941
        %v965 = vpack.c.b16 %v944, %v943
        %v966 = vpack.c.b16 %v946, %v945
        %v967 = vpack.c.b16 %v948, %v947
        %v968 = vpack.c.b16 %v950, %v949
        %v969 = vpack.c.b16 %v952, %v951
        %v970 = vpack.c.b16 %v954, %v953
        %987 = vmatprep.subr.bf16.mxu0 0
        %988 = vmatpush1.bf16.msra.mxu0 %v962
        %989 = vmatprep.subr.bf16.mxu0 0
        %990 = vmatpush1.bf16.msra.mxu0 %v961
        %991 = vmatprep.subr.bf16.mxu0 0
        %992 = vmatpush1.bf16.msra.mxu0 %v960
        %993 = vmatprep.subr.bf16.mxu0 0
        %994 = vmatpush1.bf16.msra.mxu0 %v959
        %995 = vmatprep.subr.bf16.mxu0 0
        %996 = vmatpush1.bf16.msra.mxu0 %v958
        %997 = vmatprep.subr.bf16.mxu0 0
        %998 = vmatpush1.bf16.msra.mxu0 %v957
        %999 = vmatprep.subr.bf16.mxu0 0
        %1000 = vmatpush1.bf16.msra.mxu0 %v956
        %1001 = vmatprep.subr.bf16.mxu0 0
        %1002 = vmatpush1.bf16.msra.mxu0 %v955
        %1003 = vmatprep.subr.bf16.mxu0 0
        %1004 = vmatpush2.bf16.msra.mxu0 %v970
        %1005 = vmatprep.subr.bf16.mxu0 0
        %1006 = vmatpush2.bf16.msra.mxu0 %v969
        %1007 = vmatprep.subr.bf16.mxu0 0
        %1008 = vmatpush2.bf16.msra.mxu0 %v968
        %1009 = vmatprep.subr.bf16.mxu0 0
        %1010 = vmatpush2.bf16.msra.mxu0 %v967
        %1011 = vmatprep.subr.bf16.mxu0 0
        %1012 = vmatpush2.bf16.msra.mxu0 %v966
        %1013 = vmatprep.subr.bf16.mxu0 0
        %1014 = vmatpush2.bf16.msra.mxu0 %v965
        %1015 = vmatprep.subr.bf16.mxu0 0
        %1016 = vmatpush2.bf16.msra.mxu0 %v964
        %1017 = vmatprep.subr.bf16.mxu0 0
        %1018 = vmatpush2.bf16.msra.mxu0 %v963
        %1019 = vmatprep.mubr.bf16.mxu0 %v860
        %1020 = vmatmul.mubr.bf16.gmra.mxu0 %v859
        %v1021 = vpop.f32.mrf.mxu0
        %v1022 = vadd.f32 0.0, %v1021
        %v1023 = vpop.f32.mrf.mxu0
        %v1024 = vpop.f32.mrf.mxu0
        %v1025 = vadd.f32 0.0, %v1024
        %v1026 = vpop.f32.mrf.mxu0
        %1027 = vmatprep.mubr.bf16.mxu0 %v862
        %1028 = vmatmul.mubr.bf16.gmra.mxu0 %v861
        %v1029 = vpop.f32.mrf.mxu0
        %v1030 = vadd.f32 0.0, %v1029
        %v1031 = vpop.f32.mrf.mxu0
        %v1032 = vpop.f32.mrf.mxu0
        %v1033 = vadd.f32 0.0, %v1032
        %v1034 = vpop.f32.mrf.mxu0
        %1035 = vmatprep.mubr.bf16.mxu0 %v864
        %1036 = vmatmul.mubr.bf16.gmra.mxu0 %v863
        %v1037 = vpop.f32.mrf.mxu0
        %v1038 = vadd.f32 0.0, %v1037
        %v1039 = vpop.f32.mrf.mxu0
        %v1040 = vpop.f32.mrf.mxu0
        %v1041 = vadd.f32 0.0, %v1040
        %v1042 = vpop.f32.mrf.mxu0
        %1043 = vmatprep.mubr.bf16.mxu0 %v866
        %1044 = vmatmul.mubr.bf16.gmra.mxu0 %v865
        %v1045 = vpop.f32.mrf.mxu0
        %v1046 = vadd.f32 0.0, %v1045
        %v1047 = vpop.f32.mrf.mxu0
        %v1048 = vpop.f32.mrf.mxu0
        %v1049 = vadd.f32 0.0, %v1048
        %v1050 = vpop.f32.mrf.mxu0
        %1051 = vmatprep.mubr.bf16.mxu0 %v868
        %1052 = vmatmul.mubr.bf16.gmra.mxu0 %v867
        %v1053 = vpop.f32.mrf.mxu0
        %v1054 = vadd.f32 0.0, %v1053
        %v1055 = vpop.f32.mrf.mxu0
        %v1056 = vpop.f32.mrf.mxu0
        %v1057 = vadd.f32 0.0, %v1056
        %v1058 = vpop.f32.mrf.mxu0
        %1059 = vmatprep.mubr.bf16.mxu0 %v870
        %1060 = vmatmul.mubr.bf16.gmra.mxu0 %v869
        %v1061 = vpop.f32.mrf.mxu0
        %v1062 = vadd.f32 0.0, %v1061
        %v1063 = vpop.f32.mrf.mxu0
        %v1064 = vpop.f32.mrf.mxu0
        %v1065 = vadd.f32 0.0, %v1064
        %v1066 = vpop.f32.mrf.mxu0
        %1067 = vmatprep.mubr.bf16.mxu0 %v872
        %1068 = vmatmul.mubr.bf16.gmra.mxu0 %v871
        %v1069 = vpop.f32.mrf.mxu0
        %v1070 = vadd.f32 0.0, %v1069
        %v1071 = vpop.f32.mrf.mxu0
        %v1072 = vpop.f32.mrf.mxu0
        %v1073 = vadd.f32 0.0, %v1072
        %v1074 = vpop.f32.mrf.mxu0
        %1075 = vmatprep.mubr.bf16.mxu0 %v874
        %1076 = vmatmul.mubr.bf16.gmra.mxu0 %v873
        %v1077 = vpop.f32.mrf.mxu0
        %v1078 = vadd.f32 0.0, %v1077
        %v1079 = vpop.f32.mrf.mxu0
        %v1080 = vpop.f32.mrf.mxu0
        %v1081 = vadd.f32 0.0, %v1080
        %v1082 = vpop.f32.mrf.mxu0
        %1083 = vdwg.mxu0
        %v1084 = vlaneseq
        %v1085 = vand.u32 %v1084, 127
        %vm1086 = vcmp.lt.s32.totalorder %v1085, 8
        %v1087 = vsel %vm1086, %v1022, -inf
        %v1088 = vsel %vm1086, %v1025, -inf
        %v1089 = vsel %vm1086, %v1030, -inf
        %v1090 = vsel %vm1086, %v1033, -inf
        %v1091 = vsel %vm1086, %v1038, -inf
        %v1092 = vsel %vm1086, %v1041, -inf
        %v1093 = vsel %vm1086, %v1046, -inf
        %v1094 = vsel %vm1086, %v1049, -inf
        %v1095 = vsel %vm1086, %v1054, -inf
        %v1096 = vsel %vm1086, %v1057, -inf
        %v1097 = vsel %vm1086, %v1062, -inf
        %v1098 = vsel %vm1086, %v1065, -inf
        %v1099 = vsel %vm1086, %v1070, -inf
        %v1100 = vsel %vm1086, %v1073, -inf
        %v1101 = vsel %vm1086, %v1078, -inf
        %v1102 = vsel %vm1086, %v1081, -inf
        %1103 = vmax.xlane.f32.xlu0 %v1087
        %v1104 = vpop.xlane.xlu0 %1103
        %1105 = vmax.xlane.f32.xlu0 %v1088
        %v1106 = vpop.xlane.xlu0 %1105
        %1107 = vmax.xlane.f32.xlu0 %v1089
        %v1108 = vpop.xlane.xlu0 %1107
        %1109 = vmax.xlane.f32.xlu0 %v1090
        %v1110 = vpop.xlane.xlu0 %1109
        %1111 = vmax.xlane.f32.xlu0 %v1091
        %v1112 = vpop.xlane.xlu0 %1111
        %1113 = vmax.xlane.f32.xlu0 %v1092
        %v1114 = vpop.xlane.xlu0 %1113
        %1115 = vmax.xlane.f32.xlu0 %v1093
        %v1116 = vpop.xlane.xlu0 %1115
        %1117 = vmax.xlane.f32.xlu0 %v1094
        %v1118 = vpop.xlane.xlu0 %1117
        %1119 = vmax.xlane.f32.xlu0 %v1095
        %v1120 = vpop.xlane.xlu0 %1119
        %1121 = vmax.xlane.f32.xlu0 %v1096
        %v1122 = vpop.xlane.xlu0 %1121
        %1123 = vmax.xlane.f32.xlu0 %v1097
        %v1124 = vpop.xlane.xlu0 %1123
        %1125 = vmax.xlane.f32.xlu0 %v1098
        %v1126 = vpop.xlane.xlu0 %1125
        %1127 = vmax.xlane.f32.xlu0 %v1099
        %v1128 = vpop.xlane.xlu0 %1127
        %1129 = vmax.xlane.f32.xlu0 %v1100
        %v1130 = vpop.xlane.xlu0 %1129
        %1131 = vmax.xlane.f32.xlu0 %v1101
        %v1132 = vpop.xlane.xlu0 %1131
        %1133 = vmax.xlane.f32.xlu0 %v1102
        %v1134 = vpop.xlane.xlu0 %1133
        %v1135 = vsub.f32 %v1087, %v1104
        %v1136 = vsub.f32 %v1088, %v1106
        %v1137 = vsub.f32 %v1089, %v1108
        %v1138 = vsub.f32 %v1090, %v1110
        %v1139 = vsub.f32 %v1091, %v1112
        %v1140 = vsub.f32 %v1092, %v1114
        %v1141 = vsub.f32 %v1093, %v1116
        %v1142 = vsub.f32 %v1094, %v1118
        %v1143 = vsub.f32 %v1095, %v1120
        %v1144 = vsub.f32 %v1096, %v1122
        %v1145 = vsub.f32 %v1097, %v1124
        %v1146 = vsub.f32 %v1098, %v1126
        %v1147 = vsub.f32 %v1099, %v1128
        %v1148 = vsub.f32 %v1100, %v1130
        %v1149 = vsub.f32 %v1101, %v1132
        %v1150 = vsub.f32 %v1102, %v1134
        %v1151 = vmul.f32 %v1135, 1.442695
        %v1152 = vpow.pop %v1151
        %v1153 = vmul.f32 %v1136, 1.442695
        %v1154 = vpow.pop %v1153
        %v1155 = vmul.f32 %v1137, 1.442695
        %v1156 = vpow.pop %v1155
        %v1157 = vmul.f32 %v1138, 1.442695
        %v1158 = vpow.pop %v1157
        %v1159 = vmul.f32 %v1139, 1.442695
        %v1160 = vpow.pop %v1159
        %v1161 = vmul.f32 %v1140, 1.442695
        %v1162 = vpow.pop %v1161
        %v1163 = vmul.f32 %v1141, 1.442695
        %v1164 = vpow.pop %v1163
        %v1165 = vmul.f32 %v1142, 1.442695
        %v1166 = vpow.pop %v1165
        %v1167 = vmul.f32 %v1143, 1.442695
        %v1168 = vpow.pop %v1167
        %v1169 = vmul.f32 %v1144, 1.442695
        %v1170 = vpow.pop %v1169
        %v1171 = vmul.f32 %v1145, 1.442695
        %v1172 = vpow.pop %v1171
        %v1173 = vmul.f32 %v1146, 1.442695
        %v1174 = vpow.pop %v1173
        %v1175 = vmul.f32 %v1147, 1.442695
        %v1176 = vpow.pop %v1175
        %v1177 = vmul.f32 %v1148, 1.442695
        %v1178 = vpow.pop %v1177
        %v1179 = vmul.f32 %v1149, 1.442695
        %v1180 = vpow.pop %v1179
        %v1181 = vmul.f32 %v1150, 1.442695
        %v1182 = vpow.pop %v1181
        %v1183 = vsel %vm1086, %v1152, 0.0
        %v1184 = vsel %vm1086, %v1154, 0.0
        %v1185 = vsel %vm1086, %v1156, 0.0
        %v1186 = vsel %vm1086, %v1158, 0.0
        %v1187 = vsel %vm1086, %v1160, 0.0
        %v1188 = vsel %vm1086, %v1162, 0.0
        %v1189 = vsel %vm1086, %v1164, 0.0
        %v1190 = vsel %vm1086, %v1166, 0.0
        %v1191 = vsel %vm1086, %v1168, 0.0
        %v1192 = vsel %vm1086, %v1170, 0.0
        %v1193 = vsel %vm1086, %v1172, 0.0
        %v1194 = vsel %vm1086, %v1174, 0.0
        %v1195 = vsel %vm1086, %v1176, 0.0
        %v1196 = vsel %vm1086, %v1178, 0.0
        %v1197 = vsel %vm1086, %v1180, 0.0
        %v1198 = vsel %vm1086, %v1182, 0.0
        %1199 = vadd.xlane.f32.xlu0 %v1183
        %v1200 = vpop.xlane.xlu0 %1199
        %1201 = vadd.xlane.f32.xlu0 %v1184
        %v1202 = vpop.xlane.xlu0 %1201
        %1203 = vadd.xlane.f32.xlu0 %v1185
        %v1204 = vpop.xlane.xlu0 %1203
        %1205 = vadd.xlane.f32.xlu0 %v1186
        %v1206 = vpop.xlane.xlu0 %1205
        %1207 = vadd.xlane.f32.xlu0 %v1187
        %v1208 = vpop.xlane.xlu0 %1207
        %1209 = vadd.xlane.f32.xlu0 %v1188
        %v1210 = vpop.xlane.xlu0 %1209
        %1211 = vadd.xlane.f32.xlu0 %v1189
        %v1212 = vpop.xlane.xlu0 %1211
        %1213 = vadd.xlane.f32.xlu0 %v1190
        %v1214 = vpop.xlane.xlu0 %1213
        %1215 = vadd.xlane.f32.xlu0 %v1191
        %v1216 = vpop.xlane.xlu0 %1215
        %1217 = vadd.xlane.f32.xlu0 %v1192
        %v1218 = vpop.xlane.xlu0 %1217
        %1219 = vadd.xlane.f32.xlu0 %v1193
        %v1220 = vpop.xlane.xlu0 %1219
        %1221 = vadd.xlane.f32.xlu0 %v1194
        %v1222 = vpop.xlane.xlu0 %1221
        %1223 = vadd.xlane.f32.xlu0 %v1195
        %v1224 = vpop.xlane.xlu0 %1223
        %1225 = vadd.xlane.f32.xlu0 %v1196
        %v1226 = vpop.xlane.xlu0 %1225
        %1227 = vadd.xlane.f32.xlu0 %v1197
        %v1228 = vpop.xlane.xlu0 %1227
        %1229 = vadd.xlane.f32.xlu0 %v1198
        %v1230 = vpop.xlane.xlu0 %1229
        %v1231 = vrcp.pop %v1200
        %v1232 = vrcp.pop %v1202
        %v1233 = vrcp.pop %v1204
        %v1234 = vrcp.pop %v1206
        %v1235 = vrcp.pop %v1208
        %v1236 = vrcp.pop %v1210
        %v1237 = vrcp.pop %v1212
        %v1238 = vrcp.pop %v1214
        %v1239 = vrcp.pop %v1216
        %v1240 = vrcp.pop %v1218
        %v1241 = vrcp.pop %v1220
        %v1242 = vrcp.pop %v1222
        %v1243 = vrcp.pop %v1224
        %v1244 = vrcp.pop %v1226
        %v1245 = vrcp.pop %v1228
        %v1246 = vrcp.pop %v1230
        %v1247 = vmul.f32 %v1183, %v1231
        %v1248 = vmul.f32 %v1184, %v1232
        %v1249 = vmul.f32 %v1185, %v1233
        %v1250 = vmul.f32 %v1186, %v1234
        %v1251 = vmul.f32 %v1187, %v1235
        %v1252 = vmul.f32 %v1188, %v1236
        %v1253 = vmul.f32 %v1189, %v1237
        %v1254 = vmul.f32 %v1190, %v1238
        %v1255 = vmul.f32 %v1191, %v1239
        %v1256 = vmul.f32 %v1192, %v1240
        %v1257 = vmul.f32 %v1193, %v1241
        %v1258 = vmul.f32 %v1194, %v1242
        %v1259 = vmul.f32 %v1195, %v1243
        %v1260 = vmul.f32 %v1196, %v1244
        %v1261 = vmul.f32 %v1197, %v1245
        %v1262 = vmul.f32 %v1198, %v1246
        %1263 = vst [vmem:[%s262] sm:$0xff] %v1247
        %1264 = vst [vmem:[%s262 + $0x8] sm:$0xff] %v1248
        %1265 = vst [vmem:[%s262 + $0x10] sm:$0xff] %v1249
        %1266 = vst [vmem:[%s262 + $0x18] sm:$0xff] %v1250
        %1267 = vst [vmem:[%s262 + $0x20] sm:$0xff] %v1251
        %1268 = vst [vmem:[%s262 + $0x28] sm:$0xff] %v1252
        %1269 = vst [vmem:[%s262 + $0x30] sm:$0xff] %v1253
        %1270 = vst [vmem:[%s262 + $0x38] sm:$0xff] %v1254
        %1271 = vst [vmem:[%s262 + $0x40] sm:$0xff] %v1255
        %1272 = vst [vmem:[%s262 + $0x48] sm:$0xff] %v1256
        %1273 = vst [vmem:[%s262 + $0x50] sm:$0xff] %v1257
        %1274 = vst [vmem:[%s262 + $0x58] sm:$0xff] %v1258
        %1275 = vst [vmem:[%s262 + $0x60] sm:$0xff] %v1259
        %1276 = vst [vmem:[%s262 + $0x68] sm:$0xff] %v1260
        %1277 = vst [vmem:[%s262 + $0x70] sm:$0xff] %v1261
        %1278 = vst [vmem:[%s262 + $0x78] sm:$0xff] %v1262
        %s1279 = smul.u32 16, %s20
        %p1280 = scmp.lt.s32.totalorder %s1279, 31
        %s1281 = scalar_select %p1280, %s1279, 31
        %s1282 = smul.addr %s1281, 8
        %s1283 = scalar_lea.vmem %s4, %s1282
        %s1284 = sand.u32 %s148, 1
        %s1285 = scalar_lea.sflag [#allocation3], %s1284
        %s1286 = sand.u32 %s148, 1
        %s1287 = smul.addr %s1286, 256
        %s1288 = scalar_lea.vmem [#allocation2], %s1287
        // Predicated region
        $region37: #{densenet6_forward.9} parent=35 // pred_check
          %p1289 = pneg %p132
        $region38: #{densenet6_forward.9} parent=35 // pred_check_branch
          %1291 = sbr.rel (%p1289) target = $region40
        $region39: #{densenet6_forward.9} parent=35 // pred_region
          %s1292 = smul.u32 16, %s20
        $region40: #{densenet6_forward.9} parent=35 // pred_fallthru
          _
        // Predicated region
        $region41: #{densenet6_forward.9} parent=35 // pred_check
          %p1293 = pneg %p158
        $region42: #{densenet6_forward.9} parent=35 // pred_check_branch
          %1295 = sbr.rel (%p1293) target = $region44
        $region43: #{densenet6_forward.9} parent=35 // pred_region
          %s1296 = smul.u32 16, %s20
          %s1298 = ssub.s32 4096, 4096
          %1299 = vsyncadd %s1285, %s1298
          %s1300 = smul.addr %s1296, 2
          %s1301 = smul.addr %s1300, 128
          %s1302 = scalar_lea.hbm %s5, %s1301
          %s1303 = sshll.u32 %s1288, 4
          %s1304 = int_to_ptr.vmem [resolvable:$true] %s1303
          %1309 = dma.vmem_to_hbm [thread:$0]  %s1304, 4096, %s1302, %s1285, 256, 256, 16
        $region44: #{densenet6_forward.9} parent=35 // pred_fallthru
          _
      $region36: #{densenet6_forward.9} parent=5 // pred_fallthru
        _
      %p1310 = scmp.le.s32.totalorder 2, %s15
      // Predicated region
      $region45: #{densenet6_forward.9} parent=5 // pred_check
        %p1311 = pneg %p1310
      $region46: #{densenet6_forward.9} parent=5 // pred_check_branch
        %1313 = sbr.rel (%p1311) target = $region48
      $region47: #{densenet6_forward.9} parent=5 // pred_region
        %s1314 = ssub.s32 %s15, 2
        // Predicated region
        $region49: #{densenet6_forward.9} parent=47 // pred_check
          %p1315 = pneg %p138
        $region50: #{densenet6_forward.9} parent=47 // pred_check_branch
          %1317 = sbr.rel (%p1315) target = $region52
        $region51: #{densenet6_forward.9} parent=47 // pred_region
          %s1318 = smul.u32 16, %s21
          %p1319 = scmp.lt.s32.totalorder %s1318, 31
          %s1320 = scalar_select %p1319, %s1318, 31
          %s1321 = smul.addr %s1320, 8
          %s1322 = scalar_lea.vmem %s4, %s1321
        $region52: #{densenet6_forward.9} parent=47 // pred_fallthru
          _
        // Predicated region
        $region53: #{densenet6_forward.9} parent=47 // pred_check
          %p1323 = pneg %p164
        $region54: #{densenet6_forward.9} parent=47 // pred_check_branch
          %1325 = sbr.rel (%p1323) target = $region56
        $region55: #{densenet6_forward.9} parent=47 // pred_region
          %s1326 = sand.u32 %s149, 1
          %s1327 = scalar_lea.sflag [#allocation3], %s1326
          %s1328 = sand.u32 %s149, 1
          %s1329 = smul.addr %s1328, 256
          %s1330 = scalar_lea.vmem [#allocation2], %s1329
          %1331 = dma.done %s1327, 4096
        $region56: #{densenet6_forward.9} parent=47 // pred_fallthru
          _
      $region48: #{densenet6_forward.9} parent=5 // pred_fallthru
        _
    $region6: #{densenet6_forward.9} parent=1 // loop_footer
      %s19 = sadd.s32 1, %s15
    $region7: #{densenet6_forward.9} parent=1 // loop_footer_branch
      %14 = sbr.rel target = $region3
    $region8: #{densenet6_forward.9} parent=1 // loop_exit
      _
    %1332 = vsyncpa [#allocation3], 1
    %s1333 = scalar_lea.sflag [#allocation3], 1
    %1334 = vsyncpa %s1333, 1

</llo_original>
